<compile_context>
chip_gen: v7x
topology: tpu7x:2x2x1
jax: 0.10.0
libtpu: 0.0.40
codegen_flags: <defaults>
</compile_context>

<pallas_src>
import functools

import jax
import jax.numpy as jnp
from jax import lax
from jax.experimental import pallas as pl
from jax.experimental.pallas import tpu as pltpu

HIDDEN = 256


# ----------------------------------------------------------------------------
# Pallas kernel: fused per-voxel pointwise network + shortcut + residual add
# ----------------------------------------------------------------------------
def _gelu_tanh(x):
    # tanh-form GELU: 0.5*x*(1+tanh(sqrt(2/pi)*(x+0.044715*x^3))).
    # tanh goes to the EUP slot; only ~8 VPU ops/element remain.
    c = 0.7978845608028654  # sqrt(2/pi)
    return 0.5 * x * (1.0 + jnp.tanh(c * (x + 0.044715 * (x * x * x))))


def _fused_mlp_kernel(x_ref, w01_ref, b01_ref, w2t_ref, wsct_ref, bout_ref,
                      out_ref):
    x = x_ref[...]                                             # (tm, K0) bf16
    # conv00 pointwise ∘ fc1 (depthwise affines + rel_cell folded in wrapper).
    h = jnp.dot(x, w01_ref[...],
                preferred_element_type=jnp.float32) + b01_ref[...]
    h = _gelu_tanh(h)                                          # (tm, 256) f32
    hb = h.astype(jnp.bfloat16)
    # Emit the two tiny N=3 matmuls directly in (3, tm) orientation so the
    # output store is lane-dense (contract over the last dim of both operands).
    dn = (((1,), (1,)), ((), ()))
    ret = lax.dot_general(w2t_ref[...], hb, dn,
                          preferred_element_type=jnp.float32)  # (3, tm)
    # shortcut: wsct has zero columns for all grid channels, so one dot over
    # the fused input applies the folded depthwise-separable shortcut conv.
    sc = lax.dot_general(wsct_ref[...], x, dn,
                         preferred_element_type=jnp.float32)   # (3, tm)
    out_ref[...] = ret + sc + bout_ref[...]                    # bout: (3, 1)


def _choose_tm(n_rows):
    """Adaptive row tile: largest tile (<=4096, multiple of 256) whose padded
    total (with an even grid count >= 2 for 2-TC sharding) stays within ~10%
    of the minimum achievable padded total."""
    cands = []
    for tm in (256, 512, 1024, 2048, 4096):
        g = max(2, -(-n_rows // tm))
        g += g % 2
        cands.append((tm, g * tm))
    min_tot = min(t for _, t in cands)
    return max(tm for tm, t in cands if t <= min_tot * 1.10)


def run_pointwise_net(x_flat, kp):
    N, K0 = x_flat.shape
    tm = _choose_tm(N)
    grid = max(2, -(-N // tm))
    grid += grid % 2                      # even grid count for 2-TC sharding
    Np = grid * tm
    if Np > N:
        x_flat = jnp.pad(x_flat, ((0, Np - N), (0, 0)))

    row_in = lambda i: (i, 0)
    col_out = lambda i: (0, i)
    full = lambda i: (0, 0)

    weight_bytes = (K0 * HIDDEN * 2 + HIDDEN * 4 + 3 * HIDDEN * 2
                    + 3 * K0 * 2 + 3 * 4)
    mm_flops_per_row = 2 * (K0 * HIDDEN + HIDDEN * 3 + K0 * 3)
    cost = pl.CostEstimate(
        flops=Np * mm_flops_per_row,
        transcendentals=Np * HIDDEN,                 # one tanh per hidden elem
        bytes_accessed=Np * K0 * 2 + Np * 3 * 4 + weight_bytes,
    )

    # Working set: double-buffered bf16 input + f32 output blocks, weights,
    # and ~5 live (tm, 256) f32 activation intermediates, with 25% margin.
    work_bytes = (2 * tm * K0 * 2 + 2 * 3 * tm * 4 + 2 * weight_bytes
                  + 5 * tm * HIDDEN * 4)
    vmem_limit = int(min(48 << 20, max(16 << 20, work_bytes * 5 // 4)))

    out = pl.pallas_call(
        _fused_mlp_kernel,
        out_shape=jax.ShapeDtypeStruct((3, Np), jnp.float32),
        grid_spec=pltpu.PrefetchScalarGridSpec(
            num_scalar_prefetch=0,
            grid=(grid,),
            in_specs=[
                pl.BlockSpec((tm, K0), row_in),        # fused input (bf16)
                pl.BlockSpec((K0, HIDDEN), full),      # w0∘w1 folded (bf16)
                pl.BlockSpec((1, HIDDEN), full),       # folded bias (f32)
                pl.BlockSpec((3, HIDDEN), full),       # fc2 W^T (bf16)
                pl.BlockSpec((3, K0), full),           # shortcut W^T (bf16)
                pl.BlockSpec((3, 1), full),            # fc2 b + shortcut b
            ],
            out_specs=pl.BlockSpec((3, tm), col_out),  # lane-dense (3, Np)
        ),
        compiler_params=pltpu.CompilerParams(
            dimension_semantics=("parallel",),
            vmem_limit_bytes=vmem_limit),
        cost_estimate=cost,
    )(x_flat, kp["w01"], kp["b01"], kp["w2t"], kp["wsct"], kp["bout"])
    return out[:, :N]                                  # (3, N)


# ----------------------------------------------------------------------------
# JAX glue: coordinates, grid_sample (nearest / trilinear-border), fused input
# (built channels-last directly -> no output-sized transpose in HBM)
# ----------------------------------------------------------------------------
def make_coord_3d(shape):
    seqs = []
    for n in shape:
        r = 1.0 / n
        seqs.append(-1.0 + r + 2.0 * r * jnp.arange(n, dtype=jnp.float32))
    mesh = jnp.meshgrid(*seqs, indexing="ij")
    return jnp.stack(mesh, axis=-1)            # (T, H, W, 3), order (t, h, w)


def _unnormalize(c, n):
    # grid_sample, align_corners=False
    return ((c + 1.0) * n - 1.0) * 0.5


def build_fused_input(feat, target_size):
    """Returns (B*T*H*W, K0) bf16 fused input:
       [rel_coords(24) | area-weighted nearest feats(8C)
        | trilinear-border shortcut feats(C) | zero pad].
       (Constant rel_cell channels are folded into the bias, not streamed.)"""
    B, C, Din, Hin, Win = feat.shape
    T, H, W = target_size
    THW = T * H * W
    K_used = 24 + 9 * C
    K0 = max(128, -(-K_used // 128) * 128)     # pad K to a multiple of 128

    # channels-last flattened source features (small: source volume only)
    feat_cl = jnp.transpose(feat, (0, 2, 3, 4, 1)).reshape(B, Din * Hin * Win, C)

    coord = make_coord_3d((T, H, W)).reshape(1, THW, 3)
    coord = jnp.broadcast_to(coord, (B, THW, 3))

    def gather(it, ih, iw):
        flat = (it * Hin + ih) * Win + iw                       # (B, THW)
        idx = jnp.broadcast_to(flat[..., None], (B, THW, C))
        return jnp.take_along_axis(feat_cl, idx, axis=1)        # (B, THW, C)

    rt, rh, rw = 1.0 / Din, 1.0 / Hin, 1.0 / Win
    dims_f = jnp.array([Din, Hin, Win], jnp.float32)
    eps = 1e-6

    rel_parts, feat_parts, areas = [], [], []
    for vt in (-1, 1):
        for vx in (-1, 1):
            for vy in (-1, 1):
                shift = jnp.array([vt * rt + eps, vx * rh + eps, vy * rw + eps],
                                  jnp.float32)
                c_ = jnp.clip(coord + shift, -1.0 + 1e-6, 1.0 - 1e-6)
                # grid_sample mode='nearest', align_corners=False
                it = jnp.clip(jnp.round(_unnormalize(c_[..., 0], Din)),
                              0, Din - 1).astype(jnp.int32)
                ih = jnp.clip(jnp.round(_unnormalize(c_[..., 1], Hin)),
                              0, Hin - 1).astype(jnp.int32)
                iw = jnp.clip(jnp.round(_unnormalize(c_[..., 2], Win)),
                              0, Win - 1).astype(jnp.int32)
                f_ = gather(it, ih, iw)
                # centers of sampled source cells == grid_sample(pos_lr, ...)
                old = jnp.stack(
                    [-1.0 + rt + 2.0 * rt * it.astype(jnp.float32),
                     -1.0 + rh + 2.0 * rh * ih.astype(jnp.float32),
                     -1.0 + rw + 2.0 * rw * iw.astype(jnp.float32)], axis=-1)
                rel = (coord - old) * dims_f
                area = jnp.abs(rel[..., 0] * rel[..., 1] * rel[..., 2]) + 1e-9
                rel_parts.append(rel)
                feat_parts.append(f_)
                areas.append(area)

    tot = sum(areas)
    areas = areas[::-1]        # the four pairwise swaps in the ref == reversal
    feat_parts = [f * (a / tot)[..., None] for f, a in zip(feat_parts, areas)]

    # shortcut: grid_sample mode='bilinear', padding_mode='border',
    # align_corners=False of the raw features (1x1x1 conv applied in-kernel).
    ft = jnp.clip(_unnormalize(coord[..., 0], Din), 0.0, Din - 1.0)
    fh = jnp.clip(_unnormalize(coord[..., 1], Hin), 0.0, Hin - 1.0)
    fw = jnp.clip(_unnormalize(coord[..., 2], Win), 0.0, Win - 1.0)
    t0f, h0f, w0f = jnp.floor(ft), jnp.floor(fh), jnp.floor(fw)
    wt, wh, ww = ft - t0f, fh - h0f, fw - w0f
    t0 = t0f.astype(jnp.int32)
    h0 = h0f.astype(jnp.int32)
    w0 = w0f.astype(jnp.int32)
    sc = jnp.zeros((B, THW, C), jnp.float32)
    for dt, at in ((0, 1.0 - wt), (1, wt)):
        for dh, ah in ((0, 1.0 - wh), (1, wh)):
            for dw, aw in ((0, 1.0 - ww), (1, ww)):
                ti = jnp.clip(t0 + dt, 0, Din - 1)
                hi = jnp.clip(h0 + dh, 0, Hin - 1)
                wi = jnp.clip(w0 + dw, 0, Win - 1)
                sc = sc + (at * ah * aw)[..., None] * gather(ti, hi, wi)

    parts = rel_parts + feat_parts + [sc]
    parts = [p.astype(jnp.bfloat16) for p in parts]
    if K0 > K_used:
        parts.append(jnp.zeros((B, THW, K0 - K_used), jnp.bfloat16))
    x = jnp.concatenate(parts, axis=-1).reshape(B * THW, K0)
    return x, K0


def fold_params(params, C, K0):
    """Fold depthwise (1,1,1) affines, the constant rel_cell channels, and the
    conv00∘fc1 composition into a single (K0, HIDDEN) weight; pad/transpose
    the two tiny output-projection weights for the lane-dense (3, N) output."""
    Cin = 27 + 8 * C          # conv00 input channels (incl. rel_cell)
    Kg = Cin - 3              # streamed grid channels (rel_coords + feats)

    # depthwise (1,1,1) affine folded into the conv00 pointwise weight/bias
    w0f = params["dw0_w"].reshape(Cin, 1) * params["w0"]        # (Cin, 256)
    b0f = params["b0"] + params["dw0_b"] @ params["w0"]         # (1, 256)
    # constant rel_cell channels ([2,2,2]) -> fold into the bias
    b0f = b0f + 2.0 * jnp.sum(w0f[Kg:Cin], axis=0, keepdims=True)
    # conv00 and fc1 have no nonlinearity in between -> compose exactly (f32)
    w01 = w0f[:Kg] @ params["w1"]                               # (Kg, 256)
    b01 = b0f @ params["w1"] + params["b1"]                     # (1, 256)

    # shortcut depthwise-separable (1,1,1): per-channel affine + pointwise
    wsf = params["dws_w"].reshape(C, 1) * params["ws"]          # (C, 3)
    bsf = params["bs"] + params["dws_b"] @ params["ws"]         # (1, 3)

    # place into the fused-K layout: [grid(Kg) | shortcut(C) | zero pad]
    w01_big = jnp.zeros((K0, HIDDEN), jnp.float32).at[:Kg].set(w01)
    wsct = jnp.zeros((3, K0), jnp.float32).at[:, Kg:Kg + C].set(wsf.T)
    return {
        "w01": w01_big.astype(jnp.bfloat16),
        "b01": b01,
        "w2t": params["w2"].T.astype(jnp.bfloat16),             # (3, 256)
        "wsct": wsct.astype(jnp.bfloat16),
        "bout": (params["b2"] + bsf).T,                         # (3, 1) f32
    }


@functools.partial(jax.jit, static_argnames=("target_size",))
def module_net3d_forward(feat, target_size, params):
    B, C = feat.shape[0], feat.shape[1]
    T, H, W = target_size
    x_flat, K0 = build_fused_input(feat, target_size)
    kp = fold_params(params, C, K0)
    out = run_pointwise_net(x_flat, kp)                # (3, B*T*H*W), f32
    # cheap leading-axis swap (contiguous THW blocks), not a full transpose
    return out.reshape(3, B, T, H, W).transpose(1, 0, 2, 3, 4)   # (B,3,T,H,W)


# ----------------------------------------------------------------------------
# Deterministic synthetic parameters (shapes implied by the module __init__)
# ----------------------------------------------------------------------------
def init_params(key, in_channel):
    Cin = 27 + in_channel * 8
    ks = jax.random.split(key, 12)
    rnd = lambda k, s, sc: jax.random.normal(k, s, jnp.float32) * sc
    return {
        "dw0_w": rnd(ks[0], (1, Cin), 0.5) + 1.0,
        "dw0_b": rnd(ks[1], (1, Cin), 0.1),
        "w0":    rnd(ks[2], (Cin, HIDDEN), float(Cin) ** -0.5),
        "b0":    rnd(ks[3], (1, HIDDEN), 0.05),
        "w1":    rnd(ks[4], (HIDDEN, HIDDEN), float(HIDDEN) ** -0.5),
        "b1":    rnd(ks[5], (1, HIDDEN), 0.05),
        "w2":    rnd(ks[6], (HIDDEN, 3), float(HIDDEN) ** -0.5),
        "b2":    rnd(ks[7], (1, 3), 0.05),
        "dws_w": rnd(ks[8], (1, in_channel), 0.5) + 1.0,
        "dws_b": rnd(ks[9], (1, in_channel), 0.1),
        "ws":    rnd(ks[10], (in_channel, 3), float(in_channel) ** -0.5),
        "bs":    rnd(ks[11], (1, 3), 0.05),
    }


if __name__ == "__main__":
    key = jax.random.PRNGKey(0)
    k_feat, k_par = jax.random.split(key)

    B, C, Din, Hin, Win = 2, 4, 4, 8, 8
    target_size = (8, 16, 16)

    feat = jax.random.normal(k_feat, (B, C, Din, Hin, Win), jnp.float32)
    params = init_params(k_par, C)

    out = module_net3d_forward(feat, target_size, params)
    out = jax.block_until_ready(out)

    assert out.shape == (B, 3) + target_size, out.shape
    assert bool(jnp.all(jnp.isfinite(out)))
    print("KERNEL_OK")
</pallas_src>

<mosaic_0001>
module attributes {stable_mosaic.version = 11 : i64} {
  func.func @_fused_mlp_kernel(%arg0: i32, %arg1: memref<2048x128xbf16, #tpu.memory_space<vmem>>, %arg2: memref<128x256xbf16, #tpu.memory_space<vmem>>, %arg3: memref<1x256xf32, #tpu.memory_space<vmem>>, %arg4: memref<3x256xbf16, #tpu.memory_space<vmem>>, %arg5: memref<3x128xbf16, #tpu.memory_space<vmem>>, %arg6: memref<3x1xf32, #tpu.memory_space<vmem>>, %arg7: memref<3x2048xf32, #tpu.memory_space<vmem>>) attributes {dimension_semantics = [#tpu.dimension_semantics<parallel>], iteration_bounds = array<i64: 2>, scalar_prefetch = 0 : i64, scratch_operands = 0 : i64, tpu.core_type = #tpu.core_type<tc>, window_params = [{transform_indices = @transform_0, window_bounds = array<i64: 2048, 128>}, {pipeline_mode = #tpu.pipeline_mode<synchronous>, transform_indices = @transform_1, window_bounds = array<i64: 128, 256>}, {pipeline_mode = #tpu.pipeline_mode<synchronous>, transform_indices = @transform_2, window_bounds = array<i64: 1, 256>}, {pipeline_mode = #tpu.pipeline_mode<synchronous>, transform_indices = @transform_3, window_bounds = array<i64: 3, 256>}, {pipeline_mode = #tpu.pipeline_mode<synchronous>, transform_indices = @transform_4, window_bounds = array<i64: 3, 128>}, {pipeline_mode = #tpu.pipeline_mode<synchronous>, transform_indices = @transform_5, window_bounds = array<i64: 3, 1>}, {transform_indices = @transform_6, window_bounds = array<i64: 3, 2048>}]} {
    %c0 = arith.constant 0 : index
    %c0_0 = arith.constant 0 : index
    %0 = vector.load %arg1[%c0, %c0_0] : memref<2048x128xbf16, #tpu.memory_space<vmem>>, vector<2048x128xbf16>
    %c0_1 = arith.constant 0 : index
    %c0_2 = arith.constant 0 : index
    %1 = vector.load %arg2[%c0_1, %c0_2] : memref<128x256xbf16, #tpu.memory_space<vmem>>, vector<128x256xbf16>
    %cst = arith.constant dense<0.000000e+00> : vector<2048x256xf32>
    %2 = tpu.matmul %0, %1, %cst {dimension_numbers = #tpu.dot_dimension_numbers<[1], [0], [0], [1], [0, 0, 1, 1], [], []>} : vector<2048x128xbf16>, vector<128x256xbf16>, vector<2048x256xf32> -> vector<2048x256xf32>
    %c0_3 = arith.constant 0 : index
    %c0_4 = arith.constant 0 : index
    %3 = vector.load %arg3[%c0_3, %c0_4] : memref<1x256xf32, #tpu.memory_space<vmem>>, vector<1x256xf32>
    %4 = vector.broadcast %3 : vector<1x256xf32> to vector<2048x256xf32>
    %5 = arith.addf %2, %4 : vector<2048x256xf32>
    %cst_5 = arith.constant 5.000000e-01 : f32
    %6 = vector.broadcast %cst_5 : f32 to vector<2048x256xf32>
    %7 = arith.mulf %6, %5 : vector<2048x256xf32>
    %8 = arith.mulf %5, %5 : vector<2048x256xf32>
    %9 = arith.mulf %8, %5 : vector<2048x256xf32>
    %cst_6 = arith.constant 4.471500e-02 : f32
    %10 = vector.broadcast %cst_6 : f32 to vector<2048x256xf32>
    %11 = arith.mulf %10, %9 : vector<2048x256xf32>
    %12 = arith.addf %5, %11 : vector<2048x256xf32>
    %cst_7 = arith.constant 0.797884583 : f32
    %13 = vector.broadcast %cst_7 : f32 to vector<2048x256xf32>
    %14 = arith.mulf %13, %12 : vector<2048x256xf32>
    %15 = math.tanh %14 : vector<2048x256xf32>
    %cst_8 = arith.constant 1.000000e+00 : f32
    %16 = vector.broadcast %cst_8 : f32 to vector<2048x256xf32>
    %17 = arith.addf %16, %15 : vector<2048x256xf32>
    %18 = arith.mulf %7, %17 : vector<2048x256xf32>
    %19 = arith.truncf %18 : vector<2048x256xf32> to vector<2048x256xbf16>
    %c0_9 = arith.constant 0 : index
    %c0_10 = arith.constant 0 : index
    %20 = vector.load %arg4[%c0_9, %c0_10] : memref<3x256xbf16, #tpu.memory_space<vmem>>, vector<3x256xbf16>
    %cst_11 = arith.constant dense<0.000000e+00> : vector<3x2048xf32>
    %21 = tpu.matmul %20, %19, %cst_11 {dimension_numbers = #tpu.dot_dimension_numbers<[1], [1], [0], [0], [0, 0, 1, 0], [], []>} : vector<3x256xbf16>, vector<2048x256xbf16>, vector<3x2048xf32> -> vector<3x2048xf32>
    %c0_12 = arith.constant 0 : index
    %c0_13 = arith.constant 0 : index
    %22 = vector.load %arg5[%c0_12, %c0_13] : memref<3x128xbf16, #tpu.memory_space<vmem>>, vector<3x128xbf16>
    %cst_14 = arith.constant dense<0.000000e+00> : vector<3x2048xf32>
    %23 = tpu.matmul %22, %0, %cst_14 {dimension_numbers = #tpu.dot_dimension_numbers<[1], [1], [0], [0], [0, 0, 1, 0], [], []>} : vector<3x128xbf16>, vector<2048x128xbf16>, vector<3x2048xf32> -> vector<3x2048xf32>
    %24 = arith.addf %21, %23 : vector<3x2048xf32>
    %c0_15 = arith.constant 0 : index
    %c0_16 = arith.constant 0 : index
    %25 = vector.load %arg6[%c0_15, %c0_16] : memref<3x1xf32, #tpu.memory_space<vmem>>, vector<3x1xf32>
    %26 = vector.broadcast %25 : vector<3x1xf32> to vector<3x2048xf32>
    %27 = arith.addf %24, %26 : vector<3x2048xf32>
    %c0_17 = arith.constant 0 : index
    %c0_18 = arith.constant 0 : index
    %28 = vector.load %arg7[%c0_17, %c0_18] : memref<3x2048xf32, #tpu.memory_space<vmem>>, vector<3x2048xf32>
    tpu.vector_store %arg7[%c0_17, %c0_18], %27 {strides = array<i32>} : memref<3x2048xf32, #tpu.memory_space<vmem>>, vector<3x2048xf32>,
    return
  }
  func.func @transform_0(%arg0: i32) -> (i32, i32) {
    %c0_i32 = arith.constant 0 : i32
    %c0_i32_0 = arith.constant 0 : i32
    return %arg0, %c0_i32 : i32, i32
  }
  func.func @transform_1(%arg0: i32) -> (i32, i32) {
    %c0_i32 = arith.constant 0 : i32
    %c0_i32_0 = arith.constant 0 : i32
    %c0_i32_1 = arith.constant 0 : i32
    return %c0_i32, %c0_i32_0 : i32, i32
  }
  func.func @transform_2(%arg0: i32) -> (i32, i32) {
    %c0_i32 = arith.constant 0 : i32
    %c0_i32_0 = arith.constant 0 : i32
    %c0_i32_1 = arith.constant 0 : i32
    return %c0_i32, %c0_i32_0 : i32, i32
  }
  func.func @transform_3(%arg0: i32) -> (i32, i32) {
    %c0_i32 = arith.constant 0 : i32
    %c0_i32_0 = arith.constant 0 : i32
    %c0_i32_1 = arith.constant 0 : i32
    return %c0_i32, %c0_i32_0 : i32, i32
  }
  func.func @transform_4(%arg0: i32) -> (i32, i32) {
    %c0_i32 = arith.constant 0 : i32
    %c0_i32_0 = arith.constant 0 : i32
    %c0_i32_1 = arith.constant 0 : i32
    return %c0_i32, %c0_i32_0 : i32, i32
  }
  func.func @transform_5(%arg0: i32) -> (i32, i32) {
    %c0_i32 = arith.constant 0 : i32
    %c0_i32_0 = arith.constant 0 : i32
    %c0_i32_1 = arith.constant 0 : i32
    return %c0_i32, %c0_i32_0 : i32, i32
  }
  func.func @transform_6(%arg0: i32) -> (i32, i32) {
    %c0_i32 = arith.constant 0 : i32
    %c0_i32_0 = arith.constant 0 : i32
    return %c0_i32, %arg0 : i32, i32
  }
}

</mosaic_0001>

<llo_original>
// kernel: module_net3d_forward.1
$region0: #{module_net3d_forward.1}
  #allocation0 [shape = 'u32[]', space=smem, size = 0x4, offset = 0x4, fixed_abs, tag = 'smem constant byte address 0x4 - core index']
  #allocation1 [shape = 'u32[144,128]{1,0:T(1,128)}', space=vmem, size = 0x12000, scoped, tag = 'internal scratch']
  %s0 = inlined_call_operand.vmem [shape: bf16[4096,128], index: 0, kind: input, shape index: {}]
  %s1 = inlined_call_operand.vmem [shape: bf16[128,256], index: 1, kind: input, shape index: {}]
  %s2 = inlined_call_operand.vmem [shape: f32[1,256], index: 2, kind: input, shape index: {}]
  %s3 = inlined_call_operand.vmem [shape: bf16[3,256], index: 3, kind: input, shape index: {}]
  %s4 = inlined_call_operand.vmem [shape: bf16[3,128], index: 4, kind: input, shape index: {}]
  %s5 = inlined_call_operand.vmem [shape: f32[3,1], index: 5, kind: input, shape index: {}]
  %s6 = inlined_call_operand.vmem [shape: f32[3,4096], index: 6, kind: output, shape index: {}]
  %s7 = sld [smem:[#allocation0]]
  $region57: #{module_net3d_forward.1} parent=0
    _
  %s9 = ssub.s32 1, %s7
  %s10 = scalar_select 0, %s9, %s7
  loop: start=0, step=1, limit=4
  $region2: #{module_net3d_forward.1} parent=0 // loop_pre_header
    _
  $region3: #{module_net3d_forward.1} parent=0 // loop_header
    %s12 = sphi 0, %s16
    %p13 = scmp.ge.s32.totalorder %s12, 4
    %s22 = sphi 0, %s24
    %s25 = sphi 0, %s22
    %s26 = sphi 0, %s25
    %s42 = sphi 0, %s26
    %s46 = sphi 0, %s46
    %s48 = sphi 0, %s46
    %s49 = sphi 0, %s48
    %s63 = sphi 0, %s49
    %s67 = sphi 0, %s67
    %s69 = sphi 0, %s67
    %s70 = sphi 0, %s69
    %s84 = sphi 0, %s70
    %s88 = sphi 0, %s88
    %s90 = sphi 0, %s88
    %s91 = sphi 0, %s90
    %s105 = sphi 0, %s91
    %s109 = sphi 0, %s109
    %s111 = sphi 0, %s109
    %s112 = sphi 0, %s111
    %s126 = sphi 0, %s112
    %s130 = sphi 0, %s130
    %s132 = sphi 0, %s130
    %s133 = sphi 0, %s132
    %s147 = sphi 0, %s133
    %s153 = sphi 0, %s155
    %s156 = sphi 0, %s153
    %s157 = sphi 0, %s156
    %s173 = sphi 0, %s157
  $region4: #{module_net3d_forward.1} parent=0 // loop_header_branch
    %15 = sbr.rel (%p13) target = $region8
  $region5: #{module_net3d_forward.1} parent=0 // loop_body
    %s17 = ssub.s32 %s12, 1
    %s18 = ssub.s32 %s12, 2
    %s19 = sadd.s32 %s12, 1
    %s20 = ssub.s32 %s12, %s19
    %p21 = scmp.eq.s32.totalorder %s20, 0
    %s23 = sadd.s32 %s22, 1
    %s24 = scalar_select %p21, %s22, %s23
    %p27 = pneg %p21
    %p28 = scmp.eq.s32.totalorder %s12, 1
    %p29 = por %p27, %p28
    %p30 = scmp.ne.s32.totalorder %s22, %s25
    %p31 = scmp.eq.s32.totalorder %s12, 0
    %p32 = por %p30, %p31
    %p33 = scmp.ne.s32.totalorder %s22, %s25
    %p34 = scmp.eq.s32.totalorder %s17, 1
    %p35 = por %p33, %p34
    %p36 = scmp.ne.s32.totalorder %s25, %s26
    %p37 = scmp.eq.s32.totalorder %s17, 0
    %p38 = por %p36, %p37
    %p39 = scmp.ne.s32.totalorder %s25, %s26
    %p40 = scmp.eq.s32.totalorder %s18, 1
    %p41 = por %p39, %p40
    %p43 = scmp.ne.s32.totalorder %s26, %s42
    %p44 = scmp.eq.s32.totalorder %s18, 0
    %p45 = por %p43, %p44
    %s47 = sadd.s32 %s46, 1
    %p50 = scmp.eq.s32.totalorder %s12, 1
    %p51 = scmp.ne.s32.totalorder %s46, %s48
    %p52 = scmp.eq.s32.totalorder %s12, 0
    %p53 = por %p51, %p52
    %p54 = scmp.ne.s32.totalorder %s46, %s48
    %p55 = scmp.eq.s32.totalorder %s17, 1
    %p56 = por %p54, %p55
    %p57 = scmp.ne.s32.totalorder %s48, %s49
    %p58 = scmp.eq.s32.totalorder %s17, 0
    %p59 = por %p57, %p58
    %p60 = scmp.ne.s32.totalorder %s48, %s49
    %p61 = scmp.eq.s32.totalorder %s18, 1
    %p62 = por %p60, %p61
    %p64 = scmp.ne.s32.totalorder %s49, %s63
    %p65 = scmp.eq.s32.totalorder %s18, 0
    %p66 = por %p64, %p65
    %s68 = sadd.s32 %s67, 1
    %p71 = scmp.eq.s32.totalorder %s12, 1
    %p72 = scmp.ne.s32.totalorder %s67, %s69
    %p73 = scmp.eq.s32.totalorder %s12, 0
    %p74 = por %p72, %p73
    %p75 = scmp.ne.s32.totalorder %s67, %s69
    %p76 = scmp.eq.s32.totalorder %s17, 1
    %p77 = por %p75, %p76
    %p78 = scmp.ne.s32.totalorder %s69, %s70
    %p79 = scmp.eq.s32.totalorder %s17, 0
    %p80 = por %p78, %p79
    %p81 = scmp.ne.s32.totalorder %s69, %s70
    %p82 = scmp.eq.s32.totalorder %s18, 1
    %p83 = por %p81, %p82
    %p85 = scmp.ne.s32.totalorder %s70, %s84
    %p86 = scmp.eq.s32.totalorder %s18, 0
    %p87 = por %p85, %p86
    %s89 = sadd.s32 %s88, 1
    %p92 = scmp.eq.s32.totalorder %s12, 1
    %p93 = scmp.ne.s32.totalorder %s88, %s90
    %p94 = scmp.eq.s32.totalorder %s12, 0
    %p95 = por %p93, %p94
    %p96 = scmp.ne.s32.totalorder %s88, %s90
    %p97 = scmp.eq.s32.totalorder %s17, 1
    %p98 = por %p96, %p97
    %p99 = scmp.ne.s32.totalorder %s90, %s91
    %p100 = scmp.eq.s32.totalorder %s17, 0
    %p101 = por %p99, %p100
    %p102 = scmp.ne.s32.totalorder %s90, %s91
    %p103 = scmp.eq.s32.totalorder %s18, 1
    %p104 = por %p102, %p103
    %p106 = scmp.ne.s32.totalorder %s91, %s105
    %p107 = scmp.eq.s32.totalorder %s18, 0
    %p108 = por %p106, %p107
    %s110 = sadd.s32 %s109, 1
    %p113 = scmp.eq.s32.totalorder %s12, 1
    %p114 = scmp.ne.s32.totalorder %s109, %s111
    %p115 = scmp.eq.s32.totalorder %s12, 0
    %p116 = por %p114, %p115
    %p117 = scmp.ne.s32.totalorder %s109, %s111
    %p118 = scmp.eq.s32.totalorder %s17, 1
    %p119 = por %p117, %p118
    %p120 = scmp.ne.s32.totalorder %s111, %s112
    %p121 = scmp.eq.s32.totalorder %s17, 0
    %p122 = por %p120, %p121
    %p123 = scmp.ne.s32.totalorder %s111, %s112
    %p124 = scmp.eq.s32.totalorder %s18, 1
    %p125 = por %p123, %p124
    %p127 = scmp.ne.s32.totalorder %s112, %s126
    %p128 = scmp.eq.s32.totalorder %s18, 0
    %p129 = por %p127, %p128
    %s131 = sadd.s32 %s130, 1
    %p134 = scmp.eq.s32.totalorder %s12, 1
    %p135 = scmp.ne.s32.totalorder %s130, %s132
    %p136 = scmp.eq.s32.totalorder %s12, 0
    %p137 = por %p135, %p136
    %p138 = scmp.ne.s32.totalorder %s130, %s132
    %p139 = scmp.eq.s32.totalorder %s17, 1
    %p140 = por %p138, %p139
    %p141 = scmp.ne.s32.totalorder %s132, %s133
    %p142 = scmp.eq.s32.totalorder %s17, 0
    %p143 = por %p141, %p142
    %p144 = scmp.ne.s32.totalorder %s132, %s133
    %p145 = scmp.eq.s32.totalorder %s18, 1
    %p146 = por %p144, %p145
    %p148 = scmp.ne.s32.totalorder %s133, %s147
    %p149 = scmp.eq.s32.totalorder %s18, 0
    %p150 = por %p148, %p149
    %s151 = ssub.s32 %s12, %s19
    %p152 = scmp.eq.s32.totalorder %s151, 0
    %s154 = sadd.s32 %s153, 1
    %s155 = scalar_select %p152, %s153, %s154
    %p158 = pneg %p152
    %p159 = scmp.eq.s32.totalorder %s12, 1
    %p160 = por %p158, %p159
    %p161 = scmp.ne.s32.totalorder %s153, %s156
    %p162 = scmp.eq.s32.totalorder %s12, 0
    %p163 = por %p161, %p162
    %p164 = scmp.ne.s32.totalorder %s153, %s156
    %p165 = scmp.eq.s32.totalorder %s17, 1
    %p166 = por %p164, %p165
    %p167 = scmp.ne.s32.totalorder %s156, %s157
    %p168 = scmp.eq.s32.totalorder %s17, 0
    %p169 = por %p167, %p168
    %p170 = scmp.ne.s32.totalorder %s156, %s157
    %p171 = scmp.eq.s32.totalorder %s18, 1
    %p172 = por %p170, %p171
    %p174 = scmp.ne.s32.totalorder %s157, %s173
    %p175 = scmp.eq.s32.totalorder %s18, 0
    %p176 = por %p174, %p175
    %p177 = scmp.le.s32.totalorder 1, %s12
    %p178 = scmp.lt.s32.totalorder %s12, 3
    %p179 = pnand %p177, %p178
    %p180 = pneg %p179
    // Predicated region
    $region9: #{module_net3d_forward.1} parent=5 // pred_check
      _
    $region10: #{module_net3d_forward.1} parent=5 // pred_check_branch
      %182 = sbr.rel (%p179) target = $region12
    $region11: #{module_net3d_forward.1} parent=5 // pred_region
      %s183 = ssub.s32 %s12, 1
      // Predicated region
      $region13: #{module_net3d_forward.1} parent=11 // pred_check
        %p184 = pneg %p59
      $region14: #{module_net3d_forward.1} parent=11 // pred_check_branch
        %186 = sbr.rel (%p184) target = $region16
      $region15: #{module_net3d_forward.1} parent=11 // pred_region
        _
      $region16: #{module_net3d_forward.1} parent=11 // pred_fallthru
        _
      // Predicated region
      $region17: #{module_net3d_forward.1} parent=11 // pred_check
        %p187 = pneg %p80
      $region18: #{module_net3d_forward.1} parent=11 // pred_check_branch
        %189 = sbr.rel (%p187) target = $region20
      $region19: #{module_net3d_forward.1} parent=11 // pred_region
        _
      $region20: #{module_net3d_forward.1} parent=11 // pred_fallthru
        _
      // Predicated region
      $region21: #{module_net3d_forward.1} parent=11 // pred_check
        %p190 = pneg %p101
      $region22: #{module_net3d_forward.1} parent=11 // pred_check_branch
        %192 = sbr.rel (%p190) target = $region24
      $region23: #{module_net3d_forward.1} parent=11 // pred_region
        _
      $region24: #{module_net3d_forward.1} parent=11 // pred_fallthru
        _
      // Predicated region
      $region25: #{module_net3d_forward.1} parent=11 // pred_check
        %p193 = pneg %p122
      $region26: #{module_net3d_forward.1} parent=11 // pred_check_branch
        %195 = sbr.rel (%p193) target = $region28
      $region27: #{module_net3d_forward.1} parent=11 // pred_region
        _
      $region28: #{module_net3d_forward.1} parent=11 // pred_fallthru
        _
      // Predicated region
      $region29: #{module_net3d_forward.1} parent=11 // pred_check
        %p196 = pneg %p143
      $region30: #{module_net3d_forward.1} parent=11 // pred_check_branch
        %198 = sbr.rel (%p196) target = $region32
      $region31: #{module_net3d_forward.1} parent=11 // pred_region
        _
      $region32: #{module_net3d_forward.1} parent=11 // pred_fallthru
        _
    $region12: #{module_net3d_forward.1} parent=5 // pred_fallthru
      _
    %p199 = scmp.lt.s32.totalorder %s12, 2
    // Predicated region
    $region33: #{module_net3d_forward.1} parent=5 // pred_check
      %p200 = pneg %p199
    $region34: #{module_net3d_forward.1} parent=5 // pred_check_branch
      %202 = sbr.rel (%p200) target = $region36
    $region35: #{module_net3d_forward.1} parent=5 // pred_region
      // Predicated region
      $region37: #{module_net3d_forward.1} parent=35 // pred_check
        %p203 = pneg %p32
      $region38: #{module_net3d_forward.1} parent=35 // pred_check_branch
        %205 = sbr.rel (%p203) target = $region40
      $region39: #{module_net3d_forward.1} parent=35 // pred_region
        %s206 = smul.u32 256, %s12
        %p207 = scmp.lt.s32.totalorder %s206, 511
        %s208 = scalar_select %p207, %s206, 511
        %s209 = smul.addr %s208, 4
        %s210 = scalar_lea.vmem %s0, %s209
        %s211 = smul.u32 256, %s12
      $region40: #{module_net3d_forward.1} parent=35 // pred_fallthru
        _
    $region36: #{module_net3d_forward.1} parent=5 // pred_fallthru
      _
    %p212 = scmp.le.s32.totalorder 1, %s12
    %p213 = scmp.lt.s32.totalorder %s12, 3
    %p214 = pnand %p212, %p213
    %p215 = pneg %p214
    // Predicated region
    $region41: #{module_net3d_forward.1} parent=5 // pred_check
      _
    $region42: #{module_net3d_forward.1} parent=5 // pred_check_branch
      %217 = sbr.rel (%p214) target = $region44
    $region43: #{module_net3d_forward.1} parent=5 // pred_region
      %s218 = ssub.s32 %s12, 1
      %s219 = smul.u32 256, %s17
      %p220 = scmp.lt.s32.totalorder %s219, 511
      %s221 = scalar_select %p220, %s219, 511
      %s222 = smul.addr %s221, 4
      %s223 = scalar_lea.vmem %s0, %s222
      %p224 = pneg %p38
      %p225 = pneg %p35
      %p226 = pneg %p59
      %p227 = pneg %p56
      %p228 = pneg %p80
      %p229 = pneg %p77
      %p230 = pneg %p101
      %p231 = pneg %p98
      %p232 = pneg %p122
      %p233 = pneg %p119
      %p234 = pneg %p143
      %p235 = pneg %p140
      %p236 = pneg %p169
      %p237 = pneg %p166
      %s238 = smul.u32 16, %s17
      %p239 = scmp.lt.s32.totalorder %s238, 31
      %s240 = scalar_select %p239, %s238, 31
      %s241 = smul.addr %s240, 4
      %s242 = scalar_lea.vmem %s6, %s241
      %s243 = smul.u32 256, %s17
      %p244 = scmp.lt.s32.totalorder %s243, 511
      %s245 = scalar_select %p244, %s243, 511
      %s246 = smul.addr %s245, 4
      %s247 = scalar_lea.vmem %s0, %s246
      %s248 = smul.u32 256, %s17
      %s249 = smul.u32 16, %s17
      %p250 = scmp.lt.s32.totalorder %s249, 31
      %s251 = scalar_select %p250, %s249, 31
      %s252 = smul.addr %s251, 4
      %s253 = scalar_lea.vmem %s6, %s252
      %s254 = smul.u32 16, %s17
      %v256 = vld [vmem:[%s247] sm:$0xf]
      %v257 = vld [vmem:[%s247 + $0x4] sm:$0xf]
      %v258 = vld [vmem:[%s247 + $0x8] sm:$0xf]
      %v259 = vld [vmem:[%s247 + $0xc] sm:$0xf]
      %v260 = vld [vmem:[%s247 + $0x10] sm:$0xf]
      %v261 = vld [vmem:[%s247 + $0x14] sm:$0xf]
      %v262 = vld [vmem:[%s247 + $0x18] sm:$0xf]
      %v263 = vld [vmem:[%s247 + $0x1c] sm:$0xf]
      %v264 = vld [vmem:[%s247 + $0x20] sm:$0xf]
      %v265 = vld [vmem:[%s247 + $0x24] sm:$0xf]
      %v266 = vld [vmem:[%s247 + $0x28] sm:$0xf]
      %v267 = vld [vmem:[%s247 + $0x2c] sm:$0xf]
      %v268 = vld [vmem:[%s247 + $0x30] sm:$0xf]
      %v269 = vld [vmem:[%s247 + $0x34] sm:$0xf]
      %v270 = vld [vmem:[%s247 + $0x38] sm:$0xf]
      %v271 = vld [vmem:[%s247 + $0x3c] sm:$0xf]
      %v272 = vld [vmem:[%s247 + $0x40] sm:$0xf]
      %v273 = vld [vmem:[%s247 + $0x44] sm:$0xf]
      %v274 = vld [vmem:[%s247 + $0x48] sm:$0xf]
      %v275 = vld [vmem:[%s247 + $0x4c] sm:$0xf]
      %v276 = vld [vmem:[%s247 + $0x50] sm:$0xf]
      %v277 = vld [vmem:[%s247 + $0x54] sm:$0xf]
      %v278 = vld [vmem:[%s247 + $0x58] sm:$0xf]
      %v279 = vld [vmem:[%s247 + $0x5c] sm:$0xf]
      %v280 = vld [vmem:[%s247 + $0x60] sm:$0xf]
      %v281 = vld [vmem:[%s247 + $0x64] sm:$0xf]
      %v282 = vld [vmem:[%s247 + $0x68] sm:$0xf]
      %v283 = vld [vmem:[%s247 + $0x6c] sm:$0xf]
      %v284 = vld [vmem:[%s247 + $0x70] sm:$0xf]
      %v285 = vld [vmem:[%s247 + $0x74] sm:$0xf]
      %v286 = vld [vmem:[%s247 + $0x78] sm:$0xf]
      %v287 = vld [vmem:[%s247 + $0x7c] sm:$0xf]
      %v288 = vld [vmem:[%s247 + $0x80] sm:$0xf]
      %v289 = vld [vmem:[%s247 + $0x84] sm:$0xf]
      %v290 = vld [vmem:[%s247 + $0x88] sm:$0xf]
      %v291 = vld [vmem:[%s247 + $0x8c] sm:$0xf]
      %v292 = vld [vmem:[%s247 + $0x90] sm:$0xf]
      %v293 = vld [vmem:[%s247 + $0x94] sm:$0xf]
      %v294 = vld [vmem:[%s247 + $0x98] sm:$0xf]
      %v295 = vld [vmem:[%s247 + $0x9c] sm:$0xf]
      %v296 = vld [vmem:[%s247 + $0xa0] sm:$0xf]
      %v297 = vld [vmem:[%s247 + $0xa4] sm:$0xf]
      %v298 = vld [vmem:[%s247 + $0xa8] sm:$0xf]
      %v299 = vld [vmem:[%s247 + $0xac] sm:$0xf]
      %v300 = vld [vmem:[%s247 + $0xb0] sm:$0xf]
      %v301 = vld [vmem:[%s247 + $0xb4] sm:$0xf]
      %v302 = vld [vmem:[%s247 + $0xb8] sm:$0xf]
      %v303 = vld [vmem:[%s247 + $0xbc] sm:$0xf]
      %v304 = vld [vmem:[%s247 + $0xc0] sm:$0xf]
      %v305 = vld [vmem:[%s247 + $0xc4] sm:$0xf]
      %v306 = vld [vmem:[%s247 + $0xc8] sm:$0xf]
      %v307 = vld [vmem:[%s247 + $0xcc] sm:$0xf]
      %v308 = vld [vmem:[%s247 + $0xd0] sm:$0xf]
      %v309 = vld [vmem:[%s247 + $0xd4] sm:$0xf]
      %v310 = vld [vmem:[%s247 + $0xd8] sm:$0xf]
      %v311 = vld [vmem:[%s247 + $0xdc] sm:$0xf]
      %v312 = vld [vmem:[%s247 + $0xe0] sm:$0xf]
      %v313 = vld [vmem:[%s247 + $0xe4] sm:$0xf]
      %v314 = vld [vmem:[%s247 + $0xe8] sm:$0xf]
      %v315 = vld [vmem:[%s247 + $0xec] sm:$0xf]
      %v316 = vld [vmem:[%s247 + $0xf0] sm:$0xf]
      %v317 = vld [vmem:[%s247 + $0xf4] sm:$0xf]
      %v318 = vld [vmem:[%s247 + $0xf8] sm:$0xf]
      %v319 = vld [vmem:[%s247 + $0xfc] sm:$0xf]
      %v320 = vld [vmem:[%s247 + $0x100] sm:$0xf]
      %v321 = vld [vmem:[%s247 + $0x104] sm:$0xf]
      %v322 = vld [vmem:[%s247 + $0x108] sm:$0xf]
      %v323 = vld [vmem:[%s247 + $0x10c] sm:$0xf]
      %v324 = vld [vmem:[%s247 + $0x110] sm:$0xf]
      %v325 = vld [vmem:[%s247 + $0x114] sm:$0xf]
      %v326 = vld [vmem:[%s247 + $0x118] sm:$0xf]
      %v327 = vld [vmem:[%s247 + $0x11c] sm:$0xf]
      %v328 = vld [vmem:[%s247 + $0x120] sm:$0xf]
      %v329 = vld [vmem:[%s247 + $0x124] sm:$0xf]
      %v330 = vld [vmem:[%s247 + $0x128] sm:$0xf]
      %v331 = vld [vmem:[%s247 + $0x12c] sm:$0xf]
      %v332 = vld [vmem:[%s247 + $0x130] sm:$0xf]
      %v333 = vld [vmem:[%s247 + $0x134] sm:$0xf]
      %v334 = vld [vmem:[%s247 + $0x138] sm:$0xf]
      %v335 = vld [vmem:[%s247 + $0x13c] sm:$0xf]
      %v336 = vld [vmem:[%s247 + $0x140] sm:$0xf]
      %v337 = vld [vmem:[%s247 + $0x144] sm:$0xf]
      %v338 = vld [vmem:[%s247 + $0x148] sm:$0xf]
      %v339 = vld [vmem:[%s247 + $0x14c] sm:$0xf]
      %v340 = vld [vmem:[%s247 + $0x150] sm:$0xf]
      %v341 = vld [vmem:[%s247 + $0x154] sm:$0xf]
      %v342 = vld [vmem:[%s247 + $0x158] sm:$0xf]
      %v343 = vld [vmem:[%s247 + $0x15c] sm:$0xf]
      %v344 = vld [vmem:[%s247 + $0x160] sm:$0xf]
      %v345 = vld [vmem:[%s247 + $0x164] sm:$0xf]
      %v346 = vld [vmem:[%s247 + $0x168] sm:$0xf]
      %v347 = vld [vmem:[%s247 + $0x16c] sm:$0xf]
      %v348 = vld [vmem:[%s247 + $0x170] sm:$0xf]
      %v349 = vld [vmem:[%s247 + $0x174] sm:$0xf]
      %v350 = vld [vmem:[%s247 + $0x178] sm:$0xf]
      %v351 = vld [vmem:[%s247 + $0x17c] sm:$0xf]
      %v352 = vld [vmem:[%s247 + $0x180] sm:$0xf]
      %v353 = vld [vmem:[%s247 + $0x184] sm:$0xf]
      %v354 = vld [vmem:[%s247 + $0x188] sm:$0xf]
      %v355 = vld [vmem:[%s247 + $0x18c] sm:$0xf]
      %v356 = vld [vmem:[%s247 + $0x190] sm:$0xf]
      %v357 = vld [vmem:[%s247 + $0x194] sm:$0xf]
      %v358 = vld [vmem:[%s247 + $0x198] sm:$0xf]
      %v359 = vld [vmem:[%s247 + $0x19c] sm:$0xf]
      %v360 = vld [vmem:[%s247 + $0x1a0] sm:$0xf]
      %v361 = vld [vmem:[%s247 + $0x1a4] sm:$0xf]
      %v362 = vld [vmem:[%s247 + $0x1a8] sm:$0xf]
      %v363 = vld [vmem:[%s247 + $0x1ac] sm:$0xf]
      %v364 = vld [vmem:[%s247 + $0x1b0] sm:$0xf]
      %v365 = vld [vmem:[%s247 + $0x1b4] sm:$0xf]
      %v366 = vld [vmem:[%s247 + $0x1b8] sm:$0xf]
      %v367 = vld [vmem:[%s247 + $0x1bc] sm:$0xf]
      %v368 = vld [vmem:[%s247 + $0x1c0] sm:$0xf]
      %v369 = vld [vmem:[%s247 + $0x1c4] sm:$0xf]
      %v370 = vld [vmem:[%s247 + $0x1c8] sm:$0xf]
      %v371 = vld [vmem:[%s247 + $0x1cc] sm:$0xf]
      %v372 = vld [vmem:[%s247 + $0x1d0] sm:$0xf]
      %v373 = vld [vmem:[%s247 + $0x1d4] sm:$0xf]
      %v374 = vld [vmem:[%s247 + $0x1d8] sm:$0xf]
      %v375 = vld [vmem:[%s247 + $0x1dc] sm:$0xf]
      %v376 = vld [vmem:[%s247 + $0x1e0] sm:$0xf]
      %v377 = vld [vmem:[%s247 + $0x1e4] sm:$0xf]
      %v378 = vld [vmem:[%s247 + $0x1e8] sm:$0xf]
      %v379 = vld [vmem:[%s247 + $0x1ec] sm:$0xf]
      %v380 = vld [vmem:[%s247 + $0x1f0] sm:$0xf]
      %v381 = vld [vmem:[%s247 + $0x1f4] sm:$0xf]
      %v382 = vld [vmem:[%s247 + $0x1f8] sm:$0xf]
      %v383 = vld [vmem:[%s247 + $0x1fc] sm:$0xf]
      %v384 = vld [vmem:[%s247 + $0x200] sm:$0xf]
      %v385 = vld [vmem:[%s247 + $0x204] sm:$0xf]
      %v386 = vld [vmem:[%s247 + $0x208] sm:$0xf]
      %v387 = vld [vmem:[%s247 + $0x20c] sm:$0xf]
      %v388 = vld [vmem:[%s247 + $0x210] sm:$0xf]
      %v389 = vld [vmem:[%s247 + $0x214] sm:$0xf]
      %v390 = vld [vmem:[%s247 + $0x218] sm:$0xf]
      %v391 = vld [vmem:[%s247 + $0x21c] sm:$0xf]
      %v392 = vld [vmem:[%s247 + $0x220] sm:$0xf]
      %v393 = vld [vmem:[%s247 + $0x224] sm:$0xf]
      %v394 = vld [vmem:[%s247 + $0x228] sm:$0xf]
      %v395 = vld [vmem:[%s247 + $0x22c] sm:$0xf]
      %v396 = vld [vmem:[%s247 + $0x230] sm:$0xf]
      %v397 = vld [vmem:[%s247 + $0x234] sm:$0xf]
      %v398 = vld [vmem:[%s247 + $0x238] sm:$0xf]
      %v399 = vld [vmem:[%s247 + $0x23c] sm:$0xf]
      %v400 = vld [vmem:[%s247 + $0x240] sm:$0xf]
      %v401 = vld [vmem:[%s247 + $0x244] sm:$0xf]
      %v402 = vld [vmem:[%s247 + $0x248] sm:$0xf]
      %v403 = vld [vmem:[%s247 + $0x24c] sm:$0xf]
      %v404 = vld [vmem:[%s247 + $0x250] sm:$0xf]
      %v405 = vld [vmem:[%s247 + $0x254] sm:$0xf]
      %v406 = vld [vmem:[%s247 + $0x258] sm:$0xf]
      %v407 = vld [vmem:[%s247 + $0x25c] sm:$0xf]
      %v408 = vld [vmem:[%s247 + $0x260] sm:$0xf]
      %v409 = vld [vmem:[%s247 + $0x264] sm:$0xf]
      %v410 = vld [vmem:[%s247 + $0x268] sm:$0xf]
      %v411 = vld [vmem:[%s247 + $0x26c] sm:$0xf]
      %v412 = vld [vmem:[%s247 + $0x270] sm:$0xf]
      %v413 = vld [vmem:[%s247 + $0x274] sm:$0xf]
      %v414 = vld [vmem:[%s247 + $0x278] sm:$0xf]
      %v415 = vld [vmem:[%s247 + $0x27c] sm:$0xf]
      %v416 = vld [vmem:[%s247 + $0x280] sm:$0xf]
      %v417 = vld [vmem:[%s247 + $0x284] sm:$0xf]
      %v418 = vld [vmem:[%s247 + $0x288] sm:$0xf]
      %v419 = vld [vmem:[%s247 + $0x28c] sm:$0xf]
      %v420 = vld [vmem:[%s247 + $0x290] sm:$0xf]
      %v421 = vld [vmem:[%s247 + $0x294] sm:$0xf]
      %v422 = vld [vmem:[%s247 + $0x298] sm:$0xf]
      %v423 = vld [vmem:[%s247 + $0x29c] sm:$0xf]
      %v424 = vld [vmem:[%s247 + $0x2a0] sm:$0xf]
      %v425 = vld [vmem:[%s247 + $0x2a4] sm:$0xf]
      %v426 = vld [vmem:[%s247 + $0x2a8] sm:$0xf]
      %v427 = vld [vmem:[%s247 + $0x2ac] sm:$0xf]
      %v428 = vld [vmem:[%s247 + $0x2b0] sm:$0xf]
      %v429 = vld [vmem:[%s247 + $0x2b4] sm:$0xf]
      %v430 = vld [vmem:[%s247 + $0x2b8] sm:$0xf]
      %v431 = vld [vmem:[%s247 + $0x2bc] sm:$0xf]
      %v432 = vld [vmem:[%s247 + $0x2c0] sm:$0xf]
      %v433 = vld [vmem:[%s247 + $0x2c4] sm:$0xf]
      %v434 = vld [vmem:[%s247 + $0x2c8] sm:$0xf]
      %v435 = vld [vmem:[%s247 + $0x2cc] sm:$0xf]
      %v436 = vld [vmem:[%s247 + $0x2d0] sm:$0xf]
      %v437 = vld [vmem:[%s247 + $0x2d4] sm:$0xf]
      %v438 = vld [vmem:[%s247 + $0x2d8] sm:$0xf]
      %v439 = vld [vmem:[%s247 + $0x2dc] sm:$0xf]
      %v440 = vld [vmem:[%s247 + $0x2e0] sm:$0xf]
      %v441 = vld [vmem:[%s247 + $0x2e4] sm:$0xf]
      %v442 = vld [vmem:[%s247 + $0x2e8] sm:$0xf]
      %v443 = vld [vmem:[%s247 + $0x2ec] sm:$0xf]
      %v444 = vld [vmem:[%s247 + $0x2f0] sm:$0xf]
      %v445 = vld [vmem:[%s247 + $0x2f4] sm:$0xf]
      %v446 = vld [vmem:[%s247 + $0x2f8] sm:$0xf]
      %v447 = vld [vmem:[%s247 + $0x2fc] sm:$0xf]
      %v448 = vld [vmem:[%s247 + $0x300] sm:$0xf]
      %v449 = vld [vmem:[%s247 + $0x304] sm:$0xf]
      %v450 = vld [vmem:[%s247 + $0x308] sm:$0xf]
      %v451 = vld [vmem:[%s247 + $0x30c] sm:$0xf]
      %v452 = vld [vmem:[%s247 + $0x310] sm:$0xf]
      %v453 = vld [vmem:[%s247 + $0x314] sm:$0xf]
      %v454 = vld [vmem:[%s247 + $0x318] sm:$0xf]
      %v455 = vld [vmem:[%s247 + $0x31c] sm:$0xf]
      %v456 = vld [vmem:[%s247 + $0x320] sm:$0xf]
      %v457 = vld [vmem:[%s247 + $0x324] sm:$0xf]
      %v458 = vld [vmem:[%s247 + $0x328] sm:$0xf]
      %v459 = vld [vmem:[%s247 + $0x32c] sm:$0xf]
      %v460 = vld [vmem:[%s247 + $0x330] sm:$0xf]
      %v461 = vld [vmem:[%s247 + $0x334] sm:$0xf]
      %v462 = vld [vmem:[%s247 + $0x338] sm:$0xf]
      %v463 = vld [vmem:[%s247 + $0x33c] sm:$0xf]
      %v464 = vld [vmem:[%s247 + $0x340] sm:$0xf]
      %v465 = vld [vmem:[%s247 + $0x344] sm:$0xf]
      %v466 = vld [vmem:[%s247 + $0x348] sm:$0xf]
      %v467 = vld [vmem:[%s247 + $0x34c] sm:$0xf]
      %v468 = vld [vmem:[%s247 + $0x350] sm:$0xf]
      %v469 = vld [vmem:[%s247 + $0x354] sm:$0xf]
      %v470 = vld [vmem:[%s247 + $0x358] sm:$0xf]
      %v471 = vld [vmem:[%s247 + $0x35c] sm:$0xf]
      %v472 = vld [vmem:[%s247 + $0x360] sm:$0xf]
      %v473 = vld [vmem:[%s247 + $0x364] sm:$0xf]
      %v474 = vld [vmem:[%s247 + $0x368] sm:$0xf]
      %v475 = vld [vmem:[%s247 + $0x36c] sm:$0xf]
      %v476 = vld [vmem:[%s247 + $0x370] sm:$0xf]
      %v477 = vld [vmem:[%s247 + $0x374] sm:$0xf]
      %v478 = vld [vmem:[%s247 + $0x378] sm:$0xf]
      %v479 = vld [vmem:[%s247 + $0x37c] sm:$0xf]
      %v480 = vld [vmem:[%s247 + $0x380] sm:$0xf]
      %v481 = vld [vmem:[%s247 + $0x384] sm:$0xf]
      %v482 = vld [vmem:[%s247 + $0x388] sm:$0xf]
      %v483 = vld [vmem:[%s247 + $0x38c] sm:$0xf]
      %v484 = vld [vmem:[%s247 + $0x390] sm:$0xf]
      %v485 = vld [vmem:[%s247 + $0x394] sm:$0xf]
      %v486 = vld [vmem:[%s247 + $0x398] sm:$0xf]
      %v487 = vld [vmem:[%s247 + $0x39c] sm:$0xf]
      %v488 = vld [vmem:[%s247 + $0x3a0] sm:$0xf]
      %v489 = vld [vmem:[%s247 + $0x3a4] sm:$0xf]
      %v490 = vld [vmem:[%s247 + $0x3a8] sm:$0xf]
      %v491 = vld [vmem:[%s247 + $0x3ac] sm:$0xf]
      %v492 = vld [vmem:[%s247 + $0x3b0] sm:$0xf]
      %v493 = vld [vmem:[%s247 + $0x3b4] sm:$0xf]
      %v494 = vld [vmem:[%s247 + $0x3b8] sm:$0xf]
      %v495 = vld [vmem:[%s247 + $0x3bc] sm:$0xf]
      %v496 = vld [vmem:[%s247 + $0x3c0] sm:$0xf]
      %v497 = vld [vmem:[%s247 + $0x3c4] sm:$0xf]
      %v498 = vld [vmem:[%s247 + $0x3c8] sm:$0xf]
      %v499 = vld [vmem:[%s247 + $0x3cc] sm:$0xf]
      %v500 = vld [vmem:[%s247 + $0x3d0] sm:$0xf]
      %v501 = vld [vmem:[%s247 + $0x3d4] sm:$0xf]
      %v502 = vld [vmem:[%s247 + $0x3d8] sm:$0xf]
      %v503 = vld [vmem:[%s247 + $0x3dc] sm:$0xf]
      %v504 = vld [vmem:[%s247 + $0x3e0] sm:$0xf]
      %v505 = vld [vmem:[%s247 + $0x3e4] sm:$0xf]
      %v506 = vld [vmem:[%s247 + $0x3e8] sm:$0xf]
      %v507 = vld [vmem:[%s247 + $0x3ec] sm:$0xf]
      %v508 = vld [vmem:[%s247 + $0x3f0] sm:$0xf]
      %v509 = vld [vmem:[%s247 + $0x3f4] sm:$0xf]
      %v510 = vld [vmem:[%s247 + $0x3f8] sm:$0xf]
      %v511 = vld [vmem:[%s247 + $0x3fc] sm:$0xf]
      %v512 = vld [vmem:[%s1] sm:$0xff]
      %v513 = vld [vmem:[%s1 + $0x8] sm:$0xff]
      %v514 = vld [vmem:[%s1 + $0x10] sm:$0xff]
      %v515 = vld [vmem:[%s1 + $0x18] sm:$0xff]
      %v516 = vld [vmem:[%s1 + $0x20] sm:$0xff]
      %v517 = vld [vmem:[%s1 + $0x28] sm:$0xff]
      %v518 = vld [vmem:[%s1 + $0x30] sm:$0xff]
      %v519 = vld [vmem:[%s1 + $0x38] sm:$0xff]
      %v520 = vld [vmem:[%s1 + $0x40] sm:$0xff]
      %v521 = vld [vmem:[%s1 + $0x48] sm:$0xff]
      %v522 = vld [vmem:[%s1 + $0x50] sm:$0xff]
      %v523 = vld [vmem:[%s1 + $0x58] sm:$0xff]
      %v524 = vld [vmem:[%s1 + $0x60] sm:$0xff]
      %v525 = vld [vmem:[%s1 + $0x68] sm:$0xff]
      %v526 = vld [vmem:[%s1 + $0x70] sm:$0xff]
      %v527 = vld [vmem:[%s1 + $0x78] sm:$0xff]
      %v528 = vld [vmem:[%s2] sm:$0x3]
      %v530 = vlaneseq
      %v531 = vshrl.u32 %v530, 7
      %v532 = vsub.s32 0, %v531
      %v533 = vrot.slane %v528, %v532
      %v534 = vlaneseq
      %v535 = vshrl.u32 %v534, 7
      %v536 = vsub.s32 1, %v535
      %v537 = vrot.slane %v528, %v536
      %v796 = vunpack.c.l.b16 %v256
      %v797 = vunpack.c.l.b16 %v257
      %v798 = vunpack.c.l.b16 %v258
      %v799 = vunpack.c.l.b16 %v259
      %v800 = vunpack.c.l.b16 %v260
      %v801 = vunpack.c.l.b16 %v261
      %v802 = vunpack.c.l.b16 %v262
      %v803 = vunpack.c.l.b16 %v263
      %v804 = vunpack.c.l.b16 %v264
      %v805 = vunpack.c.l.b16 %v265
      %v806 = vunpack.c.l.b16 %v266
      %v807 = vunpack.c.l.b16 %v267
      %v808 = vunpack.c.l.b16 %v268
      %v809 = vunpack.c.l.b16 %v269
      %v810 = vunpack.c.l.b16 %v270
      %v811 = vunpack.c.l.b16 %v271
      %v812 = vunpack.c.l.b16 %v272
      %v813 = vunpack.c.l.b16 %v273
      %v814 = vunpack.c.l.b16 %v274
      %v815 = vunpack.c.l.b16 %v275
      %v816 = vunpack.c.l.b16 %v276
      %v817 = vunpack.c.l.b16 %v277
      %v818 = vunpack.c.l.b16 %v278
      %v819 = vunpack.c.l.b16 %v279
      %v820 = vunpack.c.l.b16 %v280
      %v821 = vunpack.c.l.b16 %v281
      %v822 = vunpack.c.l.b16 %v282
      %v823 = vunpack.c.l.b16 %v283
      %v824 = vunpack.c.l.b16 %v284
      %v825 = vunpack.c.l.b16 %v285
      %v826 = vunpack.c.l.b16 %v286
      %v827 = vunpack.c.l.b16 %v287
      %v828 = vunpack.c.l.b16 %v288
      %v829 = vunpack.c.l.b16 %v289
      %v830 = vunpack.c.l.b16 %v290
      %v831 = vunpack.c.l.b16 %v291
      %v832 = vunpack.c.l.b16 %v292
      %v833 = vunpack.c.l.b16 %v293
      %v834 = vunpack.c.l.b16 %v294
      %v835 = vunpack.c.l.b16 %v295
      %v836 = vunpack.c.l.b16 %v296
      %v837 = vunpack.c.l.b16 %v297
      %v838 = vunpack.c.l.b16 %v298
      %v839 = vunpack.c.l.b16 %v299
      %v840 = vunpack.c.l.b16 %v300
      %v841 = vunpack.c.l.b16 %v301
      %v842 = vunpack.c.l.b16 %v302
      %v843 = vunpack.c.l.b16 %v303
      %v844 = vunpack.c.l.b16 %v304
      %v845 = vunpack.c.l.b16 %v305
      %v846 = vunpack.c.l.b16 %v306
      %v847 = vunpack.c.l.b16 %v307
      %v848 = vunpack.c.l.b16 %v308
      %v849 = vunpack.c.l.b16 %v309
      %v850 = vunpack.c.l.b16 %v310
      %v851 = vunpack.c.l.b16 %v311
      %v852 = vunpack.c.l.b16 %v312
      %v853 = vunpack.c.l.b16 %v313
      %v854 = vunpack.c.l.b16 %v314
      %v855 = vunpack.c.l.b16 %v315
      %v856 = vunpack.c.l.b16 %v316
      %v857 = vunpack.c.l.b16 %v317
      %v858 = vunpack.c.l.b16 %v318
      %v859 = vunpack.c.l.b16 %v319
      %v860 = vunpack.c.l.b16 %v320
      %v861 = vunpack.c.l.b16 %v321
      %v862 = vunpack.c.l.b16 %v322
      %v863 = vunpack.c.l.b16 %v323
      %v864 = vunpack.c.l.b16 %v324
      %v865 = vunpack.c.l.b16 %v325
      %v866 = vunpack.c.l.b16 %v326
      %v867 = vunpack.c.l.b16 %v327
      %v868 = vunpack.c.l.b16 %v328
      %v869 = vunpack.c.l.b16 %v329
      %v870 = vunpack.c.l.b16 %v330
      %v871 = vunpack.c.l.b16 %v331
      %v872 = vunpack.c.l.b16 %v332
      %v873 = vunpack.c.l.b16 %v333
      %v874 = vunpack.c.l.b16 %v334
      %v875 = vunpack.c.l.b16 %v335
      %v876 = vunpack.c.l.b16 %v336
      %v877 = vunpack.c.l.b16 %v337
      %v878 = vunpack.c.l.b16 %v338
      %v879 = vunpack.c.l.b16 %v339
      %v880 = vunpack.c.l.b16 %v340
      %v881 = vunpack.c.l.b16 %v341
      %v882 = vunpack.c.l.b16 %v342
      %v883 = vunpack.c.l.b16 %v343
      %v884 = vunpack.c.l.b16 %v344
      %v885 = vunpack.c.l.b16 %v345
      %v886 = vunpack.c.l.b16 %v346
      %v887 = vunpack.c.l.b16 %v347
      %v888 = vunpack.c.l.b16 %v348
      %v889 = vunpack.c.l.b16 %v349
      %v890 = vunpack.c.l.b16 %v350
      %v891 = vunpack.c.l.b16 %v351
      %v892 = vunpack.c.l.b16 %v352
      %v893 = vunpack.c.l.b16 %v353
      %v894 = vunpack.c.l.b16 %v354
      %v895 = vunpack.c.l.b16 %v355
      %v896 = vunpack.c.l.b16 %v356
      %v897 = vunpack.c.l.b16 %v357
      %v898 = vunpack.c.l.b16 %v358
      %v899 = vunpack.c.l.b16 %v359
      %v900 = vunpack.c.l.b16 %v360
      %v901 = vunpack.c.l.b16 %v361
      %v902 = vunpack.c.l.b16 %v362
      %v903 = vunpack.c.l.b16 %v363
      %v904 = vunpack.c.l.b16 %v364
      %v905 = vunpack.c.l.b16 %v365
      %v906 = vunpack.c.l.b16 %v366
      %v907 = vunpack.c.l.b16 %v367
      %v908 = vunpack.c.l.b16 %v368
      %v909 = vunpack.c.l.b16 %v369
      %v910 = vunpack.c.l.b16 %v370
      %v911 = vunpack.c.l.b16 %v371
      %v912 = vunpack.c.l.b16 %v372
      %v913 = vunpack.c.l.b16 %v373
      %v914 = vunpack.c.l.b16 %v374
      %v915 = vunpack.c.l.b16 %v375
      %v916 = vunpack.c.l.b16 %v376
      %v917 = vunpack.c.l.b16 %v377
      %v918 = vunpack.c.l.b16 %v378
      %v919 = vunpack.c.l.b16 %v379
      %v920 = vunpack.c.l.b16 %v380
      %v921 = vunpack.c.l.b16 %v381
      %v922 = vunpack.c.l.b16 %v382
      %v923 = vunpack.c.l.b16 %v383
      %v924 = vunpack.c.l.b16 %v384
      %v925 = vunpack.c.l.b16 %v385
      %v926 = vunpack.c.l.b16 %v386
      %v927 = vunpack.c.l.b16 %v387
      %v928 = vunpack.c.l.b16 %v388
      %v929 = vunpack.c.l.b16 %v389
      %v930 = vunpack.c.l.b16 %v390
      %v931 = vunpack.c.l.b16 %v391
      %v932 = vunpack.c.l.b16 %v392
      %v933 = vunpack.c.l.b16 %v393
      %v934 = vunpack.c.l.b16 %v394
      %v935 = vunpack.c.l.b16 %v395
      %v936 = vunpack.c.l.b16 %v396
      %v937 = vunpack.c.l.b16 %v397
      %v938 = vunpack.c.l.b16 %v398
      %v939 = vunpack.c.l.b16 %v399
      %v940 = vunpack.c.l.b16 %v400
      %v941 = vunpack.c.l.b16 %v401
      %v942 = vunpack.c.l.b16 %v402
      %v943 = vunpack.c.l.b16 %v403
      %v944 = vunpack.c.l.b16 %v404
      %v945 = vunpack.c.l.b16 %v405
      %v946 = vunpack.c.l.b16 %v406
      %v947 = vunpack.c.l.b16 %v407
      %v948 = vunpack.c.l.b16 %v408
      %v949 = vunpack.c.l.b16 %v409
      %v950 = vunpack.c.l.b16 %v410
      %v951 = vunpack.c.l.b16 %v411
      %v952 = vunpack.c.l.b16 %v412
      %v953 = vunpack.c.l.b16 %v413
      %v954 = vunpack.c.l.b16 %v414
      %v955 = vunpack.c.l.b16 %v415
      %v956 = vunpack.c.l.b16 %v416
      %v957 = vunpack.c.l.b16 %v417
      %v958 = vunpack.c.l.b16 %v418
      %v959 = vunpack.c.l.b16 %v419
      %v960 = vunpack.c.l.b16 %v420
      %v961 = vunpack.c.l.b16 %v421
      %v962 = vunpack.c.l.b16 %v422
      %v963 = vunpack.c.l.b16 %v423
      %v964 = vunpack.c.l.b16 %v424
      %v965 = vunpack.c.l.b16 %v425
      %v966 = vunpack.c.l.b16 %v426
      %v967 = vunpack.c.l.b16 %v427
      %v968 = vunpack.c.l.b16 %v428
      %v969 = vunpack.c.l.b16 %v429
      %v970 = vunpack.c.l.b16 %v430
      %v971 = vunpack.c.l.b16 %v431
      %v972 = vunpack.c.l.b16 %v432
      %v973 = vunpack.c.l.b16 %v433
      %v974 = vunpack.c.l.b16 %v434
      %v975 = vunpack.c.l.b16 %v435
      %v976 = vunpack.c.l.b16 %v436
      %v977 = vunpack.c.l.b16 %v437
      %v978 = vunpack.c.l.b16 %v438
      %v979 = vunpack.c.l.b16 %v439
      %v980 = vunpack.c.l.b16 %v440
      %v981 = vunpack.c.l.b16 %v441
      %v982 = vunpack.c.l.b16 %v442
      %v983 = vunpack.c.l.b16 %v443
      %v984 = vunpack.c.l.b16 %v444
      %v985 = vunpack.c.l.b16 %v445
      %v986 = vunpack.c.l.b16 %v446
      %v987 = vunpack.c.l.b16 %v447
      %v988 = vunpack.c.l.b16 %v448
      %v989 = vunpack.c.l.b16 %v449
      %v990 = vunpack.c.l.b16 %v450
      %v991 = vunpack.c.l.b16 %v451
      %v992 = vunpack.c.l.b16 %v452
      %v993 = vunpack.c.l.b16 %v453
      %v994 = vunpack.c.l.b16 %v454
      %v995 = vunpack.c.l.b16 %v455
      %v996 = vunpack.c.l.b16 %v456
      %v997 = vunpack.c.l.b16 %v457
      %v998 = vunpack.c.l.b16 %v458
      %v999 = vunpack.c.l.b16 %v459
      %v1000 = vunpack.c.l.b16 %v460
      %v1001 = vunpack.c.l.b16 %v461
      %v1002 = vunpack.c.l.b16 %v462
      %v1003 = vunpack.c.l.b16 %v463
      %v1004 = vunpack.c.l.b16 %v464
      %v1005 = vunpack.c.l.b16 %v465
      %v1006 = vunpack.c.l.b16 %v466
      %v1007 = vunpack.c.l.b16 %v467
      %v1008 = vunpack.c.l.b16 %v468
      %v1009 = vunpack.c.l.b16 %v469
      %v1010 = vunpack.c.l.b16 %v470
      %v1011 = vunpack.c.l.b16 %v471
      %v1012 = vunpack.c.l.b16 %v472
      %v1013 = vunpack.c.l.b16 %v473
      %v1014 = vunpack.c.l.b16 %v474
      %v1015 = vunpack.c.l.b16 %v475
      %v1016 = vunpack.c.l.b16 %v476
      %v1017 = vunpack.c.l.b16 %v477
      %v1018 = vunpack.c.l.b16 %v478
      %v1019 = vunpack.c.l.b16 %v479
      %v1020 = vunpack.c.l.b16 %v480
      %v1021 = vunpack.c.l.b16 %v481
      %v1022 = vunpack.c.l.b16 %v482
      %v1023 = vunpack.c.l.b16 %v483
      %v1024 = vunpack.c.l.b16 %v484
      %v1025 = vunpack.c.l.b16 %v485
      %v1026 = vunpack.c.l.b16 %v486
      %v1027 = vunpack.c.l.b16 %v487
      %v1028 = vunpack.c.l.b16 %v488
      %v1029 = vunpack.c.l.b16 %v489
      %v1030 = vunpack.c.l.b16 %v490
      %v1031 = vunpack.c.l.b16 %v491
      %v1032 = vunpack.c.l.b16 %v492
      %v1033 = vunpack.c.l.b16 %v493
      %v1034 = vunpack.c.l.b16 %v494
      %v1035 = vunpack.c.l.b16 %v495
      %v1036 = vunpack.c.l.b16 %v496
      %v1037 = vunpack.c.l.b16 %v497
      %v1038 = vunpack.c.l.b16 %v498
      %v1039 = vunpack.c.l.b16 %v499
      %v1040 = vunpack.c.l.b16 %v500
      %v1041 = vunpack.c.l.b16 %v501
      %v1042 = vunpack.c.l.b16 %v502
      %v1043 = vunpack.c.l.b16 %v503
      %v1044 = vunpack.c.l.b16 %v504
      %v1045 = vunpack.c.l.b16 %v505
      %v1046 = vunpack.c.l.b16 %v506
      %v1047 = vunpack.c.l.b16 %v507
      %v1048 = vunpack.c.l.b16 %v508
      %v1049 = vunpack.c.l.b16 %v509
      %v1050 = vunpack.c.l.b16 %v510
      %v1051 = vunpack.c.l.b16 %v511
      %v1052 = vpack.c.b16 %v797, %v796
      %v1053 = vpack.c.b16 %v799, %v798
      %v1054 = vpack.c.b16 %v801, %v800
      %v1055 = vpack.c.b16 %v803, %v802
      %v1056 = vpack.c.b16 %v805, %v804
      %v1057 = vpack.c.b16 %v807, %v806
      %v1058 = vpack.c.b16 %v809, %v808
      %v1059 = vpack.c.b16 %v811, %v810
      %v1060 = vpack.c.b16 %v813, %v812
      %v1061 = vpack.c.b16 %v815, %v814
      %v1062 = vpack.c.b16 %v817, %v816
      %v1063 = vpack.c.b16 %v819, %v818
      %v1064 = vpack.c.b16 %v821, %v820
      %v1065 = vpack.c.b16 %v823, %v822
      %v1066 = vpack.c.b16 %v825, %v824
      %v1067 = vpack.c.b16 %v827, %v826
      %v1068 = vpack.c.b16 %v829, %v828
      %v1069 = vpack.c.b16 %v831, %v830
      %v1070 = vpack.c.b16 %v833, %v832
      %v1071 = vpack.c.b16 %v835, %v834
      %v1072 = vpack.c.b16 %v837, %v836
      %v1073 = vpack.c.b16 %v839, %v838
      %v1074 = vpack.c.b16 %v841, %v840
      %v1075 = vpack.c.b16 %v843, %v842
      %v1076 = vpack.c.b16 %v845, %v844
      %v1077 = vpack.c.b16 %v847, %v846
      %v1078 = vpack.c.b16 %v849, %v848
      %v1079 = vpack.c.b16 %v851, %v850
      %v1080 = vpack.c.b16 %v853, %v852
      %v1081 = vpack.c.b16 %v855, %v854
      %v1082 = vpack.c.b16 %v857, %v856
      %v1083 = vpack.c.b16 %v859, %v858
      %v1084 = vpack.c.b16 %v861, %v860
      %v1085 = vpack.c.b16 %v863, %v862
      %v1086 = vpack.c.b16 %v865, %v864
      %v1087 = vpack.c.b16 %v867, %v866
      %v1088 = vpack.c.b16 %v869, %v868
      %v1089 = vpack.c.b16 %v871, %v870
      %v1090 = vpack.c.b16 %v873, %v872
      %v1091 = vpack.c.b16 %v875, %v874
      %v1092 = vpack.c.b16 %v877, %v876
      %v1093 = vpack.c.b16 %v879, %v878
      %v1094 = vpack.c.b16 %v881, %v880
      %v1095 = vpack.c.b16 %v883, %v882
      %v1096 = vpack.c.b16 %v885, %v884
      %v1097 = vpack.c.b16 %v887, %v886
      %v1098 = vpack.c.b16 %v889, %v888
      %v1099 = vpack.c.b16 %v891, %v890
      %v1100 = vpack.c.b16 %v893, %v892
      %v1101 = vpack.c.b16 %v895, %v894
      %v1102 = vpack.c.b16 %v897, %v896
      %v1103 = vpack.c.b16 %v899, %v898
      %v1104 = vpack.c.b16 %v901, %v900
      %v1105 = vpack.c.b16 %v903, %v902
      %v1106 = vpack.c.b16 %v905, %v904
      %v1107 = vpack.c.b16 %v907, %v906
      %v1108 = vpack.c.b16 %v909, %v908
      %v1109 = vpack.c.b16 %v911, %v910
      %v1110 = vpack.c.b16 %v913, %v912
      %v1111 = vpack.c.b16 %v915, %v914
      %v1112 = vpack.c.b16 %v917, %v916
      %v1113 = vpack.c.b16 %v919, %v918
      %v1114 = vpack.c.b16 %v921, %v920
      %v1115 = vpack.c.b16 %v923, %v922
      %v1116 = vpack.c.b16 %v925, %v924
      %v1117 = vpack.c.b16 %v927, %v926
      %v1118 = vpack.c.b16 %v929, %v928
      %v1119 = vpack.c.b16 %v931, %v930
      %v1120 = vpack.c.b16 %v933, %v932
      %v1121 = vpack.c.b16 %v935, %v934
      %v1122 = vpack.c.b16 %v937, %v936
      %v1123 = vpack.c.b16 %v939, %v938
      %v1124 = vpack.c.b16 %v941, %v940
      %v1125 = vpack.c.b16 %v943, %v942
      %v1126 = vpack.c.b16 %v945, %v944
      %v1127 = vpack.c.b16 %v947, %v946
      %v1128 = vpack.c.b16 %v949, %v948
      %v1129 = vpack.c.b16 %v951, %v950
      %v1130 = vpack.c.b16 %v953, %v952
      %v1131 = vpack.c.b16 %v955, %v954
      %v1132 = vpack.c.b16 %v957, %v956
      %v1133 = vpack.c.b16 %v959, %v958
      %v1134 = vpack.c.b16 %v961, %v960
      %v1135 = vpack.c.b16 %v963, %v962
      %v1136 = vpack.c.b16 %v965, %v964
      %v1137 = vpack.c.b16 %v967, %v966
      %v1138 = vpack.c.b16 %v969, %v968
      %v1139 = vpack.c.b16 %v971, %v970
      %v1140 = vpack.c.b16 %v973, %v972
      %v1141 = vpack.c.b16 %v975, %v974
      %v1142 = vpack.c.b16 %v977, %v976
      %v1143 = vpack.c.b16 %v979, %v978
      %v1144 = vpack.c.b16 %v981, %v980
      %v1145 = vpack.c.b16 %v983, %v982
      %v1146 = vpack.c.b16 %v985, %v984
      %v1147 = vpack.c.b16 %v987, %v986
      %v1148 = vpack.c.b16 %v989, %v988
      %v1149 = vpack.c.b16 %v991, %v990
      %v1150 = vpack.c.b16 %v993, %v992
      %v1151 = vpack.c.b16 %v995, %v994
      %v1152 = vpack.c.b16 %v997, %v996
      %v1153 = vpack.c.b16 %v999, %v998
      %v1154 = vpack.c.b16 %v1001, %v1000
      %v1155 = vpack.c.b16 %v1003, %v1002
      %v1156 = vpack.c.b16 %v1005, %v1004
      %v1157 = vpack.c.b16 %v1007, %v1006
      %v1158 = vpack.c.b16 %v1009, %v1008
      %v1159 = vpack.c.b16 %v1011, %v1010
      %v1160 = vpack.c.b16 %v1013, %v1012
      %v1161 = vpack.c.b16 %v1015, %v1014
      %v1162 = vpack.c.b16 %v1017, %v1016
      %v1163 = vpack.c.b16 %v1019, %v1018
      %v1164 = vpack.c.b16 %v1021, %v1020
      %v1165 = vpack.c.b16 %v1023, %v1022
      %v1166 = vpack.c.b16 %v1025, %v1024
      %v1167 = vpack.c.b16 %v1027, %v1026
      %v1168 = vpack.c.b16 %v1029, %v1028
      %v1169 = vpack.c.b16 %v1031, %v1030
      %v1170 = vpack.c.b16 %v1033, %v1032
      %v1171 = vpack.c.b16 %v1035, %v1034
      %v1172 = vpack.c.b16 %v1037, %v1036
      %v1173 = vpack.c.b16 %v1039, %v1038
      %v1174 = vpack.c.b16 %v1041, %v1040
      %v1175 = vpack.c.b16 %v1043, %v1042
      %v1176 = vpack.c.b16 %v1045, %v1044
      %v1177 = vpack.c.b16 %v1047, %v1046
      %v1178 = vpack.c.b16 %v1049, %v1048
      %v1179 = vpack.c.b16 %v1051, %v1050
      %v1324 = vunpack.c.l.b16 %v512
      %v1325 = vunpack.c.h.b16 %v512
      %v1326 = vunpack.c.l.b16 %v513
      %v1327 = vunpack.c.h.b16 %v513
      %v1328 = vunpack.c.l.b16 %v514
      %v1329 = vunpack.c.h.b16 %v514
      %v1330 = vunpack.c.l.b16 %v515
      %v1331 = vunpack.c.h.b16 %v515
      %v1332 = vunpack.c.l.b16 %v516
      %v1333 = vunpack.c.h.b16 %v516
      %v1334 = vunpack.c.l.b16 %v517
      %v1335 = vunpack.c.h.b16 %v517
      %v1336 = vunpack.c.l.b16 %v518
      %v1337 = vunpack.c.h.b16 %v518
      %v1338 = vunpack.c.l.b16 %v519
      %v1339 = vunpack.c.h.b16 %v519
      %v1340 = vunpack.c.l.b16 %v520
      %v1341 = vunpack.c.h.b16 %v520
      %v1342 = vunpack.c.l.b16 %v521
      %v1343 = vunpack.c.h.b16 %v521
      %v1344 = vunpack.c.l.b16 %v522
      %v1345 = vunpack.c.h.b16 %v522
      %v1346 = vunpack.c.l.b16 %v523
      %v1347 = vunpack.c.h.b16 %v523
      %v1348 = vunpack.c.l.b16 %v524
      %v1349 = vunpack.c.h.b16 %v524
      %v1350 = vunpack.c.l.b16 %v525
      %v1351 = vunpack.c.h.b16 %v525
      %v1352 = vunpack.c.l.b16 %v526
      %v1353 = vunpack.c.h.b16 %v526
      %v1354 = vunpack.c.l.b16 %v527
      %v1355 = vunpack.c.h.b16 %v527
      %v1356 = vpack.c.b16 %v1326, %v1324
      %v1357 = vpack.c.b16 %v1327, %v1325
      %v1358 = vpack.c.b16 %v1330, %v1328
      %v1359 = vpack.c.b16 %v1331, %v1329
      %v1360 = vpack.c.b16 %v1334, %v1332
      %v1361 = vpack.c.b16 %v1335, %v1333
      %v1362 = vpack.c.b16 %v1338, %v1336
      %v1363 = vpack.c.b16 %v1339, %v1337
      %v1364 = vpack.c.b16 %v1342, %v1340
      %v1365 = vpack.c.b16 %v1343, %v1341
      %v1366 = vpack.c.b16 %v1346, %v1344
      %v1367 = vpack.c.b16 %v1347, %v1345
      %v1368 = vpack.c.b16 %v1350, %v1348
      %v1369 = vpack.c.b16 %v1351, %v1349
      %v1370 = vpack.c.b16 %v1354, %v1352
      %v1371 = vpack.c.b16 %v1355, %v1353
      %1388 = vmatprep.subr.bf16.mxu0 %v1357
      %1389 = vmatpush1.bf16.msra.mxu0 %v1356
      %1390 = vmatprep.subr.bf16.mxu0 %v1359
      %1391 = vmatpush1.bf16.msra.mxu0 %v1358
      %1392 = vmatprep.subr.bf16.mxu0 %v1361
      %1393 = vmatpush1.bf16.msra.mxu0 %v1360
      %1394 = vmatprep.subr.bf16.mxu0 %v1363
      %1395 = vmatpush1.bf16.msra.mxu0 %v1362
      %1396 = vmatprep.subr.bf16.mxu0 %v1365
      %1397 = vmatpush1.bf16.msra.mxu0 %v1364
      %1398 = vmatprep.subr.bf16.mxu0 %v1367
      %1399 = vmatpush1.bf16.msra.mxu0 %v1366
      %1400 = vmatprep.subr.bf16.mxu0 %v1369
      %1401 = vmatpush1.bf16.msra.mxu0 %v1368
      %1402 = vmatprep.subr.bf16.mxu0 %v1371
      %1403 = vmatpush1.bf16.msra.mxu0 %v1370
      %1404 = vmatprep.subr.bf16.mxu0 0
      %1405 = vmatpush1.bf16.msra.mxu0 0
      %1406 = vmatprep.subr.bf16.mxu0 0
      %1407 = vmatpush1.bf16.msra.mxu0 0
      %1408 = vmatprep.subr.bf16.mxu0 0
      %1409 = vmatpush1.bf16.msra.mxu0 0
      %1410 = vmatprep.subr.bf16.mxu0 0
      %1411 = vmatpush1.bf16.msra.mxu0 0
      %1412 = vmatprep.subr.bf16.mxu0 0
      %1413 = vmatpush1.bf16.msra.mxu0 0
      %1414 = vmatprep.subr.bf16.mxu0 0
      %1415 = vmatpush1.bf16.msra.mxu0 0
      %1416 = vmatprep.subr.bf16.mxu0 0
      %1417 = vmatpush1.bf16.msra.mxu0 0
      %1418 = vmatprep.subr.bf16.mxu0 0
      %1419 = vmatpush1.bf16.msra.mxu0 0
      %1420 = vmatprep.mubr.bf16.mxu0 0
      %1421 = vmatmul.mubr.bf16.gmra.mrb[0].mxu0 %v1052
      %v1422 = vpop.f32.mrb[0].mxu0
      %v1423 = vadd.f32 %v533, %v1422
      %v1424 = vpop.f32.mrb[0].mxu0
      %v1425 = vadd.f32 %v537, %v1424
      %v1426 = vpop.f32.mrb[0].mxu0
      %v1427 = vadd.f32 %v533, %v1426
      %v1428 = vpop.f32.mrb[0].mxu0
      %v1429 = vadd.f32 %v537, %v1428
      %1430 = vmatprep.mubr.bf16.mxu0 0
      %1431 = vmatmul.mubr.bf16.gmra.mrb[0].mxu0 %v1053
      %v1432 = vpop.f32.mrb[0].mxu0
      %v1433 = vadd.f32 %v533, %v1432
      %v1434 = vpop.f32.mrb[0].mxu0
      %v1435 = vadd.f32 %v537, %v1434
      %v1436 = vpop.f32.mrb[0].mxu0
      %v1437 = vadd.f32 %v533, %v1436
      %v1438 = vpop.f32.mrb[0].mxu0
      %v1439 = vadd.f32 %v537, %v1438
      %1440 = vmatprep.mubr.bf16.mxu0 0
      %1441 = vmatmul.mubr.bf16.gmra.mrb[0].mxu0 %v1054
      %v1442 = vpop.f32.mrb[0].mxu0
      %v1443 = vadd.f32 %v533, %v1442
      %v1444 = vpop.f32.mrb[0].mxu0
      %v1445 = vadd.f32 %v537, %v1444
      %v1446 = vpop.f32.mrb[0].mxu0
      %v1447 = vadd.f32 %v533, %v1446
      %v1448 = vpop.f32.mrb[0].mxu0
      %v1449 = vadd.f32 %v537, %v1448
      %1450 = vmatprep.mubr.bf16.mxu0 0
      %1451 = vmatmul.mubr.bf16.gmra.mrb[0].mxu0 %v1055
      %v1452 = vpop.f32.mrb[0].mxu0
      %v1453 = vadd.f32 %v533, %v1452
      %v1454 = vpop.f32.mrb[0].mxu0
      %v1455 = vadd.f32 %v537, %v1454
      %v1456 = vpop.f32.mrb[0].mxu0
      %v1457 = vadd.f32 %v533, %v1456
      %v1458 = vpop.f32.mrb[0].mxu0
      %v1459 = vadd.f32 %v537, %v1458
      %1460 = vmatprep.mubr.bf16.mxu0 0
      %1461 = vmatmul.mubr.bf16.gmra.mrb[0].mxu0 %v1056
      %v1462 = vpop.f32.mrb[0].mxu0
      %v1463 = vadd.f32 %v533, %v1462
      %v1464 = vpop.f32.mrb[0].mxu0
      %v1465 = vadd.f32 %v537, %v1464
      %v1466 = vpop.f32.mrb[0].mxu0
      %v1467 = vadd.f32 %v533, %v1466
      %v1468 = vpop.f32.mrb[0].mxu0
      %v1469 = vadd.f32 %v537, %v1468
      %1470 = vmatprep.mubr.bf16.mxu0 0
      %1471 = vmatmul.mubr.bf16.gmra.mrb[0].mxu0 %v1057
      %v1472 = vpop.f32.mrb[0].mxu0
      %v1473 = vadd.f32 %v533, %v1472
      %v1474 = vpop.f32.mrb[0].mxu0
      %v1475 = vadd.f32 %v537, %v1474
      %v1476 = vpop.f32.mrb[0].mxu0
      %v1477 = vadd.f32 %v533, %v1476
      %v1478 = vpop.f32.mrb[0].mxu0
      %v1479 = vadd.f32 %v537, %v1478
      %1480 = vmatprep.mubr.bf16.mxu0 0
      %1481 = vmatmul.mubr.bf16.gmra.mrb[0].mxu0 %v1058
      %v1482 = vpop.f32.mrb[0].mxu0
      %v1483 = vadd.f32 %v533, %v1482
      %v1484 = vpop.f32.mrb[0].mxu0
      %v1485 = vadd.f32 %v537, %v1484
      %v1486 = vpop.f32.mrb[0].mxu0
      %v1487 = vadd.f32 %v533, %v1486
      %v1488 = vpop.f32.mrb[0].mxu0
      %v1489 = vadd.f32 %v537, %v1488
      %1490 = vmatprep.mubr.bf16.mxu0 0
      %1491 = vmatmul.mubr.bf16.gmra.mrb[0].mxu0 %v1059
      %v1492 = vpop.f32.mrb[0].mxu0
      %v1493 = vadd.f32 %v533, %v1492
      %v1494 = vpop.f32.mrb[0].mxu0
      %v1495 = vadd.f32 %v537, %v1494
      %v1496 = vpop.f32.mrb[0].mxu0
      %v1497 = vadd.f32 %v533, %v1496
      %v1498 = vpop.f32.mrb[0].mxu0
      %v1499 = vadd.f32 %v537, %v1498
      %1500 = vmatprep.mubr.bf16.mxu0 0
      %1501 = vmatmul.mubr.bf16.gmra.mrb[0].mxu0 %v1060
      %v1502 = vpop.f32.mrb[0].mxu0
      %v1503 = vadd.f32 %v533, %v1502
      %v1504 = vpop.f32.mrb[0].mxu0
      %v1505 = vadd.f32 %v537, %v1504
      %v1506 = vpop.f32.mrb[0].mxu0
      %v1507 = vadd.f32 %v533, %v1506
      %v1508 = vpop.f32.mrb[0].mxu0
      %v1509 = vadd.f32 %v537, %v1508
      %1510 = vmatprep.mubr.bf16.mxu0 0
      %1511 = vmatmul.mubr.bf16.gmra.mrb[0].mxu0 %v1061
      %v1512 = vpop.f32.mrb[0].mxu0
      %v1513 = vadd.f32 %v533, %v1512
      %v1514 = vpop.f32.mrb[0].mxu0
      %v1515 = vadd.f32 %v537, %v1514
      %v1516 = vpop.f32.mrb[0].mxu0
      %v1517 = vadd.f32 %v533, %v1516
      %v1518 = vpop.f32.mrb[0].mxu0
      %v1519 = vadd.f32 %v537, %v1518
      %1520 = vmatprep.mubr.bf16.mxu0 0
      %1521 = vmatmul.mubr.bf16.gmra.mrb[0].mxu0 %v1062
      %v1522 = vpop.f32.mrb[0].mxu0
      %v1523 = vadd.f32 %v533, %v1522
      %v1524 = vpop.f32.mrb[0].mxu0
      %v1525 = vadd.f32 %v537, %v1524
      %v1526 = vpop.f32.mrb[0].mxu0
      %v1527 = vadd.f32 %v533, %v1526
      %v1528 = vpop.f32.mrb[0].mxu0
      %v1529 = vadd.f32 %v537, %v1528
      %1530 = vmatprep.mubr.bf16.mxu0 0
      %1531 = vmatmul.mubr.bf16.gmra.mrb[0].mxu0 %v1063
      %v1532 = vpop.f32.mrb[0].mxu0
      %v1533 = vadd.f32 %v533, %v1532
      %v1534 = vpop.f32.mrb[0].mxu0
      %v1535 = vadd.f32 %v537, %v1534
      %v1536 = vpop.f32.mrb[0].mxu0
      %v1537 = vadd.f32 %v533, %v1536
      %v1538 = vpop.f32.mrb[0].mxu0
      %v1539 = vadd.f32 %v537, %v1538
      %1540 = vmatprep.mubr.bf16.mxu0 0
      %1541 = vmatmul.mubr.bf16.gmra.mrb[0].mxu0 %v1064
      %v1542 = vpop.f32.mrb[0].mxu0
      %v1543 = vadd.f32 %v533, %v1542
      %v1544 = vpop.f32.mrb[0].mxu0
      %v1545 = vadd.f32 %v537, %v1544
      %v1546 = vpop.f32.mrb[0].mxu0
      %v1547 = vadd.f32 %v533, %v1546
      %v1548 = vpop.f32.mrb[0].mxu0
      %v1549 = vadd.f32 %v537, %v1548
      %1550 = vmatprep.mubr.bf16.mxu0 0
      %1551 = vmatmul.mubr.bf16.gmra.mrb[0].mxu0 %v1065
      %v1552 = vpop.f32.mrb[0].mxu0
      %v1553 = vadd.f32 %v533, %v1552
      %v1554 = vpop.f32.mrb[0].mxu0
      %v1555 = vadd.f32 %v537, %v1554
      %v1556 = vpop.f32.mrb[0].mxu0
      %v1557 = vadd.f32 %v533, %v1556
      %v1558 = vpop.f32.mrb[0].mxu0
      %v1559 = vadd.f32 %v537, %v1558
      %1560 = vmatprep.mubr.bf16.mxu0 0
      %1561 = vmatmul.mubr.bf16.gmra.mrb[0].mxu0 %v1066
      %v1562 = vpop.f32.mrb[0].mxu0
      %v1563 = vadd.f32 %v533, %v1562
      %v1564 = vpop.f32.mrb[0].mxu0
      %v1565 = vadd.f32 %v537, %v1564
      %v1566 = vpop.f32.mrb[0].mxu0
      %v1567 = vadd.f32 %v533, %v1566
      %v1568 = vpop.f32.mrb[0].mxu0
      %v1569 = vadd.f32 %v537, %v1568
      %1570 = vmatprep.mubr.bf16.mxu0 0
      %1571 = vmatmul.mubr.bf16.gmra.mrb[0].mxu0 %v1067
      %v1572 = vpop.f32.mrb[0].mxu0
      %v1573 = vadd.f32 %v533, %v1572
      %v1574 = vpop.f32.mrb[0].mxu0
      %v1575 = vadd.f32 %v537, %v1574
      %v1576 = vpop.f32.mrb[0].mxu0
      %v1577 = vadd.f32 %v533, %v1576
      %v1578 = vpop.f32.mrb[0].mxu0
      %v1579 = vadd.f32 %v537, %v1578
      %1580 = vmatprep.mubr.bf16.mxu0 0
      %1581 = vmatmul.mubr.bf16.gmra.mrb[0].mxu0 %v1068
      %v1582 = vpop.f32.mrb[0].mxu0
      %v1583 = vadd.f32 %v533, %v1582
      %v1584 = vpop.f32.mrb[0].mxu0
      %v1585 = vadd.f32 %v537, %v1584
      %v1586 = vpop.f32.mrb[0].mxu0
      %v1587 = vadd.f32 %v533, %v1586
      %v1588 = vpop.f32.mrb[0].mxu0
      %v1589 = vadd.f32 %v537, %v1588
      %1590 = vmatprep.mubr.bf16.mxu0 0
      %1591 = vmatmul.mubr.bf16.gmra.mrb[0].mxu0 %v1069
      %v1592 = vpop.f32.mrb[0].mxu0
      %v1593 = vadd.f32 %v533, %v1592
      %v1594 = vpop.f32.mrb[0].mxu0
      %v1595 = vadd.f32 %v537, %v1594
      %v1596 = vpop.f32.mrb[0].mxu0
      %v1597 = vadd.f32 %v533, %v1596
      %v1598 = vpop.f32.mrb[0].mxu0
      %v1599 = vadd.f32 %v537, %v1598
      %1600 = vmatprep.mubr.bf16.mxu0 0
      %1601 = vmatmul.mubr.bf16.gmra.mrb[0].mxu0 %v1070
      %v1602 = vpop.f32.mrb[0].mxu0
      %v1603 = vadd.f32 %v533, %v1602
      %v1604 = vpop.f32.mrb[0].mxu0
      %v1605 = vadd.f32 %v537, %v1604
      %v1606 = vpop.f32.mrb[0].mxu0
      %v1607 = vadd.f32 %v533, %v1606
      %v1608 = vpop.f32.mrb[0].mxu0
      %v1609 = vadd.f32 %v537, %v1608
      %1610 = vmatprep.mubr.bf16.mxu0 0
      %1611 = vmatmul.mubr.bf16.gmra.mrb[0].mxu0 %v1071
      %v1612 = vpop.f32.mrb[0].mxu0
      %v1613 = vadd.f32 %v533, %v1612
      %v1614 = vpop.f32.mrb[0].mxu0
      %v1615 = vadd.f32 %v537, %v1614
      %v1616 = vpop.f32.mrb[0].mxu0
      %v1617 = vadd.f32 %v533, %v1616
      %v1618 = vpop.f32.mrb[0].mxu0
      %v1619 = vadd.f32 %v537, %v1618
      %1620 = vmatprep.mubr.bf16.mxu0 0
      %1621 = vmatmul.mubr.bf16.gmra.mrb[0].mxu0 %v1072
      %v1622 = vpop.f32.mrb[0].mxu0
      %v1623 = vadd.f32 %v533, %v1622
      %v1624 = vpop.f32.mrb[0].mxu0
      %v1625 = vadd.f32 %v537, %v1624
      %v1626 = vpop.f32.mrb[0].mxu0
      %v1627 = vadd.f32 %v533, %v1626
      %v1628 = vpop.f32.mrb[0].mxu0
      %v1629 = vadd.f32 %v537, %v1628
      %1630 = vmatprep.mubr.bf16.mxu0 0
      %1631 = vmatmul.mubr.bf16.gmra.mrb[0].mxu0 %v1073
      %v1632 = vpop.f32.mrb[0].mxu0
      %v1633 = vadd.f32 %v533, %v1632
      %v1634 = vpop.f32.mrb[0].mxu0
      %v1635 = vadd.f32 %v537, %v1634
      %v1636 = vpop.f32.mrb[0].mxu0
      %v1637 = vadd.f32 %v533, %v1636
      %v1638 = vpop.f32.mrb[0].mxu0
      %v1639 = vadd.f32 %v537, %v1638
      %1640 = vmatprep.mubr.bf16.mxu0 0
      %1641 = vmatmul.mubr.bf16.gmra.mrb[0].mxu0 %v1074
      %v1642 = vpop.f32.mrb[0].mxu0
      %v1643 = vadd.f32 %v533, %v1642
      %v1644 = vpop.f32.mrb[0].mxu0
      %v1645 = vadd.f32 %v537, %v1644
      %v1646 = vpop.f32.mrb[0].mxu0
      %v1647 = vadd.f32 %v533, %v1646
      %v1648 = vpop.f32.mrb[0].mxu0
      %v1649 = vadd.f32 %v537, %v1648
      %1650 = vmatprep.mubr.bf16.mxu0 0
      %1651 = vmatmul.mubr.bf16.gmra.mrb[0].mxu0 %v1075
      %v1652 = vpop.f32.mrb[0].mxu0
      %v1653 = vadd.f32 %v533, %v1652
      %v1654 = vpop.f32.mrb[0].mxu0
      %v1655 = vadd.f32 %v537, %v1654
      %v1656 = vpop.f32.mrb[0].mxu0
      %v1657 = vadd.f32 %v533, %v1656
      %v1658 = vpop.f32.mrb[0].mxu0
      %v1659 = vadd.f32 %v537, %v1658
      %1660 = vmatprep.mubr.bf16.mxu0 0
      %1661 = vmatmul.mubr.bf16.gmra.mrb[0].mxu0 %v1076
      %v1662 = vpop.f32.mrb[0].mxu0
      %v1663 = vadd.f32 %v533, %v1662
      %v1664 = vpop.f32.mrb[0].mxu0
      %v1665 = vadd.f32 %v537, %v1664
      %v1666 = vpop.f32.mrb[0].mxu0
      %v1667 = vadd.f32 %v533, %v1666
      %v1668 = vpop.f32.mrb[0].mxu0
      %v1669 = vadd.f32 %v537, %v1668
      %1670 = vmatprep.mubr.bf16.mxu0 0
      %1671 = vmatmul.mubr.bf16.gmra.mrb[0].mxu0 %v1077
      %v1672 = vpop.f32.mrb[0].mxu0
      %v1673 = vadd.f32 %v533, %v1672
      %v1674 = vpop.f32.mrb[0].mxu0
      %v1675 = vadd.f32 %v537, %v1674
      %v1676 = vpop.f32.mrb[0].mxu0
      %v1677 = vadd.f32 %v533, %v1676
      %v1678 = vpop.f32.mrb[0].mxu0
      %v1679 = vadd.f32 %v537, %v1678
      %1680 = vmatprep.mubr.bf16.mxu0 0
      %1681 = vmatmul.mubr.bf16.gmra.mrb[0].mxu0 %v1078
      %v1682 = vpop.f32.mrb[0].mxu0
      %v1683 = vadd.f32 %v533, %v1682
      %v1684 = vpop.f32.mrb[0].mxu0
      %v1685 = vadd.f32 %v537, %v1684
      %v1686 = vpop.f32.mrb[0].mxu0
      %v1687 = vadd.f32 %v533, %v1686
      %v1688 = vpop.f32.mrb[0].mxu0
      %v1689 = vadd.f32 %v537, %v1688
      %1690 = vmatprep.mubr.bf16.mxu0 0
      %1691 = vmatmul.mubr.bf16.gmra.mrb[0].mxu0 %v1079
      %v1692 = vpop.f32.mrb[0].mxu0
      %v1693 = vadd.f32 %v533, %v1692
      %v1694 = vpop.f32.mrb[0].mxu0
      %v1695 = vadd.f32 %v537, %v1694
      %v1696 = vpop.f32.mrb[0].mxu0
      %v1697 = vadd.f32 %v533, %v1696
      %v1698 = vpop.f32.mrb[0].mxu0
      %v1699 = vadd.f32 %v537, %v1698
      %1700 = vmatprep.mubr.bf16.mxu0 0
      %1701 = vmatmul.mubr.bf16.gmra.mrb[0].mxu0 %v1080
      %v1702 = vpop.f32.mrb[0].mxu0
      %v1703 = vadd.f32 %v533, %v1702
      %v1704 = vpop.f32.mrb[0].mxu0
      %v1705 = vadd.f32 %v537, %v1704
      %v1706 = vpop.f32.mrb[0].mxu0
      %v1707 = vadd.f32 %v533, %v1706
      %v1708 = vpop.f32.mrb[0].mxu0
      %v1709 = vadd.f32 %v537, %v1708
      %1710 = vmatprep.mubr.bf16.mxu0 0
      %1711 = vmatmul.mubr.bf16.gmra.mrb[0].mxu0 %v1081
      %v1712 = vpop.f32.mrb[0].mxu0
      %v1713 = vadd.f32 %v533, %v1712
      %v1714 = vpop.f32.mrb[0].mxu0
      %v1715 = vadd.f32 %v537, %v1714
      %v1716 = vpop.f32.mrb[0].mxu0
      %v1717 = vadd.f32 %v533, %v1716
      %v1718 = vpop.f32.mrb[0].mxu0
      %v1719 = vadd.f32 %v537, %v1718
      %1720 = vmatprep.mubr.bf16.mxu0 0
      %1721 = vmatmul.mubr.bf16.gmra.mrb[0].mxu0 %v1082
      %v1722 = vpop.f32.mrb[0].mxu0
      %v1723 = vadd.f32 %v533, %v1722
      %v1724 = vpop.f32.mrb[0].mxu0
      %v1725 = vadd.f32 %v537, %v1724
      %v1726 = vpop.f32.mrb[0].mxu0
      %v1727 = vadd.f32 %v533, %v1726
      %v1728 = vpop.f32.mrb[0].mxu0
      %v1729 = vadd.f32 %v537, %v1728
      %1730 = vmatprep.mubr.bf16.mxu0 0
      %1731 = vmatmul.mubr.bf16.gmra.mrb[0].mxu0 %v1083
      %v1732 = vpop.f32.mrb[0].mxu0
      %v1733 = vadd.f32 %v533, %v1732
      %v1734 = vpop.f32.mrb[0].mxu0
      %v1735 = vadd.f32 %v537, %v1734
      %v1736 = vpop.f32.mrb[0].mxu0
      %v1737 = vadd.f32 %v533, %v1736
      %v1738 = vpop.f32.mrb[0].mxu0
      %v1739 = vadd.f32 %v537, %v1738
      %1740 = vmatprep.mubr.bf16.mxu0 0
      %1741 = vmatmul.mubr.bf16.gmra.mrb[0].mxu0 %v1084
      %v1742 = vpop.f32.mrb[0].mxu0
      %v1743 = vadd.f32 %v533, %v1742
      %v1744 = vpop.f32.mrb[0].mxu0
      %v1745 = vadd.f32 %v537, %v1744
      %v1746 = vpop.f32.mrb[0].mxu0
      %v1747 = vadd.f32 %v533, %v1746
      %v1748 = vpop.f32.mrb[0].mxu0
      %v1749 = vadd.f32 %v537, %v1748
      %1750 = vmatprep.mubr.bf16.mxu0 0
      %1751 = vmatmul.mubr.bf16.gmra.mrb[0].mxu0 %v1085
      %v1752 = vpop.f32.mrb[0].mxu0
      %v1753 = vadd.f32 %v533, %v1752
      %v1754 = vpop.f32.mrb[0].mxu0
      %v1755 = vadd.f32 %v537, %v1754
      %v1756 = vpop.f32.mrb[0].mxu0
      %v1757 = vadd.f32 %v533, %v1756
      %v1758 = vpop.f32.mrb[0].mxu0
      %v1759 = vadd.f32 %v537, %v1758
      %1760 = vmatprep.mubr.bf16.mxu0 0
      %1761 = vmatmul.mubr.bf16.gmra.mrb[0].mxu0 %v1086
      %v1762 = vpop.f32.mrb[0].mxu0
      %v1763 = vadd.f32 %v533, %v1762
      %v1764 = vpop.f32.mrb[0].mxu0
      %v1765 = vadd.f32 %v537, %v1764
      %v1766 = vpop.f32.mrb[0].mxu0
      %v1767 = vadd.f32 %v533, %v1766
      %v1768 = vpop.f32.mrb[0].mxu0
      %v1769 = vadd.f32 %v537, %v1768
      %1770 = vmatprep.mubr.bf16.mxu0 0
      %1771 = vmatmul.mubr.bf16.gmra.mrb[0].mxu0 %v1087
      %v1772 = vpop.f32.mrb[0].mxu0
      %v1773 = vadd.f32 %v533, %v1772
      %v1774 = vpop.f32.mrb[0].mxu0
      %v1775 = vadd.f32 %v537, %v1774
      %v1776 = vpop.f32.mrb[0].mxu0
      %v1777 = vadd.f32 %v533, %v1776
      %v1778 = vpop.f32.mrb[0].mxu0
      %v1779 = vadd.f32 %v537, %v1778
      %1780 = vmatprep.mubr.bf16.mxu0 0
      %1781 = vmatmul.mubr.bf16.gmra.mrb[0].mxu0 %v1088
      %v1782 = vpop.f32.mrb[0].mxu0
      %v1783 = vadd.f32 %v533, %v1782
      %v1784 = vpop.f32.mrb[0].mxu0
      %v1785 = vadd.f32 %v537, %v1784
      %v1786 = vpop.f32.mrb[0].mxu0
      %v1787 = vadd.f32 %v533, %v1786
      %v1788 = vpop.f32.mrb[0].mxu0
      %v1789 = vadd.f32 %v537, %v1788
      %1790 = vmatprep.mubr.bf16.mxu0 0
      %1791 = vmatmul.mubr.bf16.gmra.mrb[0].mxu0 %v1089
      %v1792 = vpop.f32.mrb[0].mxu0
      %v1793 = vadd.f32 %v533, %v1792
      %v1794 = vpop.f32.mrb[0].mxu0
      %v1795 = vadd.f32 %v537, %v1794
      %v1796 = vpop.f32.mrb[0].mxu0
      %v1797 = vadd.f32 %v533, %v1796
      %v1798 = vpop.f32.mrb[0].mxu0
      %v1799 = vadd.f32 %v537, %v1798
      %1800 = vmatprep.mubr.bf16.mxu0 0
      %1801 = vmatmul.mubr.bf16.gmra.mrb[0].mxu0 %v1090
      %v1802 = vpop.f32.mrb[0].mxu0
      %v1803 = vadd.f32 %v533, %v1802
      %v1804 = vpop.f32.mrb[0].mxu0
      %v1805 = vadd.f32 %v537, %v1804
      %v1806 = vpop.f32.mrb[0].mxu0
      %v1807 = vadd.f32 %v533, %v1806
      %v1808 = vpop.f32.mrb[0].mxu0
      %v1809 = vadd.f32 %v537, %v1808
      %1810 = vmatprep.mubr.bf16.mxu0 0
      %1811 = vmatmul.mubr.bf16.gmra.mrb[0].mxu0 %v1091
      %v1812 = vpop.f32.mrb[0].mxu0
      %v1813 = vadd.f32 %v533, %v1812
      %v1814 = vpop.f32.mrb[0].mxu0
      %v1815 = vadd.f32 %v537, %v1814
      %v1816 = vpop.f32.mrb[0].mxu0
      %v1817 = vadd.f32 %v533, %v1816
      %v1818 = vpop.f32.mrb[0].mxu0
      %v1819 = vadd.f32 %v537, %v1818
      %1820 = vmatprep.mubr.bf16.mxu0 0
      %1821 = vmatmul.mubr.bf16.gmra.mrb[0].mxu0 %v1092
      %v1822 = vpop.f32.mrb[0].mxu0
      %v1823 = vadd.f32 %v533, %v1822
      %v1824 = vpop.f32.mrb[0].mxu0
      %v1825 = vadd.f32 %v537, %v1824
      %v1826 = vpop.f32.mrb[0].mxu0
      %v1827 = vadd.f32 %v533, %v1826
      %v1828 = vpop.f32.mrb[0].mxu0
      %v1829 = vadd.f32 %v537, %v1828
      %1830 = vmatprep.mubr.bf16.mxu0 0
      %1831 = vmatmul.mubr.bf16.gmra.mrb[0].mxu0 %v1093
      %v1832 = vpop.f32.mrb[0].mxu0
      %v1833 = vadd.f32 %v533, %v1832
      %v1834 = vpop.f32.mrb[0].mxu0
      %v1835 = vadd.f32 %v537, %v1834
      %v1836 = vpop.f32.mrb[0].mxu0
      %v1837 = vadd.f32 %v533, %v1836
      %v1838 = vpop.f32.mrb[0].mxu0
      %v1839 = vadd.f32 %v537, %v1838
      %1840 = vmatprep.mubr.bf16.mxu0 0
      %1841 = vmatmul.mubr.bf16.gmra.mrb[0].mxu0 %v1094
      %v1842 = vpop.f32.mrb[0].mxu0
      %v1843 = vadd.f32 %v533, %v1842
      %v1844 = vpop.f32.mrb[0].mxu0
      %v1845 = vadd.f32 %v537, %v1844
      %v1846 = vpop.f32.mrb[0].mxu0
      %v1847 = vadd.f32 %v533, %v1846
      %v1848 = vpop.f32.mrb[0].mxu0
      %v1849 = vadd.f32 %v537, %v1848
      %1850 = vmatprep.mubr.bf16.mxu0 0
      %1851 = vmatmul.mubr.bf16.gmra.mrb[0].mxu0 %v1095
      %v1852 = vpop.f32.mrb[0].mxu0
      %v1853 = vadd.f32 %v533, %v1852
      %v1854 = vpop.f32.mrb[0].mxu0
      %v1855 = vadd.f32 %v537, %v1854
      %v1856 = vpop.f32.mrb[0].mxu0
      %v1857 = vadd.f32 %v533, %v1856
      %v1858 = vpop.f32.mrb[0].mxu0
      %v1859 = vadd.f32 %v537, %v1858
      %1860 = vmatprep.mubr.bf16.mxu0 0
      %1861 = vmatmul.mubr.bf16.gmra.mrb[0].mxu0 %v1096
      %v1862 = vpop.f32.mrb[0].mxu0
      %v1863 = vadd.f32 %v533, %v1862
      %v1864 = vpop.f32.mrb[0].mxu0
      %v1865 = vadd.f32 %v537, %v1864
      %v1866 = vpop.f32.mrb[0].mxu0
      %v1867 = vadd.f32 %v533, %v1866
      %v1868 = vpop.f32.mrb[0].mxu0
      %v1869 = vadd.f32 %v537, %v1868
      %1870 = vmatprep.mubr.bf16.mxu0 0
      %1871 = vmatmul.mubr.bf16.gmra.mrb[0].mxu0 %v1097
      %v1872 = vpop.f32.mrb[0].mxu0
      %v1873 = vadd.f32 %v533, %v1872
      %v1874 = vpop.f32.mrb[0].mxu0
      %v1875 = vadd.f32 %v537, %v1874
      %v1876 = vpop.f32.mrb[0].mxu0
      %v1877 = vadd.f32 %v533, %v1876
      %v1878 = vpop.f32.mrb[0].mxu0
      %v1879 = vadd.f32 %v537, %v1878
      %1880 = vmatprep.mubr.bf16.mxu0 0
      %1881 = vmatmul.mubr.bf16.gmra.mrb[0].mxu0 %v1098
      %v1882 = vpop.f32.mrb[0].mxu0
      %v1883 = vadd.f32 %v533, %v1882
      %v1884 = vpop.f32.mrb[0].mxu0
      %v1885 = vadd.f32 %v537, %v1884
      %v1886 = vpop.f32.mrb[0].mxu0
      %v1887 = vadd.f32 %v533, %v1886
      %v1888 = vpop.f32.mrb[0].mxu0
      %v1889 = vadd.f32 %v537, %v1888
      %1890 = vmatprep.mubr.bf16.mxu0 0
      %1891 = vmatmul.mubr.bf16.gmra.mrb[0].mxu0 %v1099
      %v1892 = vpop.f32.mrb[0].mxu0
      %v1893 = vadd.f32 %v533, %v1892
      %v1894 = vpop.f32.mrb[0].mxu0
      %v1895 = vadd.f32 %v537, %v1894
      %v1896 = vpop.f32.mrb[0].mxu0
      %v1897 = vadd.f32 %v533, %v1896
      %v1898 = vpop.f32.mrb[0].mxu0
      %v1899 = vadd.f32 %v537, %v1898
      %1900 = vmatprep.mubr.bf16.mxu0 0
      %1901 = vmatmul.mubr.bf16.gmra.mrb[0].mxu0 %v1100
      %v1902 = vpop.f32.mrb[0].mxu0
      %v1903 = vadd.f32 %v533, %v1902
      %v1904 = vpop.f32.mrb[0].mxu0
      %v1905 = vadd.f32 %v537, %v1904
      %v1906 = vpop.f32.mrb[0].mxu0
      %v1907 = vadd.f32 %v533, %v1906
      %v1908 = vpop.f32.mrb[0].mxu0
      %v1909 = vadd.f32 %v537, %v1908
      %1910 = vmatprep.mubr.bf16.mxu0 0
      %1911 = vmatmul.mubr.bf16.gmra.mrb[0].mxu0 %v1101
      %v1912 = vpop.f32.mrb[0].mxu0
      %v1913 = vadd.f32 %v533, %v1912
      %v1914 = vpop.f32.mrb[0].mxu0
      %v1915 = vadd.f32 %v537, %v1914
      %v1916 = vpop.f32.mrb[0].mxu0
      %v1917 = vadd.f32 %v533, %v1916
      %v1918 = vpop.f32.mrb[0].mxu0
      %v1919 = vadd.f32 %v537, %v1918
      %1920 = vmatprep.mubr.bf16.mxu0 0
      %1921 = vmatmul.mubr.bf16.gmra.mrb[0].mxu0 %v1102
      %v1922 = vpop.f32.mrb[0].mxu0
      %v1923 = vadd.f32 %v533, %v1922
      %v1924 = vpop.f32.mrb[0].mxu0
      %v1925 = vadd.f32 %v537, %v1924
      %v1926 = vpop.f32.mrb[0].mxu0
      %v1927 = vadd.f32 %v533, %v1926
      %v1928 = vpop.f32.mrb[0].mxu0
      %v1929 = vadd.f32 %v537, %v1928
      %1930 = vmatprep.mubr.bf16.mxu0 0
      %1931 = vmatmul.mubr.bf16.gmra.mrb[0].mxu0 %v1103
      %v1932 = vpop.f32.mrb[0].mxu0
      %v1933 = vadd.f32 %v533, %v1932
      %v1934 = vpop.f32.mrb[0].mxu0
      %v1935 = vadd.f32 %v537, %v1934
      %v1936 = vpop.f32.mrb[0].mxu0
      %v1937 = vadd.f32 %v533, %v1936
      %v1938 = vpop.f32.mrb[0].mxu0
      %v1939 = vadd.f32 %v537, %v1938
      %1940 = vmatprep.mubr.bf16.mxu0 0
      %1941 = vmatmul.mubr.bf16.gmra.mrb[0].mxu0 %v1104
      %v1942 = vpop.f32.mrb[0].mxu0
      %v1943 = vadd.f32 %v533, %v1942
      %v1944 = vpop.f32.mrb[0].mxu0
      %v1945 = vadd.f32 %v537, %v1944
      %v1946 = vpop.f32.mrb[0].mxu0
      %v1947 = vadd.f32 %v533, %v1946
      %v1948 = vpop.f32.mrb[0].mxu0
      %v1949 = vadd.f32 %v537, %v1948
      %1950 = vmatprep.mubr.bf16.mxu0 0
      %1951 = vmatmul.mubr.bf16.gmra.mrb[0].mxu0 %v1105
      %v1952 = vpop.f32.mrb[0].mxu0
      %v1953 = vadd.f32 %v533, %v1952
      %v1954 = vpop.f32.mrb[0].mxu0
      %v1955 = vadd.f32 %v537, %v1954
      %v1956 = vpop.f32.mrb[0].mxu0
      %v1957 = vadd.f32 %v533, %v1956
      %v1958 = vpop.f32.mrb[0].mxu0
      %v1959 = vadd.f32 %v537, %v1958
      %1960 = vmatprep.mubr.bf16.mxu0 0
      %1961 = vmatmul.mubr.bf16.gmra.mrb[0].mxu0 %v1106
      %v1962 = vpop.f32.mrb[0].mxu0
      %v1963 = vadd.f32 %v533, %v1962
      %v1964 = vpop.f32.mrb[0].mxu0
      %v1965 = vadd.f32 %v537, %v1964
      %v1966 = vpop.f32.mrb[0].mxu0
      %v1967 = vadd.f32 %v533, %v1966
      %v1968 = vpop.f32.mrb[0].mxu0
      %v1969 = vadd.f32 %v537, %v1968
      %1970 = vmatprep.mubr.bf16.mxu0 0
      %1971 = vmatmul.mubr.bf16.gmra.mrb[0].mxu0 %v1107
      %v1972 = vpop.f32.mrb[0].mxu0
      %v1973 = vadd.f32 %v533, %v1972
      %v1974 = vpop.f32.mrb[0].mxu0
      %v1975 = vadd.f32 %v537, %v1974
      %v1976 = vpop.f32.mrb[0].mxu0
      %v1977 = vadd.f32 %v533, %v1976
      %v1978 = vpop.f32.mrb[0].mxu0
      %v1979 = vadd.f32 %v537, %v1978
      %1980 = vmatprep.mubr.bf16.mxu0 0
      %1981 = vmatmul.mubr.bf16.gmra.mrb[0].mxu0 %v1108
      %v1982 = vpop.f32.mrb[0].mxu0
      %v1983 = vadd.f32 %v533, %v1982
      %v1984 = vpop.f32.mrb[0].mxu0
      %v1985 = vadd.f32 %v537, %v1984
      %v1986 = vpop.f32.mrb[0].mxu0
      %v1987 = vadd.f32 %v533, %v1986
      %v1988 = vpop.f32.mrb[0].mxu0
      %v1989 = vadd.f32 %v537, %v1988
      %1990 = vmatprep.mubr.bf16.mxu0 0
      %1991 = vmatmul.mubr.bf16.gmra.mrb[0].mxu0 %v1109
      %v1992 = vpop.f32.mrb[0].mxu0
      %v1993 = vadd.f32 %v533, %v1992
      %v1994 = vpop.f32.mrb[0].mxu0
      %v1995 = vadd.f32 %v537, %v1994
      %v1996 = vpop.f32.mrb[0].mxu0
      %v1997 = vadd.f32 %v533, %v1996
      %v1998 = vpop.f32.mrb[0].mxu0
      %v1999 = vadd.f32 %v537, %v1998
      %2000 = vmatprep.mubr.bf16.mxu0 0
      %2001 = vmatmul.mubr.bf16.gmra.mrb[0].mxu0 %v1110
      %v2002 = vpop.f32.mrb[0].mxu0
      %v2003 = vadd.f32 %v533, %v2002
      %v2004 = vpop.f32.mrb[0].mxu0
      %v2005 = vadd.f32 %v537, %v2004
      %v2006 = vpop.f32.mrb[0].mxu0
      %v2007 = vadd.f32 %v533, %v2006
      %v2008 = vpop.f32.mrb[0].mxu0
      %v2009 = vadd.f32 %v537, %v2008
      %2010 = vmatprep.mubr.bf16.mxu0 0
      %2011 = vmatmul.mubr.bf16.gmra.mrb[0].mxu0 %v1111
      %v2012 = vpop.f32.mrb[0].mxu0
      %v2013 = vadd.f32 %v533, %v2012
      %v2014 = vpop.f32.mrb[0].mxu0
      %v2015 = vadd.f32 %v537, %v2014
      %v2016 = vpop.f32.mrb[0].mxu0
      %v2017 = vadd.f32 %v533, %v2016
      %v2018 = vpop.f32.mrb[0].mxu0
      %v2019 = vadd.f32 %v537, %v2018
      %2020 = vmatprep.mubr.bf16.mxu0 0
      %2021 = vmatmul.mubr.bf16.gmra.mrb[0].mxu0 %v1112
      %v2022 = vpop.f32.mrb[0].mxu0
      %v2023 = vadd.f32 %v533, %v2022
      %v2024 = vpop.f32.mrb[0].mxu0
      %v2025 = vadd.f32 %v537, %v2024
      %v2026 = vpop.f32.mrb[0].mxu0
      %v2027 = vadd.f32 %v533, %v2026
      %v2028 = vpop.f32.mrb[0].mxu0
      %v2029 = vadd.f32 %v537, %v2028
      %2030 = vmatprep.mubr.bf16.mxu0 0
      %2031 = vmatmul.mubr.bf16.gmra.mrb[0].mxu0 %v1113
      %v2032 = vpop.f32.mrb[0].mxu0
      %v2033 = vadd.f32 %v533, %v2032
      %v2034 = vpop.f32.mrb[0].mxu0
      %v2035 = vadd.f32 %v537, %v2034
      %v2036 = vpop.f32.mrb[0].mxu0
      %v2037 = vadd.f32 %v533, %v2036
      %v2038 = vpop.f32.mrb[0].mxu0
      %v2039 = vadd.f32 %v537, %v2038
      %2040 = vmatprep.mubr.bf16.mxu0 0
      %2041 = vmatmul.mubr.bf16.gmra.mrb[0].mxu0 %v1114
      %v2042 = vpop.f32.mrb[0].mxu0
      %v2043 = vadd.f32 %v533, %v2042
      %v2044 = vpop.f32.mrb[0].mxu0
      %v2045 = vadd.f32 %v537, %v2044
      %v2046 = vpop.f32.mrb[0].mxu0
      %v2047 = vadd.f32 %v533, %v2046
      %v2048 = vpop.f32.mrb[0].mxu0
      %v2049 = vadd.f32 %v537, %v2048
      %2050 = vmatprep.mubr.bf16.mxu0 0
      %2051 = vmatmul.mubr.bf16.gmra.mrb[0].mxu0 %v1115
      %v2052 = vpop.f32.mrb[0].mxu0
      %v2053 = vadd.f32 %v533, %v2052
      %v2054 = vpop.f32.mrb[0].mxu0
      %v2055 = vadd.f32 %v537, %v2054
      %v2056 = vpop.f32.mrb[0].mxu0
      %v2057 = vadd.f32 %v533, %v2056
      %v2058 = vpop.f32.mrb[0].mxu0
      %v2059 = vadd.f32 %v537, %v2058
      %2060 = vmatprep.mubr.bf16.mxu0 0
      %2061 = vmatmul.mubr.bf16.gmra.mrb[0].mxu0 %v1116
      %v2062 = vpop.f32.mrb[0].mxu0
      %v2063 = vadd.f32 %v533, %v2062
      %v2064 = vpop.f32.mrb[0].mxu0
      %v2065 = vadd.f32 %v537, %v2064
      %v2066 = vpop.f32.mrb[0].mxu0
      %v2067 = vadd.f32 %v533, %v2066
      %v2068 = vpop.f32.mrb[0].mxu0
      %v2069 = vadd.f32 %v537, %v2068
      %2070 = vmatprep.mubr.bf16.mxu0 0
      %2071 = vmatmul.mubr.bf16.gmra.mrb[0].mxu0 %v1117
      %v2072 = vpop.f32.mrb[0].mxu0
      %v2073 = vadd.f32 %v533, %v2072
      %v2074 = vpop.f32.mrb[0].mxu0
      %v2075 = vadd.f32 %v537, %v2074
      %v2076 = vpop.f32.mrb[0].mxu0
      %v2077 = vadd.f32 %v533, %v2076
      %v2078 = vpop.f32.mrb[0].mxu0
      %v2079 = vadd.f32 %v537, %v2078
      %2080 = vmatprep.mubr.bf16.mxu0 0
      %2081 = vmatmul.mubr.bf16.gmra.mrb[0].mxu0 %v1118
      %v2082 = vpop.f32.mrb[0].mxu0
      %v2083 = vadd.f32 %v533, %v2082
      %v2084 = vpop.f32.mrb[0].mxu0
      %v2085 = vadd.f32 %v537, %v2084
      %v2086 = vpop.f32.mrb[0].mxu0
      %v2087 = vadd.f32 %v533, %v2086
      %v2088 = vpop.f32.mrb[0].mxu0
      %v2089 = vadd.f32 %v537, %v2088
      %2090 = vmatprep.mubr.bf16.mxu0 0
      %2091 = vmatmul.mubr.bf16.gmra.mrb[0].mxu0 %v1119
      %v2092 = vpop.f32.mrb[0].mxu0
      %v2093 = vadd.f32 %v533, %v2092
      %v2094 = vpop.f32.mrb[0].mxu0
      %v2095 = vadd.f32 %v537, %v2094
      %v2096 = vpop.f32.mrb[0].mxu0
      %v2097 = vadd.f32 %v533, %v2096
      %v2098 = vpop.f32.mrb[0].mxu0
      %v2099 = vadd.f32 %v537, %v2098
      %2100 = vmatprep.mubr.bf16.mxu0 0
      %2101 = vmatmul.mubr.bf16.gmra.mrb[0].mxu0 %v1120
      %v2102 = vpop.f32.mrb[0].mxu0
      %v2103 = vadd.f32 %v533, %v2102
      %v2104 = vpop.f32.mrb[0].mxu0
      %v2105 = vadd.f32 %v537, %v2104
      %v2106 = vpop.f32.mrb[0].mxu0
      %v2107 = vadd.f32 %v533, %v2106
      %v2108 = vpop.f32.mrb[0].mxu0
      %v2109 = vadd.f32 %v537, %v2108
      %2110 = vmatprep.mubr.bf16.mxu0 0
      %2111 = vmatmul.mubr.bf16.gmra.mrb[0].mxu0 %v1121
      %v2112 = vpop.f32.mrb[0].mxu0
      %v2113 = vadd.f32 %v533, %v2112
      %v2114 = vpop.f32.mrb[0].mxu0
      %v2115 = vadd.f32 %v537, %v2114
      %v2116 = vpop.f32.mrb[0].mxu0
      %v2117 = vadd.f32 %v533, %v2116
      %v2118 = vpop.f32.mrb[0].mxu0
      %v2119 = vadd.f32 %v537, %v2118
      %2120 = vmatprep.mubr.bf16.mxu0 0
      %2121 = vmatmul.mubr.bf16.gmra.mrb[0].mxu0 %v1122
      %v2122 = vpop.f32.mrb[0].mxu0
      %v2123 = vadd.f32 %v533, %v2122
      %v2124 = vpop.f32.mrb[0].mxu0
      %v2125 = vadd.f32 %v537, %v2124
      %v2126 = vpop.f32.mrb[0].mxu0
      %v2127 = vadd.f32 %v533, %v2126
      %v2128 = vpop.f32.mrb[0].mxu0
      %v2129 = vadd.f32 %v537, %v2128
      %2130 = vmatprep.mubr.bf16.mxu0 0
      %2131 = vmatmul.mubr.bf16.gmra.mrb[0].mxu0 %v1123
      %v2132 = vpop.f32.mrb[0].mxu0
      %v2133 = vadd.f32 %v533, %v2132
      %v2134 = vpop.f32.mrb[0].mxu0
      %v2135 = vadd.f32 %v537, %v2134
      %v2136 = vpop.f32.mrb[0].mxu0
      %v2137 = vadd.f32 %v533, %v2136
      %v2138 = vpop.f32.mrb[0].mxu0
      %v2139 = vadd.f32 %v537, %v2138
      %2140 = vmatprep.mubr.bf16.mxu0 0
      %2141 = vmatmul.mubr.bf16.gmra.mrb[0].mxu0 %v1124
      %v2142 = vpop.f32.mrb[0].mxu0
      %v2143 = vadd.f32 %v533, %v2142
      %v2144 = vpop.f32.mrb[0].mxu0
      %v2145 = vadd.f32 %v537, %v2144
      %v2146 = vpop.f32.mrb[0].mxu0
      %v2147 = vadd.f32 %v533, %v2146
      %v2148 = vpop.f32.mrb[0].mxu0
      %v2149 = vadd.f32 %v537, %v2148
      %2150 = vmatprep.mubr.bf16.mxu0 0
      %2151 = vmatmul.mubr.bf16.gmra.mrb[0].mxu0 %v1125
      %v2152 = vpop.f32.mrb[0].mxu0
      %v2153 = vadd.f32 %v533, %v2152
      %v2154 = vpop.f32.mrb[0].mxu0
      %v2155 = vadd.f32 %v537, %v2154
      %v2156 = vpop.f32.mrb[0].mxu0
      %v2157 = vadd.f32 %v533, %v2156
      %v2158 = vpop.f32.mrb[0].mxu0
      %v2159 = vadd.f32 %v537, %v2158
      %2160 = vmatprep.mubr.bf16.mxu0 0
      %2161 = vmatmul.mubr.bf16.gmra.mrb[0].mxu0 %v1126
      %v2162 = vpop.f32.mrb[0].mxu0
      %v2163 = vadd.f32 %v533, %v2162
      %v2164 = vpop.f32.mrb[0].mxu0
      %v2165 = vadd.f32 %v537, %v2164
      %v2166 = vpop.f32.mrb[0].mxu0
      %v2167 = vadd.f32 %v533, %v2166
      %v2168 = vpop.f32.mrb[0].mxu0
      %v2169 = vadd.f32 %v537, %v2168
      %2170 = vmatprep.mubr.bf16.mxu0 0
      %2171 = vmatmul.mubr.bf16.gmra.mrb[0].mxu0 %v1127
      %v2172 = vpop.f32.mrb[0].mxu0
      %v2173 = vadd.f32 %v533, %v2172
      %v2174 = vpop.f32.mrb[0].mxu0
      %v2175 = vadd.f32 %v537, %v2174
      %v2176 = vpop.f32.mrb[0].mxu0
      %v2177 = vadd.f32 %v533, %v2176
      %v2178 = vpop.f32.mrb[0].mxu0
      %v2179 = vadd.f32 %v537, %v2178
      %2180 = vmatprep.mubr.bf16.mxu0 0
      %2181 = vmatmul.mubr.bf16.gmra.mrb[0].mxu0 %v1128
      %v2182 = vpop.f32.mrb[0].mxu0
      %v2183 = vadd.f32 %v533, %v2182
      %v2184 = vpop.f32.mrb[0].mxu0
      %v2185 = vadd.f32 %v537, %v2184
      %v2186 = vpop.f32.mrb[0].mxu0
      %v2187 = vadd.f32 %v533, %v2186
      %v2188 = vpop.f32.mrb[0].mxu0
      %v2189 = vadd.f32 %v537, %v2188
      %2190 = vmatprep.mubr.bf16.mxu0 0
      %2191 = vmatmul.mubr.bf16.gmra.mrb[0].mxu0 %v1129
      %v2192 = vpop.f32.mrb[0].mxu0
      %v2193 = vadd.f32 %v533, %v2192
      %v2194 = vpop.f32.mrb[0].mxu0
      %v2195 = vadd.f32 %v537, %v2194
      %v2196 = vpop.f32.mrb[0].mxu0
      %v2197 = vadd.f32 %v533, %v2196
      %v2198 = vpop.f32.mrb[0].mxu0
      %v2199 = vadd.f32 %v537, %v2198
      %2200 = vmatprep.mubr.bf16.mxu0 0
      %2201 = vmatmul.mubr.bf16.gmra.mrb[0].mxu0 %v1130
      %v2202 = vpop.f32.mrb[0].mxu0
      %v2203 = vadd.f32 %v533, %v2202
      %v2204 = vpop.f32.mrb[0].mxu0
      %v2205 = vadd.f32 %v537, %v2204
      %v2206 = vpop.f32.mrb[0].mxu0
      %v2207 = vadd.f32 %v533, %v2206
      %v2208 = vpop.f32.mrb[0].mxu0
      %v2209 = vadd.f32 %v537, %v2208
      %2210 = vmatprep.mubr.bf16.mxu0 0
      %2211 = vmatmul.mubr.bf16.gmra.mrb[0].mxu0 %v1131
      %v2212 = vpop.f32.mrb[0].mxu0
      %v2213 = vadd.f32 %v533, %v2212
      %v2214 = vpop.f32.mrb[0].mxu0
      %v2215 = vadd.f32 %v537, %v2214
      %v2216 = vpop.f32.mrb[0].mxu0
      %v2217 = vadd.f32 %v533, %v2216
      %v2218 = vpop.f32.mrb[0].mxu0
      %v2219 = vadd.f32 %v537, %v2218
      %2220 = vmatprep.mubr.bf16.mxu0 0
      %2221 = vmatmul.mubr.bf16.gmra.mrb[0].mxu0 %v1132
      %v2222 = vpop.f32.mrb[0].mxu0
      %v2223 = vadd.f32 %v533, %v2222
      %v2224 = vpop.f32.mrb[0].mxu0
      %v2225 = vadd.f32 %v537, %v2224
      %v2226 = vpop.f32.mrb[0].mxu0
      %v2227 = vadd.f32 %v533, %v2226
      %v2228 = vpop.f32.mrb[0].mxu0
      %v2229 = vadd.f32 %v537, %v2228
      %2230 = vmatprep.mubr.bf16.mxu0 0
      %2231 = vmatmul.mubr.bf16.gmra.mrb[0].mxu0 %v1133
      %v2232 = vpop.f32.mrb[0].mxu0
      %v2233 = vadd.f32 %v533, %v2232
      %v2234 = vpop.f32.mrb[0].mxu0
      %v2235 = vadd.f32 %v537, %v2234
      %v2236 = vpop.f32.mrb[0].mxu0
      %v2237 = vadd.f32 %v533, %v2236
      %v2238 = vpop.f32.mrb[0].mxu0
      %v2239 = vadd.f32 %v537, %v2238
      %2240 = vmatprep.mubr.bf16.mxu0 0
      %2241 = vmatmul.mubr.bf16.gmra.mrb[0].mxu0 %v1134
      %v2242 = vpop.f32.mrb[0].mxu0
      %v2243 = vadd.f32 %v533, %v2242
      %v2244 = vpop.f32.mrb[0].mxu0
      %v2245 = vadd.f32 %v537, %v2244
      %v2246 = vpop.f32.mrb[0].mxu0
      %v2247 = vadd.f32 %v533, %v2246
      %v2248 = vpop.f32.mrb[0].mxu0
      %v2249 = vadd.f32 %v537, %v2248
      %2250 = vmatprep.mubr.bf16.mxu0 0
      %2251 = vmatmul.mubr.bf16.gmra.mrb[0].mxu0 %v1135
      %v2252 = vpop.f32.mrb[0].mxu0
      %v2253 = vadd.f32 %v533, %v2252
      %v2254 = vpop.f32.mrb[0].mxu0
      %v2255 = vadd.f32 %v537, %v2254
      %v2256 = vpop.f32.mrb[0].mxu0
      %v2257 = vadd.f32 %v533, %v2256
      %v2258 = vpop.f32.mrb[0].mxu0
      %v2259 = vadd.f32 %v537, %v2258
      %2260 = vmatprep.mubr.bf16.mxu0 0
      %2261 = vmatmul.mubr.bf16.gmra.mrb[0].mxu0 %v1136
      %v2262 = vpop.f32.mrb[0].mxu0
      %v2263 = vadd.f32 %v533, %v2262
      %v2264 = vpop.f32.mrb[0].mxu0
      %v2265 = vadd.f32 %v537, %v2264
      %v2266 = vpop.f32.mrb[0].mxu0
      %v2267 = vadd.f32 %v533, %v2266
      %v2268 = vpop.f32.mrb[0].mxu0
      %v2269 = vadd.f32 %v537, %v2268
      %2270 = vmatprep.mubr.bf16.mxu0 0
      %2271 = vmatmul.mubr.bf16.gmra.mrb[0].mxu0 %v1137
      %v2272 = vpop.f32.mrb[0].mxu0
      %v2273 = vadd.f32 %v533, %v2272
      %v2274 = vpop.f32.mrb[0].mxu0
      %v2275 = vadd.f32 %v537, %v2274
      %v2276 = vpop.f32.mrb[0].mxu0
      %v2277 = vadd.f32 %v533, %v2276
      %v2278 = vpop.f32.mrb[0].mxu0
      %v2279 = vadd.f32 %v537, %v2278
      %2280 = vmatprep.mubr.bf16.mxu0 0
      %2281 = vmatmul.mubr.bf16.gmra.mrb[0].mxu0 %v1138
      %v2282 = vpop.f32.mrb[0].mxu0
      %v2283 = vadd.f32 %v533, %v2282
      %v2284 = vpop.f32.mrb[0].mxu0
      %v2285 = vadd.f32 %v537, %v2284
      %v2286 = vpop.f32.mrb[0].mxu0
      %v2287 = vadd.f32 %v533, %v2286
      %v2288 = vpop.f32.mrb[0].mxu0
      %v2289 = vadd.f32 %v537, %v2288
      %2290 = vmatprep.mubr.bf16.mxu0 0
      %2291 = vmatmul.mubr.bf16.gmra.mrb[0].mxu0 %v1139
      %v2292 = vpop.f32.mrb[0].mxu0
      %v2293 = vadd.f32 %v533, %v2292
      %v2294 = vpop.f32.mrb[0].mxu0
      %v2295 = vadd.f32 %v537, %v2294
      %v2296 = vpop.f32.mrb[0].mxu0
      %v2297 = vadd.f32 %v533, %v2296
      %v2298 = vpop.f32.mrb[0].mxu0
      %v2299 = vadd.f32 %v537, %v2298
      %2300 = vmatprep.mubr.bf16.mxu0 0
      %2301 = vmatmul.mubr.bf16.gmra.mrb[0].mxu0 %v1140
      %v2302 = vpop.f32.mrb[0].mxu0
      %v2303 = vadd.f32 %v533, %v2302
      %v2304 = vpop.f32.mrb[0].mxu0
      %v2305 = vadd.f32 %v537, %v2304
      %v2306 = vpop.f32.mrb[0].mxu0
      %v2307 = vadd.f32 %v533, %v2306
      %v2308 = vpop.f32.mrb[0].mxu0
      %v2309 = vadd.f32 %v537, %v2308
      %2310 = vmatprep.mubr.bf16.mxu0 0
      %2311 = vmatmul.mubr.bf16.gmra.mrb[0].mxu0 %v1141
      %v2312 = vpop.f32.mrb[0].mxu0
      %v2313 = vadd.f32 %v533, %v2312
      %v2314 = vpop.f32.mrb[0].mxu0
      %v2315 = vadd.f32 %v537, %v2314
      %v2316 = vpop.f32.mrb[0].mxu0
      %v2317 = vadd.f32 %v533, %v2316
      %v2318 = vpop.f32.mrb[0].mxu0
      %v2319 = vadd.f32 %v537, %v2318
      %2320 = vmatprep.mubr.bf16.mxu0 0
      %2321 = vmatmul.mubr.bf16.gmra.mrb[0].mxu0 %v1142
      %v2322 = vpop.f32.mrb[0].mxu0
      %v2323 = vadd.f32 %v533, %v2322
      %v2324 = vpop.f32.mrb[0].mxu0
      %v2325 = vadd.f32 %v537, %v2324
      %v2326 = vpop.f32.mrb[0].mxu0
      %v2327 = vadd.f32 %v533, %v2326
      %v2328 = vpop.f32.mrb[0].mxu0
      %v2329 = vadd.f32 %v537, %v2328
      %2330 = vmatprep.mubr.bf16.mxu0 0
      %2331 = vmatmul.mubr.bf16.gmra.mrb[0].mxu0 %v1143
      %v2332 = vpop.f32.mrb[0].mxu0
      %v2333 = vadd.f32 %v533, %v2332
      %v2334 = vpop.f32.mrb[0].mxu0
      %v2335 = vadd.f32 %v537, %v2334
      %v2336 = vpop.f32.mrb[0].mxu0
      %v2337 = vadd.f32 %v533, %v2336
      %v2338 = vpop.f32.mrb[0].mxu0
      %v2339 = vadd.f32 %v537, %v2338
      %2340 = vmatprep.mubr.bf16.mxu0 0
      %2341 = vmatmul.mubr.bf16.gmra.mrb[0].mxu0 %v1144
      %v2342 = vpop.f32.mrb[0].mxu0
      %v2343 = vadd.f32 %v533, %v2342
      %v2344 = vpop.f32.mrb[0].mxu0
      %v2345 = vadd.f32 %v537, %v2344
      %v2346 = vpop.f32.mrb[0].mxu0
      %v2347 = vadd.f32 %v533, %v2346
      %v2348 = vpop.f32.mrb[0].mxu0
      %v2349 = vadd.f32 %v537, %v2348
      %2350 = vmatprep.mubr.bf16.mxu0 0
      %2351 = vmatmul.mubr.bf16.gmra.mrb[0].mxu0 %v1145
      %v2352 = vpop.f32.mrb[0].mxu0
      %v2353 = vadd.f32 %v533, %v2352
      %v2354 = vpop.f32.mrb[0].mxu0
      %v2355 = vadd.f32 %v537, %v2354
      %v2356 = vpop.f32.mrb[0].mxu0
      %v2357 = vadd.f32 %v533, %v2356
      %v2358 = vpop.f32.mrb[0].mxu0
      %v2359 = vadd.f32 %v537, %v2358
      %2360 = vmatprep.mubr.bf16.mxu0 0
      %2361 = vmatmul.mubr.bf16.gmra.mrb[0].mxu0 %v1146
      %v2362 = vpop.f32.mrb[0].mxu0
      %v2363 = vadd.f32 %v533, %v2362
      %v2364 = vpop.f32.mrb[0].mxu0
      %v2365 = vadd.f32 %v537, %v2364
      %v2366 = vpop.f32.mrb[0].mxu0
      %v2367 = vadd.f32 %v533, %v2366
      %v2368 = vpop.f32.mrb[0].mxu0
      %v2369 = vadd.f32 %v537, %v2368
      %2370 = vmatprep.mubr.bf16.mxu0 0
      %2371 = vmatmul.mubr.bf16.gmra.mrb[0].mxu0 %v1147
      %v2372 = vpop.f32.mrb[0].mxu0
      %v2373 = vadd.f32 %v533, %v2372
      %v2374 = vpop.f32.mrb[0].mxu0
      %v2375 = vadd.f32 %v537, %v2374
      %v2376 = vpop.f32.mrb[0].mxu0
      %v2377 = vadd.f32 %v533, %v2376
      %v2378 = vpop.f32.mrb[0].mxu0
      %v2379 = vadd.f32 %v537, %v2378
      %2380 = vmatprep.mubr.bf16.mxu0 0
      %2381 = vmatmul.mubr.bf16.gmra.mrb[0].mxu0 %v1148
      %v2382 = vpop.f32.mrb[0].mxu0
      %v2383 = vadd.f32 %v533, %v2382
      %v2384 = vpop.f32.mrb[0].mxu0
      %v2385 = vadd.f32 %v537, %v2384
      %v2386 = vpop.f32.mrb[0].mxu0
      %v2387 = vadd.f32 %v533, %v2386
      %v2388 = vpop.f32.mrb[0].mxu0
      %v2389 = vadd.f32 %v537, %v2388
      %2390 = vmatprep.mubr.bf16.mxu0 0
      %2391 = vmatmul.mubr.bf16.gmra.mrb[0].mxu0 %v1149
      %v2392 = vpop.f32.mrb[0].mxu0
      %v2393 = vadd.f32 %v533, %v2392
      %v2394 = vpop.f32.mrb[0].mxu0
      %v2395 = vadd.f32 %v537, %v2394
      %v2396 = vpop.f32.mrb[0].mxu0
      %v2397 = vadd.f32 %v533, %v2396
      %v2398 = vpop.f32.mrb[0].mxu0
      %v2399 = vadd.f32 %v537, %v2398
      %2400 = vmatprep.mubr.bf16.mxu0 0
      %2401 = vmatmul.mubr.bf16.gmra.mrb[0].mxu0 %v1150
      %v2402 = vpop.f32.mrb[0].mxu0
      %v2403 = vadd.f32 %v533, %v2402
      %v2404 = vpop.f32.mrb[0].mxu0
      %v2405 = vadd.f32 %v537, %v2404
      %v2406 = vpop.f32.mrb[0].mxu0
      %v2407 = vadd.f32 %v533, %v2406
      %v2408 = vpop.f32.mrb[0].mxu0
      %v2409 = vadd.f32 %v537, %v2408
      %2410 = vmatprep.mubr.bf16.mxu0 0
      %2411 = vmatmul.mubr.bf16.gmra.mrb[0].mxu0 %v1151
      %v2412 = vpop.f32.mrb[0].mxu0
      %v2413 = vadd.f32 %v533, %v2412
      %v2414 = vpop.f32.mrb[0].mxu0
      %v2415 = vadd.f32 %v537, %v2414
      %v2416 = vpop.f32.mrb[0].mxu0
      %v2417 = vadd.f32 %v533, %v2416
      %v2418 = vpop.f32.mrb[0].mxu0
      %v2419 = vadd.f32 %v537, %v2418
      %2420 = vmatprep.mubr.bf16.mxu0 0
      %2421 = vmatmul.mubr.bf16.gmra.mrb[0].mxu0 %v1152
      %v2422 = vpop.f32.mrb[0].mxu0
      %v2423 = vadd.f32 %v533, %v2422
      %v2424 = vpop.f32.mrb[0].mxu0
      %v2425 = vadd.f32 %v537, %v2424
      %v2426 = vpop.f32.mrb[0].mxu0
      %v2427 = vadd.f32 %v533, %v2426
      %v2428 = vpop.f32.mrb[0].mxu0
      %v2429 = vadd.f32 %v537, %v2428
      %2430 = vmatprep.mubr.bf16.mxu0 0
      %2431 = vmatmul.mubr.bf16.gmra.mrb[0].mxu0 %v1153
      %v2432 = vpop.f32.mrb[0].mxu0
      %v2433 = vadd.f32 %v533, %v2432
      %v2434 = vpop.f32.mrb[0].mxu0
      %v2435 = vadd.f32 %v537, %v2434
      %v2436 = vpop.f32.mrb[0].mxu0
      %v2437 = vadd.f32 %v533, %v2436
      %v2438 = vpop.f32.mrb[0].mxu0
      %v2439 = vadd.f32 %v537, %v2438
      %2440 = vmatprep.mubr.bf16.mxu0 0
      %2441 = vmatmul.mubr.bf16.gmra.mrb[0].mxu0 %v1154
      %v2442 = vpop.f32.mrb[0].mxu0
      %v2443 = vadd.f32 %v533, %v2442
      %v2444 = vpop.f32.mrb[0].mxu0
      %v2445 = vadd.f32 %v537, %v2444
      %v2446 = vpop.f32.mrb[0].mxu0
      %v2447 = vadd.f32 %v533, %v2446
      %v2448 = vpop.f32.mrb[0].mxu0
      %v2449 = vadd.f32 %v537, %v2448
      %2450 = vmatprep.mubr.bf16.mxu0 0
      %2451 = vmatmul.mubr.bf16.gmra.mrb[0].mxu0 %v1155
      %v2452 = vpop.f32.mrb[0].mxu0
      %v2453 = vadd.f32 %v533, %v2452
      %v2454 = vpop.f32.mrb[0].mxu0
      %v2455 = vadd.f32 %v537, %v2454
      %v2456 = vpop.f32.mrb[0].mxu0
      %v2457 = vadd.f32 %v533, %v2456
      %v2458 = vpop.f32.mrb[0].mxu0
      %v2459 = vadd.f32 %v537, %v2458
      %2460 = vmatprep.mubr.bf16.mxu0 0
      %2461 = vmatmul.mubr.bf16.gmra.mrb[0].mxu0 %v1156
      %v2462 = vpop.f32.mrb[0].mxu0
      %v2463 = vadd.f32 %v533, %v2462
      %v2464 = vpop.f32.mrb[0].mxu0
      %v2465 = vadd.f32 %v537, %v2464
      %v2466 = vpop.f32.mrb[0].mxu0
      %v2467 = vadd.f32 %v533, %v2466
      %v2468 = vpop.f32.mrb[0].mxu0
      %v2469 = vadd.f32 %v537, %v2468
      %2470 = vmatprep.mubr.bf16.mxu0 0
      %2471 = vmatmul.mubr.bf16.gmra.mrb[0].mxu0 %v1157
      %v2472 = vpop.f32.mrb[0].mxu0
      %v2473 = vadd.f32 %v533, %v2472
      %v2474 = vpop.f32.mrb[0].mxu0
      %v2475 = vadd.f32 %v537, %v2474
      %v2476 = vpop.f32.mrb[0].mxu0
      %v2477 = vadd.f32 %v533, %v2476
      %v2478 = vpop.f32.mrb[0].mxu0
      %v2479 = vadd.f32 %v537, %v2478
      %2480 = vmatprep.mubr.bf16.mxu0 0
      %2481 = vmatmul.mubr.bf16.gmra.mrb[0].mxu0 %v1158
      %v2482 = vpop.f32.mrb[0].mxu0
      %v2483 = vadd.f32 %v533, %v2482
      %v2484 = vpop.f32.mrb[0].mxu0
      %v2485 = vadd.f32 %v537, %v2484
      %v2486 = vpop.f32.mrb[0].mxu0
      %v2487 = vadd.f32 %v533, %v2486
      %v2488 = vpop.f32.mrb[0].mxu0
      %v2489 = vadd.f32 %v537, %v2488
      %2490 = vmatprep.mubr.bf16.mxu0 0
      %2491 = vmatmul.mubr.bf16.gmra.mrb[0].mxu0 %v1159
      %v2492 = vpop.f32.mrb[0].mxu0
      %v2493 = vadd.f32 %v533, %v2492
      %v2494 = vpop.f32.mrb[0].mxu0
      %v2495 = vadd.f32 %v537, %v2494
      %v2496 = vpop.f32.mrb[0].mxu0
      %v2497 = vadd.f32 %v533, %v2496
      %v2498 = vpop.f32.mrb[0].mxu0
      %v2499 = vadd.f32 %v537, %v2498
      %2500 = vmatprep.mubr.bf16.mxu0 0
      %2501 = vmatmul.mubr.bf16.gmra.mrb[0].mxu0 %v1160
      %v2502 = vpop.f32.mrb[0].mxu0
      %v2503 = vadd.f32 %v533, %v2502
      %v2504 = vpop.f32.mrb[0].mxu0
      %v2505 = vadd.f32 %v537, %v2504
      %v2506 = vpop.f32.mrb[0].mxu0
      %v2507 = vadd.f32 %v533, %v2506
      %v2508 = vpop.f32.mrb[0].mxu0
      %v2509 = vadd.f32 %v537, %v2508
      %2510 = vmatprep.mubr.bf16.mxu0 0
      %2511 = vmatmul.mubr.bf16.gmra.mrb[0].mxu0 %v1161
      %v2512 = vpop.f32.mrb[0].mxu0
      %v2513 = vadd.f32 %v533, %v2512
      %v2514 = vpop.f32.mrb[0].mxu0
      %v2515 = vadd.f32 %v537, %v2514
      %v2516 = vpop.f32.mrb[0].mxu0
      %v2517 = vadd.f32 %v533, %v2516
      %v2518 = vpop.f32.mrb[0].mxu0
      %v2519 = vadd.f32 %v537, %v2518
      %2520 = vmatprep.mubr.bf16.mxu0 0
      %2521 = vmatmul.mubr.bf16.gmra.mrb[0].mxu0 %v1162
      %v2522 = vpop.f32.mrb[0].mxu0
      %v2523 = vadd.f32 %v533, %v2522
      %v2524 = vpop.f32.mrb[0].mxu0
      %v2525 = vadd.f32 %v537, %v2524
      %v2526 = vpop.f32.mrb[0].mxu0
      %v2527 = vadd.f32 %v533, %v2526
      %v2528 = vpop.f32.mrb[0].mxu0
      %v2529 = vadd.f32 %v537, %v2528
      %2530 = vmatprep.mubr.bf16.mxu0 0
      %2531 = vmatmul.mubr.bf16.gmra.mrb[0].mxu0 %v1163
      %v2532 = vpop.f32.mrb[0].mxu0
      %v2533 = vadd.f32 %v533, %v2532
      %v2534 = vpop.f32.mrb[0].mxu0
      %v2535 = vadd.f32 %v537, %v2534
      %v2536 = vpop.f32.mrb[0].mxu0
      %v2537 = vadd.f32 %v533, %v2536
      %v2538 = vpop.f32.mrb[0].mxu0
      %v2539 = vadd.f32 %v537, %v2538
      %2540 = vmatprep.mubr.bf16.mxu0 0
      %2541 = vmatmul.mubr.bf16.gmra.mrb[0].mxu0 %v1164
      %v2542 = vpop.f32.mrb[0].mxu0
      %v2543 = vadd.f32 %v533, %v2542
      %v2544 = vpop.f32.mrb[0].mxu0
      %v2545 = vadd.f32 %v537, %v2544
      %v2546 = vpop.f32.mrb[0].mxu0
      %v2547 = vadd.f32 %v533, %v2546
      %v2548 = vpop.f32.mrb[0].mxu0
      %v2549 = vadd.f32 %v537, %v2548
      %2550 = vmatprep.mubr.bf16.mxu0 0
      %2551 = vmatmul.mubr.bf16.gmra.mrb[0].mxu0 %v1165
      %v2552 = vpop.f32.mrb[0].mxu0
      %v2553 = vadd.f32 %v533, %v2552
      %v2554 = vpop.f32.mrb[0].mxu0
      %v2555 = vadd.f32 %v537, %v2554
      %v2556 = vpop.f32.mrb[0].mxu0
      %v2557 = vadd.f32 %v533, %v2556
      %v2558 = vpop.f32.mrb[0].mxu0
      %v2559 = vadd.f32 %v537, %v2558
      %2560 = vmatprep.mubr.bf16.mxu0 0
      %2561 = vmatmul.mubr.bf16.gmra.mrb[0].mxu0 %v1166
      %v2562 = vpop.f32.mrb[0].mxu0
      %v2563 = vadd.f32 %v533, %v2562
      %v2564 = vpop.f32.mrb[0].mxu0
      %v2565 = vadd.f32 %v537, %v2564
      %v2566 = vpop.f32.mrb[0].mxu0
      %v2567 = vadd.f32 %v533, %v2566
      %v2568 = vpop.f32.mrb[0].mxu0
      %v2569 = vadd.f32 %v537, %v2568
      %2570 = vmatprep.mubr.bf16.mxu0 0
      %2571 = vmatmul.mubr.bf16.gmra.mrb[0].mxu0 %v1167
      %v2572 = vpop.f32.mrb[0].mxu0
      %v2573 = vadd.f32 %v533, %v2572
      %v2574 = vpop.f32.mrb[0].mxu0
      %v2575 = vadd.f32 %v537, %v2574
      %v2576 = vpop.f32.mrb[0].mxu0
      %v2577 = vadd.f32 %v533, %v2576
      %v2578 = vpop.f32.mrb[0].mxu0
      %v2579 = vadd.f32 %v537, %v2578
      %2580 = vmatprep.mubr.bf16.mxu0 0
      %2581 = vmatmul.mubr.bf16.gmra.mrb[0].mxu0 %v1168
      %v2582 = vpop.f32.mrb[0].mxu0
      %v2583 = vadd.f32 %v533, %v2582
      %v2584 = vpop.f32.mrb[0].mxu0
      %v2585 = vadd.f32 %v537, %v2584
      %v2586 = vpop.f32.mrb[0].mxu0
      %v2587 = vadd.f32 %v533, %v2586
      %v2588 = vpop.f32.mrb[0].mxu0
      %v2589 = vadd.f32 %v537, %v2588
      %2590 = vmatprep.mubr.bf16.mxu0 0
      %2591 = vmatmul.mubr.bf16.gmra.mrb[0].mxu0 %v1169
      %v2592 = vpop.f32.mrb[0].mxu0
      %v2593 = vadd.f32 %v533, %v2592
      %v2594 = vpop.f32.mrb[0].mxu0
      %v2595 = vadd.f32 %v537, %v2594
      %v2596 = vpop.f32.mrb[0].mxu0
      %v2597 = vadd.f32 %v533, %v2596
      %v2598 = vpop.f32.mrb[0].mxu0
      %v2599 = vadd.f32 %v537, %v2598
      %2600 = vmatprep.mubr.bf16.mxu0 0
      %2601 = vmatmul.mubr.bf16.gmra.mrb[0].mxu0 %v1170
      %v2602 = vpop.f32.mrb[0].mxu0
      %v2603 = vadd.f32 %v533, %v2602
      %v2604 = vpop.f32.mrb[0].mxu0
      %v2605 = vadd.f32 %v537, %v2604
      %v2606 = vpop.f32.mrb[0].mxu0
      %v2607 = vadd.f32 %v533, %v2606
      %v2608 = vpop.f32.mrb[0].mxu0
      %v2609 = vadd.f32 %v537, %v2608
      %2610 = vmatprep.mubr.bf16.mxu0 0
      %2611 = vmatmul.mubr.bf16.gmra.mrb[0].mxu0 %v1171
      %v2612 = vpop.f32.mrb[0].mxu0
      %v2613 = vadd.f32 %v533, %v2612
      %v2614 = vpop.f32.mrb[0].mxu0
      %v2615 = vadd.f32 %v537, %v2614
      %v2616 = vpop.f32.mrb[0].mxu0
      %v2617 = vadd.f32 %v533, %v2616
      %v2618 = vpop.f32.mrb[0].mxu0
      %v2619 = vadd.f32 %v537, %v2618
      %2620 = vmatprep.mubr.bf16.mxu0 0
      %2621 = vmatmul.mubr.bf16.gmra.mrb[0].mxu0 %v1172
      %v2622 = vpop.f32.mrb[0].mxu0
      %v2623 = vadd.f32 %v533, %v2622
      %v2624 = vpop.f32.mrb[0].mxu0
      %v2625 = vadd.f32 %v537, %v2624
      %v2626 = vpop.f32.mrb[0].mxu0
      %v2627 = vadd.f32 %v533, %v2626
      %v2628 = vpop.f32.mrb[0].mxu0
      %v2629 = vadd.f32 %v537, %v2628
      %2630 = vmatprep.mubr.bf16.mxu0 0
      %2631 = vmatmul.mubr.bf16.gmra.mrb[0].mxu0 %v1173
      %v2632 = vpop.f32.mrb[0].mxu0
      %v2633 = vadd.f32 %v533, %v2632
      %v2634 = vpop.f32.mrb[0].mxu0
      %v2635 = vadd.f32 %v537, %v2634
      %v2636 = vpop.f32.mrb[0].mxu0
      %v2637 = vadd.f32 %v533, %v2636
      %v2638 = vpop.f32.mrb[0].mxu0
      %v2639 = vadd.f32 %v537, %v2638
      %2640 = vmatprep.mubr.bf16.mxu0 0
      %2641 = vmatmul.mubr.bf16.gmra.mrb[0].mxu0 %v1174
      %v2642 = vpop.f32.mrb[0].mxu0
      %v2643 = vadd.f32 %v533, %v2642
      %v2644 = vpop.f32.mrb[0].mxu0
      %v2645 = vadd.f32 %v537, %v2644
      %v2646 = vpop.f32.mrb[0].mxu0
      %v2647 = vadd.f32 %v533, %v2646
      %v2648 = vpop.f32.mrb[0].mxu0
      %v2649 = vadd.f32 %v537, %v2648
      %2650 = vmatprep.mubr.bf16.mxu0 0
      %2651 = vmatmul.mubr.bf16.gmra.mrb[0].mxu0 %v1175
      %v2652 = vpop.f32.mrb[0].mxu0
      %v2653 = vadd.f32 %v533, %v2652
      %v2654 = vpop.f32.mrb[0].mxu0
      %v2655 = vadd.f32 %v537, %v2654
      %v2656 = vpop.f32.mrb[0].mxu0
      %v2657 = vadd.f32 %v533, %v2656
      %v2658 = vpop.f32.mrb[0].mxu0
      %v2659 = vadd.f32 %v537, %v2658
      %2660 = vmatprep.mubr.bf16.mxu0 0
      %2661 = vmatmul.mubr.bf16.gmra.mrb[0].mxu0 %v1176
      %v2662 = vpop.f32.mrb[0].mxu0
      %v2663 = vadd.f32 %v533, %v2662
      %v2664 = vpop.f32.mrb[0].mxu0
      %v2665 = vadd.f32 %v537, %v2664
      %v2666 = vpop.f32.mrb[0].mxu0
      %v2667 = vadd.f32 %v533, %v2666
      %v2668 = vpop.f32.mrb[0].mxu0
      %v2669 = vadd.f32 %v537, %v2668
      %2670 = vmatprep.mubr.bf16.mxu0 0
      %2671 = vmatmul.mubr.bf16.gmra.mrb[0].mxu0 %v1177
      %v2672 = vpop.f32.mrb[0].mxu0
      %v2673 = vadd.f32 %v533, %v2672
      %v2674 = vpop.f32.mrb[0].mxu0
      %v2675 = vadd.f32 %v537, %v2674
      %v2676 = vpop.f32.mrb[0].mxu0
      %v2677 = vadd.f32 %v533, %v2676
      %v2678 = vpop.f32.mrb[0].mxu0
      %v2679 = vadd.f32 %v537, %v2678
      %2680 = vmatprep.mubr.bf16.mxu0 0
      %2681 = vmatmul.mubr.bf16.gmra.mrb[0].mxu0 %v1178
      %v2682 = vpop.f32.mrb[0].mxu0
      %v2683 = vadd.f32 %v533, %v2682
      %v2684 = vpop.f32.mrb[0].mxu0
      %v2685 = vadd.f32 %v537, %v2684
      %v2686 = vpop.f32.mrb[0].mxu0
      %v2687 = vadd.f32 %v533, %v2686
      %v2688 = vpop.f32.mrb[0].mxu0
      %v2689 = vadd.f32 %v537, %v2688
      %2690 = vmatprep.mubr.bf16.mxu0 0
      %2691 = vmatmul.mubr.bf16.gmra.mrb[0].mxu0 %v1179
      %v2692 = vpop.f32.mrb[0].mxu0
      %v2693 = vadd.f32 %v533, %v2692
      %v2694 = vpop.f32.mrb[0].mxu0
      %v2695 = vadd.f32 %v537, %v2694
      %v2696 = vpop.f32.mrb[0].mxu0
      %v2697 = vadd.f32 %v533, %v2696
      %v2698 = vpop.f32.mrb[0].mxu0
      %v2699 = vadd.f32 %v537, %v2698
      %2700 = vdwg.mxu0
      %v2701 = vmul.f32 %v1423, 0.5
      %v2702 = vmul.f32 %v1425, 0.5
      %v2703 = vmul.f32 %v1427, 0.5
      %v2704 = vmul.f32 %v1429, 0.5
      %v2705 = vmul.f32 %v1433, 0.5
      %v2706 = vmul.f32 %v1435, 0.5
      %v2707 = vmul.f32 %v1437, 0.5
      %v2708 = vmul.f32 %v1439, 0.5
      %v2709 = vmul.f32 %v1443, 0.5
      %v2710 = vmul.f32 %v1445, 0.5
      %v2711 = vmul.f32 %v1447, 0.5
      %v2712 = vmul.f32 %v1449, 0.5
      %v2713 = vmul.f32 %v1453, 0.5
      %v2714 = vmul.f32 %v1455, 0.5
      %v2715 = vmul.f32 %v1457, 0.5
      %v2716 = vmul.f32 %v1459, 0.5
      %v2717 = vmul.f32 %v1463, 0.5
      %v2718 = vmul.f32 %v1465, 0.5
      %v2719 = vmul.f32 %v1467, 0.5
      %v2720 = vmul.f32 %v1469, 0.5
      %v2721 = vmul.f32 %v1473, 0.5
      %v2722 = vmul.f32 %v1475, 0.5
      %v2723 = vmul.f32 %v1477, 0.5
      %v2724 = vmul.f32 %v1479, 0.5
      %v2725 = vmul.f32 %v1483, 0.5
      %v2726 = vmul.f32 %v1485, 0.5
      %v2727 = vmul.f32 %v1487, 0.5
      %v2728 = vmul.f32 %v1489, 0.5
      %v2729 = vmul.f32 %v1493, 0.5
      %v2730 = vmul.f32 %v1495, 0.5
      %v2731 = vmul.f32 %v1497, 0.5
      %v2732 = vmul.f32 %v1499, 0.5
      %v2733 = vmul.f32 %v1503, 0.5
      %v2734 = vmul.f32 %v1505, 0.5
      %v2735 = vmul.f32 %v1507, 0.5
      %v2736 = vmul.f32 %v1509, 0.5
      %v2737 = vmul.f32 %v1513, 0.5
      %v2738 = vmul.f32 %v1515, 0.5
      %v2739 = vmul.f32 %v1517, 0.5
      %v2740 = vmul.f32 %v1519, 0.5
      %v2741 = vmul.f32 %v1523, 0.5
      %v2742 = vmul.f32 %v1525, 0.5
      %v2743 = vmul.f32 %v1527, 0.5
      %v2744 = vmul.f32 %v1529, 0.5
      %v2745 = vmul.f32 %v1533, 0.5
      %v2746 = vmul.f32 %v1535, 0.5
      %v2747 = vmul.f32 %v1537, 0.5
      %v2748 = vmul.f32 %v1539, 0.5
      %v2749 = vmul.f32 %v1543, 0.5
      %v2750 = vmul.f32 %v1545, 0.5
      %v2751 = vmul.f32 %v1547, 0.5
      %v2752 = vmul.f32 %v1549, 0.5
      %v2753 = vmul.f32 %v1553, 0.5
      %v2754 = vmul.f32 %v1555, 0.5
      %v2755 = vmul.f32 %v1557, 0.5
      %v2756 = vmul.f32 %v1559, 0.5
      %v2757 = vmul.f32 %v1563, 0.5
      %v2758 = vmul.f32 %v1565, 0.5
      %v2759 = vmul.f32 %v1567, 0.5
      %v2760 = vmul.f32 %v1569, 0.5
      %v2761 = vmul.f32 %v1573, 0.5
      %v2762 = vmul.f32 %v1575, 0.5
      %v2763 = vmul.f32 %v1577, 0.5
      %v2764 = vmul.f32 %v1579, 0.5
      %v2765 = vmul.f32 %v1583, 0.5
      %v2766 = vmul.f32 %v1585, 0.5
      %v2767 = vmul.f32 %v1587, 0.5
      %v2768 = vmul.f32 %v1589, 0.5
      %v2769 = vmul.f32 %v1593, 0.5
      %v2770 = vmul.f32 %v1595, 0.5
      %v2771 = vmul.f32 %v1597, 0.5
      %v2772 = vmul.f32 %v1599, 0.5
      %v2773 = vmul.f32 %v1603, 0.5
      %v2774 = vmul.f32 %v1605, 0.5
      %v2775 = vmul.f32 %v1607, 0.5
      %v2776 = vmul.f32 %v1609, 0.5
      %v2777 = vmul.f32 %v1613, 0.5
      %v2778 = vmul.f32 %v1615, 0.5
      %v2779 = vmul.f32 %v1617, 0.5
      %v2780 = vmul.f32 %v1619, 0.5
      %v2781 = vmul.f32 %v1623, 0.5
      %v2782 = vmul.f32 %v1625, 0.5
      %v2783 = vmul.f32 %v1627, 0.5
      %v2784 = vmul.f32 %v1629, 0.5
      %v2785 = vmul.f32 %v1633, 0.5
      %v2786 = vmul.f32 %v1635, 0.5
      %v2787 = vmul.f32 %v1637, 0.5
      %v2788 = vmul.f32 %v1639, 0.5
      %v2789 = vmul.f32 %v1643, 0.5
      %v2790 = vmul.f32 %v1645, 0.5
      %v2791 = vmul.f32 %v1647, 0.5
      %v2792 = vmul.f32 %v1649, 0.5
      %v2793 = vmul.f32 %v1653, 0.5
      %v2794 = vmul.f32 %v1655, 0.5
      %v2795 = vmul.f32 %v1657, 0.5
      %v2796 = vmul.f32 %v1659, 0.5
      %v2797 = vmul.f32 %v1663, 0.5
      %v2798 = vmul.f32 %v1665, 0.5
      %v2799 = vmul.f32 %v1667, 0.5
      %v2800 = vmul.f32 %v1669, 0.5
      %v2801 = vmul.f32 %v1673, 0.5
      %v2802 = vmul.f32 %v1675, 0.5
      %v2803 = vmul.f32 %v1677, 0.5
      %v2804 = vmul.f32 %v1679, 0.5
      %v2805 = vmul.f32 %v1683, 0.5
      %v2806 = vmul.f32 %v1685, 0.5
      %v2807 = vmul.f32 %v1687, 0.5
      %v2808 = vmul.f32 %v1689, 0.5
      %v2809 = vmul.f32 %v1693, 0.5
      %v2810 = vmul.f32 %v1695, 0.5
      %v2811 = vmul.f32 %v1697, 0.5
      %v2812 = vmul.f32 %v1699, 0.5
      %v2813 = vmul.f32 %v1703, 0.5
      %v2814 = vmul.f32 %v1705, 0.5
      %v2815 = vmul.f32 %v1707, 0.5
      %v2816 = vmul.f32 %v1709, 0.5
      %v2817 = vmul.f32 %v1713, 0.5
      %v2818 = vmul.f32 %v1715, 0.5
      %v2819 = vmul.f32 %v1717, 0.5
      %v2820 = vmul.f32 %v1719, 0.5
      %v2821 = vmul.f32 %v1723, 0.5
      %v2822 = vmul.f32 %v1725, 0.5
      %v2823 = vmul.f32 %v1727, 0.5
      %v2824 = vmul.f32 %v1729, 0.5
      %v2825 = vmul.f32 %v1733, 0.5
      %v2826 = vmul.f32 %v1735, 0.5
      %v2827 = vmul.f32 %v1737, 0.5
      %v2828 = vmul.f32 %v1739, 0.5
      %v2829 = vmul.f32 %v1743, 0.5
      %v2830 = vmul.f32 %v1745, 0.5
      %v2831 = vmul.f32 %v1747, 0.5
      %v2832 = vmul.f32 %v1749, 0.5
      %v2833 = vmul.f32 %v1753, 0.5
      %v2834 = vmul.f32 %v1755, 0.5
      %v2835 = vmul.f32 %v1757, 0.5
      %v2836 = vmul.f32 %v1759, 0.5
      %v2837 = vmul.f32 %v1763, 0.5
      %v2838 = vmul.f32 %v1765, 0.5
      %v2839 = vmul.f32 %v1767, 0.5
      %v2840 = vmul.f32 %v1769, 0.5
      %v2841 = vmul.f32 %v1773, 0.5
      %v2842 = vmul.f32 %v1775, 0.5
      %v2843 = vmul.f32 %v1777, 0.5
      %v2844 = vmul.f32 %v1779, 0.5
      %v2845 = vmul.f32 %v1783, 0.5
      %v2846 = vmul.f32 %v1785, 0.5
      %v2847 = vmul.f32 %v1787, 0.5
      %v2848 = vmul.f32 %v1789, 0.5
      %v2849 = vmul.f32 %v1793, 0.5
      %v2850 = vmul.f32 %v1795, 0.5
      %v2851 = vmul.f32 %v1797, 0.5
      %v2852 = vmul.f32 %v1799, 0.5
      %v2853 = vmul.f32 %v1803, 0.5
      %v2854 = vmul.f32 %v1805, 0.5
      %v2855 = vmul.f32 %v1807, 0.5
      %v2856 = vmul.f32 %v1809, 0.5
      %v2857 = vmul.f32 %v1813, 0.5
      %v2858 = vmul.f32 %v1815, 0.5
      %v2859 = vmul.f32 %v1817, 0.5
      %v2860 = vmul.f32 %v1819, 0.5
      %v2861 = vmul.f32 %v1823, 0.5
      %v2862 = vmul.f32 %v1825, 0.5
      %v2863 = vmul.f32 %v1827, 0.5
      %v2864 = vmul.f32 %v1829, 0.5
      %v2865 = vmul.f32 %v1833, 0.5
      %v2866 = vmul.f32 %v1835, 0.5
      %v2867 = vmul.f32 %v1837, 0.5
      %v2868 = vmul.f32 %v1839, 0.5
      %v2869 = vmul.f32 %v1843, 0.5
      %v2870 = vmul.f32 %v1845, 0.5
      %v2871 = vmul.f32 %v1847, 0.5
      %v2872 = vmul.f32 %v1849, 0.5
      %v2873 = vmul.f32 %v1853, 0.5
      %v2874 = vmul.f32 %v1855, 0.5
      %v2875 = vmul.f32 %v1857, 0.5
      %v2876 = vmul.f32 %v1859, 0.5
      %v2877 = vmul.f32 %v1863, 0.5
      %v2878 = vmul.f32 %v1865, 0.5
      %v2879 = vmul.f32 %v1867, 0.5
      %v2880 = vmul.f32 %v1869, 0.5
      %v2881 = vmul.f32 %v1873, 0.5
      %v2882 = vmul.f32 %v1875, 0.5
      %v2883 = vmul.f32 %v1877, 0.5
      %v2884 = vmul.f32 %v1879, 0.5
      %v2885 = vmul.f32 %v1883, 0.5
      %v2886 = vmul.f32 %v1885, 0.5
      %v2887 = vmul.f32 %v1887, 0.5
      %v2888 = vmul.f32 %v1889, 0.5
      %v2889 = vmul.f32 %v1893, 0.5
      %v2890 = vmul.f32 %v1895, 0.5
      %v2891 = vmul.f32 %v1897, 0.5
      %v2892 = vmul.f32 %v1899, 0.5
      %v2893 = vmul.f32 %v1903, 0.5
      %v2894 = vmul.f32 %v1905, 0.5
      %v2895 = vmul.f32 %v1907, 0.5
      %v2896 = vmul.f32 %v1909, 0.5
      %v2897 = vmul.f32 %v1913, 0.5
      %v2898 = vmul.f32 %v1915, 0.5
      %v2899 = vmul.f32 %v1917, 0.5
      %v2900 = vmul.f32 %v1919, 0.5
      %v2901 = vmul.f32 %v1923, 0.5
      %v2902 = vmul.f32 %v1925, 0.5
      %v2903 = vmul.f32 %v1927, 0.5
      %v2904 = vmul.f32 %v1929, 0.5
      %v2905 = vmul.f32 %v1933, 0.5
      %v2906 = vmul.f32 %v1935, 0.5
      %v2907 = vmul.f32 %v1937, 0.5
      %v2908 = vmul.f32 %v1939, 0.5
      %v2909 = vmul.f32 %v1943, 0.5
      %v2910 = vmul.f32 %v1945, 0.5
      %v2911 = vmul.f32 %v1947, 0.5
      %v2912 = vmul.f32 %v1949, 0.5
      %v2913 = vmul.f32 %v1953, 0.5
      %v2914 = vmul.f32 %v1955, 0.5
      %v2915 = vmul.f32 %v1957, 0.5
      %v2916 = vmul.f32 %v1959, 0.5
      %v2917 = vmul.f32 %v1963, 0.5
      %v2918 = vmul.f32 %v1965, 0.5
      %v2919 = vmul.f32 %v1967, 0.5
      %v2920 = vmul.f32 %v1969, 0.5
      %v2921 = vmul.f32 %v1973, 0.5
      %v2922 = vmul.f32 %v1975, 0.5
      %v2923 = vmul.f32 %v1977, 0.5
      %v2924 = vmul.f32 %v1979, 0.5
      %v2925 = vmul.f32 %v1983, 0.5
      %v2926 = vmul.f32 %v1985, 0.5
      %v2927 = vmul.f32 %v1987, 0.5
      %v2928 = vmul.f32 %v1989, 0.5
      %v2929 = vmul.f32 %v1993, 0.5
      %v2930 = vmul.f32 %v1995, 0.5
      %v2931 = vmul.f32 %v1997, 0.5
      %v2932 = vmul.f32 %v1999, 0.5
      %v2933 = vmul.f32 %v2003, 0.5
      %v2934 = vmul.f32 %v2005, 0.5
      %v2935 = vmul.f32 %v2007, 0.5
      %v2936 = vmul.f32 %v2009, 0.5
      %v2937 = vmul.f32 %v2013, 0.5
      %v2938 = vmul.f32 %v2015, 0.5
      %v2939 = vmul.f32 %v2017, 0.5
      %v2940 = vmul.f32 %v2019, 0.5
      %v2941 = vmul.f32 %v2023, 0.5
      %v2942 = vmul.f32 %v2025, 0.5
      %v2943 = vmul.f32 %v2027, 0.5
      %v2944 = vmul.f32 %v2029, 0.5
      %v2945 = vmul.f32 %v2033, 0.5
      %v2946 = vmul.f32 %v2035, 0.5
      %v2947 = vmul.f32 %v2037, 0.5
      %v2948 = vmul.f32 %v2039, 0.5
      %v2949 = vmul.f32 %v2043, 0.5
      %v2950 = vmul.f32 %v2045, 0.5
      %v2951 = vmul.f32 %v2047, 0.5
      %v2952 = vmul.f32 %v2049, 0.5
      %v2953 = vmul.f32 %v2053, 0.5
      %v2954 = vmul.f32 %v2055, 0.5
      %v2955 = vmul.f32 %v2057, 0.5
      %v2956 = vmul.f32 %v2059, 0.5
      %v2957 = vmul.f32 %v2063, 0.5
      %v2958 = vmul.f32 %v2065, 0.5
      %v2959 = vmul.f32 %v2067, 0.5
      %v2960 = vmul.f32 %v2069, 0.5
      %v2961 = vmul.f32 %v2073, 0.5
      %v2962 = vmul.f32 %v2075, 0.5
      %v2963 = vmul.f32 %v2077, 0.5
      %v2964 = vmul.f32 %v2079, 0.5
      %v2965 = vmul.f32 %v2083, 0.5
      %v2966 = vmul.f32 %v2085, 0.5
      %v2967 = vmul.f32 %v2087, 0.5
      %v2968 = vmul.f32 %v2089, 0.5
      %v2969 = vmul.f32 %v2093, 0.5
      %v2970 = vmul.f32 %v2095, 0.5
      %v2971 = vmul.f32 %v2097, 0.5
      %v2972 = vmul.f32 %v2099, 0.5
      %v2973 = vmul.f32 %v2103, 0.5
      %v2974 = vmul.f32 %v2105, 0.5
      %v2975 = vmul.f32 %v2107, 0.5
      %v2976 = vmul.f32 %v2109, 0.5
      %v2977 = vmul.f32 %v2113, 0.5
      %v2978 = vmul.f32 %v2115, 0.5
      %v2979 = vmul.f32 %v2117, 0.5
      %v2980 = vmul.f32 %v2119, 0.5
      %v2981 = vmul.f32 %v2123, 0.5
      %v2982 = vmul.f32 %v2125, 0.5
      %v2983 = vmul.f32 %v2127, 0.5
      %v2984 = vmul.f32 %v2129, 0.5
      %v2985 = vmul.f32 %v2133, 0.5
      %v2986 = vmul.f32 %v2135, 0.5
      %v2987 = vmul.f32 %v2137, 0.5
      %v2988 = vmul.f32 %v2139, 0.5
      %v2989 = vmul.f32 %v2143, 0.5
      %v2990 = vmul.f32 %v2145, 0.5
      %v2991 = vmul.f32 %v2147, 0.5
      %v2992 = vmul.f32 %v2149, 0.5
      %v2993 = vmul.f32 %v2153, 0.5
      %v2994 = vmul.f32 %v2155, 0.5
      %v2995 = vmul.f32 %v2157, 0.5
      %v2996 = vmul.f32 %v2159, 0.5
      %v2997 = vmul.f32 %v2163, 0.5
      %v2998 = vmul.f32 %v2165, 0.5
      %v2999 = vmul.f32 %v2167, 0.5
      %v3000 = vmul.f32 %v2169, 0.5
      %v3001 = vmul.f32 %v2173, 0.5
      %v3002 = vmul.f32 %v2175, 0.5
      %v3003 = vmul.f32 %v2177, 0.5
      %v3004 = vmul.f32 %v2179, 0.5
      %v3005 = vmul.f32 %v2183, 0.5
      %v3006 = vmul.f32 %v2185, 0.5
      %v3007 = vmul.f32 %v2187, 0.5
      %v3008 = vmul.f32 %v2189, 0.5
      %v3009 = vmul.f32 %v2193, 0.5
      %v3010 = vmul.f32 %v2195, 0.5
      %v3011 = vmul.f32 %v2197, 0.5
      %v3012 = vmul.f32 %v2199, 0.5
      %v3013 = vmul.f32 %v2203, 0.5
      %v3014 = vmul.f32 %v2205, 0.5
      %v3015 = vmul.f32 %v2207, 0.5
      %v3016 = vmul.f32 %v2209, 0.5
      %v3017 = vmul.f32 %v2213, 0.5
      %v3018 = vmul.f32 %v2215, 0.5
      %v3019 = vmul.f32 %v2217, 0.5
      %v3020 = vmul.f32 %v2219, 0.5
      %v3021 = vmul.f32 %v2223, 0.5
      %v3022 = vmul.f32 %v2225, 0.5
      %v3023 = vmul.f32 %v2227, 0.5
      %v3024 = vmul.f32 %v2229, 0.5
      %v3025 = vmul.f32 %v2233, 0.5
      %v3026 = vmul.f32 %v2235, 0.5
      %v3027 = vmul.f32 %v2237, 0.5
      %v3028 = vmul.f32 %v2239, 0.5
      %v3029 = vmul.f32 %v2243, 0.5
      %v3030 = vmul.f32 %v2245, 0.5
      %v3031 = vmul.f32 %v2247, 0.5
      %v3032 = vmul.f32 %v2249, 0.5
      %v3033 = vmul.f32 %v2253, 0.5
      %v3034 = vmul.f32 %v2255, 0.5
      %v3035 = vmul.f32 %v2257, 0.5
      %v3036 = vmul.f32 %v2259, 0.5
      %v3037 = vmul.f32 %v2263, 0.5
      %v3038 = vmul.f32 %v2265, 0.5
      %v3039 = vmul.f32 %v2267, 0.5
      %v3040 = vmul.f32 %v2269, 0.5
      %v3041 = vmul.f32 %v2273, 0.5
      %v3042 = vmul.f32 %v2275, 0.5
      %v3043 = vmul.f32 %v2277, 0.5
      %v3044 = vmul.f32 %v2279, 0.5
      %v3045 = vmul.f32 %v2283, 0.5
      %v3046 = vmul.f32 %v2285, 0.5
      %v3047 = vmul.f32 %v2287, 0.5
      %v3048 = vmul.f32 %v2289, 0.5
      %v3049 = vmul.f32 %v2293, 0.5
      %v3050 = vmul.f32 %v2295, 0.5
      %v3051 = vmul.f32 %v2297, 0.5
      %v3052 = vmul.f32 %v2299, 0.5
      %v3053 = vmul.f32 %v2303, 0.5
      %v3054 = vmul.f32 %v2305, 0.5
      %v3055 = vmul.f32 %v2307, 0.5
      %v3056 = vmul.f32 %v2309, 0.5
      %v3057 = vmul.f32 %v2313, 0.5
      %v3058 = vmul.f32 %v2315, 0.5
      %v3059 = vmul.f32 %v2317, 0.5
      %v3060 = vmul.f32 %v2319, 0.5
      %v3061 = vmul.f32 %v2323, 0.5
      %v3062 = vmul.f32 %v2325, 0.5
      %v3063 = vmul.f32 %v2327, 0.5
      %v3064 = vmul.f32 %v2329, 0.5
      %v3065 = vmul.f32 %v2333, 0.5
      %v3066 = vmul.f32 %v2335, 0.5
      %v3067 = vmul.f32 %v2337, 0.5
      %v3068 = vmul.f32 %v2339, 0.5
      %v3069 = vmul.f32 %v2343, 0.5
      %v3070 = vmul.f32 %v2345, 0.5
      %v3071 = vmul.f32 %v2347, 0.5
      %v3072 = vmul.f32 %v2349, 0.5
      %v3073 = vmul.f32 %v2353, 0.5
      %v3074 = vmul.f32 %v2355, 0.5
      %v3075 = vmul.f32 %v2357, 0.5
      %v3076 = vmul.f32 %v2359, 0.5
      %v3077 = vmul.f32 %v2363, 0.5
      %v3078 = vmul.f32 %v2365, 0.5
      %v3079 = vmul.f32 %v2367, 0.5
      %v3080 = vmul.f32 %v2369, 0.5
      %v3081 = vmul.f32 %v2373, 0.5
      %v3082 = vmul.f32 %v2375, 0.5
      %v3083 = vmul.f32 %v2377, 0.5
      %v3084 = vmul.f32 %v2379, 0.5
      %v3085 = vmul.f32 %v2383, 0.5
      %v3086 = vmul.f32 %v2385, 0.5
      %v3087 = vmul.f32 %v2387, 0.5
      %v3088 = vmul.f32 %v2389, 0.5
      %v3089 = vmul.f32 %v2393, 0.5
      %v3090 = vmul.f32 %v2395, 0.5
      %v3091 = vmul.f32 %v2397, 0.5
      %v3092 = vmul.f32 %v2399, 0.5
      %v3093 = vmul.f32 %v2403, 0.5
      %v3094 = vmul.f32 %v2405, 0.5
      %v3095 = vmul.f32 %v2407, 0.5
      %v3096 = vmul.f32 %v2409, 0.5
      %v3097 = vmul.f32 %v2413, 0.5
      %v3098 = vmul.f32 %v2415, 0.5
      %v3099 = vmul.f32 %v2417, 0.5
      %v3100 = vmul.f32 %v2419, 0.5
      %v3101 = vmul.f32 %v2423, 0.5
      %v3102 = vmul.f32 %v2425, 0.5
      %v3103 = vmul.f32 %v2427, 0.5
      %v3104 = vmul.f32 %v2429, 0.5
      %v3105 = vmul.f32 %v2433, 0.5
      %v3106 = vmul.f32 %v2435, 0.5
      %v3107 = vmul.f32 %v2437, 0.5
      %v3108 = vmul.f32 %v2439, 0.5
      %v3109 = vmul.f32 %v2443, 0.5
      %v3110 = vmul.f32 %v2445, 0.5
      %v3111 = vmul.f32 %v2447, 0.5
      %v3112 = vmul.f32 %v2449, 0.5
      %v3113 = vmul.f32 %v2453, 0.5
      %v3114 = vmul.f32 %v2455, 0.5
      %v3115 = vmul.f32 %v2457, 0.5
      %v3116 = vmul.f32 %v2459, 0.5
      %v3117 = vmul.f32 %v2463, 0.5
      %v3118 = vmul.f32 %v2465, 0.5
      %v3119 = vmul.f32 %v2467, 0.5
      %v3120 = vmul.f32 %v2469, 0.5
      %v3121 = vmul.f32 %v2473, 0.5
      %v3122 = vmul.f32 %v2475, 0.5
      %v3123 = vmul.f32 %v2477, 0.5
      %v3124 = vmul.f32 %v2479, 0.5
      %v3125 = vmul.f32 %v2483, 0.5
      %v3126 = vmul.f32 %v2485, 0.5
      %v3127 = vmul.f32 %v2487, 0.5
      %v3128 = vmul.f32 %v2489, 0.5
      %v3129 = vmul.f32 %v2493, 0.5
      %v3130 = vmul.f32 %v2495, 0.5
      %v3131 = vmul.f32 %v2497, 0.5
      %v3132 = vmul.f32 %v2499, 0.5
      %v3133 = vmul.f32 %v2503, 0.5
      %v3134 = vmul.f32 %v2505, 0.5
      %v3135 = vmul.f32 %v2507, 0.5
      %v3136 = vmul.f32 %v2509, 0.5
      %v3137 = vmul.f32 %v2513, 0.5
      %v3138 = vmul.f32 %v2515, 0.5
      %v3139 = vmul.f32 %v2517, 0.5
      %v3140 = vmul.f32 %v2519, 0.5
      %v3141 = vmul.f32 %v2523, 0.5
      %v3142 = vmul.f32 %v2525, 0.5
      %v3143 = vmul.f32 %v2527, 0.5
      %v3144 = vmul.f32 %v2529, 0.5
      %v3145 = vmul.f32 %v2533, 0.5
      %v3146 = vmul.f32 %v2535, 0.5
      %v3147 = vmul.f32 %v2537, 0.5
      %v3148 = vmul.f32 %v2539, 0.5
      %v3149 = vmul.f32 %v2543, 0.5
      %v3150 = vmul.f32 %v2545, 0.5
      %v3151 = vmul.f32 %v2547, 0.5
      %v3152 = vmul.f32 %v2549, 0.5
      %v3153 = vmul.f32 %v2553, 0.5
      %v3154 = vmul.f32 %v2555, 0.5
      %v3155 = vmul.f32 %v2557, 0.5
      %v3156 = vmul.f32 %v2559, 0.5
      %v3157 = vmul.f32 %v2563, 0.5
      %v3158 = vmul.f32 %v2565, 0.5
      %v3159 = vmul.f32 %v2567, 0.5
      %v3160 = vmul.f32 %v2569, 0.5
      %v3161 = vmul.f32 %v2573, 0.5
      %v3162 = vmul.f32 %v2575, 0.5
      %v3163 = vmul.f32 %v2577, 0.5
      %v3164 = vmul.f32 %v2579, 0.5
      %v3165 = vmul.f32 %v2583, 0.5
      %v3166 = vmul.f32 %v2585, 0.5
      %v3167 = vmul.f32 %v2587, 0.5
      %v3168 = vmul.f32 %v2589, 0.5
      %v3169 = vmul.f32 %v2593, 0.5
      %v3170 = vmul.f32 %v2595, 0.5
      %v3171 = vmul.f32 %v2597, 0.5
      %v3172 = vmul.f32 %v2599, 0.5
      %v3173 = vmul.f32 %v2603, 0.5
      %v3174 = vmul.f32 %v2605, 0.5
      %v3175 = vmul.f32 %v2607, 0.5
      %v3176 = vmul.f32 %v2609, 0.5
      %v3177 = vmul.f32 %v2613, 0.5
      %v3178 = vmul.f32 %v2615, 0.5
      %v3179 = vmul.f32 %v2617, 0.5
      %v3180 = vmul.f32 %v2619, 0.5
      %v3181 = vmul.f32 %v2623, 0.5
      %v3182 = vmul.f32 %v2625, 0.5
      %v3183 = vmul.f32 %v2627, 0.5
      %v3184 = vmul.f32 %v2629, 0.5
      %v3185 = vmul.f32 %v2633, 0.5
      %v3186 = vmul.f32 %v2635, 0.5
      %v3187 = vmul.f32 %v2637, 0.5
      %v3188 = vmul.f32 %v2639, 0.5
      %v3189 = vmul.f32 %v2643, 0.5
      %v3190 = vmul.f32 %v2645, 0.5
      %v3191 = vmul.f32 %v2647, 0.5
      %v3192 = vmul.f32 %v2649, 0.5
      %v3193 = vmul.f32 %v2653, 0.5
      %v3194 = vmul.f32 %v2655, 0.5
      %v3195 = vmul.f32 %v2657, 0.5
      %v3196 = vmul.f32 %v2659, 0.5
      %v3197 = vmul.f32 %v2663, 0.5
      %v3198 = vmul.f32 %v2665, 0.5
      %v3199 = vmul.f32 %v2667, 0.5
      %v3200 = vmul.f32 %v2669, 0.5
      %v3201 = vmul.f32 %v2673, 0.5
      %v3202 = vmul.f32 %v2675, 0.5
      %v3203 = vmul.f32 %v2677, 0.5
      %v3204 = vmul.f32 %v2679, 0.5
      %v3205 = vmul.f32 %v2683, 0.5
      %v3206 = vmul.f32 %v2685, 0.5
      %v3207 = vmul.f32 %v2687, 0.5
      %v3208 = vmul.f32 %v2689, 0.5
      %v3209 = vmul.f32 %v2693, 0.5
      %v3210 = vmul.f32 %v2695, 0.5
      %v3211 = vmul.f32 %v2697, 0.5
      %v3212 = vmul.f32 %v2699, 0.5
      %v3213 = vmul.f32 %v1423, %v1423
      %v3214 = vmul.f32 %v1425, %v1425
      %v3215 = vmul.f32 %v1427, %v1427
      %v3216 = vmul.f32 %v1429, %v1429
      %v3217 = vmul.f32 %v1433, %v1433
      %v3218 = vmul.f32 %v1435, %v1435
      %v3219 = vmul.f32 %v1437, %v1437
      %v3220 = vmul.f32 %v1439, %v1439
      %v3221 = vmul.f32 %v1443, %v1443
      %v3222 = vmul.f32 %v1445, %v1445
      %v3223 = vmul.f32 %v1447, %v1447
      %v3224 = vmul.f32 %v1449, %v1449
      %v3225 = vmul.f32 %v1453, %v1453
      %v3226 = vmul.f32 %v1455, %v1455
      %v3227 = vmul.f32 %v1457, %v1457
      %v3228 = vmul.f32 %v1459, %v1459
      %v3229 = vmul.f32 %v1463, %v1463
      %v3230 = vmul.f32 %v1465, %v1465
      %v3231 = vmul.f32 %v1467, %v1467
      %v3232 = vmul.f32 %v1469, %v1469
      %v3233 = vmul.f32 %v1473, %v1473
      %v3234 = vmul.f32 %v1475, %v1475
      %v3235 = vmul.f32 %v1477, %v1477
      %v3236 = vmul.f32 %v1479, %v1479
      %v3237 = vmul.f32 %v1483, %v1483
      %v3238 = vmul.f32 %v1485, %v1485
      %v3239 = vmul.f32 %v1487, %v1487
      %v3240 = vmul.f32 %v1489, %v1489
      %v3241 = vmul.f32 %v1493, %v1493
      %v3242 = vmul.f32 %v1495, %v1495
      %v3243 = vmul.f32 %v1497, %v1497
      %v3244 = vmul.f32 %v1499, %v1499
      %v3245 = vmul.f32 %v1503, %v1503
      %v3246 = vmul.f32 %v1505, %v1505
      %v3247 = vmul.f32 %v1507, %v1507
      %v3248 = vmul.f32 %v1509, %v1509
      %v3249 = vmul.f32 %v1513, %v1513
      %v3250 = vmul.f32 %v1515, %v1515
      %v3251 = vmul.f32 %v1517, %v1517
      %v3252 = vmul.f32 %v1519, %v1519
      %v3253 = vmul.f32 %v1523, %v1523
      %v3254 = vmul.f32 %v1525, %v1525
      %v3255 = vmul.f32 %v1527, %v1527
      %v3256 = vmul.f32 %v1529, %v1529
      %v3257 = vmul.f32 %v1533, %v1533
      %v3258 = vmul.f32 %v1535, %v1535
      %v3259 = vmul.f32 %v1537, %v1537
      %v3260 = vmul.f32 %v1539, %v1539
      %v3261 = vmul.f32 %v1543, %v1543
      %v3262 = vmul.f32 %v1545, %v1545
      %v3263 = vmul.f32 %v1547, %v1547
      %v3264 = vmul.f32 %v1549, %v1549
      %v3265 = vmul.f32 %v1553, %v1553
      %v3266 = vmul.f32 %v1555, %v1555
      %v3267 = vmul.f32 %v1557, %v1557
      %v3268 = vmul.f32 %v1559, %v1559
      %v3269 = vmul.f32 %v1563, %v1563
      %v3270 = vmul.f32 %v1565, %v1565
      %v3271 = vmul.f32 %v1567, %v1567
      %v3272 = vmul.f32 %v1569, %v1569
      %v3273 = vmul.f32 %v1573, %v1573
      %v3274 = vmul.f32 %v1575, %v1575
      %v3275 = vmul.f32 %v1577, %v1577
      %v3276 = vmul.f32 %v1579, %v1579
      %v3277 = vmul.f32 %v1583, %v1583
      %v3278 = vmul.f32 %v1585, %v1585
      %v3279 = vmul.f32 %v1587, %v1587
      %v3280 = vmul.f32 %v1589, %v1589
      %v3281 = vmul.f32 %v1593, %v1593
      %v3282 = vmul.f32 %v1595, %v1595
      %v3283 = vmul.f32 %v1597, %v1597
      %v3284 = vmul.f32 %v1599, %v1599
      %v3285 = vmul.f32 %v1603, %v1603
      %v3286 = vmul.f32 %v1605, %v1605
      %v3287 = vmul.f32 %v1607, %v1607
      %v3288 = vmul.f32 %v1609, %v1609
      %v3289 = vmul.f32 %v1613, %v1613
      %v3290 = vmul.f32 %v1615, %v1615
      %v3291 = vmul.f32 %v1617, %v1617
      %v3292 = vmul.f32 %v1619, %v1619
      %v3293 = vmul.f32 %v1623, %v1623
      %v3294 = vmul.f32 %v1625, %v1625
      %v3295 = vmul.f32 %v1627, %v1627
      %v3296 = vmul.f32 %v1629, %v1629
      %v3297 = vmul.f32 %v1633, %v1633
      %v3298 = vmul.f32 %v1635, %v1635
      %v3299 = vmul.f32 %v1637, %v1637
      %v3300 = vmul.f32 %v1639, %v1639
      %v3301 = vmul.f32 %v1643, %v1643
      %v3302 = vmul.f32 %v1645, %v1645
      %v3303 = vmul.f32 %v1647, %v1647
      %v3304 = vmul.f32 %v1649, %v1649
      %v3305 = vmul.f32 %v1653, %v1653
      %v3306 = vmul.f32 %v1655, %v1655
      %v3307 = vmul.f32 %v1657, %v1657
      %v3308 = vmul.f32 %v1659, %v1659
      %v3309 = vmul.f32 %v1663, %v1663
      %v3310 = vmul.f32 %v1665, %v1665
      %v3311 = vmul.f32 %v1667, %v1667
      %v3312 = vmul.f32 %v1669, %v1669
      %v3313 = vmul.f32 %v1673, %v1673
      %v3314 = vmul.f32 %v1675, %v1675
      %v3315 = vmul.f32 %v1677, %v1677
      %v3316 = vmul.f32 %v1679, %v1679
      %v3317 = vmul.f32 %v1683, %v1683
      %v3318 = vmul.f32 %v1685, %v1685
      %v3319 = vmul.f32 %v1687, %v1687
      %v3320 = vmul.f32 %v1689, %v1689
      %v3321 = vmul.f32 %v1693, %v1693
      %v3322 = vmul.f32 %v1695, %v1695
      %v3323 = vmul.f32 %v1697, %v1697
      %v3324 = vmul.f32 %v1699, %v1699
      %v3325 = vmul.f32 %v1703, %v1703
      %v3326 = vmul.f32 %v1705, %v1705
      %v3327 = vmul.f32 %v1707, %v1707
      %v3328 = vmul.f32 %v1709, %v1709
      %v3329 = vmul.f32 %v1713, %v1713
      %v3330 = vmul.f32 %v1715, %v1715
      %v3331 = vmul.f32 %v1717, %v1717
      %v3332 = vmul.f32 %v1719, %v1719
      %v3333 = vmul.f32 %v1723, %v1723
      %v3334 = vmul.f32 %v1725, %v1725
      %v3335 = vmul.f32 %v1727, %v1727
      %v3336 = vmul.f32 %v1729, %v1729
      %v3337 = vmul.f32 %v1733, %v1733
      %v3338 = vmul.f32 %v1735, %v1735
      %v3339 = vmul.f32 %v1737, %v1737
      %v3340 = vmul.f32 %v1739, %v1739
      %v3341 = vmul.f32 %v1743, %v1743
      %v3342 = vmul.f32 %v1745, %v1745
      %v3343 = vmul.f32 %v1747, %v1747
      %v3344 = vmul.f32 %v1749, %v1749
      %v3345 = vmul.f32 %v1753, %v1753
      %v3346 = vmul.f32 %v1755, %v1755
      %v3347 = vmul.f32 %v1757, %v1757
      %v3348 = vmul.f32 %v1759, %v1759
      %v3349 = vmul.f32 %v1763, %v1763
      %v3350 = vmul.f32 %v1765, %v1765
      %v3351 = vmul.f32 %v1767, %v1767
      %v3352 = vmul.f32 %v1769, %v1769
      %v3353 = vmul.f32 %v1773, %v1773
      %v3354 = vmul.f32 %v1775, %v1775
      %v3355 = vmul.f32 %v1777, %v1777
      %v3356 = vmul.f32 %v1779, %v1779
      %v3357 = vmul.f32 %v1783, %v1783
      %v3358 = vmul.f32 %v1785, %v1785
      %v3359 = vmul.f32 %v1787, %v1787
      %v3360 = vmul.f32 %v1789, %v1789
      %v3361 = vmul.f32 %v1793, %v1793
      %v3362 = vmul.f32 %v1795, %v1795
      %v3363 = vmul.f32 %v1797, %v1797
      %v3364 = vmul.f32 %v1799, %v1799
      %v3365 = vmul.f32 %v1803, %v1803
      %v3366 = vmul.f32 %v1805, %v1805
      %v3367 = vmul.f32 %v1807, %v1807
      %v3368 = vmul.f32 %v1809, %v1809
      %v3369 = vmul.f32 %v1813, %v1813
      %v3370 = vmul.f32 %v1815, %v1815
      %v3371 = vmul.f32 %v1817, %v1817
      %v3372 = vmul.f32 %v1819, %v1819
      %v3373 = vmul.f32 %v1823, %v1823
      %v3374 = vmul.f32 %v1825, %v1825
      %v3375 = vmul.f32 %v1827, %v1827
      %v3376 = vmul.f32 %v1829, %v1829
      %v3377 = vmul.f32 %v1833, %v1833
      %v3378 = vmul.f32 %v1835, %v1835
      %v3379 = vmul.f32 %v1837, %v1837
      %v3380 = vmul.f32 %v1839, %v1839
      %v3381 = vmul.f32 %v1843, %v1843
      %v3382 = vmul.f32 %v1845, %v1845
      %v3383 = vmul.f32 %v1847, %v1847
      %v3384 = vmul.f32 %v1849, %v1849
      %v3385 = vmul.f32 %v1853, %v1853
      %v3386 = vmul.f32 %v1855, %v1855
      %v3387 = vmul.f32 %v1857, %v1857
      %v3388 = vmul.f32 %v1859, %v1859
      %v3389 = vmul.f32 %v1863, %v1863
      %v3390 = vmul.f32 %v1865, %v1865
      %v3391 = vmul.f32 %v1867, %v1867
      %v3392 = vmul.f32 %v1869, %v1869
      %v3393 = vmul.f32 %v1873, %v1873
      %v3394 = vmul.f32 %v1875, %v1875
      %v3395 = vmul.f32 %v1877, %v1877
      %v3396 = vmul.f32 %v1879, %v1879
      %v3397 = vmul.f32 %v1883, %v1883
      %v3398 = vmul.f32 %v1885, %v1885
      %v3399 = vmul.f32 %v1887, %v1887
      %v3400 = vmul.f32 %v1889, %v1889
      %v3401 = vmul.f32 %v1893, %v1893
      %v3402 = vmul.f32 %v1895, %v1895
      %v3403 = vmul.f32 %v1897, %v1897
      %v3404 = vmul.f32 %v1899, %v1899
      %v3405 = vmul.f32 %v1903, %v1903
      %v3406 = vmul.f32 %v1905, %v1905
      %v3407 = vmul.f32 %v1907, %v1907
      %v3408 = vmul.f32 %v1909, %v1909
      %v3409 = vmul.f32 %v1913, %v1913
      %v3410 = vmul.f32 %v1915, %v1915
      %v3411 = vmul.f32 %v1917, %v1917
      %v3412 = vmul.f32 %v1919, %v1919
      %v3413 = vmul.f32 %v1923, %v1923
      %v3414 = vmul.f32 %v1925, %v1925
      %v3415 = vmul.f32 %v1927, %v1927
      %v3416 = vmul.f32 %v1929, %v1929
      %v3417 = vmul.f32 %v1933, %v1933
      %v3418 = vmul.f32 %v1935, %v1935
      %v3419 = vmul.f32 %v1937, %v1937
      %v3420 = vmul.f32 %v1939, %v1939
      %v3421 = vmul.f32 %v1943, %v1943
      %v3422 = vmul.f32 %v1945, %v1945
      %v3423 = vmul.f32 %v1947, %v1947
      %v3424 = vmul.f32 %v1949, %v1949
      %v3425 = vmul.f32 %v1953, %v1953
      %v3426 = vmul.f32 %v1955, %v1955
      %v3427 = vmul.f32 %v1957, %v1957
      %v3428 = vmul.f32 %v1959, %v1959
      %v3429 = vmul.f32 %v1963, %v1963
      %v3430 = vmul.f32 %v1965, %v1965
      %v3431 = vmul.f32 %v1967, %v1967
      %v3432 = vmul.f32 %v1969, %v1969
      %v3433 = vmul.f32 %v1973, %v1973
      %v3434 = vmul.f32 %v1975, %v1975
      %v3435 = vmul.f32 %v1977, %v1977
      %v3436 = vmul.f32 %v1979, %v1979
      %v3437 = vmul.f32 %v1983, %v1983
      %v3438 = vmul.f32 %v1985, %v1985
      %v3439 = vmul.f32 %v1987, %v1987
      %v3440 = vmul.f32 %v1989, %v1989
      %v3441 = vmul.f32 %v1993, %v1993
      %v3442 = vmul.f32 %v1995, %v1995
      %v3443 = vmul.f32 %v1997, %v1997
      %v3444 = vmul.f32 %v1999, %v1999
      %v3445 = vmul.f32 %v2003, %v2003
      %v3446 = vmul.f32 %v2005, %v2005
      %v3447 = vmul.f32 %v2007, %v2007
      %v3448 = vmul.f32 %v2009, %v2009
      %v3449 = vmul.f32 %v2013, %v2013
      %v3450 = vmul.f32 %v2015, %v2015
      %v3451 = vmul.f32 %v2017, %v2017
      %v3452 = vmul.f32 %v2019, %v2019
      %v3453 = vmul.f32 %v2023, %v2023
      %v3454 = vmul.f32 %v2025, %v2025
      %v3455 = vmul.f32 %v2027, %v2027
      %v3456 = vmul.f32 %v2029, %v2029
      %v3457 = vmul.f32 %v2033, %v2033
      %v3458 = vmul.f32 %v2035, %v2035
      %v3459 = vmul.f32 %v2037, %v2037
      %v3460 = vmul.f32 %v2039, %v2039
      %v3461 = vmul.f32 %v2043, %v2043
      %v3462 = vmul.f32 %v2045, %v2045
      %v3463 = vmul.f32 %v2047, %v2047
      %v3464 = vmul.f32 %v2049, %v2049
      %v3465 = vmul.f32 %v2053, %v2053
      %v3466 = vmul.f32 %v2055, %v2055
      %v3467 = vmul.f32 %v2057, %v2057
      %v3468 = vmul.f32 %v2059, %v2059
      %v3469 = vmul.f32 %v2063, %v2063
      %v3470 = vmul.f32 %v2065, %v2065
      %v3471 = vmul.f32 %v2067, %v2067
      %v3472 = vmul.f32 %v2069, %v2069
      %v3473 = vmul.f32 %v2073, %v2073
      %v3474 = vmul.f32 %v2075, %v2075
      %v3475 = vmul.f32 %v2077, %v2077
      %v3476 = vmul.f32 %v2079, %v2079
      %v3477 = vmul.f32 %v2083, %v2083
      %v3478 = vmul.f32 %v2085, %v2085
      %v3479 = vmul.f32 %v2087, %v2087
      %v3480 = vmul.f32 %v2089, %v2089
      %v3481 = vmul.f32 %v2093, %v2093
      %v3482 = vmul.f32 %v2095, %v2095
      %v3483 = vmul.f32 %v2097, %v2097
      %v3484 = vmul.f32 %v2099, %v2099
      %v3485 = vmul.f32 %v2103, %v2103
      %v3486 = vmul.f32 %v2105, %v2105
      %v3487 = vmul.f32 %v2107, %v2107
      %v3488 = vmul.f32 %v2109, %v2109
      %v3489 = vmul.f32 %v2113, %v2113
      %v3490 = vmul.f32 %v2115, %v2115
      %v3491 = vmul.f32 %v2117, %v2117
      %v3492 = vmul.f32 %v2119, %v2119
      %v3493 = vmul.f32 %v2123, %v2123
      %v3494 = vmul.f32 %v2125, %v2125
      %v3495 = vmul.f32 %v2127, %v2127
      %v3496 = vmul.f32 %v2129, %v2129
      %v3497 = vmul.f32 %v2133, %v2133
      %v3498 = vmul.f32 %v2135, %v2135
      %v3499 = vmul.f32 %v2137, %v2137
      %v3500 = vmul.f32 %v2139, %v2139
      %v3501 = vmul.f32 %v2143, %v2143
      %v3502 = vmul.f32 %v2145, %v2145
      %v3503 = vmul.f32 %v2147, %v2147
      %v3504 = vmul.f32 %v2149, %v2149
      %v3505 = vmul.f32 %v2153, %v2153
      %v3506 = vmul.f32 %v2155, %v2155
      %v3507 = vmul.f32 %v2157, %v2157
      %v3508 = vmul.f32 %v2159, %v2159
      %v3509 = vmul.f32 %v2163, %v2163
      %v3510 = vmul.f32 %v2165, %v2165
      %v3511 = vmul.f32 %v2167, %v2167
      %v3512 = vmul.f32 %v2169, %v2169
      %v3513 = vmul.f32 %v2173, %v2173
      %v3514 = vmul.f32 %v2175, %v2175
      %v3515 = vmul.f32 %v2177, %v2177
      %v3516 = vmul.f32 %v2179, %v2179
      %v3517 = vmul.f32 %v2183, %v2183
      %v3518 = vmul.f32 %v2185, %v2185
      %v3519 = vmul.f32 %v2187, %v2187
      %v3520 = vmul.f32 %v2189, %v2189
      %v3521 = vmul.f32 %v2193, %v2193
      %v3522 = vmul.f32 %v2195, %v2195
      %v3523 = vmul.f32 %v2197, %v2197
      %v3524 = vmul.f32 %v2199, %v2199
      %v3525 = vmul.f32 %v2203, %v2203
      %v3526 = vmul.f32 %v2205, %v2205
      %v3527 = vmul.f32 %v2207, %v2207
      %v3528 = vmul.f32 %v2209, %v2209
      %v3529 = vmul.f32 %v2213, %v2213
      %v3530 = vmul.f32 %v2215, %v2215
      %v3531 = vmul.f32 %v2217, %v2217
      %v3532 = vmul.f32 %v2219, %v2219
      %v3533 = vmul.f32 %v2223, %v2223
      %v3534 = vmul.f32 %v2225, %v2225
      %v3535 = vmul.f32 %v2227, %v2227
      %v3536 = vmul.f32 %v2229, %v2229
      %v3537 = vmul.f32 %v2233, %v2233
      %v3538 = vmul.f32 %v2235, %v2235
      %v3539 = vmul.f32 %v2237, %v2237
      %v3540 = vmul.f32 %v2239, %v2239
      %v3541 = vmul.f32 %v2243, %v2243
      %v3542 = vmul.f32 %v2245, %v2245
      %v3543 = vmul.f32 %v2247, %v2247
      %v3544 = vmul.f32 %v2249, %v2249
      %v3545 = vmul.f32 %v2253, %v2253
      %v3546 = vmul.f32 %v2255, %v2255
      %v3547 = vmul.f32 %v2257, %v2257
      %v3548 = vmul.f32 %v2259, %v2259
      %v3549 = vmul.f32 %v2263, %v2263
      %v3550 = vmul.f32 %v2265, %v2265
      %v3551 = vmul.f32 %v2267, %v2267
      %v3552 = vmul.f32 %v2269, %v2269
      %v3553 = vmul.f32 %v2273, %v2273
      %v3554 = vmul.f32 %v2275, %v2275
      %v3555 = vmul.f32 %v2277, %v2277
      %v3556 = vmul.f32 %v2279, %v2279
      %v3557 = vmul.f32 %v2283, %v2283
      %v3558 = vmul.f32 %v2285, %v2285
      %v3559 = vmul.f32 %v2287, %v2287
      %v3560 = vmul.f32 %v2289, %v2289
      %v3561 = vmul.f32 %v2293, %v2293
      %v3562 = vmul.f32 %v2295, %v2295
      %v3563 = vmul.f32 %v2297, %v2297
      %v3564 = vmul.f32 %v2299, %v2299
      %v3565 = vmul.f32 %v2303, %v2303
      %v3566 = vmul.f32 %v2305, %v2305
      %v3567 = vmul.f32 %v2307, %v2307
      %v3568 = vmul.f32 %v2309, %v2309
      %v3569 = vmul.f32 %v2313, %v2313
      %v3570 = vmul.f32 %v2315, %v2315
      %v3571 = vmul.f32 %v2317, %v2317
      %v3572 = vmul.f32 %v2319, %v2319
      %v3573 = vmul.f32 %v2323, %v2323
      %v3574 = vmul.f32 %v2325, %v2325
      %v3575 = vmul.f32 %v2327, %v2327
      %v3576 = vmul.f32 %v2329, %v2329
      %v3577 = vmul.f32 %v2333, %v2333
      %v3578 = vmul.f32 %v2335, %v2335
      %v3579 = vmul.f32 %v2337, %v2337
      %v3580 = vmul.f32 %v2339, %v2339
      %v3581 = vmul.f32 %v2343, %v2343
      %v3582 = vmul.f32 %v2345, %v2345
      %v3583 = vmul.f32 %v2347, %v2347
      %v3584 = vmul.f32 %v2349, %v2349
      %v3585 = vmul.f32 %v2353, %v2353
      %v3586 = vmul.f32 %v2355, %v2355
      %v3587 = vmul.f32 %v2357, %v2357
      %v3588 = vmul.f32 %v2359, %v2359
      %v3589 = vmul.f32 %v2363, %v2363
      %v3590 = vmul.f32 %v2365, %v2365
      %v3591 = vmul.f32 %v2367, %v2367
      %v3592 = vmul.f32 %v2369, %v2369
      %v3593 = vmul.f32 %v2373, %v2373
      %v3594 = vmul.f32 %v2375, %v2375
      %v3595 = vmul.f32 %v2377, %v2377
      %v3596 = vmul.f32 %v2379, %v2379
      %v3597 = vmul.f32 %v2383, %v2383
      %v3598 = vmul.f32 %v2385, %v2385
      %v3599 = vmul.f32 %v2387, %v2387
      %v3600 = vmul.f32 %v2389, %v2389
      %v3601 = vmul.f32 %v2393, %v2393
      %v3602 = vmul.f32 %v2395, %v2395
      %v3603 = vmul.f32 %v2397, %v2397
      %v3604 = vmul.f32 %v2399, %v2399
      %v3605 = vmul.f32 %v2403, %v2403
      %v3606 = vmul.f32 %v2405, %v2405
      %v3607 = vmul.f32 %v2407, %v2407
      %v3608 = vmul.f32 %v2409, %v2409
      %v3609 = vmul.f32 %v2413, %v2413
      %v3610 = vmul.f32 %v2415, %v2415
      %v3611 = vmul.f32 %v2417, %v2417
      %v3612 = vmul.f32 %v2419, %v2419
      %v3613 = vmul.f32 %v2423, %v2423
      %v3614 = vmul.f32 %v2425, %v2425
      %v3615 = vmul.f32 %v2427, %v2427
      %v3616 = vmul.f32 %v2429, %v2429
      %v3617 = vmul.f32 %v2433, %v2433
      %v3618 = vmul.f32 %v2435, %v2435
      %v3619 = vmul.f32 %v2437, %v2437
      %v3620 = vmul.f32 %v2439, %v2439
      %v3621 = vmul.f32 %v2443, %v2443
      %v3622 = vmul.f32 %v2445, %v2445
      %v3623 = vmul.f32 %v2447, %v2447
      %v3624 = vmul.f32 %v2449, %v2449
      %v3625 = vmul.f32 %v2453, %v2453
      %v3626 = vmul.f32 %v2455, %v2455
      %v3627 = vmul.f32 %v2457, %v2457
      %v3628 = vmul.f32 %v2459, %v2459
      %v3629 = vmul.f32 %v2463, %v2463
      %v3630 = vmul.f32 %v2465, %v2465
      %v3631 = vmul.f32 %v2467, %v2467
      %v3632 = vmul.f32 %v2469, %v2469
      %v3633 = vmul.f32 %v2473, %v2473
      %v3634 = vmul.f32 %v2475, %v2475
      %v3635 = vmul.f32 %v2477, %v2477
      %v3636 = vmul.f32 %v2479, %v2479
      %v3637 = vmul.f32 %v2483, %v2483
      %v3638 = vmul.f32 %v2485, %v2485
      %v3639 = vmul.f32 %v2487, %v2487
      %v3640 = vmul.f32 %v2489, %v2489
      %v3641 = vmul.f32 %v2493, %v2493
      %v3642 = vmul.f32 %v2495, %v2495
      %v3643 = vmul.f32 %v2497, %v2497
      %v3644 = vmul.f32 %v2499, %v2499
      %v3645 = vmul.f32 %v2503, %v2503
      %v3646 = vmul.f32 %v2505, %v2505
      %v3647 = vmul.f32 %v2507, %v2507
      %v3648 = vmul.f32 %v2509, %v2509
      %v3649 = vmul.f32 %v2513, %v2513
      %v3650 = vmul.f32 %v2515, %v2515
      %v3651 = vmul.f32 %v2517, %v2517
      %v3652 = vmul.f32 %v2519, %v2519
      %v3653 = vmul.f32 %v2523, %v2523
      %v3654 = vmul.f32 %v2525, %v2525
      %v3655 = vmul.f32 %v2527, %v2527
      %v3656 = vmul.f32 %v2529, %v2529
      %v3657 = vmul.f32 %v2533, %v2533
      %v3658 = vmul.f32 %v2535, %v2535
      %v3659 = vmul.f32 %v2537, %v2537
      %v3660 = vmul.f32 %v2539, %v2539
      %v3661 = vmul.f32 %v2543, %v2543
      %v3662 = vmul.f32 %v2545, %v2545
      %v3663 = vmul.f32 %v2547, %v2547
      %v3664 = vmul.f32 %v2549, %v2549
      %v3665 = vmul.f32 %v2553, %v2553
      %v3666 = vmul.f32 %v2555, %v2555
      %v3667 = vmul.f32 %v2557, %v2557
      %v3668 = vmul.f32 %v2559, %v2559
      %v3669 = vmul.f32 %v2563, %v2563
      %v3670 = vmul.f32 %v2565, %v2565
      %v3671 = vmul.f32 %v2567, %v2567
      %v3672 = vmul.f32 %v2569, %v2569
      %v3673 = vmul.f32 %v2573, %v2573
      %v3674 = vmul.f32 %v2575, %v2575
      %v3675 = vmul.f32 %v2577, %v2577
      %v3676 = vmul.f32 %v2579, %v2579
      %v3677 = vmul.f32 %v2583, %v2583
      %v3678 = vmul.f32 %v2585, %v2585
      %v3679 = vmul.f32 %v2587, %v2587
      %v3680 = vmul.f32 %v2589, %v2589
      %v3681 = vmul.f32 %v2593, %v2593
      %v3682 = vmul.f32 %v2595, %v2595
      %v3683 = vmul.f32 %v2597, %v2597
      %v3684 = vmul.f32 %v2599, %v2599
      %v3685 = vmul.f32 %v2603, %v2603
      %v3686 = vmul.f32 %v2605, %v2605
      %v3687 = vmul.f32 %v2607, %v2607
      %v3688 = vmul.f32 %v2609, %v2609
      %v3689 = vmul.f32 %v2613, %v2613
      %v3690 = vmul.f32 %v2615, %v2615
      %v3691 = vmul.f32 %v2617, %v2617
      %v3692 = vmul.f32 %v2619, %v2619
      %v3693 = vmul.f32 %v2623, %v2623
      %v3694 = vmul.f32 %v2625, %v2625
      %v3695 = vmul.f32 %v2627, %v2627
      %v3696 = vmul.f32 %v2629, %v2629
      %v3697 = vmul.f32 %v2633, %v2633
      %v3698 = vmul.f32 %v2635, %v2635
      %v3699 = vmul.f32 %v2637, %v2637
      %v3700 = vmul.f32 %v2639, %v2639
      %v3701 = vmul.f32 %v2643, %v2643
      %v3702 = vmul.f32 %v2645, %v2645
      %v3703 = vmul.f32 %v2647, %v2647
      %v3704 = vmul.f32 %v2649, %v2649
      %v3705 = vmul.f32 %v2653, %v2653
      %v3706 = vmul.f32 %v2655, %v2655
      %v3707 = vmul.f32 %v2657, %v2657
      %v3708 = vmul.f32 %v2659, %v2659
      %v3709 = vmul.f32 %v2663, %v2663
      %v3710 = vmul.f32 %v2665, %v2665
      %v3711 = vmul.f32 %v2667, %v2667
      %v3712 = vmul.f32 %v2669, %v2669
      %v3713 = vmul.f32 %v2673, %v2673
      %v3714 = vmul.f32 %v2675, %v2675
      %v3715 = vmul.f32 %v2677, %v2677
      %v3716 = vmul.f32 %v2679, %v2679
      %v3717 = vmul.f32 %v2683, %v2683
      %v3718 = vmul.f32 %v2685, %v2685
      %v3719 = vmul.f32 %v2687, %v2687
      %v3720 = vmul.f32 %v2689, %v2689
      %v3721 = vmul.f32 %v2693, %v2693
      %v3722 = vmul.f32 %v2695, %v2695
      %v3723 = vmul.f32 %v2697, %v2697
      %v3724 = vmul.f32 %v2699, %v2699
      %v3725 = vmul.f32 %v3213, %v1423
      %v3726 = vmul.f32 %v3214, %v1425
      %v3727 = vmul.f32 %v3215, %v1427
      %v3728 = vmul.f32 %v3216, %v1429
      %v3729 = vmul.f32 %v3217, %v1433
      %v3730 = vmul.f32 %v3218, %v1435
      %v3731 = vmul.f32 %v3219, %v1437
      %v3732 = vmul.f32 %v3220, %v1439
      %v3733 = vmul.f32 %v3221, %v1443
      %v3734 = vmul.f32 %v3222, %v1445
      %v3735 = vmul.f32 %v3223, %v1447
      %v3736 = vmul.f32 %v3224, %v1449
      %v3737 = vmul.f32 %v3225, %v1453
      %v3738 = vmul.f32 %v3226, %v1455
      %v3739 = vmul.f32 %v3227, %v1457
      %v3740 = vmul.f32 %v3228, %v1459
      %v3741 = vmul.f32 %v3229, %v1463
      %v3742 = vmul.f32 %v3230, %v1465
      %v3743 = vmul.f32 %v3231, %v1467
      %v3744 = vmul.f32 %v3232, %v1469
      %v3745 = vmul.f32 %v3233, %v1473
      %v3746 = vmul.f32 %v3234, %v1475
      %v3747 = vmul.f32 %v3235, %v1477
      %v3748 = vmul.f32 %v3236, %v1479
      %v3749 = vmul.f32 %v3237, %v1483
      %v3750 = vmul.f32 %v3238, %v1485
      %v3751 = vmul.f32 %v3239, %v1487
      %v3752 = vmul.f32 %v3240, %v1489
      %v3753 = vmul.f32 %v3241, %v1493
      %v3754 = vmul.f32 %v3242, %v1495
      %v3755 = vmul.f32 %v3243, %v1497
      %v3756 = vmul.f32 %v3244, %v1499
      %v3757 = vmul.f32 %v3245, %v1503
      %v3758 = vmul.f32 %v3246, %v1505
      %v3759 = vmul.f32 %v3247, %v1507
      %v3760 = vmul.f32 %v3248, %v1509
      %v3761 = vmul.f32 %v3249, %v1513
      %v3762 = vmul.f32 %v3250, %v1515
      %v3763 = vmul.f32 %v3251, %v1517
      %v3764 = vmul.f32 %v3252, %v1519
      %v3765 = vmul.f32 %v3253, %v1523
      %v3766 = vmul.f32 %v3254, %v1525
      %v3767 = vmul.f32 %v3255, %v1527
      %v3768 = vmul.f32 %v3256, %v1529
      %v3769 = vmul.f32 %v3257, %v1533
      %v3770 = vmul.f32 %v3258, %v1535
      %v3771 = vmul.f32 %v3259, %v1537
      %v3772 = vmul.f32 %v3260, %v1539
      %v3773 = vmul.f32 %v3261, %v1543
      %v3774 = vmul.f32 %v3262, %v1545
      %v3775 = vmul.f32 %v3263, %v1547
      %v3776 = vmul.f32 %v3264, %v1549
      %v3777 = vmul.f32 %v3265, %v1553
      %v3778 = vmul.f32 %v3266, %v1555
      %v3779 = vmul.f32 %v3267, %v1557
      %v3780 = vmul.f32 %v3268, %v1559
      %v3781 = vmul.f32 %v3269, %v1563
      %v3782 = vmul.f32 %v3270, %v1565
      %v3783 = vmul.f32 %v3271, %v1567
      %v3784 = vmul.f32 %v3272, %v1569
      %v3785 = vmul.f32 %v3273, %v1573
      %v3786 = vmul.f32 %v3274, %v1575
      %v3787 = vmul.f32 %v3275, %v1577
      %v3788 = vmul.f32 %v3276, %v1579
      %v3789 = vmul.f32 %v3277, %v1583
      %v3790 = vmul.f32 %v3278, %v1585
      %v3791 = vmul.f32 %v3279, %v1587
      %v3792 = vmul.f32 %v3280, %v1589
      %v3793 = vmul.f32 %v3281, %v1593
      %v3794 = vmul.f32 %v3282, %v1595
      %v3795 = vmul.f32 %v3283, %v1597
      %v3796 = vmul.f32 %v3284, %v1599
      %v3797 = vmul.f32 %v3285, %v1603
      %v3798 = vmul.f32 %v3286, %v1605
      %v3799 = vmul.f32 %v3287, %v1607
      %v3800 = vmul.f32 %v3288, %v1609
      %v3801 = vmul.f32 %v3289, %v1613
      %v3802 = vmul.f32 %v3290, %v1615
      %v3803 = vmul.f32 %v3291, %v1617
      %v3804 = vmul.f32 %v3292, %v1619
      %v3805 = vmul.f32 %v3293, %v1623
      %v3806 = vmul.f32 %v3294, %v1625
      %v3807 = vmul.f32 %v3295, %v1627
      %v3808 = vmul.f32 %v3296, %v1629
      %v3809 = vmul.f32 %v3297, %v1633
      %v3810 = vmul.f32 %v3298, %v1635
      %v3811 = vmul.f32 %v3299, %v1637
      %v3812 = vmul.f32 %v3300, %v1639
      %v3813 = vmul.f32 %v3301, %v1643
      %v3814 = vmul.f32 %v3302, %v1645
      %v3815 = vmul.f32 %v3303, %v1647
      %v3816 = vmul.f32 %v3304, %v1649
      %v3817 = vmul.f32 %v3305, %v1653
      %v3818 = vmul.f32 %v3306, %v1655
      %v3819 = vmul.f32 %v3307, %v1657
      %v3820 = vmul.f32 %v3308, %v1659
      %v3821 = vmul.f32 %v3309, %v1663
      %v3822 = vmul.f32 %v3310, %v1665
      %v3823 = vmul.f32 %v3311, %v1667
      %v3824 = vmul.f32 %v3312, %v1669
      %v3825 = vmul.f32 %v3313, %v1673
      %v3826 = vmul.f32 %v3314, %v1675
      %v3827 = vmul.f32 %v3315, %v1677
      %v3828 = vmul.f32 %v3316, %v1679
      %v3829 = vmul.f32 %v3317, %v1683
      %v3830 = vmul.f32 %v3318, %v1685
      %v3831 = vmul.f32 %v3319, %v1687
      %v3832 = vmul.f32 %v3320, %v1689
      %v3833 = vmul.f32 %v3321, %v1693
      %v3834 = vmul.f32 %v3322, %v1695
      %v3835 = vmul.f32 %v3323, %v1697
      %v3836 = vmul.f32 %v3324, %v1699
      %v3837 = vmul.f32 %v3325, %v1703
      %v3838 = vmul.f32 %v3326, %v1705
      %v3839 = vmul.f32 %v3327, %v1707
      %v3840 = vmul.f32 %v3328, %v1709
      %v3841 = vmul.f32 %v3329, %v1713
      %v3842 = vmul.f32 %v3330, %v1715
      %v3843 = vmul.f32 %v3331, %v1717
      %v3844 = vmul.f32 %v3332, %v1719
      %v3845 = vmul.f32 %v3333, %v1723
      %v3846 = vmul.f32 %v3334, %v1725
      %v3847 = vmul.f32 %v3335, %v1727
      %v3848 = vmul.f32 %v3336, %v1729
      %v3849 = vmul.f32 %v3337, %v1733
      %v3850 = vmul.f32 %v3338, %v1735
      %v3851 = vmul.f32 %v3339, %v1737
      %v3852 = vmul.f32 %v3340, %v1739
      %v3853 = vmul.f32 %v3341, %v1743
      %v3854 = vmul.f32 %v3342, %v1745
      %v3855 = vmul.f32 %v3343, %v1747
      %v3856 = vmul.f32 %v3344, %v1749
      %v3857 = vmul.f32 %v3345, %v1753
      %v3858 = vmul.f32 %v3346, %v1755
      %v3859 = vmul.f32 %v3347, %v1757
      %v3860 = vmul.f32 %v3348, %v1759
      %v3861 = vmul.f32 %v3349, %v1763
      %v3862 = vmul.f32 %v3350, %v1765
      %v3863 = vmul.f32 %v3351, %v1767
      %v3864 = vmul.f32 %v3352, %v1769
      %v3865 = vmul.f32 %v3353, %v1773
      %v3866 = vmul.f32 %v3354, %v1775
      %v3867 = vmul.f32 %v3355, %v1777
      %v3868 = vmul.f32 %v3356, %v1779
      %v3869 = vmul.f32 %v3357, %v1783
      %v3870 = vmul.f32 %v3358, %v1785
      %v3871 = vmul.f32 %v3359, %v1787
      %v3872 = vmul.f32 %v3360, %v1789
      %v3873 = vmul.f32 %v3361, %v1793
      %v3874 = vmul.f32 %v3362, %v1795
      %v3875 = vmul.f32 %v3363, %v1797
      %v3876 = vmul.f32 %v3364, %v1799
      %v3877 = vmul.f32 %v3365, %v1803
      %v3878 = vmul.f32 %v3366, %v1805
      %v3879 = vmul.f32 %v3367, %v1807
      %v3880 = vmul.f32 %v3368, %v1809
      %v3881 = vmul.f32 %v3369, %v1813
      %v3882 = vmul.f32 %v3370, %v1815
      %v3883 = vmul.f32 %v3371, %v1817
      %v3884 = vmul.f32 %v3372, %v1819
      %v3885 = vmul.f32 %v3373, %v1823
      %v3886 = vmul.f32 %v3374, %v1825
      %v3887 = vmul.f32 %v3375, %v1827
      %v3888 = vmul.f32 %v3376, %v1829
      %v3889 = vmul.f32 %v3377, %v1833
      %v3890 = vmul.f32 %v3378, %v1835
      %v3891 = vmul.f32 %v3379, %v1837
      %v3892 = vmul.f32 %v3380, %v1839
      %v3893 = vmul.f32 %v3381, %v1843
      %v3894 = vmul.f32 %v3382, %v1845
      %v3895 = vmul.f32 %v3383, %v1847
      %v3896 = vmul.f32 %v3384, %v1849
      %v3897 = vmul.f32 %v3385, %v1853
      %v3898 = vmul.f32 %v3386, %v1855
      %v3899 = vmul.f32 %v3387, %v1857
      %v3900 = vmul.f32 %v3388, %v1859
      %v3901 = vmul.f32 %v3389, %v1863
      %v3902 = vmul.f32 %v3390, %v1865
      %v3903 = vmul.f32 %v3391, %v1867
      %v3904 = vmul.f32 %v3392, %v1869
      %v3905 = vmul.f32 %v3393, %v1873
      %v3906 = vmul.f32 %v3394, %v1875
      %v3907 = vmul.f32 %v3395, %v1877
      %v3908 = vmul.f32 %v3396, %v1879
      %v3909 = vmul.f32 %v3397, %v1883
      %v3910 = vmul.f32 %v3398, %v1885
      %v3911 = vmul.f32 %v3399, %v1887
      %v3912 = vmul.f32 %v3400, %v1889
      %v3913 = vmul.f32 %v3401, %v1893
      %v3914 = vmul.f32 %v3402, %v1895
      %v3915 = vmul.f32 %v3403, %v1897
      %v3916 = vmul.f32 %v3404, %v1899
      %v3917 = vmul.f32 %v3405, %v1903
      %v3918 = vmul.f32 %v3406, %v1905
      %v3919 = vmul.f32 %v3407, %v1907
      %v3920 = vmul.f32 %v3408, %v1909
      %v3921 = vmul.f32 %v3409, %v1913
      %v3922 = vmul.f32 %v3410, %v1915
      %v3923 = vmul.f32 %v3411, %v1917
      %v3924 = vmul.f32 %v3412, %v1919
      %v3925 = vmul.f32 %v3413, %v1923
      %v3926 = vmul.f32 %v3414, %v1925
      %v3927 = vmul.f32 %v3415, %v1927
      %v3928 = vmul.f32 %v3416, %v1929
      %v3929 = vmul.f32 %v3417, %v1933
      %v3930 = vmul.f32 %v3418, %v1935
      %v3931 = vmul.f32 %v3419, %v1937
      %v3932 = vmul.f32 %v3420, %v1939
      %v3933 = vmul.f32 %v3421, %v1943
      %v3934 = vmul.f32 %v3422, %v1945
      %v3935 = vmul.f32 %v3423, %v1947
      %v3936 = vmul.f32 %v3424, %v1949
      %v3937 = vmul.f32 %v3425, %v1953
      %v3938 = vmul.f32 %v3426, %v1955
      %v3939 = vmul.f32 %v3427, %v1957
      %v3940 = vmul.f32 %v3428, %v1959
      %v3941 = vmul.f32 %v3429, %v1963
      %v3942 = vmul.f32 %v3430, %v1965
      %v3943 = vmul.f32 %v3431, %v1967
      %v3944 = vmul.f32 %v3432, %v1969
      %v3945 = vmul.f32 %v3433, %v1973
      %v3946 = vmul.f32 %v3434, %v1975
      %v3947 = vmul.f32 %v3435, %v1977
      %v3948 = vmul.f32 %v3436, %v1979
      %v3949 = vmul.f32 %v3437, %v1983
      %v3950 = vmul.f32 %v3438, %v1985
      %v3951 = vmul.f32 %v3439, %v1987
      %v3952 = vmul.f32 %v3440, %v1989
      %v3953 = vmul.f32 %v3441, %v1993
      %v3954 = vmul.f32 %v3442, %v1995
      %v3955 = vmul.f32 %v3443, %v1997
      %v3956 = vmul.f32 %v3444, %v1999
      %v3957 = vmul.f32 %v3445, %v2003
      %v3958 = vmul.f32 %v3446, %v2005
      %v3959 = vmul.f32 %v3447, %v2007
      %v3960 = vmul.f32 %v3448, %v2009
      %v3961 = vmul.f32 %v3449, %v2013
      %v3962 = vmul.f32 %v3450, %v2015
      %v3963 = vmul.f32 %v3451, %v2017
      %v3964 = vmul.f32 %v3452, %v2019
      %v3965 = vmul.f32 %v3453, %v2023
      %v3966 = vmul.f32 %v3454, %v2025
      %v3967 = vmul.f32 %v3455, %v2027
      %v3968 = vmul.f32 %v3456, %v2029
      %v3969 = vmul.f32 %v3457, %v2033
      %v3970 = vmul.f32 %v3458, %v2035
      %v3971 = vmul.f32 %v3459, %v2037
      %v3972 = vmul.f32 %v3460, %v2039
      %v3973 = vmul.f32 %v3461, %v2043
      %v3974 = vmul.f32 %v3462, %v2045
      %v3975 = vmul.f32 %v3463, %v2047
      %v3976 = vmul.f32 %v3464, %v2049
      %v3977 = vmul.f32 %v3465, %v2053
      %v3978 = vmul.f32 %v3466, %v2055
      %v3979 = vmul.f32 %v3467, %v2057
      %v3980 = vmul.f32 %v3468, %v2059
      %v3981 = vmul.f32 %v3469, %v2063
      %v3982 = vmul.f32 %v3470, %v2065
      %v3983 = vmul.f32 %v3471, %v2067
      %v3984 = vmul.f32 %v3472, %v2069
      %v3985 = vmul.f32 %v3473, %v2073
      %v3986 = vmul.f32 %v3474, %v2075
      %v3987 = vmul.f32 %v3475, %v2077
      %v3988 = vmul.f32 %v3476, %v2079
      %v3989 = vmul.f32 %v3477, %v2083
      %v3990 = vmul.f32 %v3478, %v2085
      %v3991 = vmul.f32 %v3479, %v2087
      %v3992 = vmul.f32 %v3480, %v2089
      %v3993 = vmul.f32 %v3481, %v2093
      %v3994 = vmul.f32 %v3482, %v2095
      %v3995 = vmul.f32 %v3483, %v2097
      %v3996 = vmul.f32 %v3484, %v2099
      %v3997 = vmul.f32 %v3485, %v2103
      %v3998 = vmul.f32 %v3486, %v2105
      %v3999 = vmul.f32 %v3487, %v2107
      %v4000 = vmul.f32 %v3488, %v2109
      %v4001 = vmul.f32 %v3489, %v2113
      %v4002 = vmul.f32 %v3490, %v2115
      %v4003 = vmul.f32 %v3491, %v2117
      %v4004 = vmul.f32 %v3492, %v2119
      %v4005 = vmul.f32 %v3493, %v2123
      %v4006 = vmul.f32 %v3494, %v2125
      %v4007 = vmul.f32 %v3495, %v2127
      %v4008 = vmul.f32 %v3496, %v2129
      %v4009 = vmul.f32 %v3497, %v2133
      %v4010 = vmul.f32 %v3498, %v2135
      %v4011 = vmul.f32 %v3499, %v2137
      %v4012 = vmul.f32 %v3500, %v2139
      %v4013 = vmul.f32 %v3501, %v2143
      %v4014 = vmul.f32 %v3502, %v2145
      %v4015 = vmul.f32 %v3503, %v2147
      %v4016 = vmul.f32 %v3504, %v2149
      %v4017 = vmul.f32 %v3505, %v2153
      %v4018 = vmul.f32 %v3506, %v2155
      %v4019 = vmul.f32 %v3507, %v2157
      %v4020 = vmul.f32 %v3508, %v2159
      %v4021 = vmul.f32 %v3509, %v2163
      %v4022 = vmul.f32 %v3510, %v2165
      %v4023 = vmul.f32 %v3511, %v2167
      %v4024 = vmul.f32 %v3512, %v2169
      %v4025 = vmul.f32 %v3513, %v2173
      %v4026 = vmul.f32 %v3514, %v2175
      %v4027 = vmul.f32 %v3515, %v2177
      %v4028 = vmul.f32 %v3516, %v2179
      %v4029 = vmul.f32 %v3517, %v2183
      %v4030 = vmul.f32 %v3518, %v2185
      %v4031 = vmul.f32 %v3519, %v2187
      %v4032 = vmul.f32 %v3520, %v2189
      %v4033 = vmul.f32 %v3521, %v2193
      %v4034 = vmul.f32 %v3522, %v2195
      %v4035 = vmul.f32 %v3523, %v2197
      %v4036 = vmul.f32 %v3524, %v2199
      %v4037 = vmul.f32 %v3525, %v2203
      %v4038 = vmul.f32 %v3526, %v2205
      %v4039 = vmul.f32 %v3527, %v2207
      %v4040 = vmul.f32 %v3528, %v2209
      %v4041 = vmul.f32 %v3529, %v2213
      %v4042 = vmul.f32 %v3530, %v2215
      %v4043 = vmul.f32 %v3531, %v2217
      %v4044 = vmul.f32 %v3532, %v2219
      %v4045 = vmul.f32 %v3533, %v2223
      %v4046 = vmul.f32 %v3534, %v2225
      %v4047 = vmul.f32 %v3535, %v2227
      %v4048 = vmul.f32 %v3536, %v2229
      %v4049 = vmul.f32 %v3537, %v2233
      %v4050 = vmul.f32 %v3538, %v2235
      %v4051 = vmul.f32 %v3539, %v2237
      %v4052 = vmul.f32 %v3540, %v2239
      %v4053 = vmul.f32 %v3541, %v2243
      %v4054 = vmul.f32 %v3542, %v2245
      %v4055 = vmul.f32 %v3543, %v2247
      %v4056 = vmul.f32 %v3544, %v2249
      %v4057 = vmul.f32 %v3545, %v2253
      %v4058 = vmul.f32 %v3546, %v2255
      %v4059 = vmul.f32 %v3547, %v2257
      %v4060 = vmul.f32 %v3548, %v2259
      %v4061 = vmul.f32 %v3549, %v2263
      %v4062 = vmul.f32 %v3550, %v2265
      %v4063 = vmul.f32 %v3551, %v2267
      %v4064 = vmul.f32 %v3552, %v2269
      %v4065 = vmul.f32 %v3553, %v2273
      %v4066 = vmul.f32 %v3554, %v2275
      %v4067 = vmul.f32 %v3555, %v2277
      %v4068 = vmul.f32 %v3556, %v2279
      %v4069 = vmul.f32 %v3557, %v2283
      %v4070 = vmul.f32 %v3558, %v2285
      %v4071 = vmul.f32 %v3559, %v2287
      %v4072 = vmul.f32 %v3560, %v2289
      %v4073 = vmul.f32 %v3561, %v2293
      %v4074 = vmul.f32 %v3562, %v2295
      %v4075 = vmul.f32 %v3563, %v2297
      %v4076 = vmul.f32 %v3564, %v2299
      %v4077 = vmul.f32 %v3565, %v2303
      %v4078 = vmul.f32 %v3566, %v2305
      %v4079 = vmul.f32 %v3567, %v2307
      %v4080 = vmul.f32 %v3568, %v2309
      %v4081 = vmul.f32 %v3569, %v2313
      %v4082 = vmul.f32 %v3570, %v2315
      %v4083 = vmul.f32 %v3571, %v2317
      %v4084 = vmul.f32 %v3572, %v2319
      %v4085 = vmul.f32 %v3573, %v2323
      %v4086 = vmul.f32 %v3574, %v2325
      %v4087 = vmul.f32 %v3575, %v2327
      %v4088 = vmul.f32 %v3576, %v2329
      %v4089 = vmul.f32 %v3577, %v2333
      %v4090 = vmul.f32 %v3578, %v2335
      %v4091 = vmul.f32 %v3579, %v2337
      %v4092 = vmul.f32 %v3580, %v2339
      %v4093 = vmul.f32 %v3581, %v2343
      %v4094 = vmul.f32 %v3582, %v2345
      %v4095 = vmul.f32 %v3583, %v2347
      %v4096 = vmul.f32 %v3584, %v2349
      %v4097 = vmul.f32 %v3585, %v2353
      %v4098 = vmul.f32 %v3586, %v2355
      %v4099 = vmul.f32 %v3587, %v2357
      %v4100 = vmul.f32 %v3588, %v2359
      %v4101 = vmul.f32 %v3589, %v2363
      %v4102 = vmul.f32 %v3590, %v2365
      %v4103 = vmul.f32 %v3591, %v2367
      %v4104 = vmul.f32 %v3592, %v2369
      %v4105 = vmul.f32 %v3593, %v2373
      %v4106 = vmul.f32 %v3594, %v2375
      %v4107 = vmul.f32 %v3595, %v2377
      %v4108 = vmul.f32 %v3596, %v2379
      %v4109 = vmul.f32 %v3597, %v2383
      %v4110 = vmul.f32 %v3598, %v2385
      %v4111 = vmul.f32 %v3599, %v2387
      %v4112 = vmul.f32 %v3600, %v2389
      %v4113 = vmul.f32 %v3601, %v2393
      %v4114 = vmul.f32 %v3602, %v2395
      %v4115 = vmul.f32 %v3603, %v2397
      %v4116 = vmul.f32 %v3604, %v2399
      %v4117 = vmul.f32 %v3605, %v2403
      %v4118 = vmul.f32 %v3606, %v2405
      %v4119 = vmul.f32 %v3607, %v2407
      %v4120 = vmul.f32 %v3608, %v2409
      %v4121 = vmul.f32 %v3609, %v2413
      %v4122 = vmul.f32 %v3610, %v2415
      %v4123 = vmul.f32 %v3611, %v2417
      %v4124 = vmul.f32 %v3612, %v2419
      %v4125 = vmul.f32 %v3613, %v2423
      %v4126 = vmul.f32 %v3614, %v2425
      %v4127 = vmul.f32 %v3615, %v2427
      %v4128 = vmul.f32 %v3616, %v2429
      %v4129 = vmul.f32 %v3617, %v2433
      %v4130 = vmul.f32 %v3618, %v2435
      %v4131 = vmul.f32 %v3619, %v2437
      %v4132 = vmul.f32 %v3620, %v2439
      %v4133 = vmul.f32 %v3621, %v2443
      %v4134 = vmul.f32 %v3622, %v2445
      %v4135 = vmul.f32 %v3623, %v2447
      %v4136 = vmul.f32 %v3624, %v2449
      %v4137 = vmul.f32 %v3625, %v2453
      %v4138 = vmul.f32 %v3626, %v2455
      %v4139 = vmul.f32 %v3627, %v2457
      %v4140 = vmul.f32 %v3628, %v2459
      %v4141 = vmul.f32 %v3629, %v2463
      %v4142 = vmul.f32 %v3630, %v2465
      %v4143 = vmul.f32 %v3631, %v2467
      %v4144 = vmul.f32 %v3632, %v2469
      %v4145 = vmul.f32 %v3633, %v2473
      %v4146 = vmul.f32 %v3634, %v2475
      %v4147 = vmul.f32 %v3635, %v2477
      %v4148 = vmul.f32 %v3636, %v2479
      %v4149 = vmul.f32 %v3637, %v2483
      %v4150 = vmul.f32 %v3638, %v2485
      %v4151 = vmul.f32 %v3639, %v2487
      %v4152 = vmul.f32 %v3640, %v2489
      %v4153 = vmul.f32 %v3641, %v2493
      %v4154 = vmul.f32 %v3642, %v2495
      %v4155 = vmul.f32 %v3643, %v2497
      %v4156 = vmul.f32 %v3644, %v2499
      %v4157 = vmul.f32 %v3645, %v2503
      %v4158 = vmul.f32 %v3646, %v2505
      %v4159 = vmul.f32 %v3647, %v2507
      %v4160 = vmul.f32 %v3648, %v2509
      %v4161 = vmul.f32 %v3649, %v2513
      %v4162 = vmul.f32 %v3650, %v2515
      %v4163 = vmul.f32 %v3651, %v2517
      %v4164 = vmul.f32 %v3652, %v2519
      %v4165 = vmul.f32 %v3653, %v2523
      %v4166 = vmul.f32 %v3654, %v2525
      %v4167 = vmul.f32 %v3655, %v2527
      %v4168 = vmul.f32 %v3656, %v2529
      %v4169 = vmul.f32 %v3657, %v2533
      %v4170 = vmul.f32 %v3658, %v2535
      %v4171 = vmul.f32 %v3659, %v2537
      %v4172 = vmul.f32 %v3660, %v2539
      %v4173 = vmul.f32 %v3661, %v2543
      %v4174 = vmul.f32 %v3662, %v2545
      %v4175 = vmul.f32 %v3663, %v2547
      %v4176 = vmul.f32 %v3664, %v2549
      %v4177 = vmul.f32 %v3665, %v2553
      %v4178 = vmul.f32 %v3666, %v2555
      %v4179 = vmul.f32 %v3667, %v2557
      %v4180 = vmul.f32 %v3668, %v2559
      %v4181 = vmul.f32 %v3669, %v2563
      %v4182 = vmul.f32 %v3670, %v2565
      %v4183 = vmul.f32 %v3671, %v2567
      %v4184 = vmul.f32 %v3672, %v2569
      %v4185 = vmul.f32 %v3673, %v2573
      %v4186 = vmul.f32 %v3674, %v2575
      %v4187 = vmul.f32 %v3675, %v2577
      %v4188 = vmul.f32 %v3676, %v2579
      %v4189 = vmul.f32 %v3677, %v2583
      %v4190 = vmul.f32 %v3678, %v2585
      %v4191 = vmul.f32 %v3679, %v2587
      %v4192 = vmul.f32 %v3680, %v2589
      %v4193 = vmul.f32 %v3681, %v2593
      %v4194 = vmul.f32 %v3682, %v2595
      %v4195 = vmul.f32 %v3683, %v2597
      %v4196 = vmul.f32 %v3684, %v2599
      %v4197 = vmul.f32 %v3685, %v2603
      %v4198 = vmul.f32 %v3686, %v2605
      %v4199 = vmul.f32 %v3687, %v2607
      %v4200 = vmul.f32 %v3688, %v2609
      %v4201 = vmul.f32 %v3689, %v2613
      %v4202 = vmul.f32 %v3690, %v2615
      %v4203 = vmul.f32 %v3691, %v2617
      %v4204 = vmul.f32 %v3692, %v2619
      %v4205 = vmul.f32 %v3693, %v2623
      %v4206 = vmul.f32 %v3694, %v2625
      %v4207 = vmul.f32 %v3695, %v2627
      %v4208 = vmul.f32 %v3696, %v2629
      %v4209 = vmul.f32 %v3697, %v2633
      %v4210 = vmul.f32 %v3698, %v2635
      %v4211 = vmul.f32 %v3699, %v2637
      %v4212 = vmul.f32 %v3700, %v2639
      %v4213 = vmul.f32 %v3701, %v2643
      %v4214 = vmul.f32 %v3702, %v2645
      %v4215 = vmul.f32 %v3703, %v2647
      %v4216 = vmul.f32 %v3704, %v2649
      %v4217 = vmul.f32 %v3705, %v2653
      %v4218 = vmul.f32 %v3706, %v2655
      %v4219 = vmul.f32 %v3707, %v2657
      %v4220 = vmul.f32 %v3708, %v2659
      %v4221 = vmul.f32 %v3709, %v2663
      %v4222 = vmul.f32 %v3710, %v2665
      %v4223 = vmul.f32 %v3711, %v2667
      %v4224 = vmul.f32 %v3712, %v2669
      %v4225 = vmul.f32 %v3713, %v2673
      %v4226 = vmul.f32 %v3714, %v2675
      %v4227 = vmul.f32 %v3715, %v2677
      %v4228 = vmul.f32 %v3716, %v2679
      %v4229 = vmul.f32 %v3717, %v2683
      %v4230 = vmul.f32 %v3718, %v2685
      %v4231 = vmul.f32 %v3719, %v2687
      %v4232 = vmul.f32 %v3720, %v2689
      %v4233 = vmul.f32 %v3721, %v2693
      %v4234 = vmul.f32 %v3722, %v2695
      %v4235 = vmul.f32 %v3723, %v2697
      %v4236 = vmul.f32 %v3724, %v2699
      %v4237 = vmul.f32 %v3725, 0.044715
      %v4238 = vmul.f32 %v3726, 0.044715
      %v4239 = vmul.f32 %v3727, 0.044715
      %v4240 = vmul.f32 %v3728, 0.044715
      %v4241 = vmul.f32 %v3729, 0.044715
      %v4242 = vmul.f32 %v3730, 0.044715
      %v4243 = vmul.f32 %v3731, 0.044715
      %v4244 = vmul.f32 %v3732, 0.044715
      %v4245 = vmul.f32 %v3733, 0.044715
      %v4246 = vmul.f32 %v3734, 0.044715
      %v4247 = vmul.f32 %v3735, 0.044715
      %v4248 = vmul.f32 %v3736, 0.044715
      %v4249 = vmul.f32 %v3737, 0.044715
      %v4250 = vmul.f32 %v3738, 0.044715
      %v4251 = vmul.f32 %v3739, 0.044715
      %v4252 = vmul.f32 %v3740, 0.044715
      %v4253 = vmul.f32 %v3741, 0.044715
      %v4254 = vmul.f32 %v3742, 0.044715
      %v4255 = vmul.f32 %v3743, 0.044715
      %v4256 = vmul.f32 %v3744, 0.044715
      %v4257 = vmul.f32 %v3745, 0.044715
      %v4258 = vmul.f32 %v3746, 0.044715
      %v4259 = vmul.f32 %v3747, 0.044715
      %v4260 = vmul.f32 %v3748, 0.044715
      %v4261 = vmul.f32 %v3749, 0.044715
      %v4262 = vmul.f32 %v3750, 0.044715
      %v4263 = vmul.f32 %v3751, 0.044715
      %v4264 = vmul.f32 %v3752, 0.044715
      %v4265 = vmul.f32 %v3753, 0.044715
      %v4266 = vmul.f32 %v3754, 0.044715
      %v4267 = vmul.f32 %v3755, 0.044715
      %v4268 = vmul.f32 %v3756, 0.044715
      %v4269 = vmul.f32 %v3757, 0.044715
      %v4270 = vmul.f32 %v3758, 0.044715
      %v4271 = vmul.f32 %v3759, 0.044715
      %v4272 = vmul.f32 %v3760, 0.044715
      %v4273 = vmul.f32 %v3761, 0.044715
      %v4274 = vmul.f32 %v3762, 0.044715
      %v4275 = vmul.f32 %v3763, 0.044715
      %v4276 = vmul.f32 %v3764, 0.044715
      %v4277 = vmul.f32 %v3765, 0.044715
      %v4278 = vmul.f32 %v3766, 0.044715
      %v4279 = vmul.f32 %v3767, 0.044715
      %v4280 = vmul.f32 %v3768, 0.044715
      %v4281 = vmul.f32 %v3769, 0.044715
      %v4282 = vmul.f32 %v3770, 0.044715
      %v4283 = vmul.f32 %v3771, 0.044715
      %v4284 = vmul.f32 %v3772, 0.044715
      %v4285 = vmul.f32 %v3773, 0.044715
      %v4286 = vmul.f32 %v3774, 0.044715
      %v4287 = vmul.f32 %v3775, 0.044715
      %v4288 = vmul.f32 %v3776, 0.044715
      %v4289 = vmul.f32 %v3777, 0.044715
      %v4290 = vmul.f32 %v3778, 0.044715
      %v4291 = vmul.f32 %v3779, 0.044715
      %v4292 = vmul.f32 %v3780, 0.044715
      %v4293 = vmul.f32 %v3781, 0.044715
      %v4294 = vmul.f32 %v3782, 0.044715
      %v4295 = vmul.f32 %v3783, 0.044715
      %v4296 = vmul.f32 %v3784, 0.044715
      %v4297 = vmul.f32 %v3785, 0.044715
      %v4298 = vmul.f32 %v3786, 0.044715
      %v4299 = vmul.f32 %v3787, 0.044715
      %v4300 = vmul.f32 %v3788, 0.044715
      %v4301 = vmul.f32 %v3789, 0.044715
      %v4302 = vmul.f32 %v3790, 0.044715
      %v4303 = vmul.f32 %v3791, 0.044715
      %v4304 = vmul.f32 %v3792, 0.044715
      %v4305 = vmul.f32 %v3793, 0.044715
      %v4306 = vmul.f32 %v3794, 0.044715
      %v4307 = vmul.f32 %v3795, 0.044715
      %v4308 = vmul.f32 %v3796, 0.044715
      %v4309 = vmul.f32 %v3797, 0.044715
      %v4310 = vmul.f32 %v3798, 0.044715
      %v4311 = vmul.f32 %v3799, 0.044715
      %v4312 = vmul.f32 %v3800, 0.044715
      %v4313 = vmul.f32 %v3801, 0.044715
      %v4314 = vmul.f32 %v3802, 0.044715
      %v4315 = vmul.f32 %v3803, 0.044715
      %v4316 = vmul.f32 %v3804, 0.044715
      %v4317 = vmul.f32 %v3805, 0.044715
      %v4318 = vmul.f32 %v3806, 0.044715
      %v4319 = vmul.f32 %v3807, 0.044715
      %v4320 = vmul.f32 %v3808, 0.044715
      %v4321 = vmul.f32 %v3809, 0.044715
      %v4322 = vmul.f32 %v3810, 0.044715
      %v4323 = vmul.f32 %v3811, 0.044715
      %v4324 = vmul.f32 %v3812, 0.044715
      %v4325 = vmul.f32 %v3813, 0.044715
      %v4326 = vmul.f32 %v3814, 0.044715
      %v4327 = vmul.f32 %v3815, 0.044715
      %v4328 = vmul.f32 %v3816, 0.044715
      %v4329 = vmul.f32 %v3817, 0.044715
      %v4330 = vmul.f32 %v3818, 0.044715
      %v4331 = vmul.f32 %v3819, 0.044715
      %v4332 = vmul.f32 %v3820, 0.044715
      %v4333 = vmul.f32 %v3821, 0.044715
      %v4334 = vmul.f32 %v3822, 0.044715
      %v4335 = vmul.f32 %v3823, 0.044715
      %v4336 = vmul.f32 %v3824, 0.044715
      %v4337 = vmul.f32 %v3825, 0.044715
      %v4338 = vmul.f32 %v3826, 0.044715
      %v4339 = vmul.f32 %v3827, 0.044715
      %v4340 = vmul.f32 %v3828, 0.044715
      %v4341 = vmul.f32 %v3829, 0.044715
      %v4342 = vmul.f32 %v3830, 0.044715
      %v4343 = vmul.f32 %v3831, 0.044715
      %v4344 = vmul.f32 %v3832, 0.044715
      %v4345 = vmul.f32 %v3833, 0.044715
      %v4346 = vmul.f32 %v3834, 0.044715
      %v4347 = vmul.f32 %v3835, 0.044715
      %v4348 = vmul.f32 %v3836, 0.044715
      %v4349 = vmul.f32 %v3837, 0.044715
      %v4350 = vmul.f32 %v3838, 0.044715
      %v4351 = vmul.f32 %v3839, 0.044715
      %v4352 = vmul.f32 %v3840, 0.044715
      %v4353 = vmul.f32 %v3841, 0.044715
      %v4354 = vmul.f32 %v3842, 0.044715
      %v4355 = vmul.f32 %v3843, 0.044715
      %v4356 = vmul.f32 %v3844, 0.044715
      %v4357 = vmul.f32 %v3845, 0.044715
      %v4358 = vmul.f32 %v3846, 0.044715
      %v4359 = vmul.f32 %v3847, 0.044715
      %v4360 = vmul.f32 %v3848, 0.044715
      %v4361 = vmul.f32 %v3849, 0.044715
      %v4362 = vmul.f32 %v3850, 0.044715
      %v4363 = vmul.f32 %v3851, 0.044715
      %v4364 = vmul.f32 %v3852, 0.044715
      %v4365 = vmul.f32 %v3853, 0.044715
      %v4366 = vmul.f32 %v3854, 0.044715
      %v4367 = vmul.f32 %v3855, 0.044715
      %v4368 = vmul.f32 %v3856, 0.044715
      %v4369 = vmul.f32 %v3857, 0.044715
      %v4370 = vmul.f32 %v3858, 0.044715
      %v4371 = vmul.f32 %v3859, 0.044715
      %v4372 = vmul.f32 %v3860, 0.044715
      %v4373 = vmul.f32 %v3861, 0.044715
      %v4374 = vmul.f32 %v3862, 0.044715
      %v4375 = vmul.f32 %v3863, 0.044715
      %v4376 = vmul.f32 %v3864, 0.044715
      %v4377 = vmul.f32 %v3865, 0.044715
      %v4378 = vmul.f32 %v3866, 0.044715
      %v4379 = vmul.f32 %v3867, 0.044715
      %v4380 = vmul.f32 %v3868, 0.044715
      %v4381 = vmul.f32 %v3869, 0.044715
      %v4382 = vmul.f32 %v3870, 0.044715
      %v4383 = vmul.f32 %v3871, 0.044715
      %v4384 = vmul.f32 %v3872, 0.044715
      %v4385 = vmul.f32 %v3873, 0.044715
      %v4386 = vmul.f32 %v3874, 0.044715
      %v4387 = vmul.f32 %v3875, 0.044715
      %v4388 = vmul.f32 %v3876, 0.044715
      %v4389 = vmul.f32 %v3877, 0.044715
      %v4390 = vmul.f32 %v3878, 0.044715
      %v4391 = vmul.f32 %v3879, 0.044715
      %v4392 = vmul.f32 %v3880, 0.044715
      %v4393 = vmul.f32 %v3881, 0.044715
      %v4394 = vmul.f32 %v3882, 0.044715
      %v4395 = vmul.f32 %v3883, 0.044715
      %v4396 = vmul.f32 %v3884, 0.044715
      %v4397 = vmul.f32 %v3885, 0.044715
      %v4398 = vmul.f32 %v3886, 0.044715
      %v4399 = vmul.f32 %v3887, 0.044715
      %v4400 = vmul.f32 %v3888, 0.044715
      %v4401 = vmul.f32 %v3889, 0.044715
      %v4402 = vmul.f32 %v3890, 0.044715
      %v4403 = vmul.f32 %v3891, 0.044715
      %v4404 = vmul.f32 %v3892, 0.044715
      %v4405 = vmul.f32 %v3893, 0.044715
      %v4406 = vmul.f32 %v3894, 0.044715
      %v4407 = vmul.f32 %v3895, 0.044715
      %v4408 = vmul.f32 %v3896, 0.044715
      %v4409 = vmul.f32 %v3897, 0.044715
      %v4410 = vmul.f32 %v3898, 0.044715
      %v4411 = vmul.f32 %v3899, 0.044715
      %v4412 = vmul.f32 %v3900, 0.044715
      %v4413 = vmul.f32 %v3901, 0.044715
      %v4414 = vmul.f32 %v3902, 0.044715
      %v4415 = vmul.f32 %v3903, 0.044715
      %v4416 = vmul.f32 %v3904, 0.044715
      %v4417 = vmul.f32 %v3905, 0.044715
      %v4418 = vmul.f32 %v3906, 0.044715
      %v4419 = vmul.f32 %v3907, 0.044715
      %v4420 = vmul.f32 %v3908, 0.044715
      %v4421 = vmul.f32 %v3909, 0.044715
      %v4422 = vmul.f32 %v3910, 0.044715
      %v4423 = vmul.f32 %v3911, 0.044715
      %v4424 = vmul.f32 %v3912, 0.044715
      %v4425 = vmul.f32 %v3913, 0.044715
      %v4426 = vmul.f32 %v3914, 0.044715
      %v4427 = vmul.f32 %v3915, 0.044715
      %v4428 = vmul.f32 %v3916, 0.044715
      %v4429 = vmul.f32 %v3917, 0.044715
      %v4430 = vmul.f32 %v3918, 0.044715
      %v4431 = vmul.f32 %v3919, 0.044715
      %v4432 = vmul.f32 %v3920, 0.044715
      %v4433 = vmul.f32 %v3921, 0.044715
      %v4434 = vmul.f32 %v3922, 0.044715
      %v4435 = vmul.f32 %v3923, 0.044715
      %v4436 = vmul.f32 %v3924, 0.044715
      %v4437 = vmul.f32 %v3925, 0.044715
      %v4438 = vmul.f32 %v3926, 0.044715
      %v4439 = vmul.f32 %v3927, 0.044715
      %v4440 = vmul.f32 %v3928, 0.044715
      %v4441 = vmul.f32 %v3929, 0.044715
      %v4442 = vmul.f32 %v3930, 0.044715
      %v4443 = vmul.f32 %v3931, 0.044715
      %v4444 = vmul.f32 %v3932, 0.044715
      %v4445 = vmul.f32 %v3933, 0.044715
      %v4446 = vmul.f32 %v3934, 0.044715
      %v4447 = vmul.f32 %v3935, 0.044715
      %v4448 = vmul.f32 %v3936, 0.044715
      %v4449 = vmul.f32 %v3937, 0.044715
      %v4450 = vmul.f32 %v3938, 0.044715
      %v4451 = vmul.f32 %v3939, 0.044715
      %v4452 = vmul.f32 %v3940, 0.044715
      %v4453 = vmul.f32 %v3941, 0.044715
      %v4454 = vmul.f32 %v3942, 0.044715
      %v4455 = vmul.f32 %v3943, 0.044715
      %v4456 = vmul.f32 %v3944, 0.044715
      %v4457 = vmul.f32 %v3945, 0.044715
      %v4458 = vmul.f32 %v3946, 0.044715
      %v4459 = vmul.f32 %v3947, 0.044715
      %v4460 = vmul.f32 %v3948, 0.044715
      %v4461 = vmul.f32 %v3949, 0.044715
      %v4462 = vmul.f32 %v3950, 0.044715
      %v4463 = vmul.f32 %v3951, 0.044715
      %v4464 = vmul.f32 %v3952, 0.044715
      %v4465 = vmul.f32 %v3953, 0.044715
      %v4466 = vmul.f32 %v3954, 0.044715
      %v4467 = vmul.f32 %v3955, 0.044715
      %v4468 = vmul.f32 %v3956, 0.044715
      %v4469 = vmul.f32 %v3957, 0.044715
      %v4470 = vmul.f32 %v3958, 0.044715
      %v4471 = vmul.f32 %v3959, 0.044715
      %v4472 = vmul.f32 %v3960, 0.044715
      %v4473 = vmul.f32 %v3961, 0.044715
      %v4474 = vmul.f32 %v3962, 0.044715
      %v4475 = vmul.f32 %v3963, 0.044715
      %v4476 = vmul.f32 %v3964, 0.044715
      %v4477 = vmul.f32 %v3965, 0.044715
      %v4478 = vmul.f32 %v3966, 0.044715
      %v4479 = vmul.f32 %v3967, 0.044715
      %v4480 = vmul.f32 %v3968, 0.044715
      %v4481 = vmul.f32 %v3969, 0.044715
      %v4482 = vmul.f32 %v3970, 0.044715
      %v4483 = vmul.f32 %v3971, 0.044715
      %v4484 = vmul.f32 %v3972, 0.044715
      %v4485 = vmul.f32 %v3973, 0.044715
      %v4486 = vmul.f32 %v3974, 0.044715
      %v4487 = vmul.f32 %v3975, 0.044715
      %v4488 = vmul.f32 %v3976, 0.044715
      %v4489 = vmul.f32 %v3977, 0.044715
      %v4490 = vmul.f32 %v3978, 0.044715
      %v4491 = vmul.f32 %v3979, 0.044715
      %v4492 = vmul.f32 %v3980, 0.044715
      %v4493 = vmul.f32 %v3981, 0.044715
      %v4494 = vmul.f32 %v3982, 0.044715
      %v4495 = vmul.f32 %v3983, 0.044715
      %v4496 = vmul.f32 %v3984, 0.044715
      %v4497 = vmul.f32 %v3985, 0.044715
      %v4498 = vmul.f32 %v3986, 0.044715
      %v4499 = vmul.f32 %v3987, 0.044715
      %v4500 = vmul.f32 %v3988, 0.044715
      %v4501 = vmul.f32 %v3989, 0.044715
      %v4502 = vmul.f32 %v3990, 0.044715
      %v4503 = vmul.f32 %v3991, 0.044715
      %v4504 = vmul.f32 %v3992, 0.044715
      %v4505 = vmul.f32 %v3993, 0.044715
      %v4506 = vmul.f32 %v3994, 0.044715
      %v4507 = vmul.f32 %v3995, 0.044715
      %v4508 = vmul.f32 %v3996, 0.044715
      %v4509 = vmul.f32 %v3997, 0.044715
      %v4510 = vmul.f32 %v3998, 0.044715
      %v4511 = vmul.f32 %v3999, 0.044715
      %v4512 = vmul.f32 %v4000, 0.044715
      %v4513 = vmul.f32 %v4001, 0.044715
      %v4514 = vmul.f32 %v4002, 0.044715
      %v4515 = vmul.f32 %v4003, 0.044715
      %v4516 = vmul.f32 %v4004, 0.044715
      %v4517 = vmul.f32 %v4005, 0.044715
      %v4518 = vmul.f32 %v4006, 0.044715
      %v4519 = vmul.f32 %v4007, 0.044715
      %v4520 = vmul.f32 %v4008, 0.044715
      %v4521 = vmul.f32 %v4009, 0.044715
      %v4522 = vmul.f32 %v4010, 0.044715
      %v4523 = vmul.f32 %v4011, 0.044715
      %v4524 = vmul.f32 %v4012, 0.044715
      %v4525 = vmul.f32 %v4013, 0.044715
      %v4526 = vmul.f32 %v4014, 0.044715
      %v4527 = vmul.f32 %v4015, 0.044715
      %v4528 = vmul.f32 %v4016, 0.044715
      %v4529 = vmul.f32 %v4017, 0.044715
      %v4530 = vmul.f32 %v4018, 0.044715
      %v4531 = vmul.f32 %v4019, 0.044715
      %v4532 = vmul.f32 %v4020, 0.044715
      %v4533 = vmul.f32 %v4021, 0.044715
      %v4534 = vmul.f32 %v4022, 0.044715
      %v4535 = vmul.f32 %v4023, 0.044715
      %v4536 = vmul.f32 %v4024, 0.044715
      %v4537 = vmul.f32 %v4025, 0.044715
      %v4538 = vmul.f32 %v4026, 0.044715
      %v4539 = vmul.f32 %v4027, 0.044715
      %v4540 = vmul.f32 %v4028, 0.044715
      %v4541 = vmul.f32 %v4029, 0.044715
      %v4542 = vmul.f32 %v4030, 0.044715
      %v4543 = vmul.f32 %v4031, 0.044715
      %v4544 = vmul.f32 %v4032, 0.044715
      %v4545 = vmul.f32 %v4033, 0.044715
      %v4546 = vmul.f32 %v4034, 0.044715
      %v4547 = vmul.f32 %v4035, 0.044715
      %v4548 = vmul.f32 %v4036, 0.044715
      %v4549 = vmul.f32 %v4037, 0.044715
      %v4550 = vmul.f32 %v4038, 0.044715
      %v4551 = vmul.f32 %v4039, 0.044715
      %v4552 = vmul.f32 %v4040, 0.044715
      %v4553 = vmul.f32 %v4041, 0.044715
      %v4554 = vmul.f32 %v4042, 0.044715
      %v4555 = vmul.f32 %v4043, 0.044715
      %v4556 = vmul.f32 %v4044, 0.044715
      %v4557 = vmul.f32 %v4045, 0.044715
      %v4558 = vmul.f32 %v4046, 0.044715
      %v4559 = vmul.f32 %v4047, 0.044715
      %v4560 = vmul.f32 %v4048, 0.044715
      %v4561 = vmul.f32 %v4049, 0.044715
      %v4562 = vmul.f32 %v4050, 0.044715
      %v4563 = vmul.f32 %v4051, 0.044715
      %v4564 = vmul.f32 %v4052, 0.044715
      %v4565 = vmul.f32 %v4053, 0.044715
      %v4566 = vmul.f32 %v4054, 0.044715
      %v4567 = vmul.f32 %v4055, 0.044715
      %v4568 = vmul.f32 %v4056, 0.044715
      %v4569 = vmul.f32 %v4057, 0.044715
      %v4570 = vmul.f32 %v4058, 0.044715
      %v4571 = vmul.f32 %v4059, 0.044715
      %v4572 = vmul.f32 %v4060, 0.044715
      %v4573 = vmul.f32 %v4061, 0.044715
      %v4574 = vmul.f32 %v4062, 0.044715
      %v4575 = vmul.f32 %v4063, 0.044715
      %v4576 = vmul.f32 %v4064, 0.044715
      %v4577 = vmul.f32 %v4065, 0.044715
      %v4578 = vmul.f32 %v4066, 0.044715
      %v4579 = vmul.f32 %v4067, 0.044715
      %v4580 = vmul.f32 %v4068, 0.044715
      %v4581 = vmul.f32 %v4069, 0.044715
      %v4582 = vmul.f32 %v4070, 0.044715
      %v4583 = vmul.f32 %v4071, 0.044715
      %v4584 = vmul.f32 %v4072, 0.044715
      %v4585 = vmul.f32 %v4073, 0.044715
      %v4586 = vmul.f32 %v4074, 0.044715
      %v4587 = vmul.f32 %v4075, 0.044715
      %v4588 = vmul.f32 %v4076, 0.044715
      %v4589 = vmul.f32 %v4077, 0.044715
      %v4590 = vmul.f32 %v4078, 0.044715
      %v4591 = vmul.f32 %v4079, 0.044715
      %v4592 = vmul.f32 %v4080, 0.044715
      %v4593 = vmul.f32 %v4081, 0.044715
      %v4594 = vmul.f32 %v4082, 0.044715
      %v4595 = vmul.f32 %v4083, 0.044715
      %v4596 = vmul.f32 %v4084, 0.044715
      %v4597 = vmul.f32 %v4085, 0.044715
      %v4598 = vmul.f32 %v4086, 0.044715
      %v4599 = vmul.f32 %v4087, 0.044715
      %v4600 = vmul.f32 %v4088, 0.044715
      %v4601 = vmul.f32 %v4089, 0.044715
      %v4602 = vmul.f32 %v4090, 0.044715
      %v4603 = vmul.f32 %v4091, 0.044715
      %v4604 = vmul.f32 %v4092, 0.044715
      %v4605 = vmul.f32 %v4093, 0.044715
      %v4606 = vmul.f32 %v4094, 0.044715
      %v4607 = vmul.f32 %v4095, 0.044715
      %v4608 = vmul.f32 %v4096, 0.044715
      %v4609 = vmul.f32 %v4097, 0.044715
      %v4610 = vmul.f32 %v4098, 0.044715
      %v4611 = vmul.f32 %v4099, 0.044715
      %v4612 = vmul.f32 %v4100, 0.044715
      %v4613 = vmul.f32 %v4101, 0.044715
      %v4614 = vmul.f32 %v4102, 0.044715
      %v4615 = vmul.f32 %v4103, 0.044715
      %v4616 = vmul.f32 %v4104, 0.044715
      %v4617 = vmul.f32 %v4105, 0.044715
      %v4618 = vmul.f32 %v4106, 0.044715
      %v4619 = vmul.f32 %v4107, 0.044715
      %v4620 = vmul.f32 %v4108, 0.044715
      %v4621 = vmul.f32 %v4109, 0.044715
      %v4622 = vmul.f32 %v4110, 0.044715
      %v4623 = vmul.f32 %v4111, 0.044715
      %v4624 = vmul.f32 %v4112, 0.044715
      %v4625 = vmul.f32 %v4113, 0.044715
      %v4626 = vmul.f32 %v4114, 0.044715
      %v4627 = vmul.f32 %v4115, 0.044715
      %v4628 = vmul.f32 %v4116, 0.044715
      %v4629 = vmul.f32 %v4117, 0.044715
      %v4630 = vmul.f32 %v4118, 0.044715
      %v4631 = vmul.f32 %v4119, 0.044715
      %v4632 = vmul.f32 %v4120, 0.044715
      %v4633 = vmul.f32 %v4121, 0.044715
      %v4634 = vmul.f32 %v4122, 0.044715
      %v4635 = vmul.f32 %v4123, 0.044715
      %v4636 = vmul.f32 %v4124, 0.044715
      %v4637 = vmul.f32 %v4125, 0.044715
      %v4638 = vmul.f32 %v4126, 0.044715
      %v4639 = vmul.f32 %v4127, 0.044715
      %v4640 = vmul.f32 %v4128, 0.044715
      %v4641 = vmul.f32 %v4129, 0.044715
      %v4642 = vmul.f32 %v4130, 0.044715
      %v4643 = vmul.f32 %v4131, 0.044715
      %v4644 = vmul.f32 %v4132, 0.044715
      %v4645 = vmul.f32 %v4133, 0.044715
      %v4646 = vmul.f32 %v4134, 0.044715
      %v4647 = vmul.f32 %v4135, 0.044715
      %v4648 = vmul.f32 %v4136, 0.044715
      %v4649 = vmul.f32 %v4137, 0.044715
      %v4650 = vmul.f32 %v4138, 0.044715
      %v4651 = vmul.f32 %v4139, 0.044715
      %v4652 = vmul.f32 %v4140, 0.044715
      %v4653 = vmul.f32 %v4141, 0.044715
      %v4654 = vmul.f32 %v4142, 0.044715
      %v4655 = vmul.f32 %v4143, 0.044715
      %v4656 = vmul.f32 %v4144, 0.044715
      %v4657 = vmul.f32 %v4145, 0.044715
      %v4658 = vmul.f32 %v4146, 0.044715
      %v4659 = vmul.f32 %v4147, 0.044715
      %v4660 = vmul.f32 %v4148, 0.044715
      %v4661 = vmul.f32 %v4149, 0.044715
      %v4662 = vmul.f32 %v4150, 0.044715
      %v4663 = vmul.f32 %v4151, 0.044715
      %v4664 = vmul.f32 %v4152, 0.044715
      %v4665 = vmul.f32 %v4153, 0.044715
      %v4666 = vmul.f32 %v4154, 0.044715
      %v4667 = vmul.f32 %v4155, 0.044715
      %v4668 = vmul.f32 %v4156, 0.044715
      %v4669 = vmul.f32 %v4157, 0.044715
      %v4670 = vmul.f32 %v4158, 0.044715
      %v4671 = vmul.f32 %v4159, 0.044715
      %v4672 = vmul.f32 %v4160, 0.044715
      %v4673 = vmul.f32 %v4161, 0.044715
      %v4674 = vmul.f32 %v4162, 0.044715
      %v4675 = vmul.f32 %v4163, 0.044715
      %v4676 = vmul.f32 %v4164, 0.044715
      %v4677 = vmul.f32 %v4165, 0.044715
      %v4678 = vmul.f32 %v4166, 0.044715
      %v4679 = vmul.f32 %v4167, 0.044715
      %v4680 = vmul.f32 %v4168, 0.044715
      %v4681 = vmul.f32 %v4169, 0.044715
      %v4682 = vmul.f32 %v4170, 0.044715
      %v4683 = vmul.f32 %v4171, 0.044715
      %v4684 = vmul.f32 %v4172, 0.044715
      %v4685 = vmul.f32 %v4173, 0.044715
      %v4686 = vmul.f32 %v4174, 0.044715
      %v4687 = vmul.f32 %v4175, 0.044715
      %v4688 = vmul.f32 %v4176, 0.044715
      %v4689 = vmul.f32 %v4177, 0.044715
      %v4690 = vmul.f32 %v4178, 0.044715
      %v4691 = vmul.f32 %v4179, 0.044715
      %v4692 = vmul.f32 %v4180, 0.044715
      %v4693 = vmul.f32 %v4181, 0.044715
      %v4694 = vmul.f32 %v4182, 0.044715
      %v4695 = vmul.f32 %v4183, 0.044715
      %v4696 = vmul.f32 %v4184, 0.044715
      %v4697 = vmul.f32 %v4185, 0.044715
      %v4698 = vmul.f32 %v4186, 0.044715
      %v4699 = vmul.f32 %v4187, 0.044715
      %v4700 = vmul.f32 %v4188, 0.044715
      %v4701 = vmul.f32 %v4189, 0.044715
      %v4702 = vmul.f32 %v4190, 0.044715
      %v4703 = vmul.f32 %v4191, 0.044715
      %v4704 = vmul.f32 %v4192, 0.044715
      %v4705 = vmul.f32 %v4193, 0.044715
      %v4706 = vmul.f32 %v4194, 0.044715
      %v4707 = vmul.f32 %v4195, 0.044715
      %v4708 = vmul.f32 %v4196, 0.044715
      %v4709 = vmul.f32 %v4197, 0.044715
      %v4710 = vmul.f32 %v4198, 0.044715
      %v4711 = vmul.f32 %v4199, 0.044715
      %v4712 = vmul.f32 %v4200, 0.044715
      %v4713 = vmul.f32 %v4201, 0.044715
      %v4714 = vmul.f32 %v4202, 0.044715
      %v4715 = vmul.f32 %v4203, 0.044715
      %v4716 = vmul.f32 %v4204, 0.044715
      %v4717 = vmul.f32 %v4205, 0.044715
      %v4718 = vmul.f32 %v4206, 0.044715
      %v4719 = vmul.f32 %v4207, 0.044715
      %v4720 = vmul.f32 %v4208, 0.044715
      %v4721 = vmul.f32 %v4209, 0.044715
      %v4722 = vmul.f32 %v4210, 0.044715
      %v4723 = vmul.f32 %v4211, 0.044715
      %v4724 = vmul.f32 %v4212, 0.044715
      %v4725 = vmul.f32 %v4213, 0.044715
      %v4726 = vmul.f32 %v4214, 0.044715
      %v4727 = vmul.f32 %v4215, 0.044715
      %v4728 = vmul.f32 %v4216, 0.044715
      %v4729 = vmul.f32 %v4217, 0.044715
      %v4730 = vmul.f32 %v4218, 0.044715
      %v4731 = vmul.f32 %v4219, 0.044715
      %v4732 = vmul.f32 %v4220, 0.044715
      %v4733 = vmul.f32 %v4221, 0.044715
      %v4734 = vmul.f32 %v4222, 0.044715
      %v4735 = vmul.f32 %v4223, 0.044715
      %v4736 = vmul.f32 %v4224, 0.044715
      %v4737 = vmul.f32 %v4225, 0.044715
      %v4738 = vmul.f32 %v4226, 0.044715
      %v4739 = vmul.f32 %v4227, 0.044715
      %v4740 = vmul.f32 %v4228, 0.044715
      %v4741 = vmul.f32 %v4229, 0.044715
      %v4742 = vmul.f32 %v4230, 0.044715
      %v4743 = vmul.f32 %v4231, 0.044715
      %v4744 = vmul.f32 %v4232, 0.044715
      %v4745 = vmul.f32 %v4233, 0.044715
      %v4746 = vmul.f32 %v4234, 0.044715
      %v4747 = vmul.f32 %v4235, 0.044715
      %v4748 = vmul.f32 %v4236, 0.044715
      %v4749 = vadd.f32 %v1423, %v4237
      %v4750 = vadd.f32 %v1425, %v4238
      %v4751 = vadd.f32 %v1427, %v4239
      %v4752 = vadd.f32 %v1429, %v4240
      %v4753 = vadd.f32 %v1433, %v4241
      %v4754 = vadd.f32 %v1435, %v4242
      %v4755 = vadd.f32 %v1437, %v4243
      %v4756 = vadd.f32 %v1439, %v4244
      %v4757 = vadd.f32 %v1443, %v4245
      %v4758 = vadd.f32 %v1445, %v4246
      %v4759 = vadd.f32 %v1447, %v4247
      %v4760 = vadd.f32 %v1449, %v4248
      %v4761 = vadd.f32 %v1453, %v4249
      %v4762 = vadd.f32 %v1455, %v4250
      %v4763 = vadd.f32 %v1457, %v4251
      %v4764 = vadd.f32 %v1459, %v4252
      %v4765 = vadd.f32 %v1463, %v4253
      %v4766 = vadd.f32 %v1465, %v4254
      %v4767 = vadd.f32 %v1467, %v4255
      %v4768 = vadd.f32 %v1469, %v4256
      %v4769 = vadd.f32 %v1473, %v4257
      %v4770 = vadd.f32 %v1475, %v4258
      %v4771 = vadd.f32 %v1477, %v4259
      %v4772 = vadd.f32 %v1479, %v4260
      %v4773 = vadd.f32 %v1483, %v4261
      %v4774 = vadd.f32 %v1485, %v4262
      %v4775 = vadd.f32 %v1487, %v4263
      %v4776 = vadd.f32 %v1489, %v4264
      %v4777 = vadd.f32 %v1493, %v4265
      %v4778 = vadd.f32 %v1495, %v4266
      %v4779 = vadd.f32 %v1497, %v4267
      %v4780 = vadd.f32 %v1499, %v4268
      %v4781 = vadd.f32 %v1503, %v4269
      %v4782 = vadd.f32 %v1505, %v4270
      %v4783 = vadd.f32 %v1507, %v4271
      %v4784 = vadd.f32 %v1509, %v4272
      %v4785 = vadd.f32 %v1513, %v4273
      %v4786 = vadd.f32 %v1515, %v4274
      %v4787 = vadd.f32 %v1517, %v4275
      %v4788 = vadd.f32 %v1519, %v4276
      %v4789 = vadd.f32 %v1523, %v4277
      %v4790 = vadd.f32 %v1525, %v4278
      %v4791 = vadd.f32 %v1527, %v4279
      %v4792 = vadd.f32 %v1529, %v4280
      %v4793 = vadd.f32 %v1533, %v4281
      %v4794 = vadd.f32 %v1535, %v4282
      %v4795 = vadd.f32 %v1537, %v4283
      %v4796 = vadd.f32 %v1539, %v4284
      %v4797 = vadd.f32 %v1543, %v4285
      %v4798 = vadd.f32 %v1545, %v4286
      %v4799 = vadd.f32 %v1547, %v4287
      %v4800 = vadd.f32 %v1549, %v4288
      %v4801 = vadd.f32 %v1553, %v4289
      %v4802 = vadd.f32 %v1555, %v4290
      %v4803 = vadd.f32 %v1557, %v4291
      %v4804 = vadd.f32 %v1559, %v4292
      %v4805 = vadd.f32 %v1563, %v4293
      %v4806 = vadd.f32 %v1565, %v4294
      %v4807 = vadd.f32 %v1567, %v4295
      %v4808 = vadd.f32 %v1569, %v4296
      %v4809 = vadd.f32 %v1573, %v4297
      %v4810 = vadd.f32 %v1575, %v4298
      %v4811 = vadd.f32 %v1577, %v4299
      %v4812 = vadd.f32 %v1579, %v4300
      %v4813 = vadd.f32 %v1583, %v4301
      %v4814 = vadd.f32 %v1585, %v4302
      %v4815 = vadd.f32 %v1587, %v4303
      %v4816 = vadd.f32 %v1589, %v4304
      %v4817 = vadd.f32 %v1593, %v4305
      %v4818 = vadd.f32 %v1595, %v4306
      %v4819 = vadd.f32 %v1597, %v4307
      %v4820 = vadd.f32 %v1599, %v4308
      %v4821 = vadd.f32 %v1603, %v4309
      %v4822 = vadd.f32 %v1605, %v4310
      %v4823 = vadd.f32 %v1607, %v4311
      %v4824 = vadd.f32 %v1609, %v4312
      %v4825 = vadd.f32 %v1613, %v4313
      %v4826 = vadd.f32 %v1615, %v4314
      %v4827 = vadd.f32 %v1617, %v4315
      %v4828 = vadd.f32 %v1619, %v4316
      %v4829 = vadd.f32 %v1623, %v4317
      %v4830 = vadd.f32 %v1625, %v4318
      %v4831 = vadd.f32 %v1627, %v4319
      %v4832 = vadd.f32 %v1629, %v4320
      %v4833 = vadd.f32 %v1633, %v4321
      %v4834 = vadd.f32 %v1635, %v4322
      %v4835 = vadd.f32 %v1637, %v4323
      %v4836 = vadd.f32 %v1639, %v4324
      %v4837 = vadd.f32 %v1643, %v4325
      %v4838 = vadd.f32 %v1645, %v4326
      %v4839 = vadd.f32 %v1647, %v4327
      %v4840 = vadd.f32 %v1649, %v4328
      %v4841 = vadd.f32 %v1653, %v4329
      %v4842 = vadd.f32 %v1655, %v4330
      %v4843 = vadd.f32 %v1657, %v4331
      %v4844 = vadd.f32 %v1659, %v4332
      %v4845 = vadd.f32 %v1663, %v4333
      %v4846 = vadd.f32 %v1665, %v4334
      %v4847 = vadd.f32 %v1667, %v4335
      %v4848 = vadd.f32 %v1669, %v4336
      %v4849 = vadd.f32 %v1673, %v4337
      %v4850 = vadd.f32 %v1675, %v4338
      %v4851 = vadd.f32 %v1677, %v4339
      %v4852 = vadd.f32 %v1679, %v4340
      %v4853 = vadd.f32 %v1683, %v4341
      %v4854 = vadd.f32 %v1685, %v4342
      %v4855 = vadd.f32 %v1687, %v4343
      %v4856 = vadd.f32 %v1689, %v4344
      %v4857 = vadd.f32 %v1693, %v4345
      %v4858 = vadd.f32 %v1695, %v4346
      %v4859 = vadd.f32 %v1697, %v4347
      %v4860 = vadd.f32 %v1699, %v4348
      %v4861 = vadd.f32 %v1703, %v4349
      %v4862 = vadd.f32 %v1705, %v4350
      %v4863 = vadd.f32 %v1707, %v4351
      %v4864 = vadd.f32 %v1709, %v4352
      %v4865 = vadd.f32 %v1713, %v4353
      %v4866 = vadd.f32 %v1715, %v4354
      %v4867 = vadd.f32 %v1717, %v4355
      %v4868 = vadd.f32 %v1719, %v4356
      %v4869 = vadd.f32 %v1723, %v4357
      %v4870 = vadd.f32 %v1725, %v4358
      %v4871 = vadd.f32 %v1727, %v4359
      %v4872 = vadd.f32 %v1729, %v4360
      %v4873 = vadd.f32 %v1733, %v4361
      %v4874 = vadd.f32 %v1735, %v4362
      %v4875 = vadd.f32 %v1737, %v4363
      %v4876 = vadd.f32 %v1739, %v4364
      %v4877 = vadd.f32 %v1743, %v4365
      %v4878 = vadd.f32 %v1745, %v4366
      %v4879 = vadd.f32 %v1747, %v4367
      %v4880 = vadd.f32 %v1749, %v4368
      %v4881 = vadd.f32 %v1753, %v4369
      %v4882 = vadd.f32 %v1755, %v4370
      %v4883 = vadd.f32 %v1757, %v4371
      %v4884 = vadd.f32 %v1759, %v4372
      %v4885 = vadd.f32 %v1763, %v4373
      %v4886 = vadd.f32 %v1765, %v4374
      %v4887 = vadd.f32 %v1767, %v4375
      %v4888 = vadd.f32 %v1769, %v4376
      %v4889 = vadd.f32 %v1773, %v4377
      %v4890 = vadd.f32 %v1775, %v4378
      %v4891 = vadd.f32 %v1777, %v4379
      %v4892 = vadd.f32 %v1779, %v4380
      %v4893 = vadd.f32 %v1783, %v4381
      %v4894 = vadd.f32 %v1785, %v4382
      %v4895 = vadd.f32 %v1787, %v4383
      %v4896 = vadd.f32 %v1789, %v4384
      %v4897 = vadd.f32 %v1793, %v4385
      %v4898 = vadd.f32 %v1795, %v4386
      %v4899 = vadd.f32 %v1797, %v4387
      %v4900 = vadd.f32 %v1799, %v4388
      %v4901 = vadd.f32 %v1803, %v4389
      %v4902 = vadd.f32 %v1805, %v4390
      %v4903 = vadd.f32 %v1807, %v4391
      %v4904 = vadd.f32 %v1809, %v4392
      %v4905 = vadd.f32 %v1813, %v4393
      %v4906 = vadd.f32 %v1815, %v4394
      %v4907 = vadd.f32 %v1817, %v4395
      %v4908 = vadd.f32 %v1819, %v4396
      %v4909 = vadd.f32 %v1823, %v4397
      %v4910 = vadd.f32 %v1825, %v4398
      %v4911 = vadd.f32 %v1827, %v4399
      %v4912 = vadd.f32 %v1829, %v4400
      %v4913 = vadd.f32 %v1833, %v4401
      %v4914 = vadd.f32 %v1835, %v4402
      %v4915 = vadd.f32 %v1837, %v4403
      %v4916 = vadd.f32 %v1839, %v4404
      %v4917 = vadd.f32 %v1843, %v4405
      %v4918 = vadd.f32 %v1845, %v4406
      %v4919 = vadd.f32 %v1847, %v4407
      %v4920 = vadd.f32 %v1849, %v4408
      %v4921 = vadd.f32 %v1853, %v4409
      %v4922 = vadd.f32 %v1855, %v4410
      %v4923 = vadd.f32 %v1857, %v4411
      %v4924 = vadd.f32 %v1859, %v4412
      %v4925 = vadd.f32 %v1863, %v4413
      %v4926 = vadd.f32 %v1865, %v4414
      %v4927 = vadd.f32 %v1867, %v4415
      %v4928 = vadd.f32 %v1869, %v4416
      %v4929 = vadd.f32 %v1873, %v4417
      %v4930 = vadd.f32 %v1875, %v4418
      %v4931 = vadd.f32 %v1877, %v4419
      %v4932 = vadd.f32 %v1879, %v4420
      %v4933 = vadd.f32 %v1883, %v4421
      %v4934 = vadd.f32 %v1885, %v4422
      %v4935 = vadd.f32 %v1887, %v4423
      %v4936 = vadd.f32 %v1889, %v4424
      %v4937 = vadd.f32 %v1893, %v4425
      %v4938 = vadd.f32 %v1895, %v4426
      %v4939 = vadd.f32 %v1897, %v4427
      %v4940 = vadd.f32 %v1899, %v4428
      %v4941 = vadd.f32 %v1903, %v4429
      %v4942 = vadd.f32 %v1905, %v4430
      %v4943 = vadd.f32 %v1907, %v4431
      %v4944 = vadd.f32 %v1909, %v4432
      %v4945 = vadd.f32 %v1913, %v4433
      %v4946 = vadd.f32 %v1915, %v4434
      %v4947 = vadd.f32 %v1917, %v4435
      %v4948 = vadd.f32 %v1919, %v4436
      %v4949 = vadd.f32 %v1923, %v4437
      %v4950 = vadd.f32 %v1925, %v4438
      %v4951 = vadd.f32 %v1927, %v4439
      %v4952 = vadd.f32 %v1929, %v4440
      %v4953 = vadd.f32 %v1933, %v4441
      %v4954 = vadd.f32 %v1935, %v4442
      %v4955 = vadd.f32 %v1937, %v4443
      %v4956 = vadd.f32 %v1939, %v4444
      %v4957 = vadd.f32 %v1943, %v4445
      %v4958 = vadd.f32 %v1945, %v4446
      %v4959 = vadd.f32 %v1947, %v4447
      %v4960 = vadd.f32 %v1949, %v4448
      %v4961 = vadd.f32 %v1953, %v4449
      %v4962 = vadd.f32 %v1955, %v4450
      %v4963 = vadd.f32 %v1957, %v4451
      %v4964 = vadd.f32 %v1959, %v4452
      %v4965 = vadd.f32 %v1963, %v4453
      %v4966 = vadd.f32 %v1965, %v4454
      %v4967 = vadd.f32 %v1967, %v4455
      %v4968 = vadd.f32 %v1969, %v4456
      %v4969 = vadd.f32 %v1973, %v4457
      %v4970 = vadd.f32 %v1975, %v4458
      %v4971 = vadd.f32 %v1977, %v4459
      %v4972 = vadd.f32 %v1979, %v4460
      %v4973 = vadd.f32 %v1983, %v4461
      %v4974 = vadd.f32 %v1985, %v4462
      %v4975 = vadd.f32 %v1987, %v4463
      %v4976 = vadd.f32 %v1989, %v4464
      %v4977 = vadd.f32 %v1993, %v4465
      %v4978 = vadd.f32 %v1995, %v4466
      %v4979 = vadd.f32 %v1997, %v4467
      %v4980 = vadd.f32 %v1999, %v4468
      %v4981 = vadd.f32 %v2003, %v4469
      %v4982 = vadd.f32 %v2005, %v4470
      %v4983 = vadd.f32 %v2007, %v4471
      %v4984 = vadd.f32 %v2009, %v4472
      %v4985 = vadd.f32 %v2013, %v4473
      %v4986 = vadd.f32 %v2015, %v4474
      %v4987 = vadd.f32 %v2017, %v4475
      %v4988 = vadd.f32 %v2019, %v4476
      %v4989 = vadd.f32 %v2023, %v4477
      %v4990 = vadd.f32 %v2025, %v4478
      %v4991 = vadd.f32 %v2027, %v4479
      %v4992 = vadd.f32 %v2029, %v4480
      %v4993 = vadd.f32 %v2033, %v4481
      %v4994 = vadd.f32 %v2035, %v4482
      %v4995 = vadd.f32 %v2037, %v4483
      %v4996 = vadd.f32 %v2039, %v4484
      %v4997 = vadd.f32 %v2043, %v4485
      %v4998 = vadd.f32 %v2045, %v4486
      %v4999 = vadd.f32 %v2047, %v4487
      %v5000 = vadd.f32 %v2049, %v4488
      %v5001 = vadd.f32 %v2053, %v4489
      %v5002 = vadd.f32 %v2055, %v4490
      %v5003 = vadd.f32 %v2057, %v4491
      %v5004 = vadd.f32 %v2059, %v4492
      %v5005 = vadd.f32 %v2063, %v4493
      %v5006 = vadd.f32 %v2065, %v4494
      %v5007 = vadd.f32 %v2067, %v4495
      %v5008 = vadd.f32 %v2069, %v4496
      %v5009 = vadd.f32 %v2073, %v4497
      %v5010 = vadd.f32 %v2075, %v4498
      %v5011 = vadd.f32 %v2077, %v4499
      %v5012 = vadd.f32 %v2079, %v4500
      %v5013 = vadd.f32 %v2083, %v4501
      %v5014 = vadd.f32 %v2085, %v4502
      %v5015 = vadd.f32 %v2087, %v4503
      %v5016 = vadd.f32 %v2089, %v4504
      %v5017 = vadd.f32 %v2093, %v4505
      %v5018 = vadd.f32 %v2095, %v4506
      %v5019 = vadd.f32 %v2097, %v4507
      %v5020 = vadd.f32 %v2099, %v4508
      %v5021 = vadd.f32 %v2103, %v4509
      %v5022 = vadd.f32 %v2105, %v4510
      %v5023 = vadd.f32 %v2107, %v4511
      %v5024 = vadd.f32 %v2109, %v4512
      %v5025 = vadd.f32 %v2113, %v4513
      %v5026 = vadd.f32 %v2115, %v4514
      %v5027 = vadd.f32 %v2117, %v4515
      %v5028 = vadd.f32 %v2119, %v4516
      %v5029 = vadd.f32 %v2123, %v4517
      %v5030 = vadd.f32 %v2125, %v4518
      %v5031 = vadd.f32 %v2127, %v4519
      %v5032 = vadd.f32 %v2129, %v4520
      %v5033 = vadd.f32 %v2133, %v4521
      %v5034 = vadd.f32 %v2135, %v4522
      %v5035 = vadd.f32 %v2137, %v4523
      %v5036 = vadd.f32 %v2139, %v4524
      %v5037 = vadd.f32 %v2143, %v4525
      %v5038 = vadd.f32 %v2145, %v4526
      %v5039 = vadd.f32 %v2147, %v4527
      %v5040 = vadd.f32 %v2149, %v4528
      %v5041 = vadd.f32 %v2153, %v4529
      %v5042 = vadd.f32 %v2155, %v4530
      %v5043 = vadd.f32 %v2157, %v4531
      %v5044 = vadd.f32 %v2159, %v4532
      %v5045 = vadd.f32 %v2163, %v4533
      %v5046 = vadd.f32 %v2165, %v4534
      %v5047 = vadd.f32 %v2167, %v4535
      %v5048 = vadd.f32 %v2169, %v4536
      %v5049 = vadd.f32 %v2173, %v4537
      %v5050 = vadd.f32 %v2175, %v4538
      %v5051 = vadd.f32 %v2177, %v4539
      %v5052 = vadd.f32 %v2179, %v4540
      %v5053 = vadd.f32 %v2183, %v4541
      %v5054 = vadd.f32 %v2185, %v4542
      %v5055 = vadd.f32 %v2187, %v4543
      %v5056 = vadd.f32 %v2189, %v4544
      %v5057 = vadd.f32 %v2193, %v4545
      %v5058 = vadd.f32 %v2195, %v4546
      %v5059 = vadd.f32 %v2197, %v4547
      %v5060 = vadd.f32 %v2199, %v4548
      %v5061 = vadd.f32 %v2203, %v4549
      %v5062 = vadd.f32 %v2205, %v4550
      %v5063 = vadd.f32 %v2207, %v4551
      %v5064 = vadd.f32 %v2209, %v4552
      %v5065 = vadd.f32 %v2213, %v4553
      %v5066 = vadd.f32 %v2215, %v4554
      %v5067 = vadd.f32 %v2217, %v4555
      %v5068 = vadd.f32 %v2219, %v4556
      %v5069 = vadd.f32 %v2223, %v4557
      %v5070 = vadd.f32 %v2225, %v4558
      %v5071 = vadd.f32 %v2227, %v4559
      %v5072 = vadd.f32 %v2229, %v4560
      %v5073 = vadd.f32 %v2233, %v4561
      %v5074 = vadd.f32 %v2235, %v4562
      %v5075 = vadd.f32 %v2237, %v4563
      %v5076 = vadd.f32 %v2239, %v4564
      %v5077 = vadd.f32 %v2243, %v4565
      %v5078 = vadd.f32 %v2245, %v4566
      %v5079 = vadd.f32 %v2247, %v4567
      %v5080 = vadd.f32 %v2249, %v4568
      %v5081 = vadd.f32 %v2253, %v4569
      %v5082 = vadd.f32 %v2255, %v4570
      %v5083 = vadd.f32 %v2257, %v4571
      %v5084 = vadd.f32 %v2259, %v4572
      %v5085 = vadd.f32 %v2263, %v4573
      %v5086 = vadd.f32 %v2265, %v4574
      %v5087 = vadd.f32 %v2267, %v4575
      %v5088 = vadd.f32 %v2269, %v4576
      %v5089 = vadd.f32 %v2273, %v4577
      %v5090 = vadd.f32 %v2275, %v4578
      %v5091 = vadd.f32 %v2277, %v4579
      %v5092 = vadd.f32 %v2279, %v4580
      %v5093 = vadd.f32 %v2283, %v4581
      %v5094 = vadd.f32 %v2285, %v4582
      %v5095 = vadd.f32 %v2287, %v4583
      %v5096 = vadd.f32 %v2289, %v4584
      %v5097 = vadd.f32 %v2293, %v4585
      %v5098 = vadd.f32 %v2295, %v4586
      %v5099 = vadd.f32 %v2297, %v4587
      %v5100 = vadd.f32 %v2299, %v4588
      %v5101 = vadd.f32 %v2303, %v4589
      %v5102 = vadd.f32 %v2305, %v4590
      %v5103 = vadd.f32 %v2307, %v4591
      %v5104 = vadd.f32 %v2309, %v4592
      %v5105 = vadd.f32 %v2313, %v4593
      %v5106 = vadd.f32 %v2315, %v4594
      %v5107 = vadd.f32 %v2317, %v4595
      %v5108 = vadd.f32 %v2319, %v4596
      %v5109 = vadd.f32 %v2323, %v4597
      %v5110 = vadd.f32 %v2325, %v4598
      %v5111 = vadd.f32 %v2327, %v4599
      %v5112 = vadd.f32 %v2329, %v4600
      %v5113 = vadd.f32 %v2333, %v4601
      %v5114 = vadd.f32 %v2335, %v4602
      %v5115 = vadd.f32 %v2337, %v4603
      %v5116 = vadd.f32 %v2339, %v4604
      %v5117 = vadd.f32 %v2343, %v4605
      %v5118 = vadd.f32 %v2345, %v4606
      %v5119 = vadd.f32 %v2347, %v4607
      %v5120 = vadd.f32 %v2349, %v4608
      %v5121 = vadd.f32 %v2353, %v4609
      %v5122 = vadd.f32 %v2355, %v4610
      %v5123 = vadd.f32 %v2357, %v4611
      %v5124 = vadd.f32 %v2359, %v4612
      %v5125 = vadd.f32 %v2363, %v4613
      %v5126 = vadd.f32 %v2365, %v4614
      %v5127 = vadd.f32 %v2367, %v4615
      %v5128 = vadd.f32 %v2369, %v4616
      %v5129 = vadd.f32 %v2373, %v4617
      %v5130 = vadd.f32 %v2375, %v4618
      %v5131 = vadd.f32 %v2377, %v4619
      %v5132 = vadd.f32 %v2379, %v4620
      %v5133 = vadd.f32 %v2383, %v4621
      %v5134 = vadd.f32 %v2385, %v4622
      %v5135 = vadd.f32 %v2387, %v4623
      %v5136 = vadd.f32 %v2389, %v4624
      %v5137 = vadd.f32 %v2393, %v4625
      %v5138 = vadd.f32 %v2395, %v4626
      %v5139 = vadd.f32 %v2397, %v4627
      %v5140 = vadd.f32 %v2399, %v4628
      %v5141 = vadd.f32 %v2403, %v4629
      %v5142 = vadd.f32 %v2405, %v4630
      %v5143 = vadd.f32 %v2407, %v4631
      %v5144 = vadd.f32 %v2409, %v4632
      %v5145 = vadd.f32 %v2413, %v4633
      %v5146 = vadd.f32 %v2415, %v4634
      %v5147 = vadd.f32 %v2417, %v4635
      %v5148 = vadd.f32 %v2419, %v4636
      %v5149 = vadd.f32 %v2423, %v4637
      %v5150 = vadd.f32 %v2425, %v4638
      %v5151 = vadd.f32 %v2427, %v4639
      %v5152 = vadd.f32 %v2429, %v4640
      %v5153 = vadd.f32 %v2433, %v4641
      %v5154 = vadd.f32 %v2435, %v4642
      %v5155 = vadd.f32 %v2437, %v4643
      %v5156 = vadd.f32 %v2439, %v4644
      %v5157 = vadd.f32 %v2443, %v4645
      %v5158 = vadd.f32 %v2445, %v4646
      %v5159 = vadd.f32 %v2447, %v4647
      %v5160 = vadd.f32 %v2449, %v4648
      %v5161 = vadd.f32 %v2453, %v4649
      %v5162 = vadd.f32 %v2455, %v4650
      %v5163 = vadd.f32 %v2457, %v4651
      %v5164 = vadd.f32 %v2459, %v4652
      %v5165 = vadd.f32 %v2463, %v4653
      %v5166 = vadd.f32 %v2465, %v4654
      %v5167 = vadd.f32 %v2467, %v4655
      %v5168 = vadd.f32 %v2469, %v4656
      %v5169 = vadd.f32 %v2473, %v4657
      %v5170 = vadd.f32 %v2475, %v4658
      %v5171 = vadd.f32 %v2477, %v4659
      %v5172 = vadd.f32 %v2479, %v4660
      %v5173 = vadd.f32 %v2483, %v4661
      %v5174 = vadd.f32 %v2485, %v4662
      %v5175 = vadd.f32 %v2487, %v4663
      %v5176 = vadd.f32 %v2489, %v4664
      %v5177 = vadd.f32 %v2493, %v4665
      %v5178 = vadd.f32 %v2495, %v4666
      %v5179 = vadd.f32 %v2497, %v4667
      %v5180 = vadd.f32 %v2499, %v4668
      %v5181 = vadd.f32 %v2503, %v4669
      %v5182 = vadd.f32 %v2505, %v4670
      %v5183 = vadd.f32 %v2507, %v4671
      %v5184 = vadd.f32 %v2509, %v4672
      %v5185 = vadd.f32 %v2513, %v4673
      %v5186 = vadd.f32 %v2515, %v4674
      %v5187 = vadd.f32 %v2517, %v4675
      %v5188 = vadd.f32 %v2519, %v4676
      %v5189 = vadd.f32 %v2523, %v4677
      %v5190 = vadd.f32 %v2525, %v4678
      %v5191 = vadd.f32 %v2527, %v4679
      %v5192 = vadd.f32 %v2529, %v4680
      %v5193 = vadd.f32 %v2533, %v4681
      %v5194 = vadd.f32 %v2535, %v4682
      %v5195 = vadd.f32 %v2537, %v4683
      %v5196 = vadd.f32 %v2539, %v4684
      %v5197 = vadd.f32 %v2543, %v4685
      %v5198 = vadd.f32 %v2545, %v4686
      %v5199 = vadd.f32 %v2547, %v4687
      %v5200 = vadd.f32 %v2549, %v4688
      %v5201 = vadd.f32 %v2553, %v4689
      %v5202 = vadd.f32 %v2555, %v4690
      %v5203 = vadd.f32 %v2557, %v4691
      %v5204 = vadd.f32 %v2559, %v4692
      %v5205 = vadd.f32 %v2563, %v4693
      %v5206 = vadd.f32 %v2565, %v4694
      %v5207 = vadd.f32 %v2567, %v4695
      %v5208 = vadd.f32 %v2569, %v4696
      %v5209 = vadd.f32 %v2573, %v4697
      %v5210 = vadd.f32 %v2575, %v4698
      %v5211 = vadd.f32 %v2577, %v4699
      %v5212 = vadd.f32 %v2579, %v4700
      %v5213 = vadd.f32 %v2583, %v4701
      %v5214 = vadd.f32 %v2585, %v4702
      %v5215 = vadd.f32 %v2587, %v4703
      %v5216 = vadd.f32 %v2589, %v4704
      %v5217 = vadd.f32 %v2593, %v4705
      %v5218 = vadd.f32 %v2595, %v4706
      %v5219 = vadd.f32 %v2597, %v4707
      %v5220 = vadd.f32 %v2599, %v4708
      %v5221 = vadd.f32 %v2603, %v4709
      %v5222 = vadd.f32 %v2605, %v4710
      %v5223 = vadd.f32 %v2607, %v4711
      %v5224 = vadd.f32 %v2609, %v4712
      %v5225 = vadd.f32 %v2613, %v4713
      %v5226 = vadd.f32 %v2615, %v4714
      %v5227 = vadd.f32 %v2617, %v4715
      %v5228 = vadd.f32 %v2619, %v4716
      %v5229 = vadd.f32 %v2623, %v4717
      %v5230 = vadd.f32 %v2625, %v4718
      %v5231 = vadd.f32 %v2627, %v4719
      %v5232 = vadd.f32 %v2629, %v4720
      %v5233 = vadd.f32 %v2633, %v4721
      %v5234 = vadd.f32 %v2635, %v4722
      %v5235 = vadd.f32 %v2637, %v4723
      %v5236 = vadd.f32 %v2639, %v4724
      %v5237 = vadd.f32 %v2643, %v4725
      %v5238 = vadd.f32 %v2645, %v4726
      %v5239 = vadd.f32 %v2647, %v4727
      %v5240 = vadd.f32 %v2649, %v4728
      %v5241 = vadd.f32 %v2653, %v4729
      %v5242 = vadd.f32 %v2655, %v4730
      %v5243 = vadd.f32 %v2657, %v4731
      %v5244 = vadd.f32 %v2659, %v4732
      %v5245 = vadd.f32 %v2663, %v4733
      %v5246 = vadd.f32 %v2665, %v4734
      %v5247 = vadd.f32 %v2667, %v4735
      %v5248 = vadd.f32 %v2669, %v4736
      %v5249 = vadd.f32 %v2673, %v4737
      %v5250 = vadd.f32 %v2675, %v4738
      %v5251 = vadd.f32 %v2677, %v4739
      %v5252 = vadd.f32 %v2679, %v4740
      %v5253 = vadd.f32 %v2683, %v4741
      %v5254 = vadd.f32 %v2685, %v4742
      %v5255 = vadd.f32 %v2687, %v4743
      %v5256 = vadd.f32 %v2689, %v4744
      %v5257 = vadd.f32 %v2693, %v4745
      %v5258 = vadd.f32 %v2695, %v4746
      %v5259 = vadd.f32 %v2697, %v4747
      %v5260 = vadd.f32 %v2699, %v4748
      %v5261 = vmul.f32 %v4749, 0.7978846
      %v5262 = vmul.f32 %v4750, 0.7978846
      %v5263 = vmul.f32 %v4751, 0.7978846
      %v5264 = vmul.f32 %v4752, 0.7978846
      %v5265 = vmul.f32 %v4753, 0.7978846
      %v5266 = vmul.f32 %v4754, 0.7978846
      %v5267 = vmul.f32 %v4755, 0.7978846
      %v5268 = vmul.f32 %v4756, 0.7978846
      %v5269 = vmul.f32 %v4757, 0.7978846
      %v5270 = vmul.f32 %v4758, 0.7978846
      %v5271 = vmul.f32 %v4759, 0.7978846
      %v5272 = vmul.f32 %v4760, 0.7978846
      %v5273 = vmul.f32 %v4761, 0.7978846
      %v5274 = vmul.f32 %v4762, 0.7978846
      %v5275 = vmul.f32 %v4763, 0.7978846
      %v5276 = vmul.f32 %v4764, 0.7978846
      %v5277 = vmul.f32 %v4765, 0.7978846
      %v5278 = vmul.f32 %v4766, 0.7978846
      %v5279 = vmul.f32 %v4767, 0.7978846
      %v5280 = vmul.f32 %v4768, 0.7978846
      %v5281 = vmul.f32 %v4769, 0.7978846
      %v5282 = vmul.f32 %v4770, 0.7978846
      %v5283 = vmul.f32 %v4771, 0.7978846
      %v5284 = vmul.f32 %v4772, 0.7978846
      %v5285 = vmul.f32 %v4773, 0.7978846
      %v5286 = vmul.f32 %v4774, 0.7978846
      %v5287 = vmul.f32 %v4775, 0.7978846
      %v5288 = vmul.f32 %v4776, 0.7978846
      %v5289 = vmul.f32 %v4777, 0.7978846
      %v5290 = vmul.f32 %v4778, 0.7978846
      %v5291 = vmul.f32 %v4779, 0.7978846
      %v5292 = vmul.f32 %v4780, 0.7978846
      %v5293 = vmul.f32 %v4781, 0.7978846
      %v5294 = vmul.f32 %v4782, 0.7978846
      %v5295 = vmul.f32 %v4783, 0.7978846
      %v5296 = vmul.f32 %v4784, 0.7978846
      %v5297 = vmul.f32 %v4785, 0.7978846
      %v5298 = vmul.f32 %v4786, 0.7978846
      %v5299 = vmul.f32 %v4787, 0.7978846
      %v5300 = vmul.f32 %v4788, 0.7978846
      %v5301 = vmul.f32 %v4789, 0.7978846
      %v5302 = vmul.f32 %v4790, 0.7978846
      %v5303 = vmul.f32 %v4791, 0.7978846
      %v5304 = vmul.f32 %v4792, 0.7978846
      %v5305 = vmul.f32 %v4793, 0.7978846
      %v5306 = vmul.f32 %v4794, 0.7978846
      %v5307 = vmul.f32 %v4795, 0.7978846
      %v5308 = vmul.f32 %v4796, 0.7978846
      %v5309 = vmul.f32 %v4797, 0.7978846
      %v5310 = vmul.f32 %v4798, 0.7978846
      %v5311 = vmul.f32 %v4799, 0.7978846
      %v5312 = vmul.f32 %v4800, 0.7978846
      %v5313 = vmul.f32 %v4801, 0.7978846
      %v5314 = vmul.f32 %v4802, 0.7978846
      %v5315 = vmul.f32 %v4803, 0.7978846
      %v5316 = vmul.f32 %v4804, 0.7978846
      %v5317 = vmul.f32 %v4805, 0.7978846
      %v5318 = vmul.f32 %v4806, 0.7978846
      %v5319 = vmul.f32 %v4807, 0.7978846
      %v5320 = vmul.f32 %v4808, 0.7978846
      %v5321 = vmul.f32 %v4809, 0.7978846
      %v5322 = vmul.f32 %v4810, 0.7978846
      %v5323 = vmul.f32 %v4811, 0.7978846
      %v5324 = vmul.f32 %v4812, 0.7978846
      %v5325 = vmul.f32 %v4813, 0.7978846
      %v5326 = vmul.f32 %v4814, 0.7978846
      %v5327 = vmul.f32 %v4815, 0.7978846
      %v5328 = vmul.f32 %v4816, 0.7978846
      %v5329 = vmul.f32 %v4817, 0.7978846
      %v5330 = vmul.f32 %v4818, 0.7978846
      %v5331 = vmul.f32 %v4819, 0.7978846
      %v5332 = vmul.f32 %v4820, 0.7978846
      %v5333 = vmul.f32 %v4821, 0.7978846
      %v5334 = vmul.f32 %v4822, 0.7978846
      %v5335 = vmul.f32 %v4823, 0.7978846
      %v5336 = vmul.f32 %v4824, 0.7978846
      %v5337 = vmul.f32 %v4825, 0.7978846
      %v5338 = vmul.f32 %v4826, 0.7978846
      %v5339 = vmul.f32 %v4827, 0.7978846
      %v5340 = vmul.f32 %v4828, 0.7978846
      %v5341 = vmul.f32 %v4829, 0.7978846
      %v5342 = vmul.f32 %v4830, 0.7978846
      %v5343 = vmul.f32 %v4831, 0.7978846
      %v5344 = vmul.f32 %v4832, 0.7978846
      %v5345 = vmul.f32 %v4833, 0.7978846
      %v5346 = vmul.f32 %v4834, 0.7978846
      %v5347 = vmul.f32 %v4835, 0.7978846
      %v5348 = vmul.f32 %v4836, 0.7978846
      %v5349 = vmul.f32 %v4837, 0.7978846
      %v5350 = vmul.f32 %v4838, 0.7978846
      %v5351 = vmul.f32 %v4839, 0.7978846
      %v5352 = vmul.f32 %v4840, 0.7978846
      %v5353 = vmul.f32 %v4841, 0.7978846
      %v5354 = vmul.f32 %v4842, 0.7978846
      %v5355 = vmul.f32 %v4843, 0.7978846
      %v5356 = vmul.f32 %v4844, 0.7978846
      %v5357 = vmul.f32 %v4845, 0.7978846
      %v5358 = vmul.f32 %v4846, 0.7978846
      %v5359 = vmul.f32 %v4847, 0.7978846
      %v5360 = vmul.f32 %v4848, 0.7978846
      %v5361 = vmul.f32 %v4849, 0.7978846
      %v5362 = vmul.f32 %v4850, 0.7978846
      %v5363 = vmul.f32 %v4851, 0.7978846
      %v5364 = vmul.f32 %v4852, 0.7978846
      %v5365 = vmul.f32 %v4853, 0.7978846
      %v5366 = vmul.f32 %v4854, 0.7978846
      %v5367 = vmul.f32 %v4855, 0.7978846
      %v5368 = vmul.f32 %v4856, 0.7978846
      %v5369 = vmul.f32 %v4857, 0.7978846
      %v5370 = vmul.f32 %v4858, 0.7978846
      %v5371 = vmul.f32 %v4859, 0.7978846
      %v5372 = vmul.f32 %v4860, 0.7978846
      %v5373 = vmul.f32 %v4861, 0.7978846
      %v5374 = vmul.f32 %v4862, 0.7978846
      %v5375 = vmul.f32 %v4863, 0.7978846
      %v5376 = vmul.f32 %v4864, 0.7978846
      %v5377 = vmul.f32 %v4865, 0.7978846
      %v5378 = vmul.f32 %v4866, 0.7978846
      %v5379 = vmul.f32 %v4867, 0.7978846
      %v5380 = vmul.f32 %v4868, 0.7978846
      %v5381 = vmul.f32 %v4869, 0.7978846
      %v5382 = vmul.f32 %v4870, 0.7978846
      %v5383 = vmul.f32 %v4871, 0.7978846
      %v5384 = vmul.f32 %v4872, 0.7978846
      %v5385 = vmul.f32 %v4873, 0.7978846
      %v5386 = vmul.f32 %v4874, 0.7978846
      %v5387 = vmul.f32 %v4875, 0.7978846
      %v5388 = vmul.f32 %v4876, 0.7978846
      %v5389 = vmul.f32 %v4877, 0.7978846
      %v5390 = vmul.f32 %v4878, 0.7978846
      %v5391 = vmul.f32 %v4879, 0.7978846
      %v5392 = vmul.f32 %v4880, 0.7978846
      %v5393 = vmul.f32 %v4881, 0.7978846
      %v5394 = vmul.f32 %v4882, 0.7978846
      %v5395 = vmul.f32 %v4883, 0.7978846
      %v5396 = vmul.f32 %v4884, 0.7978846
      %v5397 = vmul.f32 %v4885, 0.7978846
      %v5398 = vmul.f32 %v4886, 0.7978846
      %v5399 = vmul.f32 %v4887, 0.7978846
      %v5400 = vmul.f32 %v4888, 0.7978846
      %v5401 = vmul.f32 %v4889, 0.7978846
      %v5402 = vmul.f32 %v4890, 0.7978846
      %v5403 = vmul.f32 %v4891, 0.7978846
      %v5404 = vmul.f32 %v4892, 0.7978846
      %v5405 = vmul.f32 %v4893, 0.7978846
      %v5406 = vmul.f32 %v4894, 0.7978846
      %v5407 = vmul.f32 %v4895, 0.7978846
      %v5408 = vmul.f32 %v4896, 0.7978846
      %v5409 = vmul.f32 %v4897, 0.7978846
      %v5410 = vmul.f32 %v4898, 0.7978846
      %v5411 = vmul.f32 %v4899, 0.7978846
      %v5412 = vmul.f32 %v4900, 0.7978846
      %v5413 = vmul.f32 %v4901, 0.7978846
      %v5414 = vmul.f32 %v4902, 0.7978846
      %v5415 = vmul.f32 %v4903, 0.7978846
      %v5416 = vmul.f32 %v4904, 0.7978846
      %v5417 = vmul.f32 %v4905, 0.7978846
      %v5418 = vmul.f32 %v4906, 0.7978846
      %v5419 = vmul.f32 %v4907, 0.7978846
      %v5420 = vmul.f32 %v4908, 0.7978846
      %v5421 = vmul.f32 %v4909, 0.7978846
      %v5422 = vmul.f32 %v4910, 0.7978846
      %v5423 = vmul.f32 %v4911, 0.7978846
      %v5424 = vmul.f32 %v4912, 0.7978846
      %v5425 = vmul.f32 %v4913, 0.7978846
      %v5426 = vmul.f32 %v4914, 0.7978846
      %v5427 = vmul.f32 %v4915, 0.7978846
      %v5428 = vmul.f32 %v4916, 0.7978846
      %v5429 = vmul.f32 %v4917, 0.7978846
      %v5430 = vmul.f32 %v4918, 0.7978846
      %v5431 = vmul.f32 %v4919, 0.7978846
      %v5432 = vmul.f32 %v4920, 0.7978846
      %v5433 = vmul.f32 %v4921, 0.7978846
      %v5434 = vmul.f32 %v4922, 0.7978846
      %v5435 = vmul.f32 %v4923, 0.7978846
      %v5436 = vmul.f32 %v4924, 0.7978846
      %v5437 = vmul.f32 %v4925, 0.7978846
      %v5438 = vmul.f32 %v4926, 0.7978846
      %v5439 = vmul.f32 %v4927, 0.7978846
      %v5440 = vmul.f32 %v4928, 0.7978846
      %v5441 = vmul.f32 %v4929, 0.7978846
      %v5442 = vmul.f32 %v4930, 0.7978846
      %v5443 = vmul.f32 %v4931, 0.7978846
      %v5444 = vmul.f32 %v4932, 0.7978846
      %v5445 = vmul.f32 %v4933, 0.7978846
      %v5446 = vmul.f32 %v4934, 0.7978846
      %v5447 = vmul.f32 %v4935, 0.7978846
      %v5448 = vmul.f32 %v4936, 0.7978846
      %v5449 = vmul.f32 %v4937, 0.7978846
      %v5450 = vmul.f32 %v4938, 0.7978846
      %v5451 = vmul.f32 %v4939, 0.7978846
      %v5452 = vmul.f32 %v4940, 0.7978846
      %v5453 = vmul.f32 %v4941, 0.7978846
      %v5454 = vmul.f32 %v4942, 0.7978846
      %v5455 = vmul.f32 %v4943, 0.7978846
      %v5456 = vmul.f32 %v4944, 0.7978846
      %v5457 = vmul.f32 %v4945, 0.7978846
      %v5458 = vmul.f32 %v4946, 0.7978846
      %v5459 = vmul.f32 %v4947, 0.7978846
      %v5460 = vmul.f32 %v4948, 0.7978846
      %v5461 = vmul.f32 %v4949, 0.7978846
      %v5462 = vmul.f32 %v4950, 0.7978846
      %v5463 = vmul.f32 %v4951, 0.7978846
      %v5464 = vmul.f32 %v4952, 0.7978846
      %v5465 = vmul.f32 %v4953, 0.7978846
      %v5466 = vmul.f32 %v4954, 0.7978846
      %v5467 = vmul.f32 %v4955, 0.7978846
      %v5468 = vmul.f32 %v4956, 0.7978846
      %v5469 = vmul.f32 %v4957, 0.7978846
      %v5470 = vmul.f32 %v4958, 0.7978846
      %v5471 = vmul.f32 %v4959, 0.7978846
      %v5472 = vmul.f32 %v4960, 0.7978846
      %v5473 = vmul.f32 %v4961, 0.7978846
      %v5474 = vmul.f32 %v4962, 0.7978846
      %v5475 = vmul.f32 %v4963, 0.7978846
      %v5476 = vmul.f32 %v4964, 0.7978846
      %v5477 = vmul.f32 %v4965, 0.7978846
      %v5478 = vmul.f32 %v4966, 0.7978846
      %v5479 = vmul.f32 %v4967, 0.7978846
      %v5480 = vmul.f32 %v4968, 0.7978846
      %v5481 = vmul.f32 %v4969, 0.7978846
      %v5482 = vmul.f32 %v4970, 0.7978846
      %v5483 = vmul.f32 %v4971, 0.7978846
      %v5484 = vmul.f32 %v4972, 0.7978846
      %v5485 = vmul.f32 %v4973, 0.7978846
      %v5486 = vmul.f32 %v4974, 0.7978846
      %v5487 = vmul.f32 %v4975, 0.7978846
      %v5488 = vmul.f32 %v4976, 0.7978846
      %v5489 = vmul.f32 %v4977, 0.7978846
      %v5490 = vmul.f32 %v4978, 0.7978846
      %v5491 = vmul.f32 %v4979, 0.7978846
      %v5492 = vmul.f32 %v4980, 0.7978846
      %v5493 = vmul.f32 %v4981, 0.7978846
      %v5494 = vmul.f32 %v4982, 0.7978846
      %v5495 = vmul.f32 %v4983, 0.7978846
      %v5496 = vmul.f32 %v4984, 0.7978846
      %v5497 = vmul.f32 %v4985, 0.7978846
      %v5498 = vmul.f32 %v4986, 0.7978846
      %v5499 = vmul.f32 %v4987, 0.7978846
      %v5500 = vmul.f32 %v4988, 0.7978846
      %v5501 = vmul.f32 %v4989, 0.7978846
      %v5502 = vmul.f32 %v4990, 0.7978846
      %v5503 = vmul.f32 %v4991, 0.7978846
      %v5504 = vmul.f32 %v4992, 0.7978846
      %v5505 = vmul.f32 %v4993, 0.7978846
      %v5506 = vmul.f32 %v4994, 0.7978846
      %v5507 = vmul.f32 %v4995, 0.7978846
      %v5508 = vmul.f32 %v4996, 0.7978846
      %v5509 = vmul.f32 %v4997, 0.7978846
      %v5510 = vmul.f32 %v4998, 0.7978846
      %v5511 = vmul.f32 %v4999, 0.7978846
      %v5512 = vmul.f32 %v5000, 0.7978846
      %v5513 = vmul.f32 %v5001, 0.7978846
      %v5514 = vmul.f32 %v5002, 0.7978846
      %v5515 = vmul.f32 %v5003, 0.7978846
      %v5516 = vmul.f32 %v5004, 0.7978846
      %v5517 = vmul.f32 %v5005, 0.7978846
      %v5518 = vmul.f32 %v5006, 0.7978846
      %v5519 = vmul.f32 %v5007, 0.7978846
      %v5520 = vmul.f32 %v5008, 0.7978846
      %v5521 = vmul.f32 %v5009, 0.7978846
      %v5522 = vmul.f32 %v5010, 0.7978846
      %v5523 = vmul.f32 %v5011, 0.7978846
      %v5524 = vmul.f32 %v5012, 0.7978846
      %v5525 = vmul.f32 %v5013, 0.7978846
      %v5526 = vmul.f32 %v5014, 0.7978846
      %v5527 = vmul.f32 %v5015, 0.7978846
      %v5528 = vmul.f32 %v5016, 0.7978846
      %v5529 = vmul.f32 %v5017, 0.7978846
      %v5530 = vmul.f32 %v5018, 0.7978846
      %v5531 = vmul.f32 %v5019, 0.7978846
      %v5532 = vmul.f32 %v5020, 0.7978846
      %v5533 = vmul.f32 %v5021, 0.7978846
      %v5534 = vmul.f32 %v5022, 0.7978846
      %v5535 = vmul.f32 %v5023, 0.7978846
      %v5536 = vmul.f32 %v5024, 0.7978846
      %v5537 = vmul.f32 %v5025, 0.7978846
      %v5538 = vmul.f32 %v5026, 0.7978846
      %v5539 = vmul.f32 %v5027, 0.7978846
      %v5540 = vmul.f32 %v5028, 0.7978846
      %v5541 = vmul.f32 %v5029, 0.7978846
      %v5542 = vmul.f32 %v5030, 0.7978846
      %v5543 = vmul.f32 %v5031, 0.7978846
      %v5544 = vmul.f32 %v5032, 0.7978846
      %v5545 = vmul.f32 %v5033, 0.7978846
      %v5546 = vmul.f32 %v5034, 0.7978846
      %v5547 = vmul.f32 %v5035, 0.7978846
      %v5548 = vmul.f32 %v5036, 0.7978846
      %v5549 = vmul.f32 %v5037, 0.7978846
      %v5550 = vmul.f32 %v5038, 0.7978846
      %v5551 = vmul.f32 %v5039, 0.7978846
      %v5552 = vmul.f32 %v5040, 0.7978846
      %v5553 = vmul.f32 %v5041, 0.7978846
      %v5554 = vmul.f32 %v5042, 0.7978846
      %v5555 = vmul.f32 %v5043, 0.7978846
      %v5556 = vmul.f32 %v5044, 0.7978846
      %v5557 = vmul.f32 %v5045, 0.7978846
      %v5558 = vmul.f32 %v5046, 0.7978846
      %v5559 = vmul.f32 %v5047, 0.7978846
      %v5560 = vmul.f32 %v5048, 0.7978846
      %v5561 = vmul.f32 %v5049, 0.7978846
      %v5562 = vmul.f32 %v5050, 0.7978846
      %v5563 = vmul.f32 %v5051, 0.7978846
      %v5564 = vmul.f32 %v5052, 0.7978846
      %v5565 = vmul.f32 %v5053, 0.7978846
      %v5566 = vmul.f32 %v5054, 0.7978846
      %v5567 = vmul.f32 %v5055, 0.7978846
      %v5568 = vmul.f32 %v5056, 0.7978846
      %v5569 = vmul.f32 %v5057, 0.7978846
      %v5570 = vmul.f32 %v5058, 0.7978846
      %v5571 = vmul.f32 %v5059, 0.7978846
      %v5572 = vmul.f32 %v5060, 0.7978846
      %v5573 = vmul.f32 %v5061, 0.7978846
      %v5574 = vmul.f32 %v5062, 0.7978846
      %v5575 = vmul.f32 %v5063, 0.7978846
      %v5576 = vmul.f32 %v5064, 0.7978846
      %v5577 = vmul.f32 %v5065, 0.7978846
      %v5578 = vmul.f32 %v5066, 0.7978846
      %v5579 = vmul.f32 %v5067, 0.7978846
      %v5580 = vmul.f32 %v5068, 0.7978846
      %v5581 = vmul.f32 %v5069, 0.7978846
      %v5582 = vmul.f32 %v5070, 0.7978846
      %v5583 = vmul.f32 %v5071, 0.7978846
      %v5584 = vmul.f32 %v5072, 0.7978846
      %v5585 = vmul.f32 %v5073, 0.7978846
      %v5586 = vmul.f32 %v5074, 0.7978846
      %v5587 = vmul.f32 %v5075, 0.7978846
      %v5588 = vmul.f32 %v5076, 0.7978846
      %v5589 = vmul.f32 %v5077, 0.7978846
      %v5590 = vmul.f32 %v5078, 0.7978846
      %v5591 = vmul.f32 %v5079, 0.7978846
      %v5592 = vmul.f32 %v5080, 0.7978846
      %v5593 = vmul.f32 %v5081, 0.7978846
      %v5594 = vmul.f32 %v5082, 0.7978846
      %v5595 = vmul.f32 %v5083, 0.7978846
      %v5596 = vmul.f32 %v5084, 0.7978846
      %v5597 = vmul.f32 %v5085, 0.7978846
      %v5598 = vmul.f32 %v5086, 0.7978846
      %v5599 = vmul.f32 %v5087, 0.7978846
      %v5600 = vmul.f32 %v5088, 0.7978846
      %v5601 = vmul.f32 %v5089, 0.7978846
      %v5602 = vmul.f32 %v5090, 0.7978846
      %v5603 = vmul.f32 %v5091, 0.7978846
      %v5604 = vmul.f32 %v5092, 0.7978846
      %v5605 = vmul.f32 %v5093, 0.7978846
      %v5606 = vmul.f32 %v5094, 0.7978846
      %v5607 = vmul.f32 %v5095, 0.7978846
      %v5608 = vmul.f32 %v5096, 0.7978846
      %v5609 = vmul.f32 %v5097, 0.7978846
      %v5610 = vmul.f32 %v5098, 0.7978846
      %v5611 = vmul.f32 %v5099, 0.7978846
      %v5612 = vmul.f32 %v5100, 0.7978846
      %v5613 = vmul.f32 %v5101, 0.7978846
      %v5614 = vmul.f32 %v5102, 0.7978846
      %v5615 = vmul.f32 %v5103, 0.7978846
      %v5616 = vmul.f32 %v5104, 0.7978846
      %v5617 = vmul.f32 %v5105, 0.7978846
      %v5618 = vmul.f32 %v5106, 0.7978846
      %v5619 = vmul.f32 %v5107, 0.7978846
      %v5620 = vmul.f32 %v5108, 0.7978846
      %v5621 = vmul.f32 %v5109, 0.7978846
      %v5622 = vmul.f32 %v5110, 0.7978846
      %v5623 = vmul.f32 %v5111, 0.7978846
      %v5624 = vmul.f32 %v5112, 0.7978846
      %v5625 = vmul.f32 %v5113, 0.7978846
      %v5626 = vmul.f32 %v5114, 0.7978846
      %v5627 = vmul.f32 %v5115, 0.7978846
      %v5628 = vmul.f32 %v5116, 0.7978846
      %v5629 = vmul.f32 %v5117, 0.7978846
      %v5630 = vmul.f32 %v5118, 0.7978846
      %v5631 = vmul.f32 %v5119, 0.7978846
      %v5632 = vmul.f32 %v5120, 0.7978846
      %v5633 = vmul.f32 %v5121, 0.7978846
      %v5634 = vmul.f32 %v5122, 0.7978846
      %v5635 = vmul.f32 %v5123, 0.7978846
      %v5636 = vmul.f32 %v5124, 0.7978846
      %v5637 = vmul.f32 %v5125, 0.7978846
      %v5638 = vmul.f32 %v5126, 0.7978846
      %v5639 = vmul.f32 %v5127, 0.7978846
      %v5640 = vmul.f32 %v5128, 0.7978846
      %v5641 = vmul.f32 %v5129, 0.7978846
      %v5642 = vmul.f32 %v5130, 0.7978846
      %v5643 = vmul.f32 %v5131, 0.7978846
      %v5644 = vmul.f32 %v5132, 0.7978846
      %v5645 = vmul.f32 %v5133, 0.7978846
      %v5646 = vmul.f32 %v5134, 0.7978846
      %v5647 = vmul.f32 %v5135, 0.7978846
      %v5648 = vmul.f32 %v5136, 0.7978846
      %v5649 = vmul.f32 %v5137, 0.7978846
      %v5650 = vmul.f32 %v5138, 0.7978846
      %v5651 = vmul.f32 %v5139, 0.7978846
      %v5652 = vmul.f32 %v5140, 0.7978846
      %v5653 = vmul.f32 %v5141, 0.7978846
      %v5654 = vmul.f32 %v5142, 0.7978846
      %v5655 = vmul.f32 %v5143, 0.7978846
      %v5656 = vmul.f32 %v5144, 0.7978846
      %v5657 = vmul.f32 %v5145, 0.7978846
      %v5658 = vmul.f32 %v5146, 0.7978846
      %v5659 = vmul.f32 %v5147, 0.7978846
      %v5660 = vmul.f32 %v5148, 0.7978846
      %v5661 = vmul.f32 %v5149, 0.7978846
      %v5662 = vmul.f32 %v5150, 0.7978846
      %v5663 = vmul.f32 %v5151, 0.7978846
      %v5664 = vmul.f32 %v5152, 0.7978846
      %v5665 = vmul.f32 %v5153, 0.7978846
      %v5666 = vmul.f32 %v5154, 0.7978846
      %v5667 = vmul.f32 %v5155, 0.7978846
      %v5668 = vmul.f32 %v5156, 0.7978846
      %v5669 = vmul.f32 %v5157, 0.7978846
      %v5670 = vmul.f32 %v5158, 0.7978846
      %v5671 = vmul.f32 %v5159, 0.7978846
      %v5672 = vmul.f32 %v5160, 0.7978846
      %v5673 = vmul.f32 %v5161, 0.7978846
      %v5674 = vmul.f32 %v5162, 0.7978846
      %v5675 = vmul.f32 %v5163, 0.7978846
      %v5676 = vmul.f32 %v5164, 0.7978846
      %v5677 = vmul.f32 %v5165, 0.7978846
      %v5678 = vmul.f32 %v5166, 0.7978846
      %v5679 = vmul.f32 %v5167, 0.7978846
      %v5680 = vmul.f32 %v5168, 0.7978846
      %v5681 = vmul.f32 %v5169, 0.7978846
      %v5682 = vmul.f32 %v5170, 0.7978846
      %v5683 = vmul.f32 %v5171, 0.7978846
      %v5684 = vmul.f32 %v5172, 0.7978846
      %v5685 = vmul.f32 %v5173, 0.7978846
      %v5686 = vmul.f32 %v5174, 0.7978846
      %v5687 = vmul.f32 %v5175, 0.7978846
      %v5688 = vmul.f32 %v5176, 0.7978846
      %v5689 = vmul.f32 %v5177, 0.7978846
      %v5690 = vmul.f32 %v5178, 0.7978846
      %v5691 = vmul.f32 %v5179, 0.7978846
      %v5692 = vmul.f32 %v5180, 0.7978846
      %v5693 = vmul.f32 %v5181, 0.7978846
      %v5694 = vmul.f32 %v5182, 0.7978846
      %v5695 = vmul.f32 %v5183, 0.7978846
      %v5696 = vmul.f32 %v5184, 0.7978846
      %v5697 = vmul.f32 %v5185, 0.7978846
      %v5698 = vmul.f32 %v5186, 0.7978846
      %v5699 = vmul.f32 %v5187, 0.7978846
      %v5700 = vmul.f32 %v5188, 0.7978846
      %v5701 = vmul.f32 %v5189, 0.7978846
      %v5702 = vmul.f32 %v5190, 0.7978846
      %v5703 = vmul.f32 %v5191, 0.7978846
      %v5704 = vmul.f32 %v5192, 0.7978846
      %v5705 = vmul.f32 %v5193, 0.7978846
      %v5706 = vmul.f32 %v5194, 0.7978846
      %v5707 = vmul.f32 %v5195, 0.7978846
      %v5708 = vmul.f32 %v5196, 0.7978846
      %v5709 = vmul.f32 %v5197, 0.7978846
      %v5710 = vmul.f32 %v5198, 0.7978846
      %v5711 = vmul.f32 %v5199, 0.7978846
      %v5712 = vmul.f32 %v5200, 0.7978846
      %v5713 = vmul.f32 %v5201, 0.7978846
      %v5714 = vmul.f32 %v5202, 0.7978846
      %v5715 = vmul.f32 %v5203, 0.7978846
      %v5716 = vmul.f32 %v5204, 0.7978846
      %v5717 = vmul.f32 %v5205, 0.7978846
      %v5718 = vmul.f32 %v5206, 0.7978846
      %v5719 = vmul.f32 %v5207, 0.7978846
      %v5720 = vmul.f32 %v5208, 0.7978846
      %v5721 = vmul.f32 %v5209, 0.7978846
      %v5722 = vmul.f32 %v5210, 0.7978846
      %v5723 = vmul.f32 %v5211, 0.7978846
      %v5724 = vmul.f32 %v5212, 0.7978846
      %v5725 = vmul.f32 %v5213, 0.7978846
      %v5726 = vmul.f32 %v5214, 0.7978846
      %v5727 = vmul.f32 %v5215, 0.7978846
      %v5728 = vmul.f32 %v5216, 0.7978846
      %v5729 = vmul.f32 %v5217, 0.7978846
      %v5730 = vmul.f32 %v5218, 0.7978846
      %v5731 = vmul.f32 %v5219, 0.7978846
      %v5732 = vmul.f32 %v5220, 0.7978846
      %v5733 = vmul.f32 %v5221, 0.7978846
      %v5734 = vmul.f32 %v5222, 0.7978846
      %v5735 = vmul.f32 %v5223, 0.7978846
      %v5736 = vmul.f32 %v5224, 0.7978846
      %v5737 = vmul.f32 %v5225, 0.7978846
      %v5738 = vmul.f32 %v5226, 0.7978846
      %v5739 = vmul.f32 %v5227, 0.7978846
      %v5740 = vmul.f32 %v5228, 0.7978846
      %v5741 = vmul.f32 %v5229, 0.7978846
      %v5742 = vmul.f32 %v5230, 0.7978846
      %v5743 = vmul.f32 %v5231, 0.7978846
      %v5744 = vmul.f32 %v5232, 0.7978846
      %v5745 = vmul.f32 %v5233, 0.7978846
      %v5746 = vmul.f32 %v5234, 0.7978846
      %v5747 = vmul.f32 %v5235, 0.7978846
      %v5748 = vmul.f32 %v5236, 0.7978846
      %v5749 = vmul.f32 %v5237, 0.7978846
      %v5750 = vmul.f32 %v5238, 0.7978846
      %v5751 = vmul.f32 %v5239, 0.7978846
      %v5752 = vmul.f32 %v5240, 0.7978846
      %v5753 = vmul.f32 %v5241, 0.7978846
      %v5754 = vmul.f32 %v5242, 0.7978846
      %v5755 = vmul.f32 %v5243, 0.7978846
      %v5756 = vmul.f32 %v5244, 0.7978846
      %v5757 = vmul.f32 %v5245, 0.7978846
      %v5758 = vmul.f32 %v5246, 0.7978846
      %v5759 = vmul.f32 %v5247, 0.7978846
      %v5760 = vmul.f32 %v5248, 0.7978846
      %v5761 = vmul.f32 %v5249, 0.7978846
      %v5762 = vmul.f32 %v5250, 0.7978846
      %v5763 = vmul.f32 %v5251, 0.7978846
      %v5764 = vmul.f32 %v5252, 0.7978846
      %v5765 = vmul.f32 %v5253, 0.7978846
      %v5766 = vmul.f32 %v5254, 0.7978846
      %v5767 = vmul.f32 %v5255, 0.7978846
      %v5768 = vmul.f32 %v5256, 0.7978846
      %v5769 = vmul.f32 %v5257, 0.7978846
      %v5770 = vmul.f32 %v5258, 0.7978846
      %v5771 = vmul.f32 %v5259, 0.7978846
      %v5772 = vmul.f32 %v5260, 0.7978846
      %v5773 = vtanh.pop %v5261
      %v5774 = vtanh.pop %v5262
      %v5775 = vtanh.pop %v5263
      %v5776 = vtanh.pop %v5264
      %v5777 = vtanh.pop %v5265
      %v5778 = vtanh.pop %v5266
      %v5779 = vtanh.pop %v5267
      %v5780 = vtanh.pop %v5268
      %v5781 = vtanh.pop %v5269
      %v5782 = vtanh.pop %v5270
      %v5783 = vtanh.pop %v5271
      %v5784 = vtanh.pop %v5272
      %v5785 = vtanh.pop %v5273
      %v5786 = vtanh.pop %v5274
      %v5787 = vtanh.pop %v5275
      %v5788 = vtanh.pop %v5276
      %v5789 = vtanh.pop %v5277
      %v5790 = vtanh.pop %v5278
      %v5791 = vtanh.pop %v5279
      %v5792 = vtanh.pop %v5280
      %v5793 = vtanh.pop %v5281
      %v5794 = vtanh.pop %v5282
      %v5795 = vtanh.pop %v5283
      %v5796 = vtanh.pop %v5284
      %v5797 = vtanh.pop %v5285
      %v5798 = vtanh.pop %v5286
      %v5799 = vtanh.pop %v5287
      %v5800 = vtanh.pop %v5288
      %v5801 = vtanh.pop %v5289
      %v5802 = vtanh.pop %v5290
      %v5803 = vtanh.pop %v5291
      %v5804 = vtanh.pop %v5292
      %v5805 = vtanh.pop %v5293
      %v5806 = vtanh.pop %v5294
      %v5807 = vtanh.pop %v5295
      %v5808 = vtanh.pop %v5296
      %v5809 = vtanh.pop %v5297
      %v5810 = vtanh.pop %v5298
      %v5811 = vtanh.pop %v5299
      %v5812 = vtanh.pop %v5300
      %v5813 = vtanh.pop %v5301
      %v5814 = vtanh.pop %v5302
      %v5815 = vtanh.pop %v5303
      %v5816 = vtanh.pop %v5304
      %v5817 = vtanh.pop %v5305
      %v5818 = vtanh.pop %v5306
      %v5819 = vtanh.pop %v5307
      %v5820 = vtanh.pop %v5308
      %v5821 = vtanh.pop %v5309
      %v5822 = vtanh.pop %v5310
      %v5823 = vtanh.pop %v5311
      %v5824 = vtanh.pop %v5312
      %v5825 = vtanh.pop %v5313
      %v5826 = vtanh.pop %v5314
      %v5827 = vtanh.pop %v5315
      %v5828 = vtanh.pop %v5316
      %v5829 = vtanh.pop %v5317
      %v5830 = vtanh.pop %v5318
      %v5831 = vtanh.pop %v5319
      %v5832 = vtanh.pop %v5320
      %v5833 = vtanh.pop %v5321
      %v5834 = vtanh.pop %v5322
      %v5835 = vtanh.pop %v5323
      %v5836 = vtanh.pop %v5324
      %v5837 = vtanh.pop %v5325
      %v5838 = vtanh.pop %v5326
      %v5839 = vtanh.pop %v5327
      %v5840 = vtanh.pop %v5328
      %v5841 = vtanh.pop %v5329
      %v5842 = vtanh.pop %v5330
      %v5843 = vtanh.pop %v5331
      %v5844 = vtanh.pop %v5332
      %v5845 = vtanh.pop %v5333
      %v5846 = vtanh.pop %v5334
      %v5847 = vtanh.pop %v5335
      %v5848 = vtanh.pop %v5336
      %v5849 = vtanh.pop %v5337
      %v5850 = vtanh.pop %v5338
      %v5851 = vtanh.pop %v5339
      %v5852 = vtanh.pop %v5340
      %v5853 = vtanh.pop %v5341
      %v5854 = vtanh.pop %v5342
      %v5855 = vtanh.pop %v5343
      %v5856 = vtanh.pop %v5344
      %v5857 = vtanh.pop %v5345
      %v5858 = vtanh.pop %v5346
      %v5859 = vtanh.pop %v5347
      %v5860 = vtanh.pop %v5348
      %v5861 = vtanh.pop %v5349
      %v5862 = vtanh.pop %v5350
      %v5863 = vtanh.pop %v5351
      %v5864 = vtanh.pop %v5352
      %v5865 = vtanh.pop %v5353
      %v5866 = vtanh.pop %v5354
      %v5867 = vtanh.pop %v5355
      %v5868 = vtanh.pop %v5356
      %v5869 = vtanh.pop %v5357
      %v5870 = vtanh.pop %v5358
      %v5871 = vtanh.pop %v5359
      %v5872 = vtanh.pop %v5360
      %v5873 = vtanh.pop %v5361
      %v5874 = vtanh.pop %v5362
      %v5875 = vtanh.pop %v5363
      %v5876 = vtanh.pop %v5364
      %v5877 = vtanh.pop %v5365
      %v5878 = vtanh.pop %v5366
      %v5879 = vtanh.pop %v5367
      %v5880 = vtanh.pop %v5368
      %v5881 = vtanh.pop %v5369
      %v5882 = vtanh.pop %v5370
      %v5883 = vtanh.pop %v5371
      %v5884 = vtanh.pop %v5372
      %v5885 = vtanh.pop %v5373
      %v5886 = vtanh.pop %v5374
      %v5887 = vtanh.pop %v5375
      %v5888 = vtanh.pop %v5376
      %v5889 = vtanh.pop %v5377
      %v5890 = vtanh.pop %v5378
      %v5891 = vtanh.pop %v5379
      %v5892 = vtanh.pop %v5380
      %v5893 = vtanh.pop %v5381
      %v5894 = vtanh.pop %v5382
      %v5895 = vtanh.pop %v5383
      %v5896 = vtanh.pop %v5384
      %v5897 = vtanh.pop %v5385
      %v5898 = vtanh.pop %v5386
      %v5899 = vtanh.pop %v5387
      %v5900 = vtanh.pop %v5388
      %v5901 = vtanh.pop %v5389
      %v5902 = vtanh.pop %v5390
      %v5903 = vtanh.pop %v5391
      %v5904 = vtanh.pop %v5392
      %v5905 = vtanh.pop %v5393
      %v5906 = vtanh.pop %v5394
      %v5907 = vtanh.pop %v5395
      %v5908 = vtanh.pop %v5396
      %v5909 = vtanh.pop %v5397
      %v5910 = vtanh.pop %v5398
      %v5911 = vtanh.pop %v5399
      %v5912 = vtanh.pop %v5400
      %v5913 = vtanh.pop %v5401
      %v5914 = vtanh.pop %v5402
      %v5915 = vtanh.pop %v5403
      %v5916 = vtanh.pop %v5404
      %v5917 = vtanh.pop %v5405
      %v5918 = vtanh.pop %v5406
      %v5919 = vtanh.pop %v5407
      %v5920 = vtanh.pop %v5408
      %v5921 = vtanh.pop %v5409
      %v5922 = vtanh.pop %v5410
      %v5923 = vtanh.pop %v5411
      %v5924 = vtanh.pop %v5412
      %v5925 = vtanh.pop %v5413
      %v5926 = vtanh.pop %v5414
      %v5927 = vtanh.pop %v5415
      %v5928 = vtanh.pop %v5416
      %v5929 = vtanh.pop %v5417
      %v5930 = vtanh.pop %v5418
      %v5931 = vtanh.pop %v5419
      %v5932 = vtanh.pop %v5420
      %v5933 = vtanh.pop %v5421
      %v5934 = vtanh.pop %v5422
      %v5935 = vtanh.pop %v5423
      %v5936 = vtanh.pop %v5424
      %v5937 = vtanh.pop %v5425
      %v5938 = vtanh.pop %v5426
      %v5939 = vtanh.pop %v5427
      %v5940 = vtanh.pop %v5428
      %v5941 = vtanh.pop %v5429
      %v5942 = vtanh.pop %v5430
      %v5943 = vtanh.pop %v5431
      %v5944 = vtanh.pop %v5432
      %v5945 = vtanh.pop %v5433
      %v5946 = vtanh.pop %v5434
      %v5947 = vtanh.pop %v5435
      %v5948 = vtanh.pop %v5436
      %v5949 = vtanh.pop %v5437
      %v5950 = vtanh.pop %v5438
      %v5951 = vtanh.pop %v5439
      %v5952 = vtanh.pop %v5440
      %v5953 = vtanh.pop %v5441
      %v5954 = vtanh.pop %v5442
      %v5955 = vtanh.pop %v5443
      %v5956 = vtanh.pop %v5444
      %v5957 = vtanh.pop %v5445
      %v5958 = vtanh.pop %v5446
      %v5959 = vtanh.pop %v5447
      %v5960 = vtanh.pop %v5448
      %v5961 = vtanh.pop %v5449
      %v5962 = vtanh.pop %v5450
      %v5963 = vtanh.pop %v5451
      %v5964 = vtanh.pop %v5452
      %v5965 = vtanh.pop %v5453
      %v5966 = vtanh.pop %v5454
      %v5967 = vtanh.pop %v5455
      %v5968 = vtanh.pop %v5456
      %v5969 = vtanh.pop %v5457
      %v5970 = vtanh.pop %v5458
      %v5971 = vtanh.pop %v5459
      %v5972 = vtanh.pop %v5460
      %v5973 = vtanh.pop %v5461
      %v5974 = vtanh.pop %v5462
      %v5975 = vtanh.pop %v5463
      %v5976 = vtanh.pop %v5464
      %v5977 = vtanh.pop %v5465
      %v5978 = vtanh.pop %v5466
      %v5979 = vtanh.pop %v5467
      %v5980 = vtanh.pop %v5468
      %v5981 = vtanh.pop %v5469
      %v5982 = vtanh.pop %v5470
      %v5983 = vtanh.pop %v5471
      %v5984 = vtanh.pop %v5472
      %v5985 = vtanh.pop %v5473
      %v5986 = vtanh.pop %v5474
      %v5987 = vtanh.pop %v5475
      %v5988 = vtanh.pop %v5476
      %v5989 = vtanh.pop %v5477
      %v5990 = vtanh.pop %v5478
      %v5991 = vtanh.pop %v5479
      %v5992 = vtanh.pop %v5480
      %v5993 = vtanh.pop %v5481
      %v5994 = vtanh.pop %v5482
      %v5995 = vtanh.pop %v5483
      %v5996 = vtanh.pop %v5484
      %v5997 = vtanh.pop %v5485
      %v5998 = vtanh.pop %v5486
      %v5999 = vtanh.pop %v5487
      %v6000 = vtanh.pop %v5488
      %v6001 = vtanh.pop %v5489
      %v6002 = vtanh.pop %v5490
      %v6003 = vtanh.pop %v5491
      %v6004 = vtanh.pop %v5492
      %v6005 = vtanh.pop %v5493
      %v6006 = vtanh.pop %v5494
      %v6007 = vtanh.pop %v5495
      %v6008 = vtanh.pop %v5496
      %v6009 = vtanh.pop %v5497
      %v6010 = vtanh.pop %v5498
      %v6011 = vtanh.pop %v5499
      %v6012 = vtanh.pop %v5500
      %v6013 = vtanh.pop %v5501
      %v6014 = vtanh.pop %v5502
      %v6015 = vtanh.pop %v5503
      %v6016 = vtanh.pop %v5504
      %v6017 = vtanh.pop %v5505
      %v6018 = vtanh.pop %v5506
      %v6019 = vtanh.pop %v5507
      %v6020 = vtanh.pop %v5508
      %v6021 = vtanh.pop %v5509
      %v6022 = vtanh.pop %v5510
      %v6023 = vtanh.pop %v5511
      %v6024 = vtanh.pop %v5512
      %v6025 = vtanh.pop %v5513
      %v6026 = vtanh.pop %v5514
      %v6027 = vtanh.pop %v5515
      %v6028 = vtanh.pop %v5516
      %v6029 = vtanh.pop %v5517
      %v6030 = vtanh.pop %v5518
      %v6031 = vtanh.pop %v5519
      %v6032 = vtanh.pop %v5520
      %v6033 = vtanh.pop %v5521
      %v6034 = vtanh.pop %v5522
      %v6035 = vtanh.pop %v5523
      %v6036 = vtanh.pop %v5524
      %v6037 = vtanh.pop %v5525
      %v6038 = vtanh.pop %v5526
      %v6039 = vtanh.pop %v5527
      %v6040 = vtanh.pop %v5528
      %v6041 = vtanh.pop %v5529
      %v6042 = vtanh.pop %v5530
      %v6043 = vtanh.pop %v5531
      %v6044 = vtanh.pop %v5532
      %v6045 = vtanh.pop %v5533
      %v6046 = vtanh.pop %v5534
      %v6047 = vtanh.pop %v5535
      %v6048 = vtanh.pop %v5536
      %v6049 = vtanh.pop %v5537
      %v6050 = vtanh.pop %v5538
      %v6051 = vtanh.pop %v5539
      %v6052 = vtanh.pop %v5540
      %v6053 = vtanh.pop %v5541
      %v6054 = vtanh.pop %v5542
      %v6055 = vtanh.pop %v5543
      %v6056 = vtanh.pop %v5544
      %v6057 = vtanh.pop %v5545
      %v6058 = vtanh.pop %v5546
      %v6059 = vtanh.pop %v5547
      %v6060 = vtanh.pop %v5548
      %v6061 = vtanh.pop %v5549
      %v6062 = vtanh.pop %v5550
      %v6063 = vtanh.pop %v5551
      %v6064 = vtanh.pop %v5552
      %v6065 = vtanh.pop %v5553
      %v6066 = vtanh.pop %v5554
      %v6067 = vtanh.pop %v5555
      %v6068 = vtanh.pop %v5556
      %v6069 = vtanh.pop %v5557
      %v6070 = vtanh.pop %v5558
      %v6071 = vtanh.pop %v5559
      %v6072 = vtanh.pop %v5560
      %v6073 = vtanh.pop %v5561
      %v6074 = vtanh.pop %v5562
      %v6075 = vtanh.pop %v5563
      %v6076 = vtanh.pop %v5564
      %v6077 = vtanh.pop %v5565
      %v6078 = vtanh.pop %v5566
      %v6079 = vtanh.pop %v5567
      %v6080 = vtanh.pop %v5568
      %v6081 = vtanh.pop %v5569
      %v6082 = vtanh.pop %v5570
      %v6083 = vtanh.pop %v5571
      %v6084 = vtanh.pop %v5572
      %v6085 = vtanh.pop %v5573
      %v6086 = vtanh.pop %v5574
      %v6087 = vtanh.pop %v5575
      %v6088 = vtanh.pop %v5576
      %v6089 = vtanh.pop %v5577
      %v6090 = vtanh.pop %v5578
      %v6091 = vtanh.pop %v5579
      %v6092 = vtanh.pop %v5580
      %v6093 = vtanh.pop %v5581
      %v6094 = vtanh.pop %v5582
      %v6095 = vtanh.pop %v5583
      %v6096 = vtanh.pop %v5584
      %v6097 = vtanh.pop %v5585
      %v6098 = vtanh.pop %v5586
      %v6099 = vtanh.pop %v5587
      %v6100 = vtanh.pop %v5588
      %v6101 = vtanh.pop %v5589
      %v6102 = vtanh.pop %v5590
      %v6103 = vtanh.pop %v5591
      %v6104 = vtanh.pop %v5592
      %v6105 = vtanh.pop %v5593
      %v6106 = vtanh.pop %v5594
      %v6107 = vtanh.pop %v5595
      %v6108 = vtanh.pop %v5596
      %v6109 = vtanh.pop %v5597
      %v6110 = vtanh.pop %v5598
      %v6111 = vtanh.pop %v5599
      %v6112 = vtanh.pop %v5600
      %v6113 = vtanh.pop %v5601
      %v6114 = vtanh.pop %v5602
      %v6115 = vtanh.pop %v5603
      %v6116 = vtanh.pop %v5604
      %v6117 = vtanh.pop %v5605
      %v6118 = vtanh.pop %v5606
      %v6119 = vtanh.pop %v5607
      %v6120 = vtanh.pop %v5608
      %v6121 = vtanh.pop %v5609
      %v6122 = vtanh.pop %v5610
      %v6123 = vtanh.pop %v5611
      %v6124 = vtanh.pop %v5612
      %v6125 = vtanh.pop %v5613
      %v6126 = vtanh.pop %v5614
      %v6127 = vtanh.pop %v5615
      %v6128 = vtanh.pop %v5616
      %v6129 = vtanh.pop %v5617
      %v6130 = vtanh.pop %v5618
      %v6131 = vtanh.pop %v5619
      %v6132 = vtanh.pop %v5620
      %v6133 = vtanh.pop %v5621
      %v6134 = vtanh.pop %v5622
      %v6135 = vtanh.pop %v5623
      %v6136 = vtanh.pop %v5624
      %v6137 = vtanh.pop %v5625
      %v6138 = vtanh.pop %v5626
      %v6139 = vtanh.pop %v5627
      %v6140 = vtanh.pop %v5628
      %v6141 = vtanh.pop %v5629
      %v6142 = vtanh.pop %v5630
      %v6143 = vtanh.pop %v5631
      %v6144 = vtanh.pop %v5632
      %v6145 = vtanh.pop %v5633
      %v6146 = vtanh.pop %v5634
      %v6147 = vtanh.pop %v5635
      %v6148 = vtanh.pop %v5636
      %v6149 = vtanh.pop %v5637
      %v6150 = vtanh.pop %v5638
      %v6151 = vtanh.pop %v5639
      %v6152 = vtanh.pop %v5640
      %v6153 = vtanh.pop %v5641
      %v6154 = vtanh.pop %v5642
      %v6155 = vtanh.pop %v5643
      %v6156 = vtanh.pop %v5644
      %v6157 = vtanh.pop %v5645
      %v6158 = vtanh.pop %v5646
      %v6159 = vtanh.pop %v5647
      %v6160 = vtanh.pop %v5648
      %v6161 = vtanh.pop %v5649
      %v6162 = vtanh.pop %v5650
      %v6163 = vtanh.pop %v5651
      %v6164 = vtanh.pop %v5652
      %v6165 = vtanh.pop %v5653
      %v6166 = vtanh.pop %v5654
      %v6167 = vtanh.pop %v5655
      %v6168 = vtanh.pop %v5656
      %v6169 = vtanh.pop %v5657
      %v6170 = vtanh.pop %v5658
      %v6171 = vtanh.pop %v5659
      %v6172 = vtanh.pop %v5660
      %v6173 = vtanh.pop %v5661
      %v6174 = vtanh.pop %v5662
      %v6175 = vtanh.pop %v5663
      %v6176 = vtanh.pop %v5664
      %v6177 = vtanh.pop %v5665
      %v6178 = vtanh.pop %v5666
      %v6179 = vtanh.pop %v5667
      %v6180 = vtanh.pop %v5668
      %v6181 = vtanh.pop %v5669
      %v6182 = vtanh.pop %v5670
      %v6183 = vtanh.pop %v5671
      %v6184 = vtanh.pop %v5672
      %v6185 = vtanh.pop %v5673
      %v6186 = vtanh.pop %v5674
      %v6187 = vtanh.pop %v5675
      %v6188 = vtanh.pop %v5676
      %v6189 = vtanh.pop %v5677
      %v6190 = vtanh.pop %v5678
      %v6191 = vtanh.pop %v5679
      %v6192 = vtanh.pop %v5680
      %v6193 = vtanh.pop %v5681
      %v6194 = vtanh.pop %v5682
      %v6195 = vtanh.pop %v5683
      %v6196 = vtanh.pop %v5684
      %v6197 = vtanh.pop %v5685
      %v6198 = vtanh.pop %v5686
      %v6199 = vtanh.pop %v5687
      %v6200 = vtanh.pop %v5688
      %v6201 = vtanh.pop %v5689
      %v6202 = vtanh.pop %v5690
      %v6203 = vtanh.pop %v5691
      %v6204 = vtanh.pop %v5692
      %v6205 = vtanh.pop %v5693
      %v6206 = vtanh.pop %v5694
      %v6207 = vtanh.pop %v5695
      %v6208 = vtanh.pop %v5696
      %v6209 = vtanh.pop %v5697
      %v6210 = vtanh.pop %v5698
      %v6211 = vtanh.pop %v5699
      %v6212 = vtanh.pop %v5700
      %v6213 = vtanh.pop %v5701
      %v6214 = vtanh.pop %v5702
      %v6215 = vtanh.pop %v5703
      %v6216 = vtanh.pop %v5704
      %v6217 = vtanh.pop %v5705
      %v6218 = vtanh.pop %v5706
      %v6219 = vtanh.pop %v5707
      %v6220 = vtanh.pop %v5708
      %v6221 = vtanh.pop %v5709
      %v6222 = vtanh.pop %v5710
      %v6223 = vtanh.pop %v5711
      %v6224 = vtanh.pop %v5712
      %v6225 = vtanh.pop %v5713
      %v6226 = vtanh.pop %v5714
      %v6227 = vtanh.pop %v5715
      %v6228 = vtanh.pop %v5716
      %v6229 = vtanh.pop %v5717
      %v6230 = vtanh.pop %v5718
      %v6231 = vtanh.pop %v5719
      %v6232 = vtanh.pop %v5720
      %v6233 = vtanh.pop %v5721
      %v6234 = vtanh.pop %v5722
      %v6235 = vtanh.pop %v5723
      %v6236 = vtanh.pop %v5724
      %v6237 = vtanh.pop %v5725
      %v6238 = vtanh.pop %v5726
      %v6239 = vtanh.pop %v5727
      %v6240 = vtanh.pop %v5728
      %v6241 = vtanh.pop %v5729
      %v6242 = vtanh.pop %v5730
      %v6243 = vtanh.pop %v5731
      %v6244 = vtanh.pop %v5732
      %v6245 = vtanh.pop %v5733
      %v6246 = vtanh.pop %v5734
      %v6247 = vtanh.pop %v5735
      %v6248 = vtanh.pop %v5736
      %v6249 = vtanh.pop %v5737
      %v6250 = vtanh.pop %v5738
      %v6251 = vtanh.pop %v5739
      %v6252 = vtanh.pop %v5740
      %v6253 = vtanh.pop %v5741
      %v6254 = vtanh.pop %v5742
      %v6255 = vtanh.pop %v5743
      %v6256 = vtanh.pop %v5744
      %v6257 = vtanh.pop %v5745
      %v6258 = vtanh.pop %v5746
      %v6259 = vtanh.pop %v5747
      %v6260 = vtanh.pop %v5748
      %v6261 = vtanh.pop %v5749
      %v6262 = vtanh.pop %v5750
      %v6263 = vtanh.pop %v5751
      %v6264 = vtanh.pop %v5752
      %v6265 = vtanh.pop %v5753
      %v6266 = vtanh.pop %v5754
      %v6267 = vtanh.pop %v5755
      %v6268 = vtanh.pop %v5756
      %v6269 = vtanh.pop %v5757
      %v6270 = vtanh.pop %v5758
      %v6271 = vtanh.pop %v5759
      %v6272 = vtanh.pop %v5760
      %v6273 = vtanh.pop %v5761
      %v6274 = vtanh.pop %v5762
      %v6275 = vtanh.pop %v5763
      %v6276 = vtanh.pop %v5764
      %v6277 = vtanh.pop %v5765
      %v6278 = vtanh.pop %v5766
      %v6279 = vtanh.pop %v5767
      %v6280 = vtanh.pop %v5768
      %v6281 = vtanh.pop %v5769
      %v6282 = vtanh.pop %v5770
      %v6283 = vtanh.pop %v5771
      %v6284 = vtanh.pop %v5772
      %v6285 = vadd.f32 %v5773, 1.0
      %v6286 = vadd.f32 %v5774, 1.0
      %v6287 = vadd.f32 %v5775, 1.0
      %v6288 = vadd.f32 %v5776, 1.0
      %v6289 = vadd.f32 %v5777, 1.0
      %v6290 = vadd.f32 %v5778, 1.0
      %v6291 = vadd.f32 %v5779, 1.0
      %v6292 = vadd.f32 %v5780, 1.0
      %v6293 = vadd.f32 %v5781, 1.0
      %v6294 = vadd.f32 %v5782, 1.0
      %v6295 = vadd.f32 %v5783, 1.0
      %v6296 = vadd.f32 %v5784, 1.0
      %v6297 = vadd.f32 %v5785, 1.0
      %v6298 = vadd.f32 %v5786, 1.0
      %v6299 = vadd.f32 %v5787, 1.0
      %v6300 = vadd.f32 %v5788, 1.0
      %v6301 = vadd.f32 %v5789, 1.0
      %v6302 = vadd.f32 %v5790, 1.0
      %v6303 = vadd.f32 %v5791, 1.0
      %v6304 = vadd.f32 %v5792, 1.0
      %v6305 = vadd.f32 %v5793, 1.0
      %v6306 = vadd.f32 %v5794, 1.0
      %v6307 = vadd.f32 %v5795, 1.0
      %v6308 = vadd.f32 %v5796, 1.0
      %v6309 = vadd.f32 %v5797, 1.0
      %v6310 = vadd.f32 %v5798, 1.0
      %v6311 = vadd.f32 %v5799, 1.0
      %v6312 = vadd.f32 %v5800, 1.0
      %v6313 = vadd.f32 %v5801, 1.0
      %v6314 = vadd.f32 %v5802, 1.0
      %v6315 = vadd.f32 %v5803, 1.0
      %v6316 = vadd.f32 %v5804, 1.0
      %v6317 = vadd.f32 %v5805, 1.0
      %v6318 = vadd.f32 %v5806, 1.0
      %v6319 = vadd.f32 %v5807, 1.0
      %v6320 = vadd.f32 %v5808, 1.0
      %v6321 = vadd.f32 %v5809, 1.0
      %v6322 = vadd.f32 %v5810, 1.0
      %v6323 = vadd.f32 %v5811, 1.0
      %v6324 = vadd.f32 %v5812, 1.0
      %v6325 = vadd.f32 %v5813, 1.0
      %v6326 = vadd.f32 %v5814, 1.0
      %v6327 = vadd.f32 %v5815, 1.0
      %v6328 = vadd.f32 %v5816, 1.0
      %v6329 = vadd.f32 %v5817, 1.0
      %v6330 = vadd.f32 %v5818, 1.0
      %v6331 = vadd.f32 %v5819, 1.0
      %v6332 = vadd.f32 %v5820, 1.0
      %v6333 = vadd.f32 %v5821, 1.0
      %v6334 = vadd.f32 %v5822, 1.0
      %v6335 = vadd.f32 %v5823, 1.0
      %v6336 = vadd.f32 %v5824, 1.0
      %v6337 = vadd.f32 %v5825, 1.0
      %v6338 = vadd.f32 %v5826, 1.0
      %v6339 = vadd.f32 %v5827, 1.0
      %v6340 = vadd.f32 %v5828, 1.0
      %v6341 = vadd.f32 %v5829, 1.0
      %v6342 = vadd.f32 %v5830, 1.0
      %v6343 = vadd.f32 %v5831, 1.0
      %v6344 = vadd.f32 %v5832, 1.0
      %v6345 = vadd.f32 %v5833, 1.0
      %v6346 = vadd.f32 %v5834, 1.0
      %v6347 = vadd.f32 %v5835, 1.0
      %v6348 = vadd.f32 %v5836, 1.0
      %v6349 = vadd.f32 %v5837, 1.0
      %v6350 = vadd.f32 %v5838, 1.0
      %v6351 = vadd.f32 %v5839, 1.0
      %v6352 = vadd.f32 %v5840, 1.0
      %v6353 = vadd.f32 %v5841, 1.0
      %v6354 = vadd.f32 %v5842, 1.0
      %v6355 = vadd.f32 %v5843, 1.0
      %v6356 = vadd.f32 %v5844, 1.0
      %v6357 = vadd.f32 %v5845, 1.0
      %v6358 = vadd.f32 %v5846, 1.0
      %v6359 = vadd.f32 %v5847, 1.0
      %v6360 = vadd.f32 %v5848, 1.0
      %v6361 = vadd.f32 %v5849, 1.0
      %v6362 = vadd.f32 %v5850, 1.0
      %v6363 = vadd.f32 %v5851, 1.0
      %v6364 = vadd.f32 %v5852, 1.0
      %v6365 = vadd.f32 %v5853, 1.0
      %v6366 = vadd.f32 %v5854, 1.0
      %v6367 = vadd.f32 %v5855, 1.0
      %v6368 = vadd.f32 %v5856, 1.0
      %v6369 = vadd.f32 %v5857, 1.0
      %v6370 = vadd.f32 %v5858, 1.0
      %v6371 = vadd.f32 %v5859, 1.0
      %v6372 = vadd.f32 %v5860, 1.0
      %v6373 = vadd.f32 %v5861, 1.0
      %v6374 = vadd.f32 %v5862, 1.0
      %v6375 = vadd.f32 %v5863, 1.0
      %v6376 = vadd.f32 %v5864, 1.0
      %v6377 = vadd.f32 %v5865, 1.0
      %v6378 = vadd.f32 %v5866, 1.0
      %v6379 = vadd.f32 %v5867, 1.0
      %v6380 = vadd.f32 %v5868, 1.0
      %v6381 = vadd.f32 %v5869, 1.0
      %v6382 = vadd.f32 %v5870, 1.0
      %v6383 = vadd.f32 %v5871, 1.0
      %v6384 = vadd.f32 %v5872, 1.0
      %v6385 = vadd.f32 %v5873, 1.0
      %v6386 = vadd.f32 %v5874, 1.0
      %v6387 = vadd.f32 %v5875, 1.0
      %v6388 = vadd.f32 %v5876, 1.0
      %v6389 = vadd.f32 %v5877, 1.0
      %v6390 = vadd.f32 %v5878, 1.0
      %v6391 = vadd.f32 %v5879, 1.0
      %v6392 = vadd.f32 %v5880, 1.0
      %v6393 = vadd.f32 %v5881, 1.0
      %v6394 = vadd.f32 %v5882, 1.0
      %v6395 = vadd.f32 %v5883, 1.0
      %v6396 = vadd.f32 %v5884, 1.0
      %v6397 = vadd.f32 %v5885, 1.0
      %v6398 = vadd.f32 %v5886, 1.0
      %v6399 = vadd.f32 %v5887, 1.0
      %v6400 = vadd.f32 %v5888, 1.0
      %v6401 = vadd.f32 %v5889, 1.0
      %v6402 = vadd.f32 %v5890, 1.0
      %v6403 = vadd.f32 %v5891, 1.0
      %v6404 = vadd.f32 %v5892, 1.0
      %v6405 = vadd.f32 %v5893, 1.0
      %v6406 = vadd.f32 %v5894, 1.0
      %v6407 = vadd.f32 %v5895, 1.0
      %v6408 = vadd.f32 %v5896, 1.0
      %v6409 = vadd.f32 %v5897, 1.0
      %v6410 = vadd.f32 %v5898, 1.0
      %v6411 = vadd.f32 %v5899, 1.0
      %v6412 = vadd.f32 %v5900, 1.0
      %v6413 = vadd.f32 %v5901, 1.0
      %v6414 = vadd.f32 %v5902, 1.0
      %v6415 = vadd.f32 %v5903, 1.0
      %v6416 = vadd.f32 %v5904, 1.0
      %v6417 = vadd.f32 %v5905, 1.0
      %v6418 = vadd.f32 %v5906, 1.0
      %v6419 = vadd.f32 %v5907, 1.0
      %v6420 = vadd.f32 %v5908, 1.0
      %v6421 = vadd.f32 %v5909, 1.0
      %v6422 = vadd.f32 %v5910, 1.0
      %v6423 = vadd.f32 %v5911, 1.0
      %v6424 = vadd.f32 %v5912, 1.0
      %v6425 = vadd.f32 %v5913, 1.0
      %v6426 = vadd.f32 %v5914, 1.0
      %v6427 = vadd.f32 %v5915, 1.0
      %v6428 = vadd.f32 %v5916, 1.0
      %v6429 = vadd.f32 %v5917, 1.0
      %v6430 = vadd.f32 %v5918, 1.0
      %v6431 = vadd.f32 %v5919, 1.0
      %v6432 = vadd.f32 %v5920, 1.0
      %v6433 = vadd.f32 %v5921, 1.0
      %v6434 = vadd.f32 %v5922, 1.0
      %v6435 = vadd.f32 %v5923, 1.0
      %v6436 = vadd.f32 %v5924, 1.0
      %v6437 = vadd.f32 %v5925, 1.0
      %v6438 = vadd.f32 %v5926, 1.0
      %v6439 = vadd.f32 %v5927, 1.0
      %v6440 = vadd.f32 %v5928, 1.0
      %v6441 = vadd.f32 %v5929, 1.0
      %v6442 = vadd.f32 %v5930, 1.0
      %v6443 = vadd.f32 %v5931, 1.0
      %v6444 = vadd.f32 %v5932, 1.0
      %v6445 = vadd.f32 %v5933, 1.0
      %v6446 = vadd.f32 %v5934, 1.0
      %v6447 = vadd.f32 %v5935, 1.0
      %v6448 = vadd.f32 %v5936, 1.0
      %v6449 = vadd.f32 %v5937, 1.0
      %v6450 = vadd.f32 %v5938, 1.0
      %v6451 = vadd.f32 %v5939, 1.0
      %v6452 = vadd.f32 %v5940, 1.0
      %v6453 = vadd.f32 %v5941, 1.0
      %v6454 = vadd.f32 %v5942, 1.0
      %v6455 = vadd.f32 %v5943, 1.0
      %v6456 = vadd.f32 %v5944, 1.0
      %v6457 = vadd.f32 %v5945, 1.0
      %v6458 = vadd.f32 %v5946, 1.0
      %v6459 = vadd.f32 %v5947, 1.0
      %v6460 = vadd.f32 %v5948, 1.0
      %v6461 = vadd.f32 %v5949, 1.0
      %v6462 = vadd.f32 %v5950, 1.0
      %v6463 = vadd.f32 %v5951, 1.0
      %v6464 = vadd.f32 %v5952, 1.0
      %v6465 = vadd.f32 %v5953, 1.0
      %v6466 = vadd.f32 %v5954, 1.0
      %v6467 = vadd.f32 %v5955, 1.0
      %v6468 = vadd.f32 %v5956, 1.0
      %v6469 = vadd.f32 %v5957, 1.0
      %v6470 = vadd.f32 %v5958, 1.0
      %v6471 = vadd.f32 %v5959, 1.0
      %v6472 = vadd.f32 %v5960, 1.0
      %v6473 = vadd.f32 %v5961, 1.0
      %v6474 = vadd.f32 %v5962, 1.0
      %v6475 = vadd.f32 %v5963, 1.0
      %v6476 = vadd.f32 %v5964, 1.0
      %v6477 = vadd.f32 %v5965, 1.0
      %v6478 = vadd.f32 %v5966, 1.0
      %v6479 = vadd.f32 %v5967, 1.0
      %v6480 = vadd.f32 %v5968, 1.0
      %v6481 = vadd.f32 %v5969, 1.0
      %v6482 = vadd.f32 %v5970, 1.0
      %v6483 = vadd.f32 %v5971, 1.0
      %v6484 = vadd.f32 %v5972, 1.0
      %v6485 = vadd.f32 %v5973, 1.0
      %v6486 = vadd.f32 %v5974, 1.0
      %v6487 = vadd.f32 %v5975, 1.0
      %v6488 = vadd.f32 %v5976, 1.0
      %v6489 = vadd.f32 %v5977, 1.0
      %v6490 = vadd.f32 %v5978, 1.0
      %v6491 = vadd.f32 %v5979, 1.0
      %v6492 = vadd.f32 %v5980, 1.0
      %v6493 = vadd.f32 %v5981, 1.0
      %v6494 = vadd.f32 %v5982, 1.0
      %v6495 = vadd.f32 %v5983, 1.0
      %v6496 = vadd.f32 %v5984, 1.0
      %v6497 = vadd.f32 %v5985, 1.0
      %v6498 = vadd.f32 %v5986, 1.0
      %v6499 = vadd.f32 %v5987, 1.0
      %v6500 = vadd.f32 %v5988, 1.0
      %v6501 = vadd.f32 %v5989, 1.0
      %v6502 = vadd.f32 %v5990, 1.0
      %v6503 = vadd.f32 %v5991, 1.0
      %v6504 = vadd.f32 %v5992, 1.0
      %v6505 = vadd.f32 %v5993, 1.0
      %v6506 = vadd.f32 %v5994, 1.0
      %v6507 = vadd.f32 %v5995, 1.0
      %v6508 = vadd.f32 %v5996, 1.0
      %v6509 = vadd.f32 %v5997, 1.0
      %v6510 = vadd.f32 %v5998, 1.0
      %v6511 = vadd.f32 %v5999, 1.0
      %v6512 = vadd.f32 %v6000, 1.0
      %v6513 = vadd.f32 %v6001, 1.0
      %v6514 = vadd.f32 %v6002, 1.0
      %v6515 = vadd.f32 %v6003, 1.0
      %v6516 = vadd.f32 %v6004, 1.0
      %v6517 = vadd.f32 %v6005, 1.0
      %v6518 = vadd.f32 %v6006, 1.0
      %v6519 = vadd.f32 %v6007, 1.0
      %v6520 = vadd.f32 %v6008, 1.0
      %v6521 = vadd.f32 %v6009, 1.0
      %v6522 = vadd.f32 %v6010, 1.0
      %v6523 = vadd.f32 %v6011, 1.0
      %v6524 = vadd.f32 %v6012, 1.0
      %v6525 = vadd.f32 %v6013, 1.0
      %v6526 = vadd.f32 %v6014, 1.0
      %v6527 = vadd.f32 %v6015, 1.0
      %v6528 = vadd.f32 %v6016, 1.0
      %v6529 = vadd.f32 %v6017, 1.0
      %v6530 = vadd.f32 %v6018, 1.0
      %v6531 = vadd.f32 %v6019, 1.0
      %v6532 = vadd.f32 %v6020, 1.0
      %v6533 = vadd.f32 %v6021, 1.0
      %v6534 = vadd.f32 %v6022, 1.0
      %v6535 = vadd.f32 %v6023, 1.0
      %v6536 = vadd.f32 %v6024, 1.0
      %v6537 = vadd.f32 %v6025, 1.0
      %v6538 = vadd.f32 %v6026, 1.0
      %v6539 = vadd.f32 %v6027, 1.0
      %v6540 = vadd.f32 %v6028, 1.0
      %v6541 = vadd.f32 %v6029, 1.0
      %v6542 = vadd.f32 %v6030, 1.0
      %v6543 = vadd.f32 %v6031, 1.0
      %v6544 = vadd.f32 %v6032, 1.0
      %v6545 = vadd.f32 %v6033, 1.0
      %v6546 = vadd.f32 %v6034, 1.0
      %v6547 = vadd.f32 %v6035, 1.0
      %v6548 = vadd.f32 %v6036, 1.0
      %v6549 = vadd.f32 %v6037, 1.0
      %v6550 = vadd.f32 %v6038, 1.0
      %v6551 = vadd.f32 %v6039, 1.0
      %v6552 = vadd.f32 %v6040, 1.0
      %v6553 = vadd.f32 %v6041, 1.0
      %v6554 = vadd.f32 %v6042, 1.0
      %v6555 = vadd.f32 %v6043, 1.0
      %v6556 = vadd.f32 %v6044, 1.0
      %v6557 = vadd.f32 %v6045, 1.0
      %v6558 = vadd.f32 %v6046, 1.0
      %v6559 = vadd.f32 %v6047, 1.0
      %v6560 = vadd.f32 %v6048, 1.0
      %v6561 = vadd.f32 %v6049, 1.0
      %v6562 = vadd.f32 %v6050, 1.0
      %v6563 = vadd.f32 %v6051, 1.0
      %v6564 = vadd.f32 %v6052, 1.0
      %v6565 = vadd.f32 %v6053, 1.0
      %v6566 = vadd.f32 %v6054, 1.0
      %v6567 = vadd.f32 %v6055, 1.0
      %v6568 = vadd.f32 %v6056, 1.0
      %v6569 = vadd.f32 %v6057, 1.0
      %v6570 = vadd.f32 %v6058, 1.0
      %v6571 = vadd.f32 %v6059, 1.0
      %v6572 = vadd.f32 %v6060, 1.0
      %v6573 = vadd.f32 %v6061, 1.0
      %v6574 = vadd.f32 %v6062, 1.0
      %v6575 = vadd.f32 %v6063, 1.0
      %v6576 = vadd.f32 %v6064, 1.0
      %v6577 = vadd.f32 %v6065, 1.0
      %v6578 = vadd.f32 %v6066, 1.0
      %v6579 = vadd.f32 %v6067, 1.0
      %v6580 = vadd.f32 %v6068, 1.0
      %v6581 = vadd.f32 %v6069, 1.0
      %v6582 = vadd.f32 %v6070, 1.0
      %v6583 = vadd.f32 %v6071, 1.0
      %v6584 = vadd.f32 %v6072, 1.0
      %v6585 = vadd.f32 %v6073, 1.0
      %v6586 = vadd.f32 %v6074, 1.0
      %v6587 = vadd.f32 %v6075, 1.0
      %v6588 = vadd.f32 %v6076, 1.0
      %v6589 = vadd.f32 %v6077, 1.0
      %v6590 = vadd.f32 %v6078, 1.0
      %v6591 = vadd.f32 %v6079, 1.0
      %v6592 = vadd.f32 %v6080, 1.0
      %v6593 = vadd.f32 %v6081, 1.0
      %v6594 = vadd.f32 %v6082, 1.0
      %v6595 = vadd.f32 %v6083, 1.0
      %v6596 = vadd.f32 %v6084, 1.0
      %v6597 = vadd.f32 %v6085, 1.0
      %v6598 = vadd.f32 %v6086, 1.0
      %v6599 = vadd.f32 %v6087, 1.0
      %v6600 = vadd.f32 %v6088, 1.0
      %v6601 = vadd.f32 %v6089, 1.0
      %v6602 = vadd.f32 %v6090, 1.0
      %v6603 = vadd.f32 %v6091, 1.0
      %v6604 = vadd.f32 %v6092, 1.0
      %v6605 = vadd.f32 %v6093, 1.0
      %v6606 = vadd.f32 %v6094, 1.0
      %v6607 = vadd.f32 %v6095, 1.0
      %v6608 = vadd.f32 %v6096, 1.0
      %v6609 = vadd.f32 %v6097, 1.0
      %v6610 = vadd.f32 %v6098, 1.0
      %v6611 = vadd.f32 %v6099, 1.0
      %v6612 = vadd.f32 %v6100, 1.0
      %v6613 = vadd.f32 %v6101, 1.0
      %v6614 = vadd.f32 %v6102, 1.0
      %v6615 = vadd.f32 %v6103, 1.0
      %v6616 = vadd.f32 %v6104, 1.0
      %v6617 = vadd.f32 %v6105, 1.0
      %v6618 = vadd.f32 %v6106, 1.0
      %v6619 = vadd.f32 %v6107, 1.0
      %v6620 = vadd.f32 %v6108, 1.0
      %v6621 = vadd.f32 %v6109, 1.0
      %v6622 = vadd.f32 %v6110, 1.0
      %v6623 = vadd.f32 %v6111, 1.0
      %v6624 = vadd.f32 %v6112, 1.0
      %v6625 = vadd.f32 %v6113, 1.0
      %v6626 = vadd.f32 %v6114, 1.0
      %v6627 = vadd.f32 %v6115, 1.0
      %v6628 = vadd.f32 %v6116, 1.0
      %v6629 = vadd.f32 %v6117, 1.0
      %v6630 = vadd.f32 %v6118, 1.0
      %v6631 = vadd.f32 %v6119, 1.0
      %v6632 = vadd.f32 %v6120, 1.0
      %v6633 = vadd.f32 %v6121, 1.0
      %v6634 = vadd.f32 %v6122, 1.0
      %v6635 = vadd.f32 %v6123, 1.0
      %v6636 = vadd.f32 %v6124, 1.0
      %v6637 = vadd.f32 %v6125, 1.0
      %v6638 = vadd.f32 %v6126, 1.0
      %v6639 = vadd.f32 %v6127, 1.0
      %v6640 = vadd.f32 %v6128, 1.0
      %v6641 = vadd.f32 %v6129, 1.0
      %v6642 = vadd.f32 %v6130, 1.0
      %v6643 = vadd.f32 %v6131, 1.0
      %v6644 = vadd.f32 %v6132, 1.0
      %v6645 = vadd.f32 %v6133, 1.0
      %v6646 = vadd.f32 %v6134, 1.0
      %v6647 = vadd.f32 %v6135, 1.0
      %v6648 = vadd.f32 %v6136, 1.0
      %v6649 = vadd.f32 %v6137, 1.0
      %v6650 = vadd.f32 %v6138, 1.0
      %v6651 = vadd.f32 %v6139, 1.0
      %v6652 = vadd.f32 %v6140, 1.0
      %v6653 = vadd.f32 %v6141, 1.0
      %v6654 = vadd.f32 %v6142, 1.0
      %v6655 = vadd.f32 %v6143, 1.0
      %v6656 = vadd.f32 %v6144, 1.0
      %v6657 = vadd.f32 %v6145, 1.0
      %v6658 = vadd.f32 %v6146, 1.0
      %v6659 = vadd.f32 %v6147, 1.0
      %v6660 = vadd.f32 %v6148, 1.0
      %v6661 = vadd.f32 %v6149, 1.0
      %v6662 = vadd.f32 %v6150, 1.0
      %v6663 = vadd.f32 %v6151, 1.0
      %v6664 = vadd.f32 %v6152, 1.0
      %v6665 = vadd.f32 %v6153, 1.0
      %v6666 = vadd.f32 %v6154, 1.0
      %v6667 = vadd.f32 %v6155, 1.0
      %v6668 = vadd.f32 %v6156, 1.0
      %v6669 = vadd.f32 %v6157, 1.0
      %v6670 = vadd.f32 %v6158, 1.0
      %v6671 = vadd.f32 %v6159, 1.0
      %v6672 = vadd.f32 %v6160, 1.0
      %v6673 = vadd.f32 %v6161, 1.0
      %v6674 = vadd.f32 %v6162, 1.0
      %v6675 = vadd.f32 %v6163, 1.0
      %v6676 = vadd.f32 %v6164, 1.0
      %v6677 = vadd.f32 %v6165, 1.0
      %v6678 = vadd.f32 %v6166, 1.0
      %v6679 = vadd.f32 %v6167, 1.0
      %v6680 = vadd.f32 %v6168, 1.0
      %v6681 = vadd.f32 %v6169, 1.0
      %v6682 = vadd.f32 %v6170, 1.0
      %v6683 = vadd.f32 %v6171, 1.0
      %v6684 = vadd.f32 %v6172, 1.0
      %v6685 = vadd.f32 %v6173, 1.0
      %v6686 = vadd.f32 %v6174, 1.0
      %v6687 = vadd.f32 %v6175, 1.0
      %v6688 = vadd.f32 %v6176, 1.0
      %v6689 = vadd.f32 %v6177, 1.0
      %v6690 = vadd.f32 %v6178, 1.0
      %v6691 = vadd.f32 %v6179, 1.0
      %v6692 = vadd.f32 %v6180, 1.0
      %v6693 = vadd.f32 %v6181, 1.0
      %v6694 = vadd.f32 %v6182, 1.0
      %v6695 = vadd.f32 %v6183, 1.0
      %v6696 = vadd.f32 %v6184, 1.0
      %v6697 = vadd.f32 %v6185, 1.0
      %v6698 = vadd.f32 %v6186, 1.0
      %v6699 = vadd.f32 %v6187, 1.0
      %v6700 = vadd.f32 %v6188, 1.0
      %v6701 = vadd.f32 %v6189, 1.0
      %v6702 = vadd.f32 %v6190, 1.0
      %v6703 = vadd.f32 %v6191, 1.0
      %v6704 = vadd.f32 %v6192, 1.0
      %v6705 = vadd.f32 %v6193, 1.0
      %v6706 = vadd.f32 %v6194, 1.0
      %v6707 = vadd.f32 %v6195, 1.0
      %v6708 = vadd.f32 %v6196, 1.0
      %v6709 = vadd.f32 %v6197, 1.0
      %v6710 = vadd.f32 %v6198, 1.0
      %v6711 = vadd.f32 %v6199, 1.0
      %v6712 = vadd.f32 %v6200, 1.0
      %v6713 = vadd.f32 %v6201, 1.0
      %v6714 = vadd.f32 %v6202, 1.0
      %v6715 = vadd.f32 %v6203, 1.0
      %v6716 = vadd.f32 %v6204, 1.0
      %v6717 = vadd.f32 %v6205, 1.0
      %v6718 = vadd.f32 %v6206, 1.0
      %v6719 = vadd.f32 %v6207, 1.0
      %v6720 = vadd.f32 %v6208, 1.0
      %v6721 = vadd.f32 %v6209, 1.0
      %v6722 = vadd.f32 %v6210, 1.0
      %v6723 = vadd.f32 %v6211, 1.0
      %v6724 = vadd.f32 %v6212, 1.0
      %v6725 = vadd.f32 %v6213, 1.0
      %v6726 = vadd.f32 %v6214, 1.0
      %v6727 = vadd.f32 %v6215, 1.0
      %v6728 = vadd.f32 %v6216, 1.0
      %v6729 = vadd.f32 %v6217, 1.0
      %v6730 = vadd.f32 %v6218, 1.0
      %v6731 = vadd.f32 %v6219, 1.0
      %v6732 = vadd.f32 %v6220, 1.0
      %v6733 = vadd.f32 %v6221, 1.0
      %v6734 = vadd.f32 %v6222, 1.0
      %v6735 = vadd.f32 %v6223, 1.0
      %v6736 = vadd.f32 %v6224, 1.0
      %v6737 = vadd.f32 %v6225, 1.0
      %v6738 = vadd.f32 %v6226, 1.0
      %v6739 = vadd.f32 %v6227, 1.0
      %v6740 = vadd.f32 %v6228, 1.0
      %v6741 = vadd.f32 %v6229, 1.0
      %v6742 = vadd.f32 %v6230, 1.0
      %v6743 = vadd.f32 %v6231, 1.0
      %v6744 = vadd.f32 %v6232, 1.0
      %v6745 = vadd.f32 %v6233, 1.0
      %v6746 = vadd.f32 %v6234, 1.0
      %v6747 = vadd.f32 %v6235, 1.0
      %v6748 = vadd.f32 %v6236, 1.0
      %v6749 = vadd.f32 %v6237, 1.0
      %v6750 = vadd.f32 %v6238, 1.0
      %v6751 = vadd.f32 %v6239, 1.0
      %v6752 = vadd.f32 %v6240, 1.0
      %v6753 = vadd.f32 %v6241, 1.0
      %v6754 = vadd.f32 %v6242, 1.0
      %v6755 = vadd.f32 %v6243, 1.0
      %v6756 = vadd.f32 %v6244, 1.0
      %v6757 = vadd.f32 %v6245, 1.0
      %v6758 = vadd.f32 %v6246, 1.0
      %v6759 = vadd.f32 %v6247, 1.0
      %v6760 = vadd.f32 %v6248, 1.0
      %v6761 = vadd.f32 %v6249, 1.0
      %v6762 = vadd.f32 %v6250, 1.0
      %v6763 = vadd.f32 %v6251, 1.0
      %v6764 = vadd.f32 %v6252, 1.0
      %v6765 = vadd.f32 %v6253, 1.0
      %v6766 = vadd.f32 %v6254, 1.0
      %v6767 = vadd.f32 %v6255, 1.0
      %v6768 = vadd.f32 %v6256, 1.0
      %v6769 = vadd.f32 %v6257, 1.0
      %v6770 = vadd.f32 %v6258, 1.0
      %v6771 = vadd.f32 %v6259, 1.0
      %v6772 = vadd.f32 %v6260, 1.0
      %v6773 = vadd.f32 %v6261, 1.0
      %v6774 = vadd.f32 %v6262, 1.0
      %v6775 = vadd.f32 %v6263, 1.0
      %v6776 = vadd.f32 %v6264, 1.0
      %v6777 = vadd.f32 %v6265, 1.0
      %v6778 = vadd.f32 %v6266, 1.0
      %v6779 = vadd.f32 %v6267, 1.0
      %v6780 = vadd.f32 %v6268, 1.0
      %v6781 = vadd.f32 %v6269, 1.0
      %v6782 = vadd.f32 %v6270, 1.0
      %v6783 = vadd.f32 %v6271, 1.0
      %v6784 = vadd.f32 %v6272, 1.0
      %v6785 = vadd.f32 %v6273, 1.0
      %v6786 = vadd.f32 %v6274, 1.0
      %v6787 = vadd.f32 %v6275, 1.0
      %v6788 = vadd.f32 %v6276, 1.0
      %v6789 = vadd.f32 %v6277, 1.0
      %v6790 = vadd.f32 %v6278, 1.0
      %v6791 = vadd.f32 %v6279, 1.0
      %v6792 = vadd.f32 %v6280, 1.0
      %v6793 = vadd.f32 %v6281, 1.0
      %v6794 = vadd.f32 %v6282, 1.0
      %v6795 = vadd.f32 %v6283, 1.0
      %v6796 = vadd.f32 %v6284, 1.0
      %v6797 = vmul.f32 %v2701, %v6285
      %v6798 = vmul.f32 %v2702, %v6286
      %v6799 = vmul.f32 %v2703, %v6287
      %v6800 = vmul.f32 %v2704, %v6288
      %v6801 = vmul.f32 %v2705, %v6289
      %v6802 = vmul.f32 %v2706, %v6290
      %v6803 = vmul.f32 %v2707, %v6291
      %v6804 = vmul.f32 %v2708, %v6292
      %v6805 = vmul.f32 %v2709, %v6293
      %v6806 = vmul.f32 %v2710, %v6294
      %v6807 = vmul.f32 %v2711, %v6295
      %v6808 = vmul.f32 %v2712, %v6296
      %v6809 = vmul.f32 %v2713, %v6297
      %v6810 = vmul.f32 %v2714, %v6298
      %v6811 = vmul.f32 %v2715, %v6299
      %v6812 = vmul.f32 %v2716, %v6300
      %v6813 = vmul.f32 %v2717, %v6301
      %v6814 = vmul.f32 %v2718, %v6302
      %v6815 = vmul.f32 %v2719, %v6303
      %v6816 = vmul.f32 %v2720, %v6304
      %v6817 = vmul.f32 %v2721, %v6305
      %v6818 = vmul.f32 %v2722, %v6306
      %v6819 = vmul.f32 %v2723, %v6307
      %v6820 = vmul.f32 %v2724, %v6308
      %v6821 = vmul.f32 %v2725, %v6309
      %v6822 = vmul.f32 %v2726, %v6310
      %v6823 = vmul.f32 %v2727, %v6311
      %v6824 = vmul.f32 %v2728, %v6312
      %v6825 = vmul.f32 %v2729, %v6313
      %v6826 = vmul.f32 %v2730, %v6314
      %v6827 = vmul.f32 %v2731, %v6315
      %v6828 = vmul.f32 %v2732, %v6316
      %v6829 = vmul.f32 %v2733, %v6317
      %v6830 = vmul.f32 %v2734, %v6318
      %v6831 = vmul.f32 %v2735, %v6319
      %v6832 = vmul.f32 %v2736, %v6320
      %v6833 = vmul.f32 %v2737, %v6321
      %v6834 = vmul.f32 %v2738, %v6322
      %v6835 = vmul.f32 %v2739, %v6323
      %v6836 = vmul.f32 %v2740, %v6324
      %v6837 = vmul.f32 %v2741, %v6325
      %v6838 = vmul.f32 %v2742, %v6326
      %v6839 = vmul.f32 %v2743, %v6327
      %v6840 = vmul.f32 %v2744, %v6328
      %v6841 = vmul.f32 %v2745, %v6329
      %v6842 = vmul.f32 %v2746, %v6330
      %v6843 = vmul.f32 %v2747, %v6331
      %v6844 = vmul.f32 %v2748, %v6332
      %v6845 = vmul.f32 %v2749, %v6333
      %v6846 = vmul.f32 %v2750, %v6334
      %v6847 = vmul.f32 %v2751, %v6335
      %v6848 = vmul.f32 %v2752, %v6336
      %v6849 = vmul.f32 %v2753, %v6337
      %v6850 = vmul.f32 %v2754, %v6338
      %v6851 = vmul.f32 %v2755, %v6339
      %v6852 = vmul.f32 %v2756, %v6340
      %v6853 = vmul.f32 %v2757, %v6341
      %v6854 = vmul.f32 %v2758, %v6342
      %v6855 = vmul.f32 %v2759, %v6343
      %v6856 = vmul.f32 %v2760, %v6344
      %v6857 = vmul.f32 %v2761, %v6345
      %v6858 = vmul.f32 %v2762, %v6346
      %v6859 = vmul.f32 %v2763, %v6347
      %v6860 = vmul.f32 %v2764, %v6348
      %v6861 = vmul.f32 %v2765, %v6349
      %v6862 = vmul.f32 %v2766, %v6350
      %v6863 = vmul.f32 %v2767, %v6351
      %v6864 = vmul.f32 %v2768, %v6352
      %v6865 = vmul.f32 %v2769, %v6353
      %v6866 = vmul.f32 %v2770, %v6354
      %v6867 = vmul.f32 %v2771, %v6355
      %v6868 = vmul.f32 %v2772, %v6356
      %v6869 = vmul.f32 %v2773, %v6357
      %v6870 = vmul.f32 %v2774, %v6358
      %v6871 = vmul.f32 %v2775, %v6359
      %v6872 = vmul.f32 %v2776, %v6360
      %v6873 = vmul.f32 %v2777, %v6361
      %v6874 = vmul.f32 %v2778, %v6362
      %v6875 = vmul.f32 %v2779, %v6363
      %v6876 = vmul.f32 %v2780, %v6364
      %v6877 = vmul.f32 %v2781, %v6365
      %v6878 = vmul.f32 %v2782, %v6366
      %v6879 = vmul.f32 %v2783, %v6367
      %v6880 = vmul.f32 %v2784, %v6368
      %v6881 = vmul.f32 %v2785, %v6369
      %v6882 = vmul.f32 %v2786, %v6370
      %v6883 = vmul.f32 %v2787, %v6371
      %v6884 = vmul.f32 %v2788, %v6372
      %v6885 = vmul.f32 %v2789, %v6373
      %v6886 = vmul.f32 %v2790, %v6374
      %v6887 = vmul.f32 %v2791, %v6375
      %v6888 = vmul.f32 %v2792, %v6376
      %v6889 = vmul.f32 %v2793, %v6377
      %v6890 = vmul.f32 %v2794, %v6378
      %v6891 = vmul.f32 %v2795, %v6379
      %v6892 = vmul.f32 %v2796, %v6380
      %v6893 = vmul.f32 %v2797, %v6381
      %v6894 = vmul.f32 %v2798, %v6382
      %v6895 = vmul.f32 %v2799, %v6383
      %v6896 = vmul.f32 %v2800, %v6384
      %v6897 = vmul.f32 %v2801, %v6385
      %v6898 = vmul.f32 %v2802, %v6386
      %v6899 = vmul.f32 %v2803, %v6387
      %v6900 = vmul.f32 %v2804, %v6388
      %v6901 = vmul.f32 %v2805, %v6389
      %v6902 = vmul.f32 %v2806, %v6390
      %v6903 = vmul.f32 %v2807, %v6391
      %v6904 = vmul.f32 %v2808, %v6392
      %v6905 = vmul.f32 %v2809, %v6393
      %v6906 = vmul.f32 %v2810, %v6394
      %v6907 = vmul.f32 %v2811, %v6395
      %v6908 = vmul.f32 %v2812, %v6396
      %v6909 = vmul.f32 %v2813, %v6397
      %v6910 = vmul.f32 %v2814, %v6398
      %v6911 = vmul.f32 %v2815, %v6399
      %v6912 = vmul.f32 %v2816, %v6400
      %v6913 = vmul.f32 %v2817, %v6401
      %v6914 = vmul.f32 %v2818, %v6402
      %v6915 = vmul.f32 %v2819, %v6403
      %v6916 = vmul.f32 %v2820, %v6404
      %v6917 = vmul.f32 %v2821, %v6405
      %v6918 = vmul.f32 %v2822, %v6406
      %v6919 = vmul.f32 %v2823, %v6407
      %v6920 = vmul.f32 %v2824, %v6408
      %v6921 = vmul.f32 %v2825, %v6409
      %v6922 = vmul.f32 %v2826, %v6410
      %v6923 = vmul.f32 %v2827, %v6411
      %v6924 = vmul.f32 %v2828, %v6412
      %v6925 = vmul.f32 %v2829, %v6413
      %v6926 = vmul.f32 %v2830, %v6414
      %v6927 = vmul.f32 %v2831, %v6415
      %v6928 = vmul.f32 %v2832, %v6416
      %v6929 = vmul.f32 %v2833, %v6417
      %v6930 = vmul.f32 %v2834, %v6418
      %v6931 = vmul.f32 %v2835, %v6419
      %v6932 = vmul.f32 %v2836, %v6420
      %v6933 = vmul.f32 %v2837, %v6421
      %v6934 = vmul.f32 %v2838, %v6422
      %v6935 = vmul.f32 %v2839, %v6423
      %v6936 = vmul.f32 %v2840, %v6424
      %v6937 = vmul.f32 %v2841, %v6425
      %v6938 = vmul.f32 %v2842, %v6426
      %v6939 = vmul.f32 %v2843, %v6427
      %v6940 = vmul.f32 %v2844, %v6428
      %v6941 = vmul.f32 %v2845, %v6429
      %v6942 = vmul.f32 %v2846, %v6430
      %v6943 = vmul.f32 %v2847, %v6431
      %v6944 = vmul.f32 %v2848, %v6432
      %v6945 = vmul.f32 %v2849, %v6433
      %v6946 = vmul.f32 %v2850, %v6434
      %v6947 = vmul.f32 %v2851, %v6435
      %v6948 = vmul.f32 %v2852, %v6436
      %v6949 = vmul.f32 %v2853, %v6437
      %v6950 = vmul.f32 %v2854, %v6438
      %v6951 = vmul.f32 %v2855, %v6439
      %v6952 = vmul.f32 %v2856, %v6440
      %v6953 = vmul.f32 %v2857, %v6441
      %v6954 = vmul.f32 %v2858, %v6442
      %v6955 = vmul.f32 %v2859, %v6443
      %v6956 = vmul.f32 %v2860, %v6444
      %v6957 = vmul.f32 %v2861, %v6445
      %v6958 = vmul.f32 %v2862, %v6446
      %v6959 = vmul.f32 %v2863, %v6447
      %v6960 = vmul.f32 %v2864, %v6448
      %v6961 = vmul.f32 %v2865, %v6449
      %v6962 = vmul.f32 %v2866, %v6450
      %v6963 = vmul.f32 %v2867, %v6451
      %v6964 = vmul.f32 %v2868, %v6452
      %v6965 = vmul.f32 %v2869, %v6453
      %v6966 = vmul.f32 %v2870, %v6454
      %v6967 = vmul.f32 %v2871, %v6455
      %v6968 = vmul.f32 %v2872, %v6456
      %v6969 = vmul.f32 %v2873, %v6457
      %v6970 = vmul.f32 %v2874, %v6458
      %v6971 = vmul.f32 %v2875, %v6459
      %v6972 = vmul.f32 %v2876, %v6460
      %v6973 = vmul.f32 %v2877, %v6461
      %v6974 = vmul.f32 %v2878, %v6462
      %v6975 = vmul.f32 %v2879, %v6463
      %v6976 = vmul.f32 %v2880, %v6464
      %v6977 = vmul.f32 %v2881, %v6465
      %v6978 = vmul.f32 %v2882, %v6466
      %v6979 = vmul.f32 %v2883, %v6467
      %v6980 = vmul.f32 %v2884, %v6468
      %v6981 = vmul.f32 %v2885, %v6469
      %v6982 = vmul.f32 %v2886, %v6470
      %v6983 = vmul.f32 %v2887, %v6471
      %v6984 = vmul.f32 %v2888, %v6472
      %v6985 = vmul.f32 %v2889, %v6473
      %v6986 = vmul.f32 %v2890, %v6474
      %v6987 = vmul.f32 %v2891, %v6475
      %v6988 = vmul.f32 %v2892, %v6476
      %v6989 = vmul.f32 %v2893, %v6477
      %v6990 = vmul.f32 %v2894, %v6478
      %v6991 = vmul.f32 %v2895, %v6479
      %v6992 = vmul.f32 %v2896, %v6480
      %v6993 = vmul.f32 %v2897, %v6481
      %v6994 = vmul.f32 %v2898, %v6482
      %v6995 = vmul.f32 %v2899, %v6483
      %v6996 = vmul.f32 %v2900, %v6484
      %v6997 = vmul.f32 %v2901, %v6485
      %v6998 = vmul.f32 %v2902, %v6486
      %v6999 = vmul.f32 %v2903, %v6487
      %v7000 = vmul.f32 %v2904, %v6488
      %v7001 = vmul.f32 %v2905, %v6489
      %v7002 = vmul.f32 %v2906, %v6490
      %v7003 = vmul.f32 %v2907, %v6491
      %v7004 = vmul.f32 %v2908, %v6492
      %v7005 = vmul.f32 %v2909, %v6493
      %v7006 = vmul.f32 %v2910, %v6494
      %v7007 = vmul.f32 %v2911, %v6495
      %v7008 = vmul.f32 %v2912, %v6496
      %v7009 = vmul.f32 %v2913, %v6497
      %v7010 = vmul.f32 %v2914, %v6498
      %v7011 = vmul.f32 %v2915, %v6499
      %v7012 = vmul.f32 %v2916, %v6500
      %v7013 = vmul.f32 %v2917, %v6501
      %v7014 = vmul.f32 %v2918, %v6502
      %v7015 = vmul.f32 %v2919, %v6503
      %v7016 = vmul.f32 %v2920, %v6504
      %v7017 = vmul.f32 %v2921, %v6505
      %v7018 = vmul.f32 %v2922, %v6506
      %v7019 = vmul.f32 %v2923, %v6507
      %v7020 = vmul.f32 %v2924, %v6508
      %v7021 = vmul.f32 %v2925, %v6509
      %v7022 = vmul.f32 %v2926, %v6510
      %v7023 = vmul.f32 %v2927, %v6511
      %v7024 = vmul.f32 %v2928, %v6512
      %v7025 = vmul.f32 %v2929, %v6513
      %v7026 = vmul.f32 %v2930, %v6514
      %v7027 = vmul.f32 %v2931, %v6515
      %v7028 = vmul.f32 %v2932, %v6516
      %v7029 = vmul.f32 %v2933, %v6517
      %v7030 = vmul.f32 %v2934, %v6518
      %v7031 = vmul.f32 %v2935, %v6519
      %v7032 = vmul.f32 %v2936, %v6520
      %v7033 = vmul.f32 %v2937, %v6521
      %v7034 = vmul.f32 %v2938, %v6522
      %v7035 = vmul.f32 %v2939, %v6523
      %v7036 = vmul.f32 %v2940, %v6524
      %v7037 = vmul.f32 %v2941, %v6525
      %v7038 = vmul.f32 %v2942, %v6526
      %v7039 = vmul.f32 %v2943, %v6527
      %v7040 = vmul.f32 %v2944, %v6528
      %v7041 = vmul.f32 %v2945, %v6529
      %v7042 = vmul.f32 %v2946, %v6530
      %v7043 = vmul.f32 %v2947, %v6531
      %v7044 = vmul.f32 %v2948, %v6532
      %v7045 = vmul.f32 %v2949, %v6533
      %v7046 = vmul.f32 %v2950, %v6534
      %v7047 = vmul.f32 %v2951, %v6535
      %v7048 = vmul.f32 %v2952, %v6536
      %v7049 = vmul.f32 %v2953, %v6537
      %v7050 = vmul.f32 %v2954, %v6538
      %v7051 = vmul.f32 %v2955, %v6539
      %v7052 = vmul.f32 %v2956, %v6540
      %v7053 = vmul.f32 %v2957, %v6541
      %v7054 = vmul.f32 %v2958, %v6542
      %v7055 = vmul.f32 %v2959, %v6543
      %v7056 = vmul.f32 %v2960, %v6544
      %v7057 = vmul.f32 %v2961, %v6545
      %v7058 = vmul.f32 %v2962, %v6546
      %v7059 = vmul.f32 %v2963, %v6547
      %v7060 = vmul.f32 %v2964, %v6548
      %v7061 = vmul.f32 %v2965, %v6549
      %v7062 = vmul.f32 %v2966, %v6550
      %v7063 = vmul.f32 %v2967, %v6551
      %v7064 = vmul.f32 %v2968, %v6552
      %v7065 = vmul.f32 %v2969, %v6553
      %v7066 = vmul.f32 %v2970, %v6554
      %v7067 = vmul.f32 %v2971, %v6555
      %v7068 = vmul.f32 %v2972, %v6556
      %v7069 = vmul.f32 %v2973, %v6557
      %v7070 = vmul.f32 %v2974, %v6558
      %v7071 = vmul.f32 %v2975, %v6559
      %v7072 = vmul.f32 %v2976, %v6560
      %v7073 = vmul.f32 %v2977, %v6561
      %v7074 = vmul.f32 %v2978, %v6562
      %v7075 = vmul.f32 %v2979, %v6563
      %v7076 = vmul.f32 %v2980, %v6564
      %v7077 = vmul.f32 %v2981, %v6565
      %v7078 = vmul.f32 %v2982, %v6566
      %v7079 = vmul.f32 %v2983, %v6567
      %v7080 = vmul.f32 %v2984, %v6568
      %v7081 = vmul.f32 %v2985, %v6569
      %v7082 = vmul.f32 %v2986, %v6570
      %v7083 = vmul.f32 %v2987, %v6571
      %v7084 = vmul.f32 %v2988, %v6572
      %v7085 = vmul.f32 %v2989, %v6573
      %v7086 = vmul.f32 %v2990, %v6574
      %v7087 = vmul.f32 %v2991, %v6575
      %v7088 = vmul.f32 %v2992, %v6576
      %v7089 = vmul.f32 %v2993, %v6577
      %v7090 = vmul.f32 %v2994, %v6578
      %v7091 = vmul.f32 %v2995, %v6579
      %v7092 = vmul.f32 %v2996, %v6580
      %v7093 = vmul.f32 %v2997, %v6581
      %v7094 = vmul.f32 %v2998, %v6582
      %v7095 = vmul.f32 %v2999, %v6583
      %v7096 = vmul.f32 %v3000, %v6584
      %v7097 = vmul.f32 %v3001, %v6585
      %v7098 = vmul.f32 %v3002, %v6586
      %v7099 = vmul.f32 %v3003, %v6587
      %v7100 = vmul.f32 %v3004, %v6588
      %v7101 = vmul.f32 %v3005, %v6589
      %v7102 = vmul.f32 %v3006, %v6590
      %v7103 = vmul.f32 %v3007, %v6591
      %v7104 = vmul.f32 %v3008, %v6592
      %v7105 = vmul.f32 %v3009, %v6593
      %v7106 = vmul.f32 %v3010, %v6594
      %v7107 = vmul.f32 %v3011, %v6595
      %v7108 = vmul.f32 %v3012, %v6596
      %v7109 = vmul.f32 %v3013, %v6597
      %v7110 = vmul.f32 %v3014, %v6598
      %v7111 = vmul.f32 %v3015, %v6599
      %v7112 = vmul.f32 %v3016, %v6600
      %v7113 = vmul.f32 %v3017, %v6601
      %v7114 = vmul.f32 %v3018, %v6602
      %v7115 = vmul.f32 %v3019, %v6603
      %v7116 = vmul.f32 %v3020, %v6604
      %v7117 = vmul.f32 %v3021, %v6605
      %v7118 = vmul.f32 %v3022, %v6606
      %v7119 = vmul.f32 %v3023, %v6607
      %v7120 = vmul.f32 %v3024, %v6608
      %v7121 = vmul.f32 %v3025, %v6609
      %v7122 = vmul.f32 %v3026, %v6610
      %v7123 = vmul.f32 %v3027, %v6611
      %v7124 = vmul.f32 %v3028, %v6612
      %v7125 = vmul.f32 %v3029, %v6613
      %v7126 = vmul.f32 %v3030, %v6614
      %v7127 = vmul.f32 %v3031, %v6615
      %v7128 = vmul.f32 %v3032, %v6616
      %v7129 = vmul.f32 %v3033, %v6617
      %v7130 = vmul.f32 %v3034, %v6618
      %v7131 = vmul.f32 %v3035, %v6619
      %v7132 = vmul.f32 %v3036, %v6620
      %v7133 = vmul.f32 %v3037, %v6621
      %v7134 = vmul.f32 %v3038, %v6622
      %v7135 = vmul.f32 %v3039, %v6623
      %v7136 = vmul.f32 %v3040, %v6624
      %v7137 = vmul.f32 %v3041, %v6625
      %v7138 = vmul.f32 %v3042, %v6626
      %v7139 = vmul.f32 %v3043, %v6627
      %v7140 = vmul.f32 %v3044, %v6628
      %v7141 = vmul.f32 %v3045, %v6629
      %v7142 = vmul.f32 %v3046, %v6630
      %v7143 = vmul.f32 %v3047, %v6631
      %v7144 = vmul.f32 %v3048, %v6632
      %v7145 = vmul.f32 %v3049, %v6633
      %v7146 = vmul.f32 %v3050, %v6634
      %v7147 = vmul.f32 %v3051, %v6635
      %v7148 = vmul.f32 %v3052, %v6636
      %v7149 = vmul.f32 %v3053, %v6637
      %v7150 = vmul.f32 %v3054, %v6638
      %v7151 = vmul.f32 %v3055, %v6639
      %v7152 = vmul.f32 %v3056, %v6640
      %v7153 = vmul.f32 %v3057, %v6641
      %v7154 = vmul.f32 %v3058, %v6642
      %v7155 = vmul.f32 %v3059, %v6643
      %v7156 = vmul.f32 %v3060, %v6644
      %v7157 = vmul.f32 %v3061, %v6645
      %v7158 = vmul.f32 %v3062, %v6646
      %v7159 = vmul.f32 %v3063, %v6647
      %v7160 = vmul.f32 %v3064, %v6648
      %v7161 = vmul.f32 %v3065, %v6649
      %v7162 = vmul.f32 %v3066, %v6650
      %v7163 = vmul.f32 %v3067, %v6651
      %v7164 = vmul.f32 %v3068, %v6652
      %v7165 = vmul.f32 %v3069, %v6653
      %v7166 = vmul.f32 %v3070, %v6654
      %v7167 = vmul.f32 %v3071, %v6655
      %v7168 = vmul.f32 %v3072, %v6656
      %v7169 = vmul.f32 %v3073, %v6657
      %v7170 = vmul.f32 %v3074, %v6658
      %v7171 = vmul.f32 %v3075, %v6659
      %v7172 = vmul.f32 %v3076, %v6660
      %v7173 = vmul.f32 %v3077, %v6661
      %v7174 = vmul.f32 %v3078, %v6662
      %v7175 = vmul.f32 %v3079, %v6663
      %v7176 = vmul.f32 %v3080, %v6664
      %v7177 = vmul.f32 %v3081, %v6665
      %v7178 = vmul.f32 %v3082, %v6666
      %v7179 = vmul.f32 %v3083, %v6667
      %v7180 = vmul.f32 %v3084, %v6668
      %v7181 = vmul.f32 %v3085, %v6669
      %v7182 = vmul.f32 %v3086, %v6670
      %v7183 = vmul.f32 %v3087, %v6671
      %v7184 = vmul.f32 %v3088, %v6672
      %v7185 = vmul.f32 %v3089, %v6673
      %v7186 = vmul.f32 %v3090, %v6674
      %v7187 = vmul.f32 %v3091, %v6675
      %v7188 = vmul.f32 %v3092, %v6676
      %v7189 = vmul.f32 %v3093, %v6677
      %v7190 = vmul.f32 %v3094, %v6678
      %v7191 = vmul.f32 %v3095, %v6679
      %v7192 = vmul.f32 %v3096, %v6680
      %v7193 = vmul.f32 %v3097, %v6681
      %v7194 = vmul.f32 %v3098, %v6682
      %v7195 = vmul.f32 %v3099, %v6683
      %v7196 = vmul.f32 %v3100, %v6684
      %v7197 = vmul.f32 %v3101, %v6685
      %v7198 = vmul.f32 %v3102, %v6686
      %v7199 = vmul.f32 %v3103, %v6687
      %v7200 = vmul.f32 %v3104, %v6688
      %v7201 = vmul.f32 %v3105, %v6689
      %v7202 = vmul.f32 %v3106, %v6690
      %v7203 = vmul.f32 %v3107, %v6691
      %v7204 = vmul.f32 %v3108, %v6692
      %v7205 = vmul.f32 %v3109, %v6693
      %v7206 = vmul.f32 %v3110, %v6694
      %v7207 = vmul.f32 %v3111, %v6695
      %v7208 = vmul.f32 %v3112, %v6696
      %v7209 = vmul.f32 %v3113, %v6697
      %v7210 = vmul.f32 %v3114, %v6698
      %v7211 = vmul.f32 %v3115, %v6699
      %v7212 = vmul.f32 %v3116, %v6700
      %v7213 = vmul.f32 %v3117, %v6701
      %v7214 = vmul.f32 %v3118, %v6702
      %v7215 = vmul.f32 %v3119, %v6703
      %v7216 = vmul.f32 %v3120, %v6704
      %v7217 = vmul.f32 %v3121, %v6705
      %v7218 = vmul.f32 %v3122, %v6706
      %v7219 = vmul.f32 %v3123, %v6707
      %v7220 = vmul.f32 %v3124, %v6708
      %v7221 = vmul.f32 %v3125, %v6709
      %v7222 = vmul.f32 %v3126, %v6710
      %v7223 = vmul.f32 %v3127, %v6711
      %v7224 = vmul.f32 %v3128, %v6712
      %v7225 = vmul.f32 %v3129, %v6713
      %v7226 = vmul.f32 %v3130, %v6714
      %v7227 = vmul.f32 %v3131, %v6715
      %v7228 = vmul.f32 %v3132, %v6716
      %v7229 = vmul.f32 %v3133, %v6717
      %v7230 = vmul.f32 %v3134, %v6718
      %v7231 = vmul.f32 %v3135, %v6719
      %v7232 = vmul.f32 %v3136, %v6720
      %v7233 = vmul.f32 %v3137, %v6721
      %v7234 = vmul.f32 %v3138, %v6722
      %v7235 = vmul.f32 %v3139, %v6723
      %v7236 = vmul.f32 %v3140, %v6724
      %v7237 = vmul.f32 %v3141, %v6725
      %v7238 = vmul.f32 %v3142, %v6726
      %v7239 = vmul.f32 %v3143, %v6727
      %v7240 = vmul.f32 %v3144, %v6728
      %v7241 = vmul.f32 %v3145, %v6729
      %v7242 = vmul.f32 %v3146, %v6730
      %v7243 = vmul.f32 %v3147, %v6731
      %v7244 = vmul.f32 %v3148, %v6732
      %v7245 = vmul.f32 %v3149, %v6733
      %v7246 = vmul.f32 %v3150, %v6734
      %v7247 = vmul.f32 %v3151, %v6735
      %v7248 = vmul.f32 %v3152, %v6736
      %v7249 = vmul.f32 %v3153, %v6737
      %v7250 = vmul.f32 %v3154, %v6738
      %v7251 = vmul.f32 %v3155, %v6739
      %v7252 = vmul.f32 %v3156, %v6740
      %v7253 = vmul.f32 %v3157, %v6741
      %v7254 = vmul.f32 %v3158, %v6742
      %v7255 = vmul.f32 %v3159, %v6743
      %v7256 = vmul.f32 %v3160, %v6744
      %v7257 = vmul.f32 %v3161, %v6745
      %v7258 = vmul.f32 %v3162, %v6746
      %v7259 = vmul.f32 %v3163, %v6747
      %v7260 = vmul.f32 %v3164, %v6748
      %v7261 = vmul.f32 %v3165, %v6749
      %v7262 = vmul.f32 %v3166, %v6750
      %v7263 = vmul.f32 %v3167, %v6751
      %v7264 = vmul.f32 %v3168, %v6752
      %v7265 = vmul.f32 %v3169, %v6753
      %v7266 = vmul.f32 %v3170, %v6754
      %v7267 = vmul.f32 %v3171, %v6755
      %v7268 = vmul.f32 %v3172, %v6756
      %v7269 = vmul.f32 %v3173, %v6757
      %v7270 = vmul.f32 %v3174, %v6758
      %v7271 = vmul.f32 %v3175, %v6759
      %v7272 = vmul.f32 %v3176, %v6760
      %v7273 = vmul.f32 %v3177, %v6761
      %v7274 = vmul.f32 %v3178, %v6762
      %v7275 = vmul.f32 %v3179, %v6763
      %v7276 = vmul.f32 %v3180, %v6764
      %v7277 = vmul.f32 %v3181, %v6765
      %v7278 = vmul.f32 %v3182, %v6766
      %v7279 = vmul.f32 %v3183, %v6767
      %v7280 = vmul.f32 %v3184, %v6768
      %v7281 = vmul.f32 %v3185, %v6769
      %v7282 = vmul.f32 %v3186, %v6770
      %v7283 = vmul.f32 %v3187, %v6771
      %v7284 = vmul.f32 %v3188, %v6772
      %v7285 = vmul.f32 %v3189, %v6773
      %v7286 = vmul.f32 %v3190, %v6774
      %v7287 = vmul.f32 %v3191, %v6775
      %v7288 = vmul.f32 %v3192, %v6776
      %v7289 = vmul.f32 %v3193, %v6777
      %v7290 = vmul.f32 %v3194, %v6778
      %v7291 = vmul.f32 %v3195, %v6779
      %v7292 = vmul.f32 %v3196, %v6780
      %v7293 = vmul.f32 %v3197, %v6781
      %v7294 = vmul.f32 %v3198, %v6782
      %v7295 = vmul.f32 %v3199, %v6783
      %v7296 = vmul.f32 %v3200, %v6784
      %v7297 = vmul.f32 %v3201, %v6785
      %v7298 = vmul.f32 %v3202, %v6786
      %v7299 = vmul.f32 %v3203, %v6787
      %v7300 = vmul.f32 %v3204, %v6788
      %v7301 = vmul.f32 %v3205, %v6789
      %v7302 = vmul.f32 %v3206, %v6790
      %v7303 = vmul.f32 %v3207, %v6791
      %v7304 = vmul.f32 %v3208, %v6792
      %v7305 = vmul.f32 %v3209, %v6793
      %v7306 = vmul.f32 %v3210, %v6794
      %v7307 = vmul.f32 %v3211, %v6795
      %v7308 = vmul.f32 %v3212, %v6796
      %v7309 = vpack.c.bf16 %v6799, %v6797
      %v7310 = vpack.c.bf16 %v6800, %v6798
      %v7311 = vpack.c.bf16 %v6803, %v6801
      %v7312 = vpack.c.bf16 %v6804, %v6802
      %v7313 = vpack.c.bf16 %v6807, %v6805
      %v7314 = vpack.c.bf16 %v6808, %v6806
      %v7315 = vpack.c.bf16 %v6811, %v6809
      %v7316 = vpack.c.bf16 %v6812, %v6810
      %v7317 = vpack.c.bf16 %v6815, %v6813
      %v7318 = vpack.c.bf16 %v6816, %v6814
      %v7319 = vpack.c.bf16 %v6819, %v6817
      %v7320 = vpack.c.bf16 %v6820, %v6818
      %v7321 = vpack.c.bf16 %v6823, %v6821
      %v7322 = vpack.c.bf16 %v6824, %v6822
      %v7323 = vpack.c.bf16 %v6827, %v6825
      %v7324 = vpack.c.bf16 %v6828, %v6826
      %v7325 = vpack.c.bf16 %v6831, %v6829
      %v7326 = vpack.c.bf16 %v6832, %v6830
      %v7327 = vpack.c.bf16 %v6835, %v6833
      %v7328 = vpack.c.bf16 %v6836, %v6834
      %v7329 = vpack.c.bf16 %v6839, %v6837
      %v7330 = vpack.c.bf16 %v6840, %v6838
      %v7331 = vpack.c.bf16 %v6843, %v6841
      %v7332 = vpack.c.bf16 %v6844, %v6842
      %v7333 = vpack.c.bf16 %v6847, %v6845
      %v7334 = vpack.c.bf16 %v6848, %v6846
      %v7335 = vpack.c.bf16 %v6851, %v6849
      %v7336 = vpack.c.bf16 %v6852, %v6850
      %v7337 = vpack.c.bf16 %v6855, %v6853
      %v7338 = vpack.c.bf16 %v6856, %v6854
      %v7339 = vpack.c.bf16 %v6859, %v6857
      %v7340 = vpack.c.bf16 %v6860, %v6858
      %v7341 = vpack.c.bf16 %v6863, %v6861
      %v7342 = vpack.c.bf16 %v6864, %v6862
      %v7343 = vpack.c.bf16 %v6867, %v6865
      %v7344 = vpack.c.bf16 %v6868, %v6866
      %v7345 = vpack.c.bf16 %v6871, %v6869
      %v7346 = vpack.c.bf16 %v6872, %v6870
      %v7347 = vpack.c.bf16 %v6875, %v6873
      %v7348 = vpack.c.bf16 %v6876, %v6874
      %v7349 = vpack.c.bf16 %v6879, %v6877
      %v7350 = vpack.c.bf16 %v6880, %v6878
      %v7351 = vpack.c.bf16 %v6883, %v6881
      %v7352 = vpack.c.bf16 %v6884, %v6882
      %v7353 = vpack.c.bf16 %v6887, %v6885
      %v7354 = vpack.c.bf16 %v6888, %v6886
      %v7355 = vpack.c.bf16 %v6891, %v6889
      %v7356 = vpack.c.bf16 %v6892, %v6890
      %v7357 = vpack.c.bf16 %v6895, %v6893
      %v7358 = vpack.c.bf16 %v6896, %v6894
      %v7359 = vpack.c.bf16 %v6899, %v6897
      %v7360 = vpack.c.bf16 %v6900, %v6898
      %v7361 = vpack.c.bf16 %v6903, %v6901
      %v7362 = vpack.c.bf16 %v6904, %v6902
      %v7363 = vpack.c.bf16 %v6907, %v6905
      %v7364 = vpack.c.bf16 %v6908, %v6906
      %v7365 = vpack.c.bf16 %v6911, %v6909
      %v7366 = vpack.c.bf16 %v6912, %v6910
      %v7367 = vpack.c.bf16 %v6915, %v6913
      %v7368 = vpack.c.bf16 %v6916, %v6914
      %v7369 = vpack.c.bf16 %v6919, %v6917
      %v7370 = vpack.c.bf16 %v6920, %v6918
      %v7371 = vpack.c.bf16 %v6923, %v6921
      %v7372 = vpack.c.bf16 %v6924, %v6922
      %v7373 = vpack.c.bf16 %v6927, %v6925
      %v7374 = vpack.c.bf16 %v6928, %v6926
      %v7375 = vpack.c.bf16 %v6931, %v6929
      %v7376 = vpack.c.bf16 %v6932, %v6930
      %v7377 = vpack.c.bf16 %v6935, %v6933
      %v7378 = vpack.c.bf16 %v6936, %v6934
      %v7379 = vpack.c.bf16 %v6939, %v6937
      %v7380 = vpack.c.bf16 %v6940, %v6938
      %v7381 = vpack.c.bf16 %v6943, %v6941
      %v7382 = vpack.c.bf16 %v6944, %v6942
      %v7383 = vpack.c.bf16 %v6947, %v6945
      %v7384 = vpack.c.bf16 %v6948, %v6946
      %v7385 = vpack.c.bf16 %v6951, %v6949
      %v7386 = vpack.c.bf16 %v6952, %v6950
      %v7387 = vpack.c.bf16 %v6955, %v6953
      %v7388 = vpack.c.bf16 %v6956, %v6954
      %v7389 = vpack.c.bf16 %v6959, %v6957
      %v7390 = vpack.c.bf16 %v6960, %v6958
      %v7391 = vpack.c.bf16 %v6963, %v6961
      %v7392 = vpack.c.bf16 %v6964, %v6962
      %v7393 = vpack.c.bf16 %v6967, %v6965
      %v7394 = vpack.c.bf16 %v6968, %v6966
      %v7395 = vpack.c.bf16 %v6971, %v6969
      %v7396 = vpack.c.bf16 %v6972, %v6970
      %v7397 = vpack.c.bf16 %v6975, %v6973
      %v7398 = vpack.c.bf16 %v6976, %v6974
      %v7399 = vpack.c.bf16 %v6979, %v6977
      %v7400 = vpack.c.bf16 %v6980, %v6978
      %v7401 = vpack.c.bf16 %v6983, %v6981
      %v7402 = vpack.c.bf16 %v6984, %v6982
      %v7403 = vpack.c.bf16 %v6987, %v6985
      %v7404 = vpack.c.bf16 %v6988, %v6986
      %v7405 = vpack.c.bf16 %v6991, %v6989
      %v7406 = vpack.c.bf16 %v6992, %v6990
      %v7407 = vpack.c.bf16 %v6995, %v6993
      %v7408 = vpack.c.bf16 %v6996, %v6994
      %v7409 = vpack.c.bf16 %v6999, %v6997
      %v7410 = vpack.c.bf16 %v7000, %v6998
      %v7411 = vpack.c.bf16 %v7003, %v7001
      %v7412 = vpack.c.bf16 %v7004, %v7002
      %v7413 = vpack.c.bf16 %v7007, %v7005
      %v7414 = vpack.c.bf16 %v7008, %v7006
      %v7415 = vpack.c.bf16 %v7011, %v7009
      %v7416 = vpack.c.bf16 %v7012, %v7010
      %v7417 = vpack.c.bf16 %v7015, %v7013
      %v7418 = vpack.c.bf16 %v7016, %v7014
      %v7419 = vpack.c.bf16 %v7019, %v7017
      %v7420 = vpack.c.bf16 %v7020, %v7018
      %v7421 = vpack.c.bf16 %v7023, %v7021
      %v7422 = vpack.c.bf16 %v7024, %v7022
      %v7423 = vpack.c.bf16 %v7027, %v7025
      %v7424 = vpack.c.bf16 %v7028, %v7026
      %v7425 = vpack.c.bf16 %v7031, %v7029
      %v7426 = vpack.c.bf16 %v7032, %v7030
      %v7427 = vpack.c.bf16 %v7035, %v7033
      %v7428 = vpack.c.bf16 %v7036, %v7034
      %v7429 = vpack.c.bf16 %v7039, %v7037
      %v7430 = vpack.c.bf16 %v7040, %v7038
      %v7431 = vpack.c.bf16 %v7043, %v7041
      %v7432 = vpack.c.bf16 %v7044, %v7042
      %v7433 = vpack.c.bf16 %v7047, %v7045
      %v7434 = vpack.c.bf16 %v7048, %v7046
      %v7435 = vpack.c.bf16 %v7051, %v7049
      %v7436 = vpack.c.bf16 %v7052, %v7050
      %v7437 = vpack.c.bf16 %v7055, %v7053
      %v7438 = vpack.c.bf16 %v7056, %v7054
      %v7439 = vpack.c.bf16 %v7059, %v7057
      %v7440 = vpack.c.bf16 %v7060, %v7058
      %v7441 = vpack.c.bf16 %v7063, %v7061
      %v7442 = vpack.c.bf16 %v7064, %v7062
      %v7443 = vpack.c.bf16 %v7067, %v7065
      %v7444 = vpack.c.bf16 %v7068, %v7066
      %v7445 = vpack.c.bf16 %v7071, %v7069
      %v7446 = vpack.c.bf16 %v7072, %v7070
      %v7447 = vpack.c.bf16 %v7075, %v7073
      %v7448 = vpack.c.bf16 %v7076, %v7074
      %v7449 = vpack.c.bf16 %v7079, %v7077
      %v7450 = vpack.c.bf16 %v7080, %v7078
      %v7451 = vpack.c.bf16 %v7083, %v7081
      %v7452 = vpack.c.bf16 %v7084, %v7082
      %v7453 = vpack.c.bf16 %v7087, %v7085
      %v7454 = vpack.c.bf16 %v7088, %v7086
      %v7455 = vpack.c.bf16 %v7091, %v7089
      %v7456 = vpack.c.bf16 %v7092, %v7090
      %v7457 = vpack.c.bf16 %v7095, %v7093
      %v7458 = vpack.c.bf16 %v7096, %v7094
      %v7459 = vpack.c.bf16 %v7099, %v7097
      %v7460 = vpack.c.bf16 %v7100, %v7098
      %v7461 = vpack.c.bf16 %v7103, %v7101
      %v7462 = vpack.c.bf16 %v7104, %v7102
      %v7463 = vpack.c.bf16 %v7107, %v7105
      %v7464 = vpack.c.bf16 %v7108, %v7106
      %v7465 = vpack.c.bf16 %v7111, %v7109
      %v7466 = vpack.c.bf16 %v7112, %v7110
      %v7467 = vpack.c.bf16 %v7115, %v7113
      %v7468 = vpack.c.bf16 %v7116, %v7114
      %v7469 = vpack.c.bf16 %v7119, %v7117
      %v7470 = vpack.c.bf16 %v7120, %v7118
      %v7471 = vpack.c.bf16 %v7123, %v7121
      %v7472 = vpack.c.bf16 %v7124, %v7122
      %v7473 = vpack.c.bf16 %v7127, %v7125
      %v7474 = vpack.c.bf16 %v7128, %v7126
      %v7475 = vpack.c.bf16 %v7131, %v7129
      %v7476 = vpack.c.bf16 %v7132, %v7130
      %v7477 = vpack.c.bf16 %v7135, %v7133
      %v7478 = vpack.c.bf16 %v7136, %v7134
      %v7479 = vpack.c.bf16 %v7139, %v7137
      %v7480 = vpack.c.bf16 %v7140, %v7138
      %v7481 = vpack.c.bf16 %v7143, %v7141
      %v7482 = vpack.c.bf16 %v7144, %v7142
      %v7483 = vpack.c.bf16 %v7147, %v7145
      %v7484 = vpack.c.bf16 %v7148, %v7146
      %v7485 = vpack.c.bf16 %v7151, %v7149
      %v7486 = vpack.c.bf16 %v7152, %v7150
      %v7487 = vpack.c.bf16 %v7155, %v7153
      %v7488 = vpack.c.bf16 %v7156, %v7154
      %v7489 = vpack.c.bf16 %v7159, %v7157
      %v7490 = vpack.c.bf16 %v7160, %v7158
      %v7491 = vpack.c.bf16 %v7163, %v7161
      %v7492 = vpack.c.bf16 %v7164, %v7162
      %v7493 = vpack.c.bf16 %v7167, %v7165
      %v7494 = vpack.c.bf16 %v7168, %v7166
      %v7495 = vpack.c.bf16 %v7171, %v7169
      %v7496 = vpack.c.bf16 %v7172, %v7170
      %v7497 = vpack.c.bf16 %v7175, %v7173
      %v7498 = vpack.c.bf16 %v7176, %v7174
      %v7499 = vpack.c.bf16 %v7179, %v7177
      %v7500 = vpack.c.bf16 %v7180, %v7178
      %v7501 = vpack.c.bf16 %v7183, %v7181
      %v7502 = vpack.c.bf16 %v7184, %v7182
      %v7503 = vpack.c.bf16 %v7187, %v7185
      %v7504 = vpack.c.bf16 %v7188, %v7186
      %v7505 = vpack.c.bf16 %v7191, %v7189
      %v7506 = vpack.c.bf16 %v7192, %v7190
      %v7507 = vpack.c.bf16 %v7195, %v7193
      %v7508 = vpack.c.bf16 %v7196, %v7194
      %v7509 = vpack.c.bf16 %v7199, %v7197
      %v7510 = vpack.c.bf16 %v7200, %v7198
      %v7511 = vpack.c.bf16 %v7203, %v7201
      %v7512 = vpack.c.bf16 %v7204, %v7202
      %v7513 = vpack.c.bf16 %v7207, %v7205
      %v7514 = vpack.c.bf16 %v7208, %v7206
      %v7515 = vpack.c.bf16 %v7211, %v7209
      %v7516 = vpack.c.bf16 %v7212, %v7210
      %v7517 = vpack.c.bf16 %v7215, %v7213
      %v7518 = vpack.c.bf16 %v7216, %v7214
      %v7519 = vpack.c.bf16 %v7219, %v7217
      %v7520 = vpack.c.bf16 %v7220, %v7218
      %v7521 = vpack.c.bf16 %v7223, %v7221
      %v7522 = vpack.c.bf16 %v7224, %v7222
      %v7523 = vpack.c.bf16 %v7227, %v7225
      %v7524 = vpack.c.bf16 %v7228, %v7226
      %v7525 = vpack.c.bf16 %v7231, %v7229
      %v7526 = vpack.c.bf16 %v7232, %v7230
      %v7527 = vpack.c.bf16 %v7235, %v7233
      %v7528 = vpack.c.bf16 %v7236, %v7234
      %v7529 = vpack.c.bf16 %v7239, %v7237
      %v7530 = vpack.c.bf16 %v7240, %v7238
      %v7531 = vpack.c.bf16 %v7243, %v7241
      %v7532 = vpack.c.bf16 %v7244, %v7242
      %v7533 = vpack.c.bf16 %v7247, %v7245
      %v7534 = vpack.c.bf16 %v7248, %v7246
      %v7535 = vpack.c.bf16 %v7251, %v7249
      %v7536 = vpack.c.bf16 %v7252, %v7250
      %v7537 = vpack.c.bf16 %v7255, %v7253
      %v7538 = vpack.c.bf16 %v7256, %v7254
      %v7539 = vpack.c.bf16 %v7259, %v7257
      %v7540 = vpack.c.bf16 %v7260, %v7258
      %v7541 = vpack.c.bf16 %v7263, %v7261
      %v7542 = vpack.c.bf16 %v7264, %v7262
      %v7543 = vpack.c.bf16 %v7267, %v7265
      %v7544 = vpack.c.bf16 %v7268, %v7266
      %v7545 = vpack.c.bf16 %v7271, %v7269
      %v7546 = vpack.c.bf16 %v7272, %v7270
      %v7547 = vpack.c.bf16 %v7275, %v7273
      %v7548 = vpack.c.bf16 %v7276, %v7274
      %v7549 = vpack.c.bf16 %v7279, %v7277
      %v7550 = vpack.c.bf16 %v7280, %v7278
      %v7551 = vpack.c.bf16 %v7283, %v7281
      %v7552 = vpack.c.bf16 %v7284, %v7282
      %v7553 = vpack.c.bf16 %v7287, %v7285
      %v7554 = vpack.c.bf16 %v7288, %v7286
      %v7555 = vpack.c.bf16 %v7291, %v7289
      %v7556 = vpack.c.bf16 %v7292, %v7290
      %v7557 = vpack.c.bf16 %v7295, %v7293
      %v7558 = vpack.c.bf16 %v7296, %v7294
      %v7559 = vpack.c.bf16 %v7299, %v7297
      %v7560 = vpack.c.bf16 %v7300, %v7298
      %v7561 = vpack.c.bf16 %v7303, %v7301
      %v7562 = vpack.c.bf16 %v7304, %v7302
      %v7563 = vpack.c.bf16 %v7307, %v7305
      %v7564 = vpack.c.bf16 %v7308, %v7306
      %v7565 = vld [vmem:[%s3] sm:$0xf]
      %v7566 = vld [vmem:[%s4] sm:$0x3]
      %7567 = vmatprep.subr.bf16.mxu0 0
      %7568 = vmatpush1.bf16.xpose.msra.mxu0 %v1052
      %7569 = vmatprep.subr.bf16.mxu0 0
      %7570 = vmatpush1.bf16.xpose.msra.mxu0 %v1053
      %7571 = vmatprep.subr.bf16.mxu0 0
      %7572 = vmatpush1.bf16.xpose.msra.mxu0 %v1054
      %7573 = vmatprep.subr.bf16.mxu0 0
      %7574 = vmatpush1.bf16.xpose.msra.mxu0 %v1055
      %7575 = vmatprep.subr.bf16.mxu0 0
      %7576 = vmatpush1.bf16.xpose.msra.mxu0 %v1056
      %7577 = vmatprep.subr.bf16.mxu0 0
      %7578 = vmatpush1.bf16.xpose.msra.mxu0 %v1057
      %7579 = vmatprep.subr.bf16.mxu0 0
      %7580 = vmatpush1.bf16.xpose.msra.mxu0 %v1058
      %7581 = vmatprep.subr.bf16.mxu0 0
      %7582 = vmatpush1.bf16.xpose.msra.mxu0 %v1059
      %7583 = vmatprep.subr.bf16.mxu0 0
      %7584 = vmatpush1.bf16.xpose.msra.mxu0 %v1060
      %7585 = vmatprep.subr.bf16.mxu0 0
      %7586 = vmatpush1.bf16.xpose.msra.mxu0 %v1061
      %7587 = vmatprep.subr.bf16.mxu0 0
      %7588 = vmatpush1.bf16.xpose.msra.mxu0 %v1062
      %7589 = vmatprep.subr.bf16.mxu0 0
      %7590 = vmatpush1.bf16.xpose.msra.mxu0 %v1063
      %7591 = vmatprep.subr.bf16.mxu0 0
      %7592 = vmatpush1.bf16.xpose.msra.mxu0 %v1064
      %7593 = vmatprep.subr.bf16.mxu0 0
      %7594 = vmatpush1.bf16.xpose.msra.mxu0 %v1065
      %7595 = vmatprep.subr.bf16.mxu0 0
      %7596 = vmatpush1.bf16.xpose.msra.mxu0 %v1066
      %7597 = vmatprep.subr.bf16.mxu0 0
      %7598 = vmatpush1.bf16.xpose.msra.mxu0 %v1067
      %7599 = vmatprep.mubr.bf16.mxu0 0
      %7600 = vmatmul.mubr.bf16.gmra.mrb[0].mxu0 %v7566
      %v7601 = vpop.f32.mrb[0].mxu0
      %v7602 = vadd.f32 0.0, %v7601
      %v7603 = vpop.f32.mrb[0].mxu0
      %v7604 = vadd.f32 0.0, %v7603
      %v7605 = vpop.f32.mrb[0].mxu0
      %v7606 = vpop.f32.mrb[0].mxu0
      %7607 = vdwg.mxu0
      %7608 = vmatprep.subr.bf16.mxu0 0
      %7609 = vmatpush1.bf16.xpose.msra.mxu0 %v1068
      %7610 = vmatprep.subr.bf16.mxu0 0
      %7611 = vmatpush1.bf16.xpose.msra.mxu0 %v1069
      %7612 = vmatprep.subr.bf16.mxu0 0
      %7613 = vmatpush1.bf16.xpose.msra.mxu0 %v1070
      %7614 = vmatprep.subr.bf16.mxu0 0
      %7615 = vmatpush1.bf16.xpose.msra.mxu0 %v1071
      %7616 = vmatprep.subr.bf16.mxu0 0
      %7617 = vmatpush1.bf16.xpose.msra.mxu0 %v1072
      %7618 = vmatprep.subr.bf16.mxu0 0
      %7619 = vmatpush1.bf16.xpose.msra.mxu0 %v1073
      %7620 = vmatprep.subr.bf16.mxu0 0
      %7621 = vmatpush1.bf16.xpose.msra.mxu0 %v1074
      %7622 = vmatprep.subr.bf16.mxu0 0
      %7623 = vmatpush1.bf16.xpose.msra.mxu0 %v1075
      %7624 = vmatprep.subr.bf16.mxu0 0
      %7625 = vmatpush1.bf16.xpose.msra.mxu0 %v1076
      %7626 = vmatprep.subr.bf16.mxu0 0
      %7627 = vmatpush1.bf16.xpose.msra.mxu0 %v1077
      %7628 = vmatprep.subr.bf16.mxu0 0
      %7629 = vmatpush1.bf16.xpose.msra.mxu0 %v1078
      %7630 = vmatprep.subr.bf16.mxu0 0
      %7631 = vmatpush1.bf16.xpose.msra.mxu0 %v1079
      %7632 = vmatprep.subr.bf16.mxu0 0
      %7633 = vmatpush1.bf16.xpose.msra.mxu0 %v1080
      %7634 = vmatprep.subr.bf16.mxu0 0
      %7635 = vmatpush1.bf16.xpose.msra.mxu0 %v1081
      %7636 = vmatprep.subr.bf16.mxu0 0
      %7637 = vmatpush1.bf16.xpose.msra.mxu0 %v1082
      %7638 = vmatprep.subr.bf16.mxu0 0
      %7639 = vmatpush1.bf16.xpose.msra.mxu0 %v1083
      %7640 = vmatprep.mubr.bf16.mxu0 0
      %7641 = vmatmul.mubr.bf16.gmra.mrb[0].mxu0 %v7566
      %v7642 = vpop.f32.mrb[0].mxu0
      %v7643 = vadd.f32 0.0, %v7642
      %v7644 = vpop.f32.mrb[0].mxu0
      %v7645 = vadd.f32 0.0, %v7644
      %v7646 = vpop.f32.mrb[0].mxu0
      %v7647 = vpop.f32.mrb[0].mxu0
      %7648 = vdwg.mxu0
      %7649 = vmatprep.subr.bf16.mxu0 0
      %7650 = vmatpush1.bf16.xpose.msra.mxu0 %v1084
      %7651 = vmatprep.subr.bf16.mxu0 0
      %7652 = vmatpush1.bf16.xpose.msra.mxu0 %v1085
      %7653 = vmatprep.subr.bf16.mxu0 0
      %7654 = vmatpush1.bf16.xpose.msra.mxu0 %v1086
      %7655 = vmatprep.subr.bf16.mxu0 0
      %7656 = vmatpush1.bf16.xpose.msra.mxu0 %v1087
      %7657 = vmatprep.subr.bf16.mxu0 0
      %7658 = vmatpush1.bf16.xpose.msra.mxu0 %v1088
      %7659 = vmatprep.subr.bf16.mxu0 0
      %7660 = vmatpush1.bf16.xpose.msra.mxu0 %v1089
      %7661 = vmatprep.subr.bf16.mxu0 0
      %7662 = vmatpush1.bf16.xpose.msra.mxu0 %v1090
      %7663 = vmatprep.subr.bf16.mxu0 0
      %7664 = vmatpush1.bf16.xpose.msra.mxu0 %v1091
      %7665 = vmatprep.subr.bf16.mxu0 0
      %7666 = vmatpush1.bf16.xpose.msra.mxu0 %v1092
      %7667 = vmatprep.subr.bf16.mxu0 0
      %7668 = vmatpush1.bf16.xpose.msra.mxu0 %v1093
      %7669 = vmatprep.subr.bf16.mxu0 0
      %7670 = vmatpush1.bf16.xpose.msra.mxu0 %v1094
      %7671 = vmatprep.subr.bf16.mxu0 0
      %7672 = vmatpush1.bf16.xpose.msra.mxu0 %v1095
      %7673 = vmatprep.subr.bf16.mxu0 0
      %7674 = vmatpush1.bf16.xpose.msra.mxu0 %v1096
      %7675 = vmatprep.subr.bf16.mxu0 0
      %7676 = vmatpush1.bf16.xpose.msra.mxu0 %v1097
      %7677 = vmatprep.subr.bf16.mxu0 0
      %7678 = vmatpush1.bf16.xpose.msra.mxu0 %v1098
      %7679 = vmatprep.subr.bf16.mxu0 0
      %7680 = vmatpush1.bf16.xpose.msra.mxu0 %v1099
      %7681 = vmatprep.mubr.bf16.mxu0 0
      %7682 = vmatmul.mubr.bf16.gmra.mrb[0].mxu0 %v7566
      %v7683 = vpop.f32.mrb[0].mxu0
      %v7684 = vadd.f32 0.0, %v7683
      %v7685 = vpop.f32.mrb[0].mxu0
      %v7686 = vadd.f32 0.0, %v7685
      %v7687 = vpop.f32.mrb[0].mxu0
      %v7688 = vpop.f32.mrb[0].mxu0
      %7689 = vdwg.mxu0
      %7690 = vmatprep.subr.bf16.mxu0 0
      %7691 = vmatpush1.bf16.xpose.msra.mxu0 %v1100
      %7692 = vmatprep.subr.bf16.mxu0 0
      %7693 = vmatpush1.bf16.xpose.msra.mxu0 %v1101
      %7694 = vmatprep.subr.bf16.mxu0 0
      %7695 = vmatpush1.bf16.xpose.msra.mxu0 %v1102
      %7696 = vmatprep.subr.bf16.mxu0 0
      %7697 = vmatpush1.bf16.xpose.msra.mxu0 %v1103
      %7698 = vmatprep.subr.bf16.mxu0 0
      %7699 = vmatpush1.bf16.xpose.msra.mxu0 %v1104
      %7700 = vmatprep.subr.bf16.mxu0 0
      %7701 = vmatpush1.bf16.xpose.msra.mxu0 %v1105
      %7702 = vmatprep.subr.bf16.mxu0 0
      %7703 = vmatpush1.bf16.xpose.msra.mxu0 %v1106
      %7704 = vmatprep.subr.bf16.mxu0 0
      %7705 = vmatpush1.bf16.xpose.msra.mxu0 %v1107
      %7706 = vmatprep.subr.bf16.mxu0 0
      %7707 = vmatpush1.bf16.xpose.msra.mxu0 %v1108
      %7708 = vmatprep.subr.bf16.mxu0 0
      %7709 = vmatpush1.bf16.xpose.msra.mxu0 %v1109
      %7710 = vmatprep.subr.bf16.mxu0 0
      %7711 = vmatpush1.bf16.xpose.msra.mxu0 %v1110
      %7712 = vmatprep.subr.bf16.mxu0 0
      %7713 = vmatpush1.bf16.xpose.msra.mxu0 %v1111
      %7714 = vmatprep.subr.bf16.mxu0 0
      %7715 = vmatpush1.bf16.xpose.msra.mxu0 %v1112
      %7716 = vmatprep.subr.bf16.mxu0 0
      %7717 = vmatpush1.bf16.xpose.msra.mxu0 %v1113
      %7718 = vmatprep.subr.bf16.mxu0 0
      %7719 = vmatpush1.bf16.xpose.msra.mxu0 %v1114
      %7720 = vmatprep.subr.bf16.mxu0 0
      %7721 = vmatpush1.bf16.xpose.msra.mxu0 %v1115
      %7722 = vmatprep.mubr.bf16.mxu0 0
      %7723 = vmatmul.mubr.bf16.gmra.mrb[0].mxu0 %v7566
      %v7724 = vpop.f32.mrb[0].mxu0
      %v7725 = vadd.f32 0.0, %v7724
      %v7726 = vpop.f32.mrb[0].mxu0
      %v7727 = vadd.f32 0.0, %v7726
      %v7728 = vpop.f32.mrb[0].mxu0
      %v7729 = vpop.f32.mrb[0].mxu0
      %7730 = vdwg.mxu0
      %7731 = vmatprep.subr.bf16.mxu0 0
      %7732 = vmatpush1.bf16.xpose.msra.mxu0 %v1116
      %7733 = vmatprep.subr.bf16.mxu0 0
      %7734 = vmatpush1.bf16.xpose.msra.mxu0 %v1117
      %7735 = vmatprep.subr.bf16.mxu0 0
      %7736 = vmatpush1.bf16.xpose.msra.mxu0 %v1118
      %7737 = vmatprep.subr.bf16.mxu0 0
      %7738 = vmatpush1.bf16.xpose.msra.mxu0 %v1119
      %7739 = vmatprep.subr.bf16.mxu0 0
      %7740 = vmatpush1.bf16.xpose.msra.mxu0 %v1120
      %7741 = vmatprep.subr.bf16.mxu0 0
      %7742 = vmatpush1.bf16.xpose.msra.mxu0 %v1121
      %7743 = vmatprep.subr.bf16.mxu0 0
      %7744 = vmatpush1.bf16.xpose.msra.mxu0 %v1122
      %7745 = vmatprep.subr.bf16.mxu0 0
      %7746 = vmatpush1.bf16.xpose.msra.mxu0 %v1123
      %7747 = vmatprep.subr.bf16.mxu0 0
      %7748 = vmatpush1.bf16.xpose.msra.mxu0 %v1124
      %7749 = vmatprep.subr.bf16.mxu0 0
      %7750 = vmatpush1.bf16.xpose.msra.mxu0 %v1125
      %7751 = vmatprep.subr.bf16.mxu0 0
      %7752 = vmatpush1.bf16.xpose.msra.mxu0 %v1126
      %7753 = vmatprep.subr.bf16.mxu0 0
      %7754 = vmatpush1.bf16.xpose.msra.mxu0 %v1127
      %7755 = vmatprep.subr.bf16.mxu0 0
      %7756 = vmatpush1.bf16.xpose.msra.mxu0 %v1128
      %7757 = vmatprep.subr.bf16.mxu0 0
      %7758 = vmatpush1.bf16.xpose.msra.mxu0 %v1129
      %7759 = vmatprep.subr.bf16.mxu0 0
      %7760 = vmatpush1.bf16.xpose.msra.mxu0 %v1130
      %7761 = vmatprep.subr.bf16.mxu0 0
      %7762 = vmatpush1.bf16.xpose.msra.mxu0 %v1131
      %7763 = vmatprep.mubr.bf16.mxu0 0
      %7764 = vmatmul.mubr.bf16.gmra.mrb[0].mxu0 %v7566
      %v7765 = vpop.f32.mrb[0].mxu0
      %v7766 = vadd.f32 0.0, %v7765
      %v7767 = vpop.f32.mrb[0].mxu0
      %v7768 = vadd.f32 0.0, %v7767
      %v7769 = vpop.f32.mrb[0].mxu0
      %v7770 = vpop.f32.mrb[0].mxu0
      %7771 = vdwg.mxu0
      %7772 = vmatprep.subr.bf16.mxu0 0
      %7773 = vmatpush1.bf16.xpose.msra.mxu0 %v1132
      %7774 = vmatprep.subr.bf16.mxu0 0
      %7775 = vmatpush1.bf16.xpose.msra.mxu0 %v1133
      %7776 = vmatprep.subr.bf16.mxu0 0
      %7777 = vmatpush1.bf16.xpose.msra.mxu0 %v1134
      %7778 = vmatprep.subr.bf16.mxu0 0
      %7779 = vmatpush1.bf16.xpose.msra.mxu0 %v1135
      %7780 = vmatprep.subr.bf16.mxu0 0
      %7781 = vmatpush1.bf16.xpose.msra.mxu0 %v1136
      %7782 = vmatprep.subr.bf16.mxu0 0
      %7783 = vmatpush1.bf16.xpose.msra.mxu0 %v1137
      %7784 = vmatprep.subr.bf16.mxu0 0
      %7785 = vmatpush1.bf16.xpose.msra.mxu0 %v1138
      %7786 = vmatprep.subr.bf16.mxu0 0
      %7787 = vmatpush1.bf16.xpose.msra.mxu0 %v1139
      %7788 = vmatprep.subr.bf16.mxu0 0
      %7789 = vmatpush1.bf16.xpose.msra.mxu0 %v1140
      %7790 = vmatprep.subr.bf16.mxu0 0
      %7791 = vmatpush1.bf16.xpose.msra.mxu0 %v1141
      %7792 = vmatprep.subr.bf16.mxu0 0
      %7793 = vmatpush1.bf16.xpose.msra.mxu0 %v1142
      %7794 = vmatprep.subr.bf16.mxu0 0
      %7795 = vmatpush1.bf16.xpose.msra.mxu0 %v1143
      %7796 = vmatprep.subr.bf16.mxu0 0
      %7797 = vmatpush1.bf16.xpose.msra.mxu0 %v1144
      %7798 = vmatprep.subr.bf16.mxu0 0
      %7799 = vmatpush1.bf16.xpose.msra.mxu0 %v1145
      %7800 = vmatprep.subr.bf16.mxu0 0
      %7801 = vmatpush1.bf16.xpose.msra.mxu0 %v1146
      %7802 = vmatprep.subr.bf16.mxu0 0
      %7803 = vmatpush1.bf16.xpose.msra.mxu0 %v1147
      %7804 = vmatprep.mubr.bf16.mxu0 0
      %7805 = vmatmul.mubr.bf16.gmra.mrb[0].mxu0 %v7566
      %v7806 = vpop.f32.mrb[0].mxu0
      %v7807 = vadd.f32 0.0, %v7806
      %v7808 = vpop.f32.mrb[0].mxu0
      %v7809 = vadd.f32 0.0, %v7808
      %v7810 = vpop.f32.mrb[0].mxu0
      %v7811 = vpop.f32.mrb[0].mxu0
      %7812 = vdwg.mxu0
      %7813 = vmatprep.subr.bf16.mxu0 0
      %7814 = vmatpush1.bf16.xpose.msra.mxu0 %v1148
      %7815 = vmatprep.subr.bf16.mxu0 0
      %7816 = vmatpush1.bf16.xpose.msra.mxu0 %v1149
      %7817 = vmatprep.subr.bf16.mxu0 0
      %7818 = vmatpush1.bf16.xpose.msra.mxu0 %v1150
      %7819 = vmatprep.subr.bf16.mxu0 0
      %7820 = vmatpush1.bf16.xpose.msra.mxu0 %v1151
      %7821 = vmatprep.subr.bf16.mxu0 0
      %7822 = vmatpush1.bf16.xpose.msra.mxu0 %v1152
      %7823 = vmatprep.subr.bf16.mxu0 0
      %7824 = vmatpush1.bf16.xpose.msra.mxu0 %v1153
      %7825 = vmatprep.subr.bf16.mxu0 0
      %7826 = vmatpush1.bf16.xpose.msra.mxu0 %v1154
      %7827 = vmatprep.subr.bf16.mxu0 0
      %7828 = vmatpush1.bf16.xpose.msra.mxu0 %v1155
      %7829 = vmatprep.subr.bf16.mxu0 0
      %7830 = vmatpush1.bf16.xpose.msra.mxu0 %v1156
      %7831 = vmatprep.subr.bf16.mxu0 0
      %7832 = vmatpush1.bf16.xpose.msra.mxu0 %v1157
      %7833 = vmatprep.subr.bf16.mxu0 0
      %7834 = vmatpush1.bf16.xpose.msra.mxu0 %v1158
      %7835 = vmatprep.subr.bf16.mxu0 0
      %7836 = vmatpush1.bf16.xpose.msra.mxu0 %v1159
      %7837 = vmatprep.subr.bf16.mxu0 0
      %7838 = vmatpush1.bf16.xpose.msra.mxu0 %v1160
      %7839 = vmatprep.subr.bf16.mxu0 0
      %7840 = vmatpush1.bf16.xpose.msra.mxu0 %v1161
      %7841 = vmatprep.subr.bf16.mxu0 0
      %7842 = vmatpush1.bf16.xpose.msra.mxu0 %v1162
      %7843 = vmatprep.subr.bf16.mxu0 0
      %7844 = vmatpush1.bf16.xpose.msra.mxu0 %v1163
      %7845 = vmatprep.mubr.bf16.mxu0 0
      %7846 = vmatmul.mubr.bf16.gmra.mrb[0].mxu0 %v7566
      %v7847 = vpop.f32.mrb[0].mxu0
      %v7848 = vadd.f32 0.0, %v7847
      %v7849 = vpop.f32.mrb[0].mxu0
      %v7850 = vadd.f32 0.0, %v7849
      %v7851 = vpop.f32.mrb[0].mxu0
      %v7852 = vpop.f32.mrb[0].mxu0
      %7853 = vdwg.mxu0
      %7854 = vmatprep.subr.bf16.mxu0 0
      %7855 = vmatpush1.bf16.xpose.msra.mxu0 %v1164
      %7856 = vmatprep.subr.bf16.mxu0 0
      %7857 = vmatpush1.bf16.xpose.msra.mxu0 %v1165
      %7858 = vmatprep.subr.bf16.mxu0 0
      %7859 = vmatpush1.bf16.xpose.msra.mxu0 %v1166
      %7860 = vmatprep.subr.bf16.mxu0 0
      %7861 = vmatpush1.bf16.xpose.msra.mxu0 %v1167
      %7862 = vmatprep.subr.bf16.mxu0 0
      %7863 = vmatpush1.bf16.xpose.msra.mxu0 %v1168
      %7864 = vmatprep.subr.bf16.mxu0 0
      %7865 = vmatpush1.bf16.xpose.msra.mxu0 %v1169
      %7866 = vmatprep.subr.bf16.mxu0 0
      %7867 = vmatpush1.bf16.xpose.msra.mxu0 %v1170
      %7868 = vmatprep.subr.bf16.mxu0 0
      %7869 = vmatpush1.bf16.xpose.msra.mxu0 %v1171
      %7870 = vmatprep.subr.bf16.mxu0 0
      %7871 = vmatpush1.bf16.xpose.msra.mxu0 %v1172
      %7872 = vmatprep.subr.bf16.mxu0 0
      %7873 = vmatpush1.bf16.xpose.msra.mxu0 %v1173
      %7874 = vmatprep.subr.bf16.mxu0 0
      %7875 = vmatpush1.bf16.xpose.msra.mxu0 %v1174
      %7876 = vmatprep.subr.bf16.mxu0 0
      %7877 = vmatpush1.bf16.xpose.msra.mxu0 %v1175
      %7878 = vmatprep.subr.bf16.mxu0 0
      %7879 = vmatpush1.bf16.xpose.msra.mxu0 %v1176
      %7880 = vmatprep.subr.bf16.mxu0 0
      %7881 = vmatpush1.bf16.xpose.msra.mxu0 %v1177
      %7882 = vmatprep.subr.bf16.mxu0 0
      %7883 = vmatpush1.bf16.xpose.msra.mxu0 %v1178
      %7884 = vmatprep.subr.bf16.mxu0 0
      %7885 = vmatpush1.bf16.xpose.msra.mxu0 %v1179
      %7886 = vmatprep.mubr.bf16.mxu0 0
      %7887 = vmatmul.mubr.bf16.gmra.mrb[0].mxu0 %v7566
      %v7888 = vpop.f32.mrb[0].mxu0
      %v7889 = vadd.f32 0.0, %v7888
      %v7890 = vpop.f32.mrb[0].mxu0
      %v7891 = vadd.f32 0.0, %v7890
      %v7892 = vpop.f32.mrb[0].mxu0
      %v7893 = vpop.f32.mrb[0].mxu0
      %7894 = vdwg.mxu0
      %v7897 = vunpack.c.l.s4 1983009808
      %v7898 = vunpack.c.0.s8 %v7897
      %v7899 = vlaneseq
      %v7900 = vshrl.u32 %v7899, 7
      %v7901 = vsub.s32 %v7898, %v7900
      %v7902 = vrot.slane %v7565, %v7901
      %v7903 = vcombine.high %v7902, %v7902
      %7906 = vmatprep.subr.bf16.mxu0 %v7310
      %7907 = vmatpush1.bf16.xpose.msra.mxu0 %v7309
      %7908 = vmatprep.subr.bf16.mxu0 %v7312
      %7909 = vmatpush1.bf16.xpose.msra.mxu0 %v7311
      %7910 = vmatprep.subr.bf16.mxu0 %v7314
      %7911 = vmatpush1.bf16.xpose.msra.mxu0 %v7313
      %7912 = vmatprep.subr.bf16.mxu0 %v7316
      %7913 = vmatpush1.bf16.xpose.msra.mxu0 %v7315
      %7914 = vmatprep.subr.bf16.mxu0 %v7318
      %7915 = vmatpush1.bf16.xpose.msra.mxu0 %v7317
      %7916 = vmatprep.subr.bf16.mxu0 %v7320
      %7917 = vmatpush1.bf16.xpose.msra.mxu0 %v7319
      %7918 = vmatprep.subr.bf16.mxu0 %v7322
      %7919 = vmatpush1.bf16.xpose.msra.mxu0 %v7321
      %7920 = vmatprep.subr.bf16.mxu0 %v7324
      %7921 = vmatpush1.bf16.xpose.msra.mxu0 %v7323
      %7922 = vmatprep.subr.bf16.mxu0 %v7326
      %7923 = vmatpush1.bf16.xpose.msra.mxu0 %v7325
      %7924 = vmatprep.subr.bf16.mxu0 %v7328
      %7925 = vmatpush1.bf16.xpose.msra.mxu0 %v7327
      %7926 = vmatprep.subr.bf16.mxu0 %v7330
      %7927 = vmatpush1.bf16.xpose.msra.mxu0 %v7329
      %7928 = vmatprep.subr.bf16.mxu0 %v7332
      %7929 = vmatpush1.bf16.xpose.msra.mxu0 %v7331
      %7930 = vmatprep.subr.bf16.mxu0 %v7334
      %7931 = vmatpush1.bf16.xpose.msra.mxu0 %v7333
      %7932 = vmatprep.subr.bf16.mxu0 %v7336
      %7933 = vmatpush1.bf16.xpose.msra.mxu0 %v7335
      %7934 = vmatprep.subr.bf16.mxu0 %v7338
      %7935 = vmatpush1.bf16.xpose.msra.mxu0 %v7337
      %7936 = vmatprep.subr.bf16.mxu0 %v7340
      %7937 = vmatpush1.bf16.xpose.msra.mxu0 %v7339
      %7938 = vmatprep.mubr.bf16.mxu0 %v7903
      %7939 = vmatmul.mubr.bf16.gmra.mrb[0].mxu0 %v7902
      %v7940 = vpop.f32.mrb[0].mxu0
      %v7941 = vadd.f32 %v7602, %v7940
      %v7942 = vpop.f32.mrb[0].mxu0
      %v7943 = vadd.f32 %v7604, %v7942
      %v7944 = vpop.f32.mrb[0].mxu0
      %v7945 = vpop.f32.mrb[0].mxu0
      %7946 = vdwg.mxu0
      %7947 = vmatprep.subr.bf16.mxu0 %v7342
      %7948 = vmatpush1.bf16.xpose.msra.mxu0 %v7341
      %7949 = vmatprep.subr.bf16.mxu0 %v7344
      %7950 = vmatpush1.bf16.xpose.msra.mxu0 %v7343
      %7951 = vmatprep.subr.bf16.mxu0 %v7346
      %7952 = vmatpush1.bf16.xpose.msra.mxu0 %v7345
      %7953 = vmatprep.subr.bf16.mxu0 %v7348
      %7954 = vmatpush1.bf16.xpose.msra.mxu0 %v7347
      %7955 = vmatprep.subr.bf16.mxu0 %v7350
      %7956 = vmatpush1.bf16.xpose.msra.mxu0 %v7349
      %7957 = vmatprep.subr.bf16.mxu0 %v7352
      %7958 = vmatpush1.bf16.xpose.msra.mxu0 %v7351
      %7959 = vmatprep.subr.bf16.mxu0 %v7354
      %7960 = vmatpush1.bf16.xpose.msra.mxu0 %v7353
      %7961 = vmatprep.subr.bf16.mxu0 %v7356
      %7962 = vmatpush1.bf16.xpose.msra.mxu0 %v7355
      %7963 = vmatprep.subr.bf16.mxu0 %v7358
      %7964 = vmatpush1.bf16.xpose.msra.mxu0 %v7357
      %7965 = vmatprep.subr.bf16.mxu0 %v7360
      %7966 = vmatpush1.bf16.xpose.msra.mxu0 %v7359
      %7967 = vmatprep.subr.bf16.mxu0 %v7362
      %7968 = vmatpush1.bf16.xpose.msra.mxu0 %v7361
      %7969 = vmatprep.subr.bf16.mxu0 %v7364
      %7970 = vmatpush1.bf16.xpose.msra.mxu0 %v7363
      %7971 = vmatprep.subr.bf16.mxu0 %v7366
      %7972 = vmatpush1.bf16.xpose.msra.mxu0 %v7365
      %7973 = vmatprep.subr.bf16.mxu0 %v7368
      %7974 = vmatpush1.bf16.xpose.msra.mxu0 %v7367
      %7975 = vmatprep.subr.bf16.mxu0 %v7370
      %7976 = vmatpush1.bf16.xpose.msra.mxu0 %v7369
      %7977 = vmatprep.subr.bf16.mxu0 %v7372
      %7978 = vmatpush1.bf16.xpose.msra.mxu0 %v7371
      %7979 = vmatprep.mubr.bf16.mxu0 %v7903
      %7980 = vmatmul.mubr.bf16.gmra.mrb[0].mxu0 %v7902
      %v7981 = vpop.f32.mrb[0].mxu0
      %v7982 = vadd.f32 %v7643, %v7981
      %v7983 = vpop.f32.mrb[0].mxu0
      %v7984 = vadd.f32 %v7645, %v7983
      %v7985 = vpop.f32.mrb[0].mxu0
      %v7986 = vpop.f32.mrb[0].mxu0
      %7987 = vdwg.mxu0
      %7988 = vmatprep.subr.bf16.mxu0 %v7374
      %7989 = vmatpush1.bf16.xpose.msra.mxu0 %v7373
      %7990 = vmatprep.subr.bf16.mxu0 %v7376
      %7991 = vmatpush1.bf16.xpose.msra.mxu0 %v7375
      %7992 = vmatprep.subr.bf16.mxu0 %v7378
      %7993 = vmatpush1.bf16.xpose.msra.mxu0 %v7377
      %7994 = vmatprep.subr.bf16.mxu0 %v7380
      %7995 = vmatpush1.bf16.xpose.msra.mxu0 %v7379
      %7996 = vmatprep.subr.bf16.mxu0 %v7382
      %7997 = vmatpush1.bf16.xpose.msra.mxu0 %v7381
      %7998 = vmatprep.subr.bf16.mxu0 %v7384
      %7999 = vmatpush1.bf16.xpose.msra.mxu0 %v7383
      %8000 = vmatprep.subr.bf16.mxu0 %v7386
      %8001 = vmatpush1.bf16.xpose.msra.mxu0 %v7385
      %8002 = vmatprep.subr.bf16.mxu0 %v7388
      %8003 = vmatpush1.bf16.xpose.msra.mxu0 %v7387
      %8004 = vmatprep.subr.bf16.mxu0 %v7390
      %8005 = vmatpush1.bf16.xpose.msra.mxu0 %v7389
      %8006 = vmatprep.subr.bf16.mxu0 %v7392
      %8007 = vmatpush1.bf16.xpose.msra.mxu0 %v7391
      %8008 = vmatprep.subr.bf16.mxu0 %v7394
      %8009 = vmatpush1.bf16.xpose.msra.mxu0 %v7393
      %8010 = vmatprep.subr.bf16.mxu0 %v7396
      %8011 = vmatpush1.bf16.xpose.msra.mxu0 %v7395
      %8012 = vmatprep.subr.bf16.mxu0 %v7398
      %8013 = vmatpush1.bf16.xpose.msra.mxu0 %v7397
      %8014 = vmatprep.subr.bf16.mxu0 %v7400
      %8015 = vmatpush1.bf16.xpose.msra.mxu0 %v7399
      %8016 = vmatprep.subr.bf16.mxu0 %v7402
      %8017 = vmatpush1.bf16.xpose.msra.mxu0 %v7401
      %8018 = vmatprep.subr.bf16.mxu0 %v7404
      %8019 = vmatpush1.bf16.xpose.msra.mxu0 %v7403
      %8020 = vmatprep.mubr.bf16.mxu0 %v7903
      %8021 = vmatmul.mubr.bf16.gmra.mrb[0].mxu0 %v7902
      %v8022 = vpop.f32.mrb[0].mxu0
      %v8023 = vadd.f32 %v7684, %v8022
      %v8024 = vpop.f32.mrb[0].mxu0
      %v8025 = vadd.f32 %v7686, %v8024
      %v8026 = vpop.f32.mrb[0].mxu0
      %v8027 = vpop.f32.mrb[0].mxu0
      %8028 = vdwg.mxu0
      %8029 = vmatprep.subr.bf16.mxu0 %v7406
      %8030 = vmatpush1.bf16.xpose.msra.mxu0 %v7405
      %8031 = vmatprep.subr.bf16.mxu0 %v7408
      %8032 = vmatpush1.bf16.xpose.msra.mxu0 %v7407
      %8033 = vmatprep.subr.bf16.mxu0 %v7410
      %8034 = vmatpush1.bf16.xpose.msra.mxu0 %v7409
      %8035 = vmatprep.subr.bf16.mxu0 %v7412
      %8036 = vmatpush1.bf16.xpose.msra.mxu0 %v7411
      %8037 = vmatprep.subr.bf16.mxu0 %v7414
      %8038 = vmatpush1.bf16.xpose.msra.mxu0 %v7413
      %8039 = vmatprep.subr.bf16.mxu0 %v7416
      %8040 = vmatpush1.bf16.xpose.msra.mxu0 %v7415
      %8041 = vmatprep.subr.bf16.mxu0 %v7418
      %8042 = vmatpush1.bf16.xpose.msra.mxu0 %v7417
      %8043 = vmatprep.subr.bf16.mxu0 %v7420
      %8044 = vmatpush1.bf16.xpose.msra.mxu0 %v7419
      %8045 = vmatprep.subr.bf16.mxu0 %v7422
      %8046 = vmatpush1.bf16.xpose.msra.mxu0 %v7421
      %8047 = vmatprep.subr.bf16.mxu0 %v7424
      %8048 = vmatpush1.bf16.xpose.msra.mxu0 %v7423
      %8049 = vmatprep.subr.bf16.mxu0 %v7426
      %8050 = vmatpush1.bf16.xpose.msra.mxu0 %v7425
      %8051 = vmatprep.subr.bf16.mxu0 %v7428
      %8052 = vmatpush1.bf16.xpose.msra.mxu0 %v7427
      %8053 = vmatprep.subr.bf16.mxu0 %v7430
      %8054 = vmatpush1.bf16.xpose.msra.mxu0 %v7429
      %8055 = vmatprep.subr.bf16.mxu0 %v7432
      %8056 = vmatpush1.bf16.xpose.msra.mxu0 %v7431
      %8057 = vmatprep.subr.bf16.mxu0 %v7434
      %8058 = vmatpush1.bf16.xpose.msra.mxu0 %v7433
      %8059 = vmatprep.subr.bf16.mxu0 %v7436
      %8060 = vmatpush1.bf16.xpose.msra.mxu0 %v7435
      %8061 = vmatprep.mubr.bf16.mxu0 %v7903
      %8062 = vmatmul.mubr.bf16.gmra.mrb[0].mxu0 %v7902
      %v8063 = vpop.f32.mrb[0].mxu0
      %v8064 = vadd.f32 %v7725, %v8063
      %v8065 = vpop.f32.mrb[0].mxu0
      %v8066 = vadd.f32 %v7727, %v8065
      %v8067 = vpop.f32.mrb[0].mxu0
      %v8068 = vpop.f32.mrb[0].mxu0
      %8069 = vdwg.mxu0
      %8070 = vmatprep.subr.bf16.mxu0 %v7438
      %8071 = vmatpush1.bf16.xpose.msra.mxu0 %v7437
      %8072 = vmatprep.subr.bf16.mxu0 %v7440
      %8073 = vmatpush1.bf16.xpose.msra.mxu0 %v7439
      %8074 = vmatprep.subr.bf16.mxu0 %v7442
      %8075 = vmatpush1.bf16.xpose.msra.mxu0 %v7441
      %8076 = vmatprep.subr.bf16.mxu0 %v7444
      %8077 = vmatpush1.bf16.xpose.msra.mxu0 %v7443
      %8078 = vmatprep.subr.bf16.mxu0 %v7446
      %8079 = vmatpush1.bf16.xpose.msra.mxu0 %v7445
      %8080 = vmatprep.subr.bf16.mxu0 %v7448
      %8081 = vmatpush1.bf16.xpose.msra.mxu0 %v7447
      %8082 = vmatprep.subr.bf16.mxu0 %v7450
      %8083 = vmatpush1.bf16.xpose.msra.mxu0 %v7449
      %8084 = vmatprep.subr.bf16.mxu0 %v7452
      %8085 = vmatpush1.bf16.xpose.msra.mxu0 %v7451
      %8086 = vmatprep.subr.bf16.mxu0 %v7454
      %8087 = vmatpush1.bf16.xpose.msra.mxu0 %v7453
      %8088 = vmatprep.subr.bf16.mxu0 %v7456
      %8089 = vmatpush1.bf16.xpose.msra.mxu0 %v7455
      %8090 = vmatprep.subr.bf16.mxu0 %v7458
      %8091 = vmatpush1.bf16.xpose.msra.mxu0 %v7457
      %8092 = vmatprep.subr.bf16.mxu0 %v7460
      %8093 = vmatpush1.bf16.xpose.msra.mxu0 %v7459
      %8094 = vmatprep.subr.bf16.mxu0 %v7462
      %8095 = vmatpush1.bf16.xpose.msra.mxu0 %v7461
      %8096 = vmatprep.subr.bf16.mxu0 %v7464
      %8097 = vmatpush1.bf16.xpose.msra.mxu0 %v7463
      %8098 = vmatprep.subr.bf16.mxu0 %v7466
      %8099 = vmatpush1.bf16.xpose.msra.mxu0 %v7465
      %8100 = vmatprep.subr.bf16.mxu0 %v7468
      %8101 = vmatpush1.bf16.xpose.msra.mxu0 %v7467
      %8102 = vmatprep.mubr.bf16.mxu0 %v7903
      %8103 = vmatmul.mubr.bf16.gmra.mrb[0].mxu0 %v7902
      %v8104 = vpop.f32.mrb[0].mxu0
      %v8105 = vadd.f32 %v7766, %v8104
      %v8106 = vpop.f32.mrb[0].mxu0
      %v8107 = vadd.f32 %v7768, %v8106
      %v8108 = vpop.f32.mrb[0].mxu0
      %v8109 = vpop.f32.mrb[0].mxu0
      %8110 = vdwg.mxu0
      %8111 = vmatprep.subr.bf16.mxu0 %v7470
      %8112 = vmatpush1.bf16.xpose.msra.mxu0 %v7469
      %8113 = vmatprep.subr.bf16.mxu0 %v7472
      %8114 = vmatpush1.bf16.xpose.msra.mxu0 %v7471
      %8115 = vmatprep.subr.bf16.mxu0 %v7474
      %8116 = vmatpush1.bf16.xpose.msra.mxu0 %v7473
      %8117 = vmatprep.subr.bf16.mxu0 %v7476
      %8118 = vmatpush1.bf16.xpose.msra.mxu0 %v7475
      %8119 = vmatprep.subr.bf16.mxu0 %v7478
      %8120 = vmatpush1.bf16.xpose.msra.mxu0 %v7477
      %8121 = vmatprep.subr.bf16.mxu0 %v7480
      %8122 = vmatpush1.bf16.xpose.msra.mxu0 %v7479
      %8123 = vmatprep.subr.bf16.mxu0 %v7482
      %8124 = vmatpush1.bf16.xpose.msra.mxu0 %v7481
      %8125 = vmatprep.subr.bf16.mxu0 %v7484
      %8126 = vmatpush1.bf16.xpose.msra.mxu0 %v7483
      %8127 = vmatprep.subr.bf16.mxu0 %v7486
      %8128 = vmatpush1.bf16.xpose.msra.mxu0 %v7485
      %8129 = vmatprep.subr.bf16.mxu0 %v7488
      %8130 = vmatpush1.bf16.xpose.msra.mxu0 %v7487
      %8131 = vmatprep.subr.bf16.mxu0 %v7490
      %8132 = vmatpush1.bf16.xpose.msra.mxu0 %v7489
      %8133 = vmatprep.subr.bf16.mxu0 %v7492
      %8134 = vmatpush1.bf16.xpose.msra.mxu0 %v7491
      %8135 = vmatprep.subr.bf16.mxu0 %v7494
      %8136 = vmatpush1.bf16.xpose.msra.mxu0 %v7493
      %8137 = vmatprep.subr.bf16.mxu0 %v7496
      %8138 = vmatpush1.bf16.xpose.msra.mxu0 %v7495
      %8139 = vmatprep.subr.bf16.mxu0 %v7498
      %8140 = vmatpush1.bf16.xpose.msra.mxu0 %v7497
      %8141 = vmatprep.subr.bf16.mxu0 %v7500
      %8142 = vmatpush1.bf16.xpose.msra.mxu0 %v7499
      %8143 = vmatprep.mubr.bf16.mxu0 %v7903
      %8144 = vmatmul.mubr.bf16.gmra.mrb[0].mxu0 %v7902
      %v8145 = vpop.f32.mrb[0].mxu0
      %v8146 = vadd.f32 %v7807, %v8145
      %v8147 = vpop.f32.mrb[0].mxu0
      %v8148 = vadd.f32 %v7809, %v8147
      %v8149 = vpop.f32.mrb[0].mxu0
      %v8150 = vpop.f32.mrb[0].mxu0
      %8151 = vdwg.mxu0
      %8152 = vmatprep.subr.bf16.mxu0 %v7502
      %8153 = vmatpush1.bf16.xpose.msra.mxu0 %v7501
      %8154 = vmatprep.subr.bf16.mxu0 %v7504
      %8155 = vmatpush1.bf16.xpose.msra.mxu0 %v7503
      %8156 = vmatprep.subr.bf16.mxu0 %v7506
      %8157 = vmatpush1.bf16.xpose.msra.mxu0 %v7505
      %8158 = vmatprep.subr.bf16.mxu0 %v7508
      %8159 = vmatpush1.bf16.xpose.msra.mxu0 %v7507
      %8160 = vmatprep.subr.bf16.mxu0 %v7510
      %8161 = vmatpush1.bf16.xpose.msra.mxu0 %v7509
      %8162 = vmatprep.subr.bf16.mxu0 %v7512
      %8163 = vmatpush1.bf16.xpose.msra.mxu0 %v7511
      %8164 = vmatprep.subr.bf16.mxu0 %v7514
      %8165 = vmatpush1.bf16.xpose.msra.mxu0 %v7513
      %8166 = vmatprep.subr.bf16.mxu0 %v7516
      %8167 = vmatpush1.bf16.xpose.msra.mxu0 %v7515
      %8168 = vmatprep.subr.bf16.mxu0 %v7518
      %8169 = vmatpush1.bf16.xpose.msra.mxu0 %v7517
      %8170 = vmatprep.subr.bf16.mxu0 %v7520
      %8171 = vmatpush1.bf16.xpose.msra.mxu0 %v7519
      %8172 = vmatprep.subr.bf16.mxu0 %v7522
      %8173 = vmatpush1.bf16.xpose.msra.mxu0 %v7521
      %8174 = vmatprep.subr.bf16.mxu0 %v7524
      %8175 = vmatpush1.bf16.xpose.msra.mxu0 %v7523
      %8176 = vmatprep.subr.bf16.mxu0 %v7526
      %8177 = vmatpush1.bf16.xpose.msra.mxu0 %v7525
      %8178 = vmatprep.subr.bf16.mxu0 %v7528
      %8179 = vmatpush1.bf16.xpose.msra.mxu0 %v7527
      %8180 = vmatprep.subr.bf16.mxu0 %v7530
      %8181 = vmatpush1.bf16.xpose.msra.mxu0 %v7529
      %8182 = vmatprep.subr.bf16.mxu0 %v7532
      %8183 = vmatpush1.bf16.xpose.msra.mxu0 %v7531
      %8184 = vmatprep.mubr.bf16.mxu0 %v7903
      %8185 = vmatmul.mubr.bf16.gmra.mrb[0].mxu0 %v7902
      %v8186 = vpop.f32.mrb[0].mxu0
      %v8187 = vadd.f32 %v7848, %v8186
      %v8188 = vpop.f32.mrb[0].mxu0
      %v8189 = vadd.f32 %v7850, %v8188
      %v8190 = vpop.f32.mrb[0].mxu0
      %v8191 = vpop.f32.mrb[0].mxu0
      %8192 = vdwg.mxu0
      %8193 = vmatprep.subr.bf16.mxu0 %v7534
      %8194 = vmatpush1.bf16.xpose.msra.mxu0 %v7533
      %8195 = vmatprep.subr.bf16.mxu0 %v7536
      %8196 = vmatpush1.bf16.xpose.msra.mxu0 %v7535
      %8197 = vmatprep.subr.bf16.mxu0 %v7538
      %8198 = vmatpush1.bf16.xpose.msra.mxu0 %v7537
      %8199 = vmatprep.subr.bf16.mxu0 %v7540
      %8200 = vmatpush1.bf16.xpose.msra.mxu0 %v7539
      %8201 = vmatprep.subr.bf16.mxu0 %v7542
      %8202 = vmatpush1.bf16.xpose.msra.mxu0 %v7541
      %8203 = vmatprep.subr.bf16.mxu0 %v7544
      %8204 = vmatpush1.bf16.xpose.msra.mxu0 %v7543
      %8205 = vmatprep.subr.bf16.mxu0 %v7546
      %8206 = vmatpush1.bf16.xpose.msra.mxu0 %v7545
      %8207 = vmatprep.subr.bf16.mxu0 %v7548
      %8208 = vmatpush1.bf16.xpose.msra.mxu0 %v7547
      %8209 = vmatprep.subr.bf16.mxu0 %v7550
      %8210 = vmatpush1.bf16.xpose.msra.mxu0 %v7549
      %8211 = vmatprep.subr.bf16.mxu0 %v7552
      %8212 = vmatpush1.bf16.xpose.msra.mxu0 %v7551
      %8213 = vmatprep.subr.bf16.mxu0 %v7554
      %8214 = vmatpush1.bf16.xpose.msra.mxu0 %v7553
      %8215 = vmatprep.subr.bf16.mxu0 %v7556
      %8216 = vmatpush1.bf16.xpose.msra.mxu0 %v7555
      %8217 = vmatprep.subr.bf16.mxu0 %v7558
      %8218 = vmatpush1.bf16.xpose.msra.mxu0 %v7557
      %8219 = vmatprep.subr.bf16.mxu0 %v7560
      %8220 = vmatpush1.bf16.xpose.msra.mxu0 %v7559
      %8221 = vmatprep.subr.bf16.mxu0 %v7562
      %8222 = vmatpush1.bf16.xpose.msra.mxu0 %v7561
      %8223 = vmatprep.subr.bf16.mxu0 %v7564
      %8224 = vmatpush1.bf16.xpose.msra.mxu0 %v7563
      %8225 = vmatprep.mubr.bf16.mxu0 %v7903
      %8226 = vmatmul.mubr.bf16.gmra.mrb[0].mxu0 %v7902
      %v8227 = vpop.f32.mrb[0].mxu0
      %v8228 = vadd.f32 %v7889, %v8227
      %v8229 = vpop.f32.mrb[0].mxu0
      %v8230 = vadd.f32 %v7891, %v8229
      %v8231 = vpop.f32.mrb[0].mxu0
      %v8232 = vpop.f32.mrb[0].mxu0
      %8233 = vdwg.mxu0
      %v8234 = vld [vmem:[%s5] sm:$0x7]
      %8236 = vset.pattern.permute.xlu0 0
      %8237 = vperm.xlu0 %8236, %v8234
      %v8238 = vpop.permute.xlu0 %8237
      %v8240 = vadd.f32 %v7941, %v8238
      %v8241 = vadd.f32 %v7943, %v8238
      %v8242 = vadd.f32 %v7982, %v8238
      %v8243 = vadd.f32 %v7984, %v8238
      %v8244 = vadd.f32 %v8023, %v8238
      %v8245 = vadd.f32 %v8025, %v8238
      %v8246 = vadd.f32 %v8064, %v8238
      %v8247 = vadd.f32 %v8066, %v8238
      %v8248 = vadd.f32 %v8105, %v8238
      %v8249 = vadd.f32 %v8107, %v8238
      %v8250 = vadd.f32 %v8146, %v8238
      %v8251 = vadd.f32 %v8148, %v8238
      %v8252 = vadd.f32 %v8187, %v8238
      %v8253 = vadd.f32 %v8189, %v8238
      %v8254 = vadd.f32 %v8228, %v8238
      %v8255 = vadd.f32 %v8230, %v8238
      %v8272 = vcombine.low %v8240, %v8241
      %v8273 = vcombine.low %v8242, %v8243
      %v8274 = vcombine.low %v8244, %v8245
      %v8275 = vcombine.low %v8246, %v8247
      %v8276 = vcombine.low %v8248, %v8249
      %v8277 = vcombine.low %v8250, %v8251
      %v8278 = vcombine.low %v8252, %v8253
      %v8279 = vcombine.low %v8254, %v8255
      %8288 = vst [vmem:[%s253] sm:$0x77] %v8272
      %8289 = vst [vmem:[%s253 + $0x8] sm:$0x77] %v8273
      %8290 = vst [vmem:[%s253 + $0x10] sm:$0x77] %v8274
      %8291 = vst [vmem:[%s253 + $0x18] sm:$0x77] %v8275
      %8292 = vst [vmem:[%s253 + $0x20] sm:$0x77] %v8276
      %8293 = vst [vmem:[%s253 + $0x28] sm:$0x77] %v8277
      %8294 = vst [vmem:[%s253 + $0x30] sm:$0x77] %v8278
      %8295 = vst [vmem:[%s253 + $0x38] sm:$0x77] %v8279
      %s8296 = smul.u32 16, %s17
      %p8297 = scmp.lt.s32.totalorder %s8296, 31
      %s8298 = scalar_select %p8297, %s8296, 31
      %s8299 = smul.addr %s8298, 4
      %s8300 = scalar_lea.vmem %s6, %s8299
      // Predicated region
      $region45: #{module_net3d_forward.1} parent=43 // pred_check
        %p8301 = pneg %p166
      $region46: #{module_net3d_forward.1} parent=43 // pred_check_branch
        %8303 = sbr.rel (%p8301) target = $region48
      $region47: #{module_net3d_forward.1} parent=43 // pred_region
        %s8304 = smul.u32 16, %s17
      $region48: #{module_net3d_forward.1} parent=43 // pred_fallthru
        _
    $region44: #{module_net3d_forward.1} parent=5 // pred_fallthru
      _
    %p8305 = scmp.le.s32.totalorder 2, %s12
    // Predicated region
    $region49: #{module_net3d_forward.1} parent=5 // pred_check
      %p8306 = pneg %p8305
    $region50: #{module_net3d_forward.1} parent=5 // pred_check_branch
      %8308 = sbr.rel (%p8306) target = $region52
    $region51: #{module_net3d_forward.1} parent=5 // pred_region
      %s8309 = ssub.s32 %s12, 2
      // Predicated region
      $region53: #{module_net3d_forward.1} parent=51 // pred_check
        %p8310 = pneg %p172
      $region54: #{module_net3d_forward.1} parent=51 // pred_check_branch
        %8312 = sbr.rel (%p8310) target = $region56
      $region55: #{module_net3d_forward.1} parent=51 // pred_region
        %s8313 = smul.u32 16, %s18
        %p8314 = scmp.lt.s32.totalorder %s8313, 31
        %s8315 = scalar_select %p8314, %s8313, 31
        %s8316 = smul.addr %s8315, 4
        %s8317 = scalar_lea.vmem %s6, %s8316
      $region56: #{module_net3d_forward.1} parent=51 // pred_fallthru
        _
    $region52: #{module_net3d_forward.1} parent=5 // pred_fallthru
      _
  $region6: #{module_net3d_forward.1} parent=0 // loop_footer
    %s16 = sadd.s32 1, %s12
  $region7: #{module_net3d_forward.1} parent=0 // loop_footer_branch
    %11 = sbr.rel target = $region3
  $region8: #{module_net3d_forward.1} parent=0 // loop_exit
    _

</llo_original>
